<compile_context>
chip_gen: v6e
topology: v6e:2x2x1
jax: 0.10.0
libtpu: 0.0.40
codegen_flags: <defaults>
</compile_context>

<pallas_src>
import jax
import jax.numpy as jnp
from jax.experimental import pallas as pl
from jax.experimental.pallas import tpu as pltpu

D_MODEL = 32
N_HEADS = 4
D_HEAD = D_MODEL // N_HEADS
D_FF = 64
N_LAYERS = 2
EPS = 1e-6


# ------------------------------ fused kernel --------------------------------

def _decoder_stack_kernel(
        x_ref, enc_ref, src_bias_ref, tgt_bias_ref,
        sa_wqkv_ref, sa_bqkv_ref, sa_wo_ref, sa_bo_ref,
        ca_wq_ref, ca_bq_ref, ca_wkv_ref, ca_bkv_ref, ca_wo_ref, ca_bo_ref,
        ffn_w1_ref, ffn_b1_ref, ffn_w2_ref, ffn_b2_ref,
        ln_ref, final_ln_ref,
        o_ref):
    B, Tq, D = x_ref.shape
    Tk = enc_ref.shape[1]
    Mq = B * Tq
    Mk = B * Tk

    # Activations stay VMEM-resident 2-D values for the whole stack.
    x2 = x_ref[...].reshape(Mq, D)            # (B*Tq, D)
    enc2 = enc_ref[...].reshape(Mk, D)        # (B*Tk, D)
    src_bias = src_bias_ref[...]              # (H*B, Tq, Tk) additive mask bias
    tgt_bias = tgt_bias_ref[...]              # (H*B, Tq, Tq) additive mask bias

    inv_dm1 = 1.0 / (D - 1)                   # torch .std() default: unbiased

    def layer_norm(h2, alpha, bias):
        mean = jnp.mean(h2, axis=-1, keepdims=True)
        c = h2 - mean
        std = jnp.sqrt(jnp.sum(c * c, axis=-1, keepdims=True) * inv_dm1)
        # 1/(std+eps) on the EUP; alpha/bias are SMEM scalars.
        return alpha * c * pl.reciprocal(std + EPS, approx=True) + bias

    def split_heads(z2, off, t):
        # z2: (B*t, lanes) -> (H*B, t, dh); head h lives at lane offset off+h*dh.
        # Leading-dim reshapes + major-axis concat only (no lane<->sublane moves).
        return jnp.concatenate(
            [z2[:, off + h * D_HEAD: off + (h + 1) * D_HEAD].reshape(B, t, D_HEAD)
             for h in range(N_HEADS)], axis=0)

    def attention(q_src, q_off, kv_src, k_off, v_off, t_kv, bias, wo, bo):
        qh = split_heads(q_src, q_off, Tq)        # (H*B, Tq, dh)  (scale pre-folded)
        kh = split_heads(kv_src, k_off, t_kv)     # (H*B, t_kv, dh)
        vh = split_heads(kv_src, v_off, t_kv)     # (H*B, t_kv, dh)
        # One score einsum + ONE softmax for all heads & batches.
        s = jnp.einsum('gqd,gkd->gqk', qh, kh,
                       preferred_element_type=jnp.float32) + bias
        m = jnp.max(s, axis=-1, keepdims=True)
        e = jnp.exp(s - m)
        p = e * pl.reciprocal(jnp.sum(e, axis=-1, keepdims=True), approx=True)
        ctx = jnp.einsum('gqk,gkd->gqd', p, vh,
                         preferred_element_type=jnp.float32)      # (H*B, Tq, dh)
        # Merge heads back onto lanes (head-contiguous columns) -> ONE output proj.
        ctx2 = jnp.concatenate(
            [ctx[h * B:(h + 1) * B].reshape(Mq, D_HEAD) for h in range(N_HEADS)],
            axis=1)                                               # (Mq, D)
        return jnp.dot(ctx2, wo, preferred_element_type=jnp.float32) + bo

    for l in range(N_LAYERS):
        # ------------------- masked self-attention -------------------
        h2 = layer_norm(x2, ln_ref[l, 0], ln_ref[l, 1])
        qkv = jnp.dot(h2, sa_wqkv_ref[l],
                      preferred_element_type=jnp.float32) + sa_bqkv_ref[l]  # (Mq, 3D)
        x2 = x2 + attention(qkv, 0, qkv, D, 2 * D, Tq, tgt_bias,
                            sa_wo_ref[l], sa_bo_ref[l])

        # ---------------- cross-attention (encoder K/V) ----------------
        h2 = layer_norm(x2, ln_ref[l, 2], ln_ref[l, 3])
        q2 = jnp.dot(h2, ca_wq_ref[l],
                     preferred_element_type=jnp.float32) + ca_bq_ref[l]      # (Mq, D)
        kv = jnp.dot(enc2, ca_wkv_ref[l],
                     preferred_element_type=jnp.float32) + ca_bkv_ref[l]     # (Mk, 2D)
        x2 = x2 + attention(q2, 0, kv, 0, D, Tk, src_bias,
                            ca_wo_ref[l], ca_bo_ref[l])

        # ------------------- position-wise FFN -------------------
        h2 = layer_norm(x2, ln_ref[l, 4], ln_ref[l, 5])
        hid = jnp.maximum(jnp.dot(h2, ffn_w1_ref[l],
                                  preferred_element_type=jnp.float32)
                          + ffn_b1_ref[l], 0.0)
        x2 = x2 + jnp.dot(hid, ffn_w2_ref[l],
                          preferred_element_type=jnp.float32) + ffn_b2_ref[l]

    # -------------------- final LayerNormalization --------------------
    y2 = layer_norm(x2, final_ln_ref[0, 0], final_ln_ref[0, 1])
    # TODO(synk): output lane width is D=32 (<128) -> masked store; fine at this
    # size, present a lane-dense slab if D_MODEL / B*T ever scale up.
    o_ref[...] = y2.reshape(B, Tq, D)


# ------------------------------ wrapper / packing ----------------------------

def pack_params(params):
    """One-time repack: lane-dense fused weights; softmax scale folded into Q."""
    scale = 1.0 / (D_HEAD ** 0.5)
    sa_wqkv, sa_bqkv, sa_wo, sa_bo = [], [], [], []
    ca_wq, ca_bq, ca_wkv, ca_bkv, ca_wo, ca_bo = [], [], [], [], [], []
    w1, b1, w2, b2, ln = [], [], [], [], []
    for p in params['layers']:
        sa, ca = p['self_attn'], p['cross_attn']
        sa_wqkv.append(jnp.concatenate([sa['wq'] * scale, sa['wk'], sa['wv']], axis=1))
        sa_bqkv.append(jnp.concatenate([sa['bq'] * scale, sa['bk'], sa['bv']], axis=1))
        sa_wo.append(sa['wo']); sa_bo.append(sa['bo'])
        ca_wq.append(ca['wq'] * scale); ca_bq.append(ca['bq'] * scale)
        ca_wkv.append(jnp.concatenate([ca['wk'], ca['wv']], axis=1))
        ca_bkv.append(jnp.concatenate([ca['bk'], ca['bv']], axis=1))
        ca_wo.append(ca['wo']); ca_bo.append(ca['bo'])
        w1.append(p['ffn_w1']); b1.append(p['ffn_b1'])
        w2.append(p['ffn_w2']); b2.append(p['ffn_b2'])
        ln.append(jnp.stack([p['ln1_a'][0, 0], p['ln1_b'][0, 0],
                             p['ln2_a'][0, 0], p['ln2_b'][0, 0],
                             p['ln3_a'][0, 0], p['ln3_b'][0, 0]]))
    return dict(
        sa_wqkv=jnp.stack(sa_wqkv), sa_bqkv=jnp.stack(sa_bqkv),
        sa_wo=jnp.stack(sa_wo), sa_bo=jnp.stack(sa_bo),
        ca_wq=jnp.stack(ca_wq), ca_bq=jnp.stack(ca_bq),
        ca_wkv=jnp.stack(ca_wkv), ca_bkv=jnp.stack(ca_bkv),
        ca_wo=jnp.stack(ca_wo), ca_bo=jnp.stack(ca_bo),
        ffn_w1=jnp.stack(w1), ffn_b1=jnp.stack(b1),
        ffn_w2=jnp.stack(w2), ffn_b2=jnp.stack(b2),
        ln=jnp.stack(ln),                                        # (L, 6) scalars
        final_ln=jnp.stack([params['norm_a'][0, 0],
                            params['norm_b'][0, 0]]).reshape(1, 2),
    )


@jax.jit
def decoder_forward(packed, x, encoder_output, src_mask, tgt_mask):
    B, Tq, D = x.shape
    Tk = encoder_output.shape[1]
    NEG = -1e9
    # (B,1,1,Tk)/(B,1,Tq,Tq) -> additive bias, replicated per head: g = h*B + b.
    src3 = jnp.broadcast_to(src_mask[:, 0], (B, Tq, Tk)).astype(jnp.float32)
    tgt3 = jnp.broadcast_to(tgt_mask[:, 0], (B, Tq, Tq)).astype(jnp.float32)
    src_bias = jnp.tile(jnp.where(src3 == 0.0, NEG, 0.0), (N_HEADS, 1, 1))
    tgt_bias = jnp.tile(jnp.where(tgt3 == 0.0, NEG, 0.0), (N_HEADS, 1, 1))

    vmem = pl.BlockSpec(memory_space=pltpu.MemorySpace.VMEM)
    smem = pl.BlockSpec(memory_space=pltpu.MemorySpace.SMEM)
    return pl.pallas_call(
        _decoder_stack_kernel,
        out_shape=jax.ShapeDtypeStruct((B, Tq, D), jnp.float32),
        # grid=() : single invocation, everything resident; ln scalars in SMEM.
        in_specs=[vmem] * 18 + [smem, smem],
    )(x, encoder_output, src_bias, tgt_bias,
      packed['sa_wqkv'], packed['sa_bqkv'], packed['sa_wo'], packed['sa_bo'],
      packed['ca_wq'], packed['ca_bq'], packed['ca_wkv'], packed['ca_bkv'],
      packed['ca_wo'], packed['ca_bo'],
      packed['ffn_w1'], packed['ffn_b1'], packed['ffn_w2'], packed['ffn_b2'],
      packed['ln'], packed['final_ln'])


# ------------------------------ pure-JAX reference ---------------------------

def _layer_norm_ref(x, a, b):
    mean = jnp.mean(x, axis=-1, keepdims=True)
    c = x - mean
    std = jnp.sqrt(jnp.sum(c * c, axis=-1, keepdims=True) / (x.shape[-1] - 1))
    return a[0, 0] * c / (std + EPS) + b[0, 0]


def _mha_ref(p, q_in, kv_in, mask):
    B, Tq, D = q_in.shape
    Tk = kv_in.shape[1]
    q = q_in @ p['wq'] + p['bq']
    k = kv_in @ p['wk'] + p['bk']
    v = kv_in @ p['wv'] + p['bv']
    q = q.reshape(B, Tq, N_HEADS, D_HEAD).transpose(0, 2, 1, 3)
    k = k.reshape(B, Tk, N_HEADS, D_HEAD).transpose(0, 2, 1, 3)
    v = v.reshape(B, Tk, N_HEADS, D_HEAD).transpose(0, 2, 1, 3)
    s = jnp.einsum('bhqd,bhkd->bhqk', q, k) / (D_HEAD ** 0.5)
    s = jnp.where(mask == 0.0, -1e9, s)
    p_attn = jax.nn.softmax(s, axis=-1)
    ctx = jnp.einsum('bhqk,bhkd->bhqd', p_attn, v)
    ctx = ctx.transpose(0, 2, 1, 3).reshape(B, Tq, D)
    return ctx @ p['wo'] + p['bo']


def decoder_reference(params, x, enc, src_mask, tgt_mask):
    with jax.default_matmul_precision("highest"):
        for p in params['layers']:
            h = _layer_norm_ref(x, p['ln1_a'], p['ln1_b'])
            x = x + _mha_ref(p['self_attn'], h, h, tgt_mask)
            h = _layer_norm_ref(x, p['ln2_a'], p['ln2_b'])
            x = x + _mha_ref(p['cross_attn'], h, enc, src_mask)
            h = _layer_norm_ref(x, p['ln3_a'], p['ln3_b'])
            x = x + (jnp.maximum(h @ p['ffn_w1'] + p['ffn_b1'], 0.0)
                     @ p['ffn_w2'] + p['ffn_b2'])
        return _layer_norm_ref(x, params['norm_a'], params['norm_b'])


# ------------------------------ parameter init -------------------------------

def _init_linear(key, din, dout):
    k1, k2 = jax.random.split(key)
    w = jax.random.normal(k1, (din, dout), jnp.float32) * 0.05
    b = jax.random.normal(k2, (1, dout), jnp.float32) * 0.05
    return w, b


def _init_mha(key):
    ks = jax.random.split(key, 4)
    wq, bq = _init_linear(ks[0], D_MODEL, D_MODEL)
    wk, bk = _init_linear(ks[1], D_MODEL, D_MODEL)
    wv, bv = _init_linear(ks[2], D_MODEL, D_MODEL)
    wo, bo = _init_linear(ks[3], D_MODEL, D_MODEL)
    return dict(wq=wq, bq=bq, wk=wk, bk=bk, wv=wv, bv=bv, wo=wo, bo=bo)


def init_params(key):
    ones = jnp.ones((1, 1), jnp.float32)
    zeros = jnp.zeros((1, 1), jnp.float32)
    layers = []
    for i in range(N_LAYERS):
        k_sa, k_ca, k_f1, k_f2, key = jax.random.split(jax.random.fold_in(key, i), 5)
        w1, b1 = _init_linear(k_f1, D_MODEL, D_FF)
        w2, b2 = _init_linear(k_f2, D_FF, D_MODEL)
        layers.append(dict(
            self_attn=_init_mha(k_sa), cross_attn=_init_mha(k_ca),
            ffn_w1=w1, ffn_b1=b1, ffn_w2=w2, ffn_b2=b2,
            ln1_a=ones, ln1_b=zeros, ln2_a=ones, ln2_b=zeros,
            ln3_a=ones, ln3_b=zeros))
    return dict(layers=layers, norm_a=ones, norm_b=zeros)


# ---------------------------------- main --------------------------------------

if __name__ == "__main__":
    B, T_TGT, T_SRC = 2, 8, 8
    key = jax.random.PRNGKey(0)
    k_p, k_x, k_e = jax.random.split(key, 3)

    params = init_params(k_p)
    packed = pack_params(params)

    x = jax.random.normal(k_x, (B, T_TGT, D_MODEL), jnp.float32)
    encoder_output = jax.random.normal(k_e, (B, T_SRC, D_MODEL), jnp.float32)
    src_mask = jnp.ones((B, 1, 1, T_SRC), jnp.float32)
    tgt_mask = jnp.broadcast_to(
        jnp.tril(jnp.ones((T_TGT, T_TGT), jnp.float32))[None, None],
        (B, 1, T_TGT, T_TGT))

    out = decoder_forward(packed, x, encoder_output, src_mask, tgt_mask)
    jax.block_until_ready(out)
    assert out.shape == (B, T_TGT, D_MODEL)

    # Sanity check against a pure-JAX reference (tolerance covers MXU f32
    # multi-pass precision and the approx-reciprocal EUP path).
    ref = decoder_reference(params, x, encoder_output, src_mask, tgt_mask)
    assert jnp.allclose(out, ref, atol=2e-2, rtol=2e-2), \
        float(jnp.max(jnp.abs(out - ref)))

    print("KERNEL_OK")
</pallas_src>

<mosaic_0001>
module attributes {stable_mosaic.version = 11 : i64} {
  func.func @_decoder_stack_kernel(%arg0: memref<2x8x32xf32, #tpu.memory_space<vmem>>, %arg1: memref<2x8x32xf32, #tpu.memory_space<vmem>>, %arg2: memref<8x8x8xf32, #tpu.memory_space<vmem>>, %arg3: memref<8x8x8xf32, #tpu.memory_space<vmem>>, %arg4: memref<2x32x96xf32, #tpu.memory_space<vmem>>, %arg5: memref<2x1x96xf32, #tpu.memory_space<vmem>>, %arg6: memref<2x32x32xf32, #tpu.memory_space<vmem>>, %arg7: memref<2x1x32xf32, #tpu.memory_space<vmem>>, %arg8: memref<2x32x32xf32, #tpu.memory_space<vmem>>, %arg9: memref<2x1x32xf32, #tpu.memory_space<vmem>>, %arg10: memref<2x32x64xf32, #tpu.memory_space<vmem>>, %arg11: memref<2x1x64xf32, #tpu.memory_space<vmem>>, %arg12: memref<2x32x32xf32, #tpu.memory_space<vmem>>, %arg13: memref<2x1x32xf32, #tpu.memory_space<vmem>>, %arg14: memref<2x32x64xf32, #tpu.memory_space<vmem>>, %arg15: memref<2x1x64xf32, #tpu.memory_space<vmem>>, %arg16: memref<2x64x32xf32, #tpu.memory_space<vmem>>, %arg17: memref<2x1x32xf32, #tpu.memory_space<vmem>>, %arg18: memref<2x6xf32, #tpu.memory_space<smem>>, %arg19: memref<1x2xf32, #tpu.memory_space<smem>>, %arg20: memref<2x8x32xf32, #tpu.memory_space<vmem>>) attributes {dimension_semantics = [], scalar_prefetch = 0 : i64, scratch_operands = 0 : i64, tpu.core_type = #tpu.core_type<tc>} {
    %c0 = arith.constant 0 : index
    %c0_0 = arith.constant 0 : index
    %c0_1 = arith.constant 0 : index
    %0 = vector.load %arg0[%c0, %c0_0, %c0_1] : memref<2x8x32xf32, #tpu.memory_space<vmem>>, vector<2x8x32xf32>
    %1 = vector.shape_cast %0 : vector<2x8x32xf32> to vector<16x32xf32>
    %c0_2 = arith.constant 0 : index
    %c0_3 = arith.constant 0 : index
    %c0_4 = arith.constant 0 : index
    %2 = vector.load %arg1[%c0_2, %c0_3, %c0_4] : memref<2x8x32xf32, #tpu.memory_space<vmem>>, vector<2x8x32xf32>
    %3 = vector.shape_cast %2 : vector<2x8x32xf32> to vector<16x32xf32>
    %c0_5 = arith.constant 0 : index
    %c0_6 = arith.constant 0 : index
    %c0_7 = arith.constant 0 : index
    %4 = vector.load %arg2[%c0_5, %c0_6, %c0_7] : memref<8x8x8xf32, #tpu.memory_space<vmem>>, vector<8x8x8xf32>
    %5 = vector.shape_cast %4 : vector<8x8x8xf32> to vector<8x8x8xf32>
    %c0_8 = arith.constant 0 : index
    %c0_9 = arith.constant 0 : index
    %c0_10 = arith.constant 0 : index
    %6 = vector.load %arg3[%c0_8, %c0_9, %c0_10] : memref<8x8x8xf32, #tpu.memory_space<vmem>>, vector<8x8x8xf32>
    %7 = vector.shape_cast %6 : vector<8x8x8xf32> to vector<8x8x8xf32>
    %c0_11 = arith.constant 0 : index
    %c0_12 = arith.constant 0 : index
    %8 = memref.load %arg18[%c0_11, %c0_12] : memref<2x6xf32, #tpu.memory_space<smem>>
    %c0_13 = arith.constant 0 : index
    %c1 = arith.constant 1 : index
    %9 = memref.load %arg18[%c0_13, %c1] : memref<2x6xf32, #tpu.memory_space<smem>>
    %cst = arith.constant dense<0.000000e+00> : vector<16xf32>
    %10 = vector.multi_reduction <add>, %1, %cst [1] : vector<16x32xf32> to vector<16xf32>
    %11 = vector.shape_cast %10 : vector<16xf32> to vector<16x1xf32>
    %cst_14 = arith.constant 3.200000e+01 : f32
    %12 = vector.broadcast %cst_14 : f32 to vector<16x1xf32>
    %13 = arith.divf %11, %12 : vector<16x1xf32>
    %14 = vector.broadcast %13 : vector<16x1xf32> to vector<16x32xf32>
    %15 = arith.subf %1, %14 : vector<16x32xf32>
    %16 = arith.mulf %15, %15 : vector<16x32xf32>
    %cst_15 = arith.constant dense<0.000000e+00> : vector<16xf32>
    %17 = vector.multi_reduction <add>, %16, %cst_15 [1] : vector<16x32xf32> to vector<16xf32>
    %18 = vector.shape_cast %17 : vector<16xf32> to vector<16x1xf32>
    %cst_16 = arith.constant 0.0322580636 : f32
    %19 = vector.broadcast %cst_16 : f32 to vector<16x1xf32>
    %20 = arith.mulf %18, %19 : vector<16x1xf32>
    %21 = math.sqrt %20 : vector<16x1xf32>
    %22 = vector.broadcast %8 : f32 to vector<16x32xf32>
    %23 = arith.mulf %22, %15 : vector<16x32xf32>
    %cst_17 = arith.constant 9.99999997E-7 : f32
    %24 = vector.broadcast %cst_17 : f32 to vector<16x1xf32>
    %25 = arith.addf %21, %24 : vector<16x1xf32>
    %26 = tpu.reciprocal %25 {approx = true} : vector<16x1xf32> -> vector<16x1xf32>
    %27 = vector.broadcast %26 : vector<16x1xf32> to vector<16x32xf32>
    %28 = arith.mulf %23, %27 : vector<16x32xf32>
    %29 = vector.broadcast %9 : f32 to vector<16x32xf32>
    %30 = arith.addf %28, %29 : vector<16x32xf32>
    %c0_18 = arith.constant 0 : index
    %c0_19 = arith.constant 0 : index
    %c0_20 = arith.constant 0 : index
    %31 = vector.load %arg4[%c0_18, %c0_19, %c0_20] : memref<2x32x96xf32, #tpu.memory_space<vmem>>, vector<1x32x96xf32>
    %32 = vector.shape_cast %31 : vector<1x32x96xf32> to vector<32x96xf32>
    %cst_21 = arith.constant dense<0.000000e+00> : vector<16x96xf32>
    %33 = tpu.matmul %30, %32, %cst_21 {dimension_numbers = #tpu.dot_dimension_numbers<[1], [0], [0], [1], [0, 0, 1, 1], [], []>} : vector<16x32xf32>, vector<32x96xf32>, vector<16x96xf32> -> vector<16x96xf32>
    %c0_22 = arith.constant 0 : index
    %c0_23 = arith.constant 0 : index
    %c0_24 = arith.constant 0 : index
    %34 = vector.load %arg5[%c0_22, %c0_23, %c0_24] : memref<2x1x96xf32, #tpu.memory_space<vmem>>, vector<1x1x96xf32>
    %35 = vector.shape_cast %34 : vector<1x1x96xf32> to vector<1x96xf32>
    %36 = vector.broadcast %35 : vector<1x96xf32> to vector<16x96xf32>
    %37 = arith.addf %33, %36 : vector<16x96xf32>
    %c0_25 = arith.constant 0 : index
    %c0_26 = arith.constant 0 : index
    %c0_27 = arith.constant 0 : index
    %38 = vector.load %arg6[%c0_25, %c0_26, %c0_27] : memref<2x32x32xf32, #tpu.memory_space<vmem>>, vector<1x32x32xf32>
    %39 = vector.shape_cast %38 : vector<1x32x32xf32> to vector<32x32xf32>
    %c0_28 = arith.constant 0 : index
    %c0_29 = arith.constant 0 : index
    %c0_30 = arith.constant 0 : index
    %40 = vector.load %arg7[%c0_28, %c0_29, %c0_30] : memref<2x1x32xf32, #tpu.memory_space<vmem>>, vector<1x1x32xf32>
    %41 = vector.shape_cast %40 : vector<1x1x32xf32> to vector<1x32xf32>
    %42 = vector.extract_strided_slice %37 {offsets = [0, 0], sizes = [16, 8], strides = [1, 1]} : vector<16x96xf32> to vector<16x8xf32>
    %43 = vector.shape_cast %42 : vector<16x8xf32> to vector<2x8x8xf32>
    %44 = vector.extract_strided_slice %37 {offsets = [0, 8], sizes = [16, 8], strides = [1, 1]} : vector<16x96xf32> to vector<16x8xf32>
    %45 = vector.shape_cast %44 : vector<16x8xf32> to vector<2x8x8xf32>
    %46 = vector.extract_strided_slice %37 {offsets = [0, 16], sizes = [16, 8], strides = [1, 1]} : vector<16x96xf32> to vector<16x8xf32>
    %47 = vector.shape_cast %46 : vector<16x8xf32> to vector<2x8x8xf32>
    %48 = vector.extract_strided_slice %37 {offsets = [0, 24], sizes = [16, 8], strides = [1, 1]} : vector<16x96xf32> to vector<16x8xf32>
    %49 = vector.shape_cast %48 : vector<16x8xf32> to vector<2x8x8xf32>
    %50 = tpu.concatenate %43, %45, %47, %49 in 0 : vector<2x8x8xf32>, vector<2x8x8xf32>, vector<2x8x8xf32>, vector<2x8x8xf32> -> vector<8x8x8xf32>
    %51 = vector.extract_strided_slice %37 {offsets = [0, 32], sizes = [16, 8], strides = [1, 1]} : vector<16x96xf32> to vector<16x8xf32>
    %52 = vector.shape_cast %51 : vector<16x8xf32> to vector<2x8x8xf32>
    %53 = vector.extract_strided_slice %37 {offsets = [0, 40], sizes = [16, 8], strides = [1, 1]} : vector<16x96xf32> to vector<16x8xf32>
    %54 = vector.shape_cast %53 : vector<16x8xf32> to vector<2x8x8xf32>
    %55 = vector.extract_strided_slice %37 {offsets = [0, 48], sizes = [16, 8], strides = [1, 1]} : vector<16x96xf32> to vector<16x8xf32>
    %56 = vector.shape_cast %55 : vector<16x8xf32> to vector<2x8x8xf32>
    %57 = vector.extract_strided_slice %37 {offsets = [0, 56], sizes = [16, 8], strides = [1, 1]} : vector<16x96xf32> to vector<16x8xf32>
    %58 = vector.shape_cast %57 : vector<16x8xf32> to vector<2x8x8xf32>
    %59 = tpu.concatenate %52, %54, %56, %58 in 0 : vector<2x8x8xf32>, vector<2x8x8xf32>, vector<2x8x8xf32>, vector<2x8x8xf32> -> vector<8x8x8xf32>
    %60 = vector.extract_strided_slice %37 {offsets = [0, 64], sizes = [16, 8], strides = [1, 1]} : vector<16x96xf32> to vector<16x8xf32>
    %61 = vector.shape_cast %60 : vector<16x8xf32> to vector<2x8x8xf32>
    %62 = vector.extract_strided_slice %37 {offsets = [0, 72], sizes = [16, 8], strides = [1, 1]} : vector<16x96xf32> to vector<16x8xf32>
    %63 = vector.shape_cast %62 : vector<16x8xf32> to vector<2x8x8xf32>
    %64 = vector.extract_strided_slice %37 {offsets = [0, 80], sizes = [16, 8], strides = [1, 1]} : vector<16x96xf32> to vector<16x8xf32>
    %65 = vector.shape_cast %64 : vector<16x8xf32> to vector<2x8x8xf32>
    %66 = vector.extract_strided_slice %37 {offsets = [0, 88], sizes = [16, 8], strides = [1, 1]} : vector<16x96xf32> to vector<16x8xf32>
    %67 = vector.shape_cast %66 : vector<16x8xf32> to vector<2x8x8xf32>
    %68 = tpu.concatenate %61, %63, %65, %67 in 0 : vector<2x8x8xf32>, vector<2x8x8xf32>, vector<2x8x8xf32>, vector<2x8x8xf32> -> vector<8x8x8xf32>
    "tpu.trace_start"() <{level = 10 : i32, message = "gqd,gkd->gqk"}> : () -> ()
    %cst_31 = arith.constant dense<0.000000e+00> : vector<8x8x8xf32>
    %69 = tpu.matmul %50, %59, %cst_31 {dimension_numbers = #tpu.dot_dimension_numbers<[2], [2], [1], [1], [0, 0, 0, 1, 1, 1], [0], [0]>} : vector<8x8x8xf32>, vector<8x8x8xf32>, vector<8x8x8xf32> -> vector<8x8x8xf32>
    "tpu.trace_stop"() : () -> ()
    %70 = arith.addf %69, %7 : vector<8x8x8xf32>
    %cst_32 = arith.constant dense<0xFF800000> : vector<8x8xf32>
    %71 = vector.multi_reduction <maximumf>, %70, %cst_32 [2] : vector<8x8x8xf32> to vector<8x8xf32>
    %72 = vector.shape_cast %71 : vector<8x8xf32> to vector<8x8x1xf32>
    %73 = vector.broadcast %72 : vector<8x8x1xf32> to vector<8x8x8xf32>
    %74 = arith.subf %70, %73 : vector<8x8x8xf32>
    %75 = math.exp %74 : vector<8x8x8xf32>
    %cst_33 = arith.constant dense<0.000000e+00> : vector<8x8xf32>
    %76 = vector.multi_reduction <add>, %75, %cst_33 [2] : vector<8x8x8xf32> to vector<8x8xf32>
    %77 = vector.shape_cast %76 : vector<8x8xf32> to vector<8x8x1xf32>
    %78 = tpu.reciprocal %77 {approx = true} : vector<8x8x1xf32> -> vector<8x8x1xf32>
    %79 = vector.broadcast %78 : vector<8x8x1xf32> to vector<8x8x8xf32>
    %80 = arith.mulf %75, %79 : vector<8x8x8xf32>
    "tpu.trace_start"() <{level = 10 : i32, message = "gqk,gkd->gqd"}> : () -> ()
    %cst_34 = arith.constant dense<0.000000e+00> : vector<8x8x8xf32>
    %81 = tpu.matmul %80, %68, %cst_34 {dimension_numbers = #tpu.dot_dimension_numbers<[2], [1], [1], [2], [0, 0, 0, 1, 1, 2], [0], [0]>} : vector<8x8x8xf32>, vector<8x8x8xf32>, vector<8x8x8xf32> -> vector<8x8x8xf32>
    "tpu.trace_stop"() : () -> ()
    %82 = vector.extract_strided_slice %81 {offsets = [0, 0, 0], sizes = [2, 8, 8], strides = [1, 1, 1]} : vector<8x8x8xf32> to vector<2x8x8xf32>
    %83 = vector.shape_cast %82 : vector<2x8x8xf32> to vector<16x8xf32>
    %84 = vector.extract_strided_slice %81 {offsets = [2, 0, 0], sizes = [2, 8, 8], strides = [1, 1, 1]} : vector<8x8x8xf32> to vector<2x8x8xf32>
    %85 = vector.shape_cast %84 : vector<2x8x8xf32> to vector<16x8xf32>
    %86 = vector.extract_strided_slice %81 {offsets = [4, 0, 0], sizes = [2, 8, 8], strides = [1, 1, 1]} : vector<8x8x8xf32> to vector<2x8x8xf32>
    %87 = vector.shape_cast %86 : vector<2x8x8xf32> to vector<16x8xf32>
    %88 = vector.extract_strided_slice %81 {offsets = [6, 0, 0], sizes = [2, 8, 8], strides = [1, 1, 1]} : vector<8x8x8xf32> to vector<2x8x8xf32>
    %89 = vector.shape_cast %88 : vector<2x8x8xf32> to vector<16x8xf32>
    %90 = tpu.concatenate %83, %85, %87, %89 in 1 : vector<16x8xf32>, vector<16x8xf32>, vector<16x8xf32>, vector<16x8xf32> -> vector<16x32xf32>
    %cst_35 = arith.constant dense<0.000000e+00> : vector<16x32xf32>
    %91 = tpu.matmul %90, %39, %cst_35 {dimension_numbers = #tpu.dot_dimension_numbers<[1], [0], [0], [1], [0, 0, 1, 1], [], []>} : vector<16x32xf32>, vector<32x32xf32>, vector<16x32xf32> -> vector<16x32xf32>
    %92 = vector.broadcast %41 : vector<1x32xf32> to vector<16x32xf32>
    %93 = arith.addf %91, %92 : vector<16x32xf32>
    %94 = arith.addf %1, %93 : vector<16x32xf32>
    %c0_36 = arith.constant 0 : index
    %c2 = arith.constant 2 : index
    %95 = memref.load %arg18[%c0_36, %c2] : memref<2x6xf32, #tpu.memory_space<smem>>
    %c0_37 = arith.constant 0 : index
    %c3 = arith.constant 3 : index
    %96 = memref.load %arg18[%c0_37, %c3] : memref<2x6xf32, #tpu.memory_space<smem>>
    %cst_38 = arith.constant dense<0.000000e+00> : vector<16xf32>
    %97 = vector.multi_reduction <add>, %94, %cst_38 [1] : vector<16x32xf32> to vector<16xf32>
    %98 = vector.shape_cast %97 : vector<16xf32> to vector<16x1xf32>
    %cst_39 = arith.constant 3.200000e+01 : f32
    %99 = vector.broadcast %cst_39 : f32 to vector<16x1xf32>
    %100 = arith.divf %98, %99 : vector<16x1xf32>
    %101 = vector.broadcast %100 : vector<16x1xf32> to vector<16x32xf32>
    %102 = arith.subf %94, %101 : vector<16x32xf32>
    %103 = arith.mulf %102, %102 : vector<16x32xf32>
    %cst_40 = arith.constant dense<0.000000e+00> : vector<16xf32>
    %104 = vector.multi_reduction <add>, %103, %cst_40 [1] : vector<16x32xf32> to vector<16xf32>
    %105 = vector.shape_cast %104 : vector<16xf32> to vector<16x1xf32>
    %cst_41 = arith.constant 0.0322580636 : f32
    %106 = vector.broadcast %cst_41 : f32 to vector<16x1xf32>
    %107 = arith.mulf %105, %106 : vector<16x1xf32>
    %108 = math.sqrt %107 : vector<16x1xf32>
    %109 = vector.broadcast %95 : f32 to vector<16x32xf32>
    %110 = arith.mulf %109, %102 : vector<16x32xf32>
    %cst_42 = arith.constant 9.99999997E-7 : f32
    %111 = vector.broadcast %cst_42 : f32 to vector<16x1xf32>
    %112 = arith.addf %108, %111 : vector<16x1xf32>
    %113 = tpu.reciprocal %112 {approx = true} : vector<16x1xf32> -> vector<16x1xf32>
    %114 = vector.broadcast %113 : vector<16x1xf32> to vector<16x32xf32>
    %115 = arith.mulf %110, %114 : vector<16x32xf32>
    %116 = vector.broadcast %96 : f32 to vector<16x32xf32>
    %117 = arith.addf %115, %116 : vector<16x32xf32>
    %c0_43 = arith.constant 0 : index
    %c0_44 = arith.constant 0 : index
    %c0_45 = arith.constant 0 : index
    %118 = vector.load %arg8[%c0_43, %c0_44, %c0_45] : memref<2x32x32xf32, #tpu.memory_space<vmem>>, vector<1x32x32xf32>
    %119 = vector.shape_cast %118 : vector<1x32x32xf32> to vector<32x32xf32>
    %cst_46 = arith.constant dense<0.000000e+00> : vector<16x32xf32>
    %120 = tpu.matmul %117, %119, %cst_46 {dimension_numbers = #tpu.dot_dimension_numbers<[1], [0], [0], [1], [0, 0, 1, 1], [], []>} : vector<16x32xf32>, vector<32x32xf32>, vector<16x32xf32> -> vector<16x32xf32>
    %c0_47 = arith.constant 0 : index
    %c0_48 = arith.constant 0 : index
    %c0_49 = arith.constant 0 : index
    %121 = vector.load %arg9[%c0_47, %c0_48, %c0_49] : memref<2x1x32xf32, #tpu.memory_space<vmem>>, vector<1x1x32xf32>
    %122 = vector.shape_cast %121 : vector<1x1x32xf32> to vector<1x32xf32>
    %123 = vector.broadcast %122 : vector<1x32xf32> to vector<16x32xf32>
    %124 = arith.addf %120, %123 : vector<16x32xf32>
    %c0_50 = arith.constant 0 : index
    %c0_51 = arith.constant 0 : index
    %c0_52 = arith.constant 0 : index
    %125 = vector.load %arg10[%c0_50, %c0_51, %c0_52] : memref<2x32x64xf32, #tpu.memory_space<vmem>>, vector<1x32x64xf32>
    %126 = vector.shape_cast %125 : vector<1x32x64xf32> to vector<32x64xf32>
    %cst_53 = arith.constant dense<0.000000e+00> : vector<16x64xf32>
    %127 = tpu.matmul %3, %126, %cst_53 {dimension_numbers = #tpu.dot_dimension_numbers<[1], [0], [0], [1], [0, 0, 1, 1], [], []>} : vector<16x32xf32>, vector<32x64xf32>, vector<16x64xf32> -> vector<16x64xf32>
    %c0_54 = arith.constant 0 : index
    %c0_55 = arith.constant 0 : index
    %c0_56 = arith.constant 0 : index
    %128 = vector.load %arg11[%c0_54, %c0_55, %c0_56] : memref<2x1x64xf32, #tpu.memory_space<vmem>>, vector<1x1x64xf32>
    %129 = vector.shape_cast %128 : vector<1x1x64xf32> to vector<1x64xf32>
    %130 = vector.broadcast %129 : vector<1x64xf32> to vector<16x64xf32>
    %131 = arith.addf %127, %130 : vector<16x64xf32>
    %c0_57 = arith.constant 0 : index
    %c0_58 = arith.constant 0 : index
    %c0_59 = arith.constant 0 : index
    %132 = vector.load %arg12[%c0_57, %c0_58, %c0_59] : memref<2x32x32xf32, #tpu.memory_space<vmem>>, vector<1x32x32xf32>
    %133 = vector.shape_cast %132 : vector<1x32x32xf32> to vector<32x32xf32>
    %c0_60 = arith.constant 0 : index
    %c0_61 = arith.constant 0 : index
    %c0_62 = arith.constant 0 : index
    %134 = vector.load %arg13[%c0_60, %c0_61, %c0_62] : memref<2x1x32xf32, #tpu.memory_space<vmem>>, vector<1x1x32xf32>
    %135 = vector.shape_cast %134 : vector<1x1x32xf32> to vector<1x32xf32>
    %136 = vector.extract_strided_slice %124 {offsets = [0, 0], sizes = [16, 8], strides = [1, 1]} : vector<16x32xf32> to vector<16x8xf32>
    %137 = vector.shape_cast %136 : vector<16x8xf32> to vector<2x8x8xf32>
    %138 = vector.extract_strided_slice %124 {offsets = [0, 8], sizes = [16, 8], strides = [1, 1]} : vector<16x32xf32> to vector<16x8xf32>
    %139 = vector.shape_cast %138 : vector<16x8xf32> to vector<2x8x8xf32>
    %140 = vector.extract_strided_slice %124 {offsets = [0, 16], sizes = [16, 8], strides = [1, 1]} : vector<16x32xf32> to vector<16x8xf32>
    %141 = vector.shape_cast %140 : vector<16x8xf32> to vector<2x8x8xf32>
    %142 = vector.extract_strided_slice %124 {offsets = [0, 24], sizes = [16, 8], strides = [1, 1]} : vector<16x32xf32> to vector<16x8xf32>
    %143 = vector.shape_cast %142 : vector<16x8xf32> to vector<2x8x8xf32>
    %144 = tpu.concatenate %137, %139, %141, %143 in 0 : vector<2x8x8xf32>, vector<2x8x8xf32>, vector<2x8x8xf32>, vector<2x8x8xf32> -> vector<8x8x8xf32>
    %145 = vector.extract_strided_slice %131 {offsets = [0, 0], sizes = [16, 8], strides = [1, 1]} : vector<16x64xf32> to vector<16x8xf32>
    %146 = vector.shape_cast %145 : vector<16x8xf32> to vector<2x8x8xf32>
    %147 = vector.extract_strided_slice %131 {offsets = [0, 8], sizes = [16, 8], strides = [1, 1]} : vector<16x64xf32> to vector<16x8xf32>
    %148 = vector.shape_cast %147 : vector<16x8xf32> to vector<2x8x8xf32>
    %149 = vector.extract_strided_slice %131 {offsets = [0, 16], sizes = [16, 8], strides = [1, 1]} : vector<16x64xf32> to vector<16x8xf32>
    %150 = vector.shape_cast %149 : vector<16x8xf32> to vector<2x8x8xf32>
    %151 = vector.extract_strided_slice %131 {offsets = [0, 24], sizes = [16, 8], strides = [1, 1]} : vector<16x64xf32> to vector<16x8xf32>
    %152 = vector.shape_cast %151 : vector<16x8xf32> to vector<2x8x8xf32>
    %153 = tpu.concatenate %146, %148, %150, %152 in 0 : vector<2x8x8xf32>, vector<2x8x8xf32>, vector<2x8x8xf32>, vector<2x8x8xf32> -> vector<8x8x8xf32>
    %154 = vector.extract_strided_slice %131 {offsets = [0, 32], sizes = [16, 8], strides = [1, 1]} : vector<16x64xf32> to vector<16x8xf32>
    %155 = vector.shape_cast %154 : vector<16x8xf32> to vector<2x8x8xf32>
    %156 = vector.extract_strided_slice %131 {offsets = [0, 40], sizes = [16, 8], strides = [1, 1]} : vector<16x64xf32> to vector<16x8xf32>
    %157 = vector.shape_cast %156 : vector<16x8xf32> to vector<2x8x8xf32>
    %158 = vector.extract_strided_slice %131 {offsets = [0, 48], sizes = [16, 8], strides = [1, 1]} : vector<16x64xf32> to vector<16x8xf32>
    %159 = vector.shape_cast %158 : vector<16x8xf32> to vector<2x8x8xf32>
    %160 = vector.extract_strided_slice %131 {offsets = [0, 56], sizes = [16, 8], strides = [1, 1]} : vector<16x64xf32> to vector<16x8xf32>
    %161 = vector.shape_cast %160 : vector<16x8xf32> to vector<2x8x8xf32>
    %162 = tpu.concatenate %155, %157, %159, %161 in 0 : vector<2x8x8xf32>, vector<2x8x8xf32>, vector<2x8x8xf32>, vector<2x8x8xf32> -> vector<8x8x8xf32>
    "tpu.trace_start"() <{level = 10 : i32, message = "gqd,gkd->gqk"}> : () -> ()
    %cst_63 = arith.constant dense<0.000000e+00> : vector<8x8x8xf32>
    %163 = tpu.matmul %144, %153, %cst_63 {dimension_numbers = #tpu.dot_dimension_numbers<[2], [2], [1], [1], [0, 0, 0, 1, 1, 1], [0], [0]>} : vector<8x8x8xf32>, vector<8x8x8xf32>, vector<8x8x8xf32> -> vector<8x8x8xf32>
    "tpu.trace_stop"() : () -> ()
    %164 = arith.addf %163, %5 : vector<8x8x8xf32>
    %cst_64 = arith.constant dense<0xFF800000> : vector<8x8xf32>
    %165 = vector.multi_reduction <maximumf>, %164, %cst_64 [2] : vector<8x8x8xf32> to vector<8x8xf32>
    %166 = vector.shape_cast %165 : vector<8x8xf32> to vector<8x8x1xf32>
    %167 = vector.broadcast %166 : vector<8x8x1xf32> to vector<8x8x8xf32>
    %168 = arith.subf %164, %167 : vector<8x8x8xf32>
    %169 = math.exp %168 : vector<8x8x8xf32>
    %cst_65 = arith.constant dense<0.000000e+00> : vector<8x8xf32>
    %170 = vector.multi_reduction <add>, %169, %cst_65 [2] : vector<8x8x8xf32> to vector<8x8xf32>
    %171 = vector.shape_cast %170 : vector<8x8xf32> to vector<8x8x1xf32>
    %172 = tpu.reciprocal %171 {approx = true} : vector<8x8x1xf32> -> vector<8x8x1xf32>
    %173 = vector.broadcast %172 : vector<8x8x1xf32> to vector<8x8x8xf32>
    %174 = arith.mulf %169, %173 : vector<8x8x8xf32>
    "tpu.trace_start"() <{level = 10 : i32, message = "gqk,gkd->gqd"}> : () -> ()
    %cst_66 = arith.constant dense<0.000000e+00> : vector<8x8x8xf32>
    %175 = tpu.matmul %174, %162, %cst_66 {dimension_numbers = #tpu.dot_dimension_numbers<[2], [1], [1], [2], [0, 0, 0, 1, 1, 2], [0], [0]>} : vector<8x8x8xf32>, vector<8x8x8xf32>, vector<8x8x8xf32> -> vector<8x8x8xf32>
    "tpu.trace_stop"() : () -> ()
    %176 = vector.extract_strided_slice %175 {offsets = [0, 0, 0], sizes = [2, 8, 8], strides = [1, 1, 1]} : vector<8x8x8xf32> to vector<2x8x8xf32>
    %177 = vector.shape_cast %176 : vector<2x8x8xf32> to vector<16x8xf32>
    %178 = vector.extract_strided_slice %175 {offsets = [2, 0, 0], sizes = [2, 8, 8], strides = [1, 1, 1]} : vector<8x8x8xf32> to vector<2x8x8xf32>
    %179 = vector.shape_cast %178 : vector<2x8x8xf32> to vector<16x8xf32>
    %180 = vector.extract_strided_slice %175 {offsets = [4, 0, 0], sizes = [2, 8, 8], strides = [1, 1, 1]} : vector<8x8x8xf32> to vector<2x8x8xf32>
    %181 = vector.shape_cast %180 : vector<2x8x8xf32> to vector<16x8xf32>
    %182 = vector.extract_strided_slice %175 {offsets = [6, 0, 0], sizes = [2, 8, 8], strides = [1, 1, 1]} : vector<8x8x8xf32> to vector<2x8x8xf32>
    %183 = vector.shape_cast %182 : vector<2x8x8xf32> to vector<16x8xf32>
    %184 = tpu.concatenate %177, %179, %181, %183 in 1 : vector<16x8xf32>, vector<16x8xf32>, vector<16x8xf32>, vector<16x8xf32> -> vector<16x32xf32>
    %cst_67 = arith.constant dense<0.000000e+00> : vector<16x32xf32>
    %185 = tpu.matmul %184, %133, %cst_67 {dimension_numbers = #tpu.dot_dimension_numbers<[1], [0], [0], [1], [0, 0, 1, 1], [], []>} : vector<16x32xf32>, vector<32x32xf32>, vector<16x32xf32> -> vector<16x32xf32>
    %186 = vector.broadcast %135 : vector<1x32xf32> to vector<16x32xf32>
    %187 = arith.addf %185, %186 : vector<16x32xf32>
    %188 = arith.addf %94, %187 : vector<16x32xf32>
    %c0_68 = arith.constant 0 : index
    %c4 = arith.constant 4 : index
    %189 = memref.load %arg18[%c0_68, %c4] : memref<2x6xf32, #tpu.memory_space<smem>>
    %c0_69 = arith.constant 0 : index
    %c5 = arith.constant 5 : index
    %190 = memref.load %arg18[%c0_69, %c5] : memref<2x6xf32, #tpu.memory_space<smem>>
    %cst_70 = arith.constant dense<0.000000e+00> : vector<16xf32>
    %191 = vector.multi_reduction <add>, %188, %cst_70 [1] : vector<16x32xf32> to vector<16xf32>
    %192 = vector.shape_cast %191 : vector<16xf32> to vector<16x1xf32>
    %cst_71 = arith.constant 3.200000e+01 : f32
    %193 = vector.broadcast %cst_71 : f32 to vector<16x1xf32>
    %194 = arith.divf %192, %193 : vector<16x1xf32>
    %195 = vector.broadcast %194 : vector<16x1xf32> to vector<16x32xf32>
    %196 = arith.subf %188, %195 : vector<16x32xf32>
    %197 = arith.mulf %196, %196 : vector<16x32xf32>
    %cst_72 = arith.constant dense<0.000000e+00> : vector<16xf32>
    %198 = vector.multi_reduction <add>, %197, %cst_72 [1] : vector<16x32xf32> to vector<16xf32>
    %199 = vector.shape_cast %198 : vector<16xf32> to vector<16x1xf32>
    %cst_73 = arith.constant 0.0322580636 : f32
    %200 = vector.broadcast %cst_73 : f32 to vector<16x1xf32>
    %201 = arith.mulf %199, %200 : vector<16x1xf32>
    %202 = math.sqrt %201 : vector<16x1xf32>
    %203 = vector.broadcast %189 : f32 to vector<16x32xf32>
    %204 = arith.mulf %203, %196 : vector<16x32xf32>
    %cst_74 = arith.constant 9.99999997E-7 : f32
    %205 = vector.broadcast %cst_74 : f32 to vector<16x1xf32>
    %206 = arith.addf %202, %205 : vector<16x1xf32>
    %207 = tpu.reciprocal %206 {approx = true} : vector<16x1xf32> -> vector<16x1xf32>
    %208 = vector.broadcast %207 : vector<16x1xf32> to vector<16x32xf32>
    %209 = arith.mulf %204, %208 : vector<16x32xf32>
    %210 = vector.broadcast %190 : f32 to vector<16x32xf32>
    %211 = arith.addf %209, %210 : vector<16x32xf32>
    %c0_75 = arith.constant 0 : index
    %c0_76 = arith.constant 0 : index
    %c0_77 = arith.constant 0 : index
    %212 = vector.load %arg14[%c0_75, %c0_76, %c0_77] : memref<2x32x64xf32, #tpu.memory_space<vmem>>, vector<1x32x64xf32>
    %213 = vector.shape_cast %212 : vector<1x32x64xf32> to vector<32x64xf32>
    %cst_78 = arith.constant dense<0.000000e+00> : vector<16x64xf32>
    %214 = tpu.matmul %211, %213, %cst_78 {dimension_numbers = #tpu.dot_dimension_numbers<[1], [0], [0], [1], [0, 0, 1, 1], [], []>} : vector<16x32xf32>, vector<32x64xf32>, vector<16x64xf32> -> vector<16x64xf32>
    %c0_79 = arith.constant 0 : index
    %c0_80 = arith.constant 0 : index
    %c0_81 = arith.constant 0 : index
    %215 = vector.load %arg15[%c0_79, %c0_80, %c0_81] : memref<2x1x64xf32, #tpu.memory_space<vmem>>, vector<1x1x64xf32>
    %216 = vector.shape_cast %215 : vector<1x1x64xf32> to vector<1x64xf32>
    %217 = vector.broadcast %216 : vector<1x64xf32> to vector<16x64xf32>
    %218 = arith.addf %214, %217 : vector<16x64xf32>
    %cst_82 = arith.constant 0.000000e+00 : f32
    %219 = vector.broadcast %cst_82 : f32 to vector<16x64xf32>
    %220 = arith.maximumf %218, %219 : vector<16x64xf32>
    %c0_83 = arith.constant 0 : index
    %c0_84 = arith.constant 0 : index
    %c0_85 = arith.constant 0 : index
    %221 = vector.load %arg16[%c0_83, %c0_84, %c0_85] : memref<2x64x32xf32, #tpu.memory_space<vmem>>, vector<1x64x32xf32>
    %222 = vector.shape_cast %221 : vector<1x64x32xf32> to vector<64x32xf32>
    %cst_86 = arith.constant dense<0.000000e+00> : vector<16x32xf32>
    %223 = tpu.matmul %220, %222, %cst_86 {dimension_numbers = #tpu.dot_dimension_numbers<[1], [0], [0], [1], [0, 0, 1, 1], [], []>} : vector<16x64xf32>, vector<64x32xf32>, vector<16x32xf32> -> vector<16x32xf32>
    %224 = arith.addf %188, %223 : vector<16x32xf32>
    %c0_87 = arith.constant 0 : index
    %c0_88 = arith.constant 0 : index
    %c0_89 = arith.constant 0 : index
    %225 = vector.load %arg17[%c0_87, %c0_88, %c0_89] : memref<2x1x32xf32, #tpu.memory_space<vmem>>, vector<1x1x32xf32>
    %226 = vector.shape_cast %225 : vector<1x1x32xf32> to vector<1x32xf32>
    %227 = vector.broadcast %226 : vector<1x32xf32> to vector<16x32xf32>
    %228 = arith.addf %224, %227 : vector<16x32xf32>
    %c1_90 = arith.constant 1 : index
    %c0_91 = arith.constant 0 : index
    %229 = memref.load %arg18[%c1_90, %c0_91] : memref<2x6xf32, #tpu.memory_space<smem>>
    %c1_92 = arith.constant 1 : index
    %c1_93 = arith.constant 1 : index
    %230 = memref.load %arg18[%c1_92, %c1_93] : memref<2x6xf32, #tpu.memory_space<smem>>
    %cst_94 = arith.constant dense<0.000000e+00> : vector<16xf32>
    %231 = vector.multi_reduction <add>, %228, %cst_94 [1] : vector<16x32xf32> to vector<16xf32>
    %232 = vector.shape_cast %231 : vector<16xf32> to vector<16x1xf32>
    %cst_95 = arith.constant 3.200000e+01 : f32
    %233 = vector.broadcast %cst_95 : f32 to vector<16x1xf32>
    %234 = arith.divf %232, %233 : vector<16x1xf32>
    %235 = vector.broadcast %234 : vector<16x1xf32> to vector<16x32xf32>
    %236 = arith.subf %228, %235 : vector<16x32xf32>
    %237 = arith.mulf %236, %236 : vector<16x32xf32>
    %cst_96 = arith.constant dense<0.000000e+00> : vector<16xf32>
    %238 = vector.multi_reduction <add>, %237, %cst_96 [1] : vector<16x32xf32> to vector<16xf32>
    %239 = vector.shape_cast %238 : vector<16xf32> to vector<16x1xf32>
    %cst_97 = arith.constant 0.0322580636 : f32
    %240 = vector.broadcast %cst_97 : f32 to vector<16x1xf32>
    %241 = arith.mulf %239, %240 : vector<16x1xf32>
    %242 = math.sqrt %241 : vector<16x1xf32>
    %243 = vector.broadcast %229 : f32 to vector<16x32xf32>
    %244 = arith.mulf %243, %236 : vector<16x32xf32>
    %cst_98 = arith.constant 9.99999997E-7 : f32
    %245 = vector.broadcast %cst_98 : f32 to vector<16x1xf32>
    %246 = arith.addf %242, %245 : vector<16x1xf32>
    %247 = tpu.reciprocal %246 {approx = true} : vector<16x1xf32> -> vector<16x1xf32>
    %248 = vector.broadcast %247 : vector<16x1xf32> to vector<16x32xf32>
    %249 = arith.mulf %244, %248 : vector<16x32xf32>
    %250 = vector.broadcast %230 : f32 to vector<16x32xf32>
    %251 = arith.addf %249, %250 : vector<16x32xf32>
    %c1_99 = arith.constant 1 : index
    %c0_100 = arith.constant 0 : index
    %c0_101 = arith.constant 0 : index
    %252 = vector.load %arg4[%c1_99, %c0_100, %c0_101] : memref<2x32x96xf32, #tpu.memory_space<vmem>>, vector<1x32x96xf32>
    %253 = vector.shape_cast %252 : vector<1x32x96xf32> to vector<32x96xf32>
    %cst_102 = arith.constant dense<0.000000e+00> : vector<16x96xf32>
    %254 = tpu.matmul %251, %253, %cst_102 {dimension_numbers = #tpu.dot_dimension_numbers<[1], [0], [0], [1], [0, 0, 1, 1], [], []>} : vector<16x32xf32>, vector<32x96xf32>, vector<16x96xf32> -> vector<16x96xf32>
    %c1_103 = arith.constant 1 : index
    %c0_104 = arith.constant 0 : index
    %c0_105 = arith.constant 0 : index
    %255 = vector.load %arg5[%c1_103, %c0_104, %c0_105] : memref<2x1x96xf32, #tpu.memory_space<vmem>>, vector<1x1x96xf32>
    %256 = vector.shape_cast %255 : vector<1x1x96xf32> to vector<1x96xf32>
    %257 = vector.broadcast %256 : vector<1x96xf32> to vector<16x96xf32>
    %258 = arith.addf %254, %257 : vector<16x96xf32>
    %c1_106 = arith.constant 1 : index
    %c0_107 = arith.constant 0 : index
    %c0_108 = arith.constant 0 : index
    %259 = vector.load %arg6[%c1_106, %c0_107, %c0_108] : memref<2x32x32xf32, #tpu.memory_space<vmem>>, vector<1x32x32xf32>
    %260 = vector.shape_cast %259 : vector<1x32x32xf32> to vector<32x32xf32>
    %c1_109 = arith.constant 1 : index
    %c0_110 = arith.constant 0 : index
    %c0_111 = arith.constant 0 : index
    %261 = vector.load %arg7[%c1_109, %c0_110, %c0_111] : memref<2x1x32xf32, #tpu.memory_space<vmem>>, vector<1x1x32xf32>
    %262 = vector.shape_cast %261 : vector<1x1x32xf32> to vector<1x32xf32>
    %263 = vector.extract_strided_slice %258 {offsets = [0, 0], sizes = [16, 8], strides = [1, 1]} : vector<16x96xf32> to vector<16x8xf32>
    %264 = vector.shape_cast %263 : vector<16x8xf32> to vector<2x8x8xf32>
    %265 = vector.extract_strided_slice %258 {offsets = [0, 8], sizes = [16, 8], strides = [1, 1]} : vector<16x96xf32> to vector<16x8xf32>
    %266 = vector.shape_cast %265 : vector<16x8xf32> to vector<2x8x8xf32>
    %267 = vector.extract_strided_slice %258 {offsets = [0, 16], sizes = [16, 8], strides = [1, 1]} : vector<16x96xf32> to vector<16x8xf32>
    %268 = vector.shape_cast %267 : vector<16x8xf32> to vector<2x8x8xf32>
    %269 = vector.extract_strided_slice %258 {offsets = [0, 24], sizes = [16, 8], strides = [1, 1]} : vector<16x96xf32> to vector<16x8xf32>
    %270 = vector.shape_cast %269 : vector<16x8xf32> to vector<2x8x8xf32>
    %271 = tpu.concatenate %264, %266, %268, %270 in 0 : vector<2x8x8xf32>, vector<2x8x8xf32>, vector<2x8x8xf32>, vector<2x8x8xf32> -> vector<8x8x8xf32>
    %272 = vector.extract_strided_slice %258 {offsets = [0, 32], sizes = [16, 8], strides = [1, 1]} : vector<16x96xf32> to vector<16x8xf32>
    %273 = vector.shape_cast %272 : vector<16x8xf32> to vector<2x8x8xf32>
    %274 = vector.extract_strided_slice %258 {offsets = [0, 40], sizes = [16, 8], strides = [1, 1]} : vector<16x96xf32> to vector<16x8xf32>
    %275 = vector.shape_cast %274 : vector<16x8xf32> to vector<2x8x8xf32>
    %276 = vector.extract_strided_slice %258 {offsets = [0, 48], sizes = [16, 8], strides = [1, 1]} : vector<16x96xf32> to vector<16x8xf32>
    %277 = vector.shape_cast %276 : vector<16x8xf32> to vector<2x8x8xf32>
    %278 = vector.extract_strided_slice %258 {offsets = [0, 56], sizes = [16, 8], strides = [1, 1]} : vector<16x96xf32> to vector<16x8xf32>
    %279 = vector.shape_cast %278 : vector<16x8xf32> to vector<2x8x8xf32>
    %280 = tpu.concatenate %273, %275, %277, %279 in 0 : vector<2x8x8xf32>, vector<2x8x8xf32>, vector<2x8x8xf32>, vector<2x8x8xf32> -> vector<8x8x8xf32>
    %281 = vector.extract_strided_slice %258 {offsets = [0, 64], sizes = [16, 8], strides = [1, 1]} : vector<16x96xf32> to vector<16x8xf32>
    %282 = vector.shape_cast %281 : vector<16x8xf32> to vector<2x8x8xf32>
    %283 = vector.extract_strided_slice %258 {offsets = [0, 72], sizes = [16, 8], strides = [1, 1]} : vector<16x96xf32> to vector<16x8xf32>
    %284 = vector.shape_cast %283 : vector<16x8xf32> to vector<2x8x8xf32>
    %285 = vector.extract_strided_slice %258 {offsets = [0, 80], sizes = [16, 8], strides = [1, 1]} : vector<16x96xf32> to vector<16x8xf32>
    %286 = vector.shape_cast %285 : vector<16x8xf32> to vector<2x8x8xf32>
    %287 = vector.extract_strided_slice %258 {offsets = [0, 88], sizes = [16, 8], strides = [1, 1]} : vector<16x96xf32> to vector<16x8xf32>
    %288 = vector.shape_cast %287 : vector<16x8xf32> to vector<2x8x8xf32>
    %289 = tpu.concatenate %282, %284, %286, %288 in 0 : vector<2x8x8xf32>, vector<2x8x8xf32>, vector<2x8x8xf32>, vector<2x8x8xf32> -> vector<8x8x8xf32>
    "tpu.trace_start"() <{level = 10 : i32, message = "gqd,gkd->gqk"}> : () -> ()
    %cst_112 = arith.constant dense<0.000000e+00> : vector<8x8x8xf32>
    %290 = tpu.matmul %271, %280, %cst_112 {dimension_numbers = #tpu.dot_dimension_numbers<[2], [2], [1], [1], [0, 0, 0, 1, 1, 1], [0], [0]>} : vector<8x8x8xf32>, vector<8x8x8xf32>, vector<8x8x8xf32> -> vector<8x8x8xf32>
    "tpu.trace_stop"() : () -> ()
    %291 = arith.addf %290, %7 : vector<8x8x8xf32>
    %cst_113 = arith.constant dense<0xFF800000> : vector<8x8xf32>
    %292 = vector.multi_reduction <maximumf>, %291, %cst_113 [2] : vector<8x8x8xf32> to vector<8x8xf32>
    %293 = vector.shape_cast %292 : vector<8x8xf32> to vector<8x8x1xf32>
    %294 = vector.broadcast %293 : vector<8x8x1xf32> to vector<8x8x8xf32>
    %295 = arith.subf %291, %294 : vector<8x8x8xf32>
    %296 = math.exp %295 : vector<8x8x8xf32>
    %cst_114 = arith.constant dense<0.000000e+00> : vector<8x8xf32>
    %297 = vector.multi_reduction <add>, %296, %cst_114 [2] : vector<8x8x8xf32> to vector<8x8xf32>
    %298 = vector.shape_cast %297 : vector<8x8xf32> to vector<8x8x1xf32>
    %299 = tpu.reciprocal %298 {approx = true} : vector<8x8x1xf32> -> vector<8x8x1xf32>
    %300 = vector.broadcast %299 : vector<8x8x1xf32> to vector<8x8x8xf32>
    %301 = arith.mulf %296, %300 : vector<8x8x8xf32>
    "tpu.trace_start"() <{level = 10 : i32, message = "gqk,gkd->gqd"}> : () -> ()
    %cst_115 = arith.constant dense<0.000000e+00> : vector<8x8x8xf32>
    %302 = tpu.matmul %301, %289, %cst_115 {dimension_numbers = #tpu.dot_dimension_numbers<[2], [1], [1], [2], [0, 0, 0, 1, 1, 2], [0], [0]>} : vector<8x8x8xf32>, vector<8x8x8xf32>, vector<8x8x8xf32> -> vector<8x8x8xf32>
    "tpu.trace_stop"() : () -> ()
    %303 = vector.extract_strided_slice %302 {offsets = [0, 0, 0], sizes = [2, 8, 8], strides = [1, 1, 1]} : vector<8x8x8xf32> to vector<2x8x8xf32>
    %304 = vector.shape_cast %303 : vector<2x8x8xf32> to vector<16x8xf32>
    %305 = vector.extract_strided_slice %302 {offsets = [2, 0, 0], sizes = [2, 8, 8], strides = [1, 1, 1]} : vector<8x8x8xf32> to vector<2x8x8xf32>
    %306 = vector.shape_cast %305 : vector<2x8x8xf32> to vector<16x8xf32>
    %307 = vector.extract_strided_slice %302 {offsets = [4, 0, 0], sizes = [2, 8, 8], strides = [1, 1, 1]} : vector<8x8x8xf32> to vector<2x8x8xf32>
    %308 = vector.shape_cast %307 : vector<2x8x8xf32> to vector<16x8xf32>
    %309 = vector.extract_strided_slice %302 {offsets = [6, 0, 0], sizes = [2, 8, 8], strides = [1, 1, 1]} : vector<8x8x8xf32> to vector<2x8x8xf32>
    %310 = vector.shape_cast %309 : vector<2x8x8xf32> to vector<16x8xf32>
    %311 = tpu.concatenate %304, %306, %308, %310 in 1 : vector<16x8xf32>, vector<16x8xf32>, vector<16x8xf32>, vector<16x8xf32> -> vector<16x32xf32>
    %cst_116 = arith.constant dense<0.000000e+00> : vector<16x32xf32>
    %312 = tpu.matmul %311, %260, %cst_116 {dimension_numbers = #tpu.dot_dimension_numbers<[1], [0], [0], [1], [0, 0, 1, 1], [], []>} : vector<16x32xf32>, vector<32x32xf32>, vector<16x32xf32> -> vector<16x32xf32>
    %313 = vector.broadcast %262 : vector<1x32xf32> to vector<16x32xf32>
    %314 = arith.addf %312, %313 : vector<16x32xf32>
    %315 = arith.addf %228, %314 : vector<16x32xf32>
    %c1_117 = arith.constant 1 : index
    %c2_118 = arith.constant 2 : index
    %316 = memref.load %arg18[%c1_117, %c2_118] : memref<2x6xf32, #tpu.memory_space<smem>>
    %c1_119 = arith.constant 1 : index
    %c3_120 = arith.constant 3 : index
    %317 = memref.load %arg18[%c1_119, %c3_120] : memref<2x6xf32, #tpu.memory_space<smem>>
    %cst_121 = arith.constant dense<0.000000e+00> : vector<16xf32>
    %318 = vector.multi_reduction <add>, %315, %cst_121 [1] : vector<16x32xf32> to vector<16xf32>
    %319 = vector.shape_cast %318 : vector<16xf32> to vector<16x1xf32>
    %cst_122 = arith.constant 3.200000e+01 : f32
    %320 = vector.broadcast %cst_122 : f32 to vector<16x1xf32>
    %321 = arith.divf %319, %320 : vector<16x1xf32>
    %322 = vector.broadcast %321 : vector<16x1xf32> to vector<16x32xf32>
    %323 = arith.subf %315, %322 : vector<16x32xf32>
    %324 = arith.mulf %323, %323 : vector<16x32xf32>
    %cst_123 = arith.constant dense<0.000000e+00> : vector<16xf32>
    %325 = vector.multi_reduction <add>, %324, %cst_123 [1] : vector<16x32xf32> to vector<16xf32>
    %326 = vector.shape_cast %325 : vector<16xf32> to vector<16x1xf32>
    %cst_124 = arith.constant 0.0322580636 : f32
    %327 = vector.broadcast %cst_124 : f32 to vector<16x1xf32>
    %328 = arith.mulf %326, %327 : vector<16x1xf32>
    %329 = math.sqrt %328 : vector<16x1xf32>
    %330 = vector.broadcast %316 : f32 to vector<16x32xf32>
    %331 = arith.mulf %330, %323 : vector<16x32xf32>
    %cst_125 = arith.constant 9.99999997E-7 : f32
    %332 = vector.broadcast %cst_125 : f32 to vector<16x1xf32>
    %333 = arith.addf %329, %332 : vector<16x1xf32>
    %334 = tpu.reciprocal %333 {approx = true} : vector<16x1xf32> -> vector<16x1xf32>
    %335 = vector.broadcast %334 : vector<16x1xf32> to vector<16x32xf32>
    %336 = arith.mulf %331, %335 : vector<16x32xf32>
    %337 = vector.broadcast %317 : f32 to vector<16x32xf32>
    %338 = arith.addf %336, %337 : vector<16x32xf32>
    %c1_126 = arith.constant 1 : index
    %c0_127 = arith.constant 0 : index
    %c0_128 = arith.constant 0 : index
    %339 = vector.load %arg8[%c1_126, %c0_127, %c0_128] : memref<2x32x32xf32, #tpu.memory_space<vmem>>, vector<1x32x32xf32>
    %340 = vector.shape_cast %339 : vector<1x32x32xf32> to vector<32x32xf32>
    %cst_129 = arith.constant dense<0.000000e+00> : vector<16x32xf32>
    %341 = tpu.matmul %338, %340, %cst_129 {dimension_numbers = #tpu.dot_dimension_numbers<[1], [0], [0], [1], [0, 0, 1, 1], [], []>} : vector<16x32xf32>, vector<32x32xf32>, vector<16x32xf32> -> vector<16x32xf32>
    %c1_130 = arith.constant 1 : index
    %c0_131 = arith.constant 0 : index
    %c0_132 = arith.constant 0 : index
    %342 = vector.load %arg9[%c1_130, %c0_131, %c0_132] : memref<2x1x32xf32, #tpu.memory_space<vmem>>, vector<1x1x32xf32>
    %343 = vector.shape_cast %342 : vector<1x1x32xf32> to vector<1x32xf32>
    %344 = vector.broadcast %343 : vector<1x32xf32> to vector<16x32xf32>
    %345 = arith.addf %341, %344 : vector<16x32xf32>
    %c1_133 = arith.constant 1 : index
    %c0_134 = arith.constant 0 : index
    %c0_135 = arith.constant 0 : index
    %346 = vector.load %arg10[%c1_133, %c0_134, %c0_135] : memref<2x32x64xf32, #tpu.memory_space<vmem>>, vector<1x32x64xf32>
    %347 = vector.shape_cast %346 : vector<1x32x64xf32> to vector<32x64xf32>
    %cst_136 = arith.constant dense<0.000000e+00> : vector<16x64xf32>
    %348 = tpu.matmul %3, %347, %cst_136 {dimension_numbers = #tpu.dot_dimension_numbers<[1], [0], [0], [1], [0, 0, 1, 1], [], []>} : vector<16x32xf32>, vector<32x64xf32>, vector<16x64xf32> -> vector<16x64xf32>
    %c1_137 = arith.constant 1 : index
    %c0_138 = arith.constant 0 : index
    %c0_139 = arith.constant 0 : index
    %349 = vector.load %arg11[%c1_137, %c0_138, %c0_139] : memref<2x1x64xf32, #tpu.memory_space<vmem>>, vector<1x1x64xf32>
    %350 = vector.shape_cast %349 : vector<1x1x64xf32> to vector<1x64xf32>
    %351 = vector.broadcast %350 : vector<1x64xf32> to vector<16x64xf32>
    %352 = arith.addf %348, %351 : vector<16x64xf32>
    %c1_140 = arith.constant 1 : index
    %c0_141 = arith.constant 0 : index
    %c0_142 = arith.constant 0 : index
    %353 = vector.load %arg12[%c1_140, %c0_141, %c0_142] : memref<2x32x32xf32, #tpu.memory_space<vmem>>, vector<1x32x32xf32>
    %354 = vector.shape_cast %353 : vector<1x32x32xf32> to vector<32x32xf32>
    %c1_143 = arith.constant 1 : index
    %c0_144 = arith.constant 0 : index
    %c0_145 = arith.constant 0 : index
    %355 = vector.load %arg13[%c1_143, %c0_144, %c0_145] : memref<2x1x32xf32, #tpu.memory_space<vmem>>, vector<1x1x32xf32>
    %356 = vector.shape_cast %355 : vector<1x1x32xf32> to vector<1x32xf32>
    %357 = vector.extract_strided_slice %345 {offsets = [0, 0], sizes = [16, 8], strides = [1, 1]} : vector<16x32xf32> to vector<16x8xf32>
    %358 = vector.shape_cast %357 : vector<16x8xf32> to vector<2x8x8xf32>
    %359 = vector.extract_strided_slice %345 {offsets = [0, 8], sizes = [16, 8], strides = [1, 1]} : vector<16x32xf32> to vector<16x8xf32>
    %360 = vector.shape_cast %359 : vector<16x8xf32> to vector<2x8x8xf32>
    %361 = vector.extract_strided_slice %345 {offsets = [0, 16], sizes = [16, 8], strides = [1, 1]} : vector<16x32xf32> to vector<16x8xf32>
    %362 = vector.shape_cast %361 : vector<16x8xf32> to vector<2x8x8xf32>
    %363 = vector.extract_strided_slice %345 {offsets = [0, 24], sizes = [16, 8], strides = [1, 1]} : vector<16x32xf32> to vector<16x8xf32>
    %364 = vector.shape_cast %363 : vector<16x8xf32> to vector<2x8x8xf32>
    %365 = tpu.concatenate %358, %360, %362, %364 in 0 : vector<2x8x8xf32>, vector<2x8x8xf32>, vector<2x8x8xf32>, vector<2x8x8xf32> -> vector<8x8x8xf32>
    %366 = vector.extract_strided_slice %352 {offsets = [0, 0], sizes = [16, 8], strides = [1, 1]} : vector<16x64xf32> to vector<16x8xf32>
    %367 = vector.shape_cast %366 : vector<16x8xf32> to vector<2x8x8xf32>
    %368 = vector.extract_strided_slice %352 {offsets = [0, 8], sizes = [16, 8], strides = [1, 1]} : vector<16x64xf32> to vector<16x8xf32>
    %369 = vector.shape_cast %368 : vector<16x8xf32> to vector<2x8x8xf32>
    %370 = vector.extract_strided_slice %352 {offsets = [0, 16], sizes = [16, 8], strides = [1, 1]} : vector<16x64xf32> to vector<16x8xf32>
    %371 = vector.shape_cast %370 : vector<16x8xf32> to vector<2x8x8xf32>
    %372 = vector.extract_strided_slice %352 {offsets = [0, 24], sizes = [16, 8], strides = [1, 1]} : vector<16x64xf32> to vector<16x8xf32>
    %373 = vector.shape_cast %372 : vector<16x8xf32> to vector<2x8x8xf32>
    %374 = tpu.concatenate %367, %369, %371, %373 in 0 : vector<2x8x8xf32>, vector<2x8x8xf32>, vector<2x8x8xf32>, vector<2x8x8xf32> -> vector<8x8x8xf32>
    %375 = vector.extract_strided_slice %352 {offsets = [0, 32], sizes = [16, 8], strides = [1, 1]} : vector<16x64xf32> to vector<16x8xf32>
    %376 = vector.shape_cast %375 : vector<16x8xf32> to vector<2x8x8xf32>
    %377 = vector.extract_strided_slice %352 {offsets = [0, 40], sizes = [16, 8], strides = [1, 1]} : vector<16x64xf32> to vector<16x8xf32>
    %378 = vector.shape_cast %377 : vector<16x8xf32> to vector<2x8x8xf32>
    %379 = vector.extract_strided_slice %352 {offsets = [0, 48], sizes = [16, 8], strides = [1, 1]} : vector<16x64xf32> to vector<16x8xf32>
    %380 = vector.shape_cast %379 : vector<16x8xf32> to vector<2x8x8xf32>
    %381 = vector.extract_strided_slice %352 {offsets = [0, 56], sizes = [16, 8], strides = [1, 1]} : vector<16x64xf32> to vector<16x8xf32>
    %382 = vector.shape_cast %381 : vector<16x8xf32> to vector<2x8x8xf32>
    %383 = tpu.concatenate %376, %378, %380, %382 in 0 : vector<2x8x8xf32>, vector<2x8x8xf32>, vector<2x8x8xf32>, vector<2x8x8xf32> -> vector<8x8x8xf32>
    "tpu.trace_start"() <{level = 10 : i32, message = "gqd,gkd->gqk"}> : () -> ()
    %cst_146 = arith.constant dense<0.000000e+00> : vector<8x8x8xf32>
    %384 = tpu.matmul %365, %374, %cst_146 {dimension_numbers = #tpu.dot_dimension_numbers<[2], [2], [1], [1], [0, 0, 0, 1, 1, 1], [0], [0]>} : vector<8x8x8xf32>, vector<8x8x8xf32>, vector<8x8x8xf32> -> vector<8x8x8xf32>
    "tpu.trace_stop"() : () -> ()
    %385 = arith.addf %384, %5 : vector<8x8x8xf32>
    %cst_147 = arith.constant dense<0xFF800000> : vector<8x8xf32>
    %386 = vector.multi_reduction <maximumf>, %385, %cst_147 [2] : vector<8x8x8xf32> to vector<8x8xf32>
    %387 = vector.shape_cast %386 : vector<8x8xf32> to vector<8x8x1xf32>
    %388 = vector.broadcast %387 : vector<8x8x1xf32> to vector<8x8x8xf32>
    %389 = arith.subf %385, %388 : vector<8x8x8xf32>
    %390 = math.exp %389 : vector<8x8x8xf32>
    %cst_148 = arith.constant dense<0.000000e+00> : vector<8x8xf32>
    %391 = vector.multi_reduction <add>, %390, %cst_148 [2] : vector<8x8x8xf32> to vector<8x8xf32>
    %392 = vector.shape_cast %391 : vector<8x8xf32> to vector<8x8x1xf32>
    %393 = tpu.reciprocal %392 {approx = true} : vector<8x8x1xf32> -> vector<8x8x1xf32>
    %394 = vector.broadcast %393 : vector<8x8x1xf32> to vector<8x8x8xf32>
    %395 = arith.mulf %390, %394 : vector<8x8x8xf32>
    "tpu.trace_start"() <{level = 10 : i32, message = "gqk,gkd->gqd"}> : () -> ()
    %cst_149 = arith.constant dense<0.000000e+00> : vector<8x8x8xf32>
    %396 = tpu.matmul %395, %383, %cst_149 {dimension_numbers = #tpu.dot_dimension_numbers<[2], [1], [1], [2], [0, 0, 0, 1, 1, 2], [0], [0]>} : vector<8x8x8xf32>, vector<8x8x8xf32>, vector<8x8x8xf32> -> vector<8x8x8xf32>
    "tpu.trace_stop"() : () -> ()
    %397 = vector.extract_strided_slice %396 {offsets = [0, 0, 0], sizes = [2, 8, 8], strides = [1, 1, 1]} : vector<8x8x8xf32> to vector<2x8x8xf32>
    %398 = vector.shape_cast %397 : vector<2x8x8xf32> to vector<16x8xf32>
    %399 = vector.extract_strided_slice %396 {offsets = [2, 0, 0], sizes = [2, 8, 8], strides = [1, 1, 1]} : vector<8x8x8xf32> to vector<2x8x8xf32>
    %400 = vector.shape_cast %399 : vector<2x8x8xf32> to vector<16x8xf32>
    %401 = vector.extract_strided_slice %396 {offsets = [4, 0, 0], sizes = [2, 8, 8], strides = [1, 1, 1]} : vector<8x8x8xf32> to vector<2x8x8xf32>
    %402 = vector.shape_cast %401 : vector<2x8x8xf32> to vector<16x8xf32>
    %403 = vector.extract_strided_slice %396 {offsets = [6, 0, 0], sizes = [2, 8, 8], strides = [1, 1, 1]} : vector<8x8x8xf32> to vector<2x8x8xf32>
    %404 = vector.shape_cast %403 : vector<2x8x8xf32> to vector<16x8xf32>
    %405 = tpu.concatenate %398, %400, %402, %404 in 1 : vector<16x8xf32>, vector<16x8xf32>, vector<16x8xf32>, vector<16x8xf32> -> vector<16x32xf32>
    %cst_150 = arith.constant dense<0.000000e+00> : vector<16x32xf32>
    %406 = tpu.matmul %405, %354, %cst_150 {dimension_numbers = #tpu.dot_dimension_numbers<[1], [0], [0], [1], [0, 0, 1, 1], [], []>} : vector<16x32xf32>, vector<32x32xf32>, vector<16x32xf32> -> vector<16x32xf32>
    %407 = vector.broadcast %356 : vector<1x32xf32> to vector<16x32xf32>
    %408 = arith.addf %406, %407 : vector<16x32xf32>
    %409 = arith.addf %315, %408 : vector<16x32xf32>
    %c1_151 = arith.constant 1 : index
    %c4_152 = arith.constant 4 : index
    %410 = memref.load %arg18[%c1_151, %c4_152] : memref<2x6xf32, #tpu.memory_space<smem>>
    %c1_153 = arith.constant 1 : index
    %c5_154 = arith.constant 5 : index
    %411 = memref.load %arg18[%c1_153, %c5_154] : memref<2x6xf32, #tpu.memory_space<smem>>
    %cst_155 = arith.constant dense<0.000000e+00> : vector<16xf32>
    %412 = vector.multi_reduction <add>, %409, %cst_155 [1] : vector<16x32xf32> to vector<16xf32>
    %413 = vector.shape_cast %412 : vector<16xf32> to vector<16x1xf32>
    %cst_156 = arith.constant 3.200000e+01 : f32
    %414 = vector.broadcast %cst_156 : f32 to vector<16x1xf32>
    %415 = arith.divf %413, %414 : vector<16x1xf32>
    %416 = vector.broadcast %415 : vector<16x1xf32> to vector<16x32xf32>
    %417 = arith.subf %409, %416 : vector<16x32xf32>
    %418 = arith.mulf %417, %417 : vector<16x32xf32>
    %cst_157 = arith.constant dense<0.000000e+00> : vector<16xf32>
    %419 = vector.multi_reduction <add>, %418, %cst_157 [1] : vector<16x32xf32> to vector<16xf32>
    %420 = vector.shape_cast %419 : vector<16xf32> to vector<16x1xf32>
    %cst_158 = arith.constant 0.0322580636 : f32
    %421 = vector.broadcast %cst_158 : f32 to vector<16x1xf32>
    %422 = arith.mulf %420, %421 : vector<16x1xf32>
    %423 = math.sqrt %422 : vector<16x1xf32>
    %424 = vector.broadcast %410 : f32 to vector<16x32xf32>
    %425 = arith.mulf %424, %417 : vector<16x32xf32>
    %cst_159 = arith.constant 9.99999997E-7 : f32
    %426 = vector.broadcast %cst_159 : f32 to vector<16x1xf32>
    %427 = arith.addf %423, %426 : vector<16x1xf32>
    %428 = tpu.reciprocal %427 {approx = true} : vector<16x1xf32> -> vector<16x1xf32>
    %429 = vector.broadcast %428 : vector<16x1xf32> to vector<16x32xf32>
    %430 = arith.mulf %425, %429 : vector<16x32xf32>
    %431 = vector.broadcast %411 : f32 to vector<16x32xf32>
    %432 = arith.addf %430, %431 : vector<16x32xf32>
    %c1_160 = arith.constant 1 : index
    %c0_161 = arith.constant 0 : index
    %c0_162 = arith.constant 0 : index
    %433 = vector.load %arg14[%c1_160, %c0_161, %c0_162] : memref<2x32x64xf32, #tpu.memory_space<vmem>>, vector<1x32x64xf32>
    %434 = vector.shape_cast %433 : vector<1x32x64xf32> to vector<32x64xf32>
    %cst_163 = arith.constant dense<0.000000e+00> : vector<16x64xf32>
    %435 = tpu.matmul %432, %434, %cst_163 {dimension_numbers = #tpu.dot_dimension_numbers<[1], [0], [0], [1], [0, 0, 1, 1], [], []>} : vector<16x32xf32>, vector<32x64xf32>, vector<16x64xf32> -> vector<16x64xf32>
    %c1_164 = arith.constant 1 : index
    %c0_165 = arith.constant 0 : index
    %c0_166 = arith.constant 0 : index
    %436 = vector.load %arg15[%c1_164, %c0_165, %c0_166] : memref<2x1x64xf32, #tpu.memory_space<vmem>>, vector<1x1x64xf32>
    %437 = vector.shape_cast %436 : vector<1x1x64xf32> to vector<1x64xf32>
    %438 = vector.broadcast %437 : vector<1x64xf32> to vector<16x64xf32>
    %439 = arith.addf %435, %438 : vector<16x64xf32>
    %cst_167 = arith.constant 0.000000e+00 : f32
    %440 = vector.broadcast %cst_167 : f32 to vector<16x64xf32>
    %441 = arith.maximumf %439, %440 : vector<16x64xf32>
    %c1_168 = arith.constant 1 : index
    %c0_169 = arith.constant 0 : index
    %c0_170 = arith.constant 0 : index
    %442 = vector.load %arg16[%c1_168, %c0_169, %c0_170] : memref<2x64x32xf32, #tpu.memory_space<vmem>>, vector<1x64x32xf32>
    %443 = vector.shape_cast %442 : vector<1x64x32xf32> to vector<64x32xf32>
    %cst_171 = arith.constant dense<0.000000e+00> : vector<16x32xf32>
    %444 = tpu.matmul %441, %443, %cst_171 {dimension_numbers = #tpu.dot_dimension_numbers<[1], [0], [0], [1], [0, 0, 1, 1], [], []>} : vector<16x64xf32>, vector<64x32xf32>, vector<16x32xf32> -> vector<16x32xf32>
    %445 = arith.addf %409, %444 : vector<16x32xf32>
    %c1_172 = arith.constant 1 : index
    %c0_173 = arith.constant 0 : index
    %c0_174 = arith.constant 0 : index
    %446 = vector.load %arg17[%c1_172, %c0_173, %c0_174] : memref<2x1x32xf32, #tpu.memory_space<vmem>>, vector<1x1x32xf32>
    %447 = vector.shape_cast %446 : vector<1x1x32xf32> to vector<1x32xf32>
    %448 = vector.broadcast %447 : vector<1x32xf32> to vector<16x32xf32>
    %449 = arith.addf %445, %448 : vector<16x32xf32>
    %c0_175 = arith.constant 0 : index
    %c0_176 = arith.constant 0 : index
    %450 = memref.load %arg19[%c0_175, %c0_176] : memref<1x2xf32, #tpu.memory_space<smem>>
    %c0_177 = arith.constant 0 : index
    %c1_178 = arith.constant 1 : index
    %451 = memref.load %arg19[%c0_177, %c1_178] : memref<1x2xf32, #tpu.memory_space<smem>>
    %cst_179 = arith.constant dense<0.000000e+00> : vector<16xf32>
    %452 = vector.multi_reduction <add>, %449, %cst_179 [1] : vector<16x32xf32> to vector<16xf32>
    %453 = vector.shape_cast %452 : vector<16xf32> to vector<16x1xf32>
    %cst_180 = arith.constant 3.200000e+01 : f32
    %454 = vector.broadcast %cst_180 : f32 to vector<16x1xf32>
    %455 = arith.divf %453, %454 : vector<16x1xf32>
    %456 = vector.broadcast %455 : vector<16x1xf32> to vector<16x32xf32>
    %457 = arith.subf %449, %456 : vector<16x32xf32>
    %458 = arith.mulf %457, %457 : vector<16x32xf32>
    %cst_181 = arith.constant dense<0.000000e+00> : vector<16xf32>
    %459 = vector.multi_reduction <add>, %458, %cst_181 [1] : vector<16x32xf32> to vector<16xf32>
    %460 = vector.shape_cast %459 : vector<16xf32> to vector<16x1xf32>
    %cst_182 = arith.constant 0.0322580636 : f32
    %461 = vector.broadcast %cst_182 : f32 to vector<16x1xf32>
    %462 = arith.mulf %460, %461 : vector<16x1xf32>
    %463 = math.sqrt %462 : vector<16x1xf32>
    %464 = vector.broadcast %450 : f32 to vector<16x32xf32>
    %465 = arith.mulf %464, %457 : vector<16x32xf32>
    %cst_183 = arith.constant 9.99999997E-7 : f32
    %466 = vector.broadcast %cst_183 : f32 to vector<16x1xf32>
    %467 = arith.addf %463, %466 : vector<16x1xf32>
    %468 = tpu.reciprocal %467 {approx = true} : vector<16x1xf32> -> vector<16x1xf32>
    %469 = vector.broadcast %468 : vector<16x1xf32> to vector<16x32xf32>
    %470 = arith.mulf %465, %469 : vector<16x32xf32>
    %471 = vector.broadcast %451 : f32 to vector<16x32xf32>
    %472 = arith.addf %470, %471 : vector<16x32xf32>
    %473 = vector.shape_cast %472 : vector<16x32xf32> to vector<2x8x32xf32>
    %c0_184 = arith.constant 0 : index
    %c0_185 = arith.constant 0 : index
    %c0_186 = arith.constant 0 : index
    %474 = vector.load %arg20[%c0_184, %c0_185, %c0_186] : memref<2x8x32xf32, #tpu.memory_space<vmem>>, vector<2x8x32xf32>
    tpu.vector_store %arg20[%c0_184, %c0_185, %c0_186], %473 {strides = array<i32>} : memref<2x8x32xf32, #tpu.memory_space<vmem>>, vector<2x8x32xf32>,
    return
  }
}

</mosaic_0001>

<llo_original>
// kernel: decoder_forward.1
$region0: #{decoder_forward.1}
  #allocation0 [shape = 'u32[]', space=smem, size = 0x4, offset = 0x4, fixed_abs, tag = 'smem constant byte address 0x4 - core index']
  #allocation1 [shape = 'u32[144,128]{1,0:T(1,128)}', space=vmem, size = 0x12000, scoped, tag = 'internal scratch']
  %s0 = inlined_call_operand.vmem [shape: f32[2,8,32], index: 0, kind: input, shape index: {}]
  %s1 = inlined_call_operand.hbm [shape: f32[2,8,32], index: 1, kind: input, shape index: {}]
  %s2 = inlined_call_operand.vmem [shape: f32[8,8,8], index: 2, kind: input, shape index: {}]
  %s3 = inlined_call_operand.vmem [shape: f32[8,8,8], index: 3, kind: input, shape index: {}]
  %s4 = inlined_call_operand.vmem [shape: f32[2,32,96], index: 4, kind: input, shape index: {}]
  %s5 = inlined_call_operand.hbm [shape: f32[2,1,96], index: 5, kind: input, shape index: {}]
  %s6 = inlined_call_operand.vmem [shape: f32[2,32,32], index: 6, kind: input, shape index: {}]
  %s7 = inlined_call_operand.hbm [shape: f32[2,1,32], index: 7, kind: input, shape index: {}]
  %s8 = inlined_call_operand.vmem [shape: f32[2,32,32], index: 8, kind: input, shape index: {}]
  %s9 = inlined_call_operand.hbm [shape: f32[2,1,32], index: 9, kind: input, shape index: {}]
  %s10 = inlined_call_operand.vmem [shape: f32[2,32,64], index: 10, kind: input, shape index: {}]
  %s11 = inlined_call_operand.hbm [shape: f32[2,1,64], index: 11, kind: input, shape index: {}]
  %s12 = inlined_call_operand.vmem [shape: f32[2,32,32], index: 12, kind: input, shape index: {}]
  %s13 = inlined_call_operand.hbm [shape: f32[2,1,32], index: 13, kind: input, shape index: {}]
  %s14 = inlined_call_operand.vmem [shape: f32[2,32,64], index: 14, kind: input, shape index: {}]
  %s15 = inlined_call_operand.hbm [shape: f32[2,1,64], index: 15, kind: input, shape index: {}]
  %s16 = inlined_call_operand.vmem [shape: f32[2,64,32], index: 16, kind: input, shape index: {}]
  %s17 = inlined_call_operand.hbm [shape: f32[2,1,32], index: 17, kind: input, shape index: {}]
  %s18 = inlined_call_operand.hbm [shape: f32[2,6], index: 18, kind: input, shape index: {}]
  %s19 = inlined_call_operand.vmem [shape: f32[1,2], index: 19, kind: input, shape index: {}]
  %s20 = inlined_call_operand.hbm [shape: f32[2,8,32], index: 20, kind: output, shape index: {}]
  %s21 = sld [smem:[#allocation0]]
  $region130: #{decoder_forward.1} parent=0
    _
  %s23 = ssub.s32 1, %s21
  %s24 = scalar_select 0, %s23, %s21
  $region1: #{decoder_forward.1} parent=0
    #allocation2 [shape = 'u8[8192]{0}', space=vmem, size = 0x2000, scoped, tag = 'input window, operand 1, single buffered']
    #allocation3 [shape = 's32[1]{0}', space=sflag, size = 0x4, scoped, tag = 'scoped memory for decoder_forward.1']
    #allocation4 [shape = 's32[1]{0}', space=sflag, size = 0x4, scoped, tag = 'scoped memory for decoder_forward.1']
    #allocation5 [shape = 's32[1]{0}', space=sflag, size = 0x4, scoped, tag = 'scoped memory for decoder_forward.1']
    #allocation6 [shape = 's32[1]{0}', space=sflag, size = 0x4, scoped, tag = 'scoped memory for decoder_forward.1']
    #allocation7 [shape = 'u8[1024]{0}', space=vmem, size = 0x400, scoped, tag = 'input window, operand 5, single buffered']
    #allocation8 [shape = 's32[1]{0}', space=sflag, size = 0x4, scoped, tag = 'scoped memory for decoder_forward.1']
    #allocation9 [shape = 'u8[1024]{0}', space=vmem, size = 0x400, scoped, tag = 'input window, operand 7, single buffered']
    #allocation10 [shape = 'u8[1024]{0}', space=vmem, size = 0x400, scoped, tag = 'input window, operand 9, single buffered']
    #allocation11 [shape = 's32[1]{0}', space=sflag, size = 0x4, scoped, tag = 'scoped memory for decoder_forward.1']
    #allocation12 [shape = 'u8[1024]{0}', space=vmem, size = 0x400, scoped, tag = 'input window, operand 11, single buffered']
    #allocation13 [shape = 'u8[1024]{0}', space=vmem, size = 0x400, scoped, tag = 'input window, operand 13, single buffered']
    #allocation14 [shape = 's32[1]{0}', space=sflag, size = 0x4, scoped, tag = 'scoped memory for decoder_forward.1']
    #allocation15 [shape = 'u8[1024]{0}', space=vmem, size = 0x400, scoped, tag = 'input window, operand 15, single buffered']
    #allocation16 [shape = 'u8[1024]{0}', space=vmem, size = 0x400, scoped, tag = 'input window, operand 17, single buffered']
    #allocation17 [shape = 's32[1]{0}', space=sflag, size = 0x4, scoped, tag = 'scoped memory for decoder_forward.1']
    #allocation18 [shape = 'u8[1024]{0}', space=smem, size = 0x400, scoped, tag = 'input window, operand 18, single buffered']
    #allocation19 [shape = 'u8[512]{0}', space=smem, size = 0x200, scoped, tag = 'input window, operand 19, single buffered']
    #allocation20 [shape = 'u8[8192]{0}', space=vmem, size = 0x2000, scoped, tag = 'output window, operand 0, single buffered']
    %25 = vsyncpa [#allocation3], 0
    %26 = vsyncpa [#allocation8], 0
    %27 = vsyncpa [#allocation11], 0
    %28 = vsyncpa [#allocation14], 0
    %29 = vsyncpa [#allocation17], 0
    %30 = vsyncpa [#allocation5], 0
    %31 = vsyncpa [#allocation6], 0
    %32 = vsyncpa [#allocation4], 0
    // Predicated region
    $region2: #{decoder_forward.1} parent=1 // pred_check
      _
    $region3: #{decoder_forward.1} parent=1 // pred_check_branch
      %34 = sbr.rel (0) target = $region5
    $region4: #{decoder_forward.1} parent=1 // pred_region
      _
    $region5: #{decoder_forward.1} parent=1 // pred_fallthru
      _
    // Predicated region
    $region6: #{decoder_forward.1} parent=1 // pred_check
      _
    $region7: #{decoder_forward.1} parent=1 // pred_check_branch
      %36 = sbr.rel (0) target = $region9
    $region8: #{decoder_forward.1} parent=1 // pred_region
      %s38 = ssub.s32 256, 256
      %39 = vsyncadd [#allocation3], %s38
      %s40 = sshll.u32 [#allocation2], 4
      %s41 = int_to_ptr.vmem [resolvable:$true] %s40
      %46 = dma.hbm_to_vmem [thread:$0]  %s1, 256, %s41, [#allocation3], 128, 128, 8
    $region9: #{decoder_forward.1} parent=1 // pred_fallthru
      _
    // Predicated region
    $region10: #{decoder_forward.1} parent=1 // pred_check
      _
    $region11: #{decoder_forward.1} parent=1 // pred_check_branch
      %48 = sbr.rel (0) target = $region13
    $region12: #{decoder_forward.1} parent=1 // pred_region
      _
    $region13: #{decoder_forward.1} parent=1 // pred_fallthru
      _
    // Predicated region
    $region14: #{decoder_forward.1} parent=1 // pred_check
      _
    $region15: #{decoder_forward.1} parent=1 // pred_check_branch
      %50 = sbr.rel (0) target = $region17
    $region16: #{decoder_forward.1} parent=1 // pred_region
      _
    $region17: #{decoder_forward.1} parent=1 // pred_fallthru
      _
    // Predicated region
    $region18: #{decoder_forward.1} parent=1 // pred_check
      _
    $region19: #{decoder_forward.1} parent=1 // pred_check_branch
      %52 = sbr.rel (0) target = $region21
    $region20: #{decoder_forward.1} parent=1 // pred_region
      _
    $region21: #{decoder_forward.1} parent=1 // pred_fallthru
      _
    // Predicated region
    $region22: #{decoder_forward.1} parent=1 // pred_check
      _
    $region23: #{decoder_forward.1} parent=1 // pred_check_branch
      %54 = sbr.rel (0) target = $region25
    $region24: #{decoder_forward.1} parent=1 // pred_region
      %s56 = ssub.s32 32, 32
      %57 = vsyncadd [#allocation8], %s56
      %s58 = sshll.u32 [#allocation7], 4
      %s59 = int_to_ptr.vmem [resolvable:$true] %s58
      %64 = dma.hbm_to_vmem [thread:$0]  %s5, 32, %s59, [#allocation8], 16, 16, 1
    $region25: #{decoder_forward.1} parent=1 // pred_fallthru
      _
    // Predicated region
    $region26: #{decoder_forward.1} parent=1 // pred_check
      _
    $region27: #{decoder_forward.1} parent=1 // pred_check_branch
      %66 = sbr.rel (0) target = $region29
    $region28: #{decoder_forward.1} parent=1 // pred_region
      _
    $region29: #{decoder_forward.1} parent=1 // pred_fallthru
      _
    // Predicated region
    $region30: #{decoder_forward.1} parent=1 // pred_check
      _
    $region31: #{decoder_forward.1} parent=1 // pred_check_branch
      %68 = sbr.rel (0) target = $region33
    $region32: #{decoder_forward.1} parent=1 // pred_region
      %s70 = ssub.s32 32, 32
      %71 = vsyncadd [#allocation8], %s70
      %s72 = sshll.u32 [#allocation9], 4
      %s73 = int_to_ptr.vmem [resolvable:$true] %s72
      %78 = dma.hbm_to_vmem [thread:$0]  %s7, 32, %s73, [#allocation8], 16, 16, 1
    $region33: #{decoder_forward.1} parent=1 // pred_fallthru
      _
    // Predicated region
    $region34: #{decoder_forward.1} parent=1 // pred_check
      _
    $region35: #{decoder_forward.1} parent=1 // pred_check_branch
      %80 = sbr.rel (0) target = $region37
    $region36: #{decoder_forward.1} parent=1 // pred_region
      _
    $region37: #{decoder_forward.1} parent=1 // pred_fallthru
      _
    // Predicated region
    $region38: #{decoder_forward.1} parent=1 // pred_check
      _
    $region39: #{decoder_forward.1} parent=1 // pred_check_branch
      %82 = sbr.rel (0) target = $region41
    $region40: #{decoder_forward.1} parent=1 // pred_region
      %s84 = ssub.s32 32, 32
      %85 = vsyncadd [#allocation11], %s84
      %s86 = sshll.u32 [#allocation10], 4
      %s87 = int_to_ptr.vmem [resolvable:$true] %s86
      %92 = dma.hbm_to_vmem [thread:$0]  %s9, 32, %s87, [#allocation11], 16, 16, 1
    $region41: #{decoder_forward.1} parent=1 // pred_fallthru
      _
    // Predicated region
    $region42: #{decoder_forward.1} parent=1 // pred_check
      _
    $region43: #{decoder_forward.1} parent=1 // pred_check_branch
      %94 = sbr.rel (0) target = $region45
    $region44: #{decoder_forward.1} parent=1 // pred_region
      _
    $region45: #{decoder_forward.1} parent=1 // pred_fallthru
      _
    // Predicated region
    $region46: #{decoder_forward.1} parent=1 // pred_check
      _
    $region47: #{decoder_forward.1} parent=1 // pred_check_branch
      %96 = sbr.rel (0) target = $region49
    $region48: #{decoder_forward.1} parent=1 // pred_region
      %s98 = ssub.s32 32, 32
      %99 = vsyncadd [#allocation11], %s98
      %s100 = sshll.u32 [#allocation12], 4
      %s101 = int_to_ptr.vmem [resolvable:$true] %s100
      %106 = dma.hbm_to_vmem [thread:$0]  %s11, 32, %s101, [#allocation11], 16, 16, 1
    $region49: #{decoder_forward.1} parent=1 // pred_fallthru
      _
    // Predicated region
    $region50: #{decoder_forward.1} parent=1 // pred_check
      _
    $region51: #{decoder_forward.1} parent=1 // pred_check_branch
      %108 = sbr.rel (0) target = $region53
    $region52: #{decoder_forward.1} parent=1 // pred_region
      _
    $region53: #{decoder_forward.1} parent=1 // pred_fallthru
      _
    // Predicated region
    $region54: #{decoder_forward.1} parent=1 // pred_check
      _
    $region55: #{decoder_forward.1} parent=1 // pred_check_branch
      %110 = sbr.rel (0) target = $region57
    $region56: #{decoder_forward.1} parent=1 // pred_region
      %s112 = ssub.s32 32, 32
      %113 = vsyncadd [#allocation14], %s112
      %s114 = sshll.u32 [#allocation13], 4
      %s115 = int_to_ptr.vmem [resolvable:$true] %s114
      %120 = dma.hbm_to_vmem [thread:$0]  %s13, 32, %s115, [#allocation14], 16, 16, 1
    $region57: #{decoder_forward.1} parent=1 // pred_fallthru
      _
    // Predicated region
    $region58: #{decoder_forward.1} parent=1 // pred_check
      _
    $region59: #{decoder_forward.1} parent=1 // pred_check_branch
      %122 = sbr.rel (0) target = $region61
    $region60: #{decoder_forward.1} parent=1 // pred_region
      _
    $region61: #{decoder_forward.1} parent=1 // pred_fallthru
      _
    // Predicated region
    $region62: #{decoder_forward.1} parent=1 // pred_check
      _
    $region63: #{decoder_forward.1} parent=1 // pred_check_branch
      %124 = sbr.rel (0) target = $region65
    $region64: #{decoder_forward.1} parent=1 // pred_region
      %s126 = ssub.s32 32, 32
      %127 = vsyncadd [#allocation14], %s126
      %s128 = sshll.u32 [#allocation15], 4
      %s129 = int_to_ptr.vmem [resolvable:$true] %s128
      %134 = dma.hbm_to_vmem [thread:$0]  %s15, 32, %s129, [#allocation14], 16, 16, 1
    $region65: #{decoder_forward.1} parent=1 // pred_fallthru
      _
    // Predicated region
    $region66: #{decoder_forward.1} parent=1 // pred_check
      _
    $region67: #{decoder_forward.1} parent=1 // pred_check_branch
      %136 = sbr.rel (0) target = $region69
    $region68: #{decoder_forward.1} parent=1 // pred_region
      _
    $region69: #{decoder_forward.1} parent=1 // pred_fallthru
      _
    // Predicated region
    $region70: #{decoder_forward.1} parent=1 // pred_check
      _
    $region71: #{decoder_forward.1} parent=1 // pred_check_branch
      %138 = sbr.rel (0) target = $region73
    $region72: #{decoder_forward.1} parent=1 // pred_region
      %s140 = ssub.s32 32, 32
      %141 = vsyncadd [#allocation17], %s140
      %s142 = sshll.u32 [#allocation16], 4
      %s143 = int_to_ptr.vmem [resolvable:$true] %s142
      %148 = dma.hbm_to_vmem [thread:$0]  %s17, 32, %s143, [#allocation17], 16, 16, 1
    $region73: #{decoder_forward.1} parent=1 // pred_fallthru
      _
    // Predicated region
    $region74: #{decoder_forward.1} parent=1 // pred_check
      _
    $region75: #{decoder_forward.1} parent=1 // pred_check_branch
      %150 = sbr.rel (0) target = $region77
    $region76: #{decoder_forward.1} parent=1 // pred_region
      %s152 = ssub.s32 32, 32
      %153 = vsyncadd [#allocation5], %s152
      %156 = dma.hbm_to_smem %s18, 32, [#allocation18], [#allocation5]
    $region77: #{decoder_forward.1} parent=1 // pred_fallthru
      _
    // Predicated region
    $region78: #{decoder_forward.1} parent=1 // pred_check
      _
    $region79: #{decoder_forward.1} parent=1 // pred_check_branch
      %158 = sbr.rel (0) target = $region81
    $region80: #{decoder_forward.1} parent=1 // pred_region
      %s160 = ssub.s32 16, 16
      %161 = vsyncadd [#allocation6], %s160
      %s163 = sshll.u32 %s19, 4
      %s164 = int_to_ptr.vmem [resolvable:$true] %s163
      %166 = dma.vmem_to_smem %s164, 16, [#allocation19], [#allocation6]
    $region81: #{decoder_forward.1} parent=1 // pred_fallthru
      _
    // Predicated region
    $region82: #{decoder_forward.1} parent=1 // pred_check
      _
    $region83: #{decoder_forward.1} parent=1 // pred_check_branch
      %168 = sbr.rel (0) target = $region85
    $region84: #{decoder_forward.1} parent=1 // pred_region
      %169 = dma.done [#allocation3], 256
    $region85: #{decoder_forward.1} parent=1 // pred_fallthru
      _
    // Predicated region
    $region86: #{decoder_forward.1} parent=1 // pred_check
      _
    $region87: #{decoder_forward.1} parent=1 // pred_check_branch
      %171 = sbr.rel (0) target = $region89
    $region88: #{decoder_forward.1} parent=1 // pred_region
      %172 = dma.done [#allocation8], 32
    $region89: #{decoder_forward.1} parent=1 // pred_fallthru
      _
    // Predicated region
    $region90: #{decoder_forward.1} parent=1 // pred_check
      _
    $region91: #{decoder_forward.1} parent=1 // pred_check_branch
      %174 = sbr.rel (0) target = $region93
    $region92: #{decoder_forward.1} parent=1 // pred_region
      %175 = dma.done [#allocation8], 32
    $region93: #{decoder_forward.1} parent=1 // pred_fallthru
      _
    // Predicated region
    $region94: #{decoder_forward.1} parent=1 // pred_check
      _
    $region95: #{decoder_forward.1} parent=1 // pred_check_branch
      %177 = sbr.rel (0) target = $region97
    $region96: #{decoder_forward.1} parent=1 // pred_region
      %178 = dma.done [#allocation11], 32
    $region97: #{decoder_forward.1} parent=1 // pred_fallthru
      _
    // Predicated region
    $region98: #{decoder_forward.1} parent=1 // pred_check
      _
    $region99: #{decoder_forward.1} parent=1 // pred_check_branch
      %180 = sbr.rel (0) target = $region101
    $region100: #{decoder_forward.1} parent=1 // pred_region
      %181 = dma.done [#allocation11], 32
    $region101: #{decoder_forward.1} parent=1 // pred_fallthru
      _
    // Predicated region
    $region102: #{decoder_forward.1} parent=1 // pred_check
      _
    $region103: #{decoder_forward.1} parent=1 // pred_check_branch
      %183 = sbr.rel (0) target = $region105
    $region104: #{decoder_forward.1} parent=1 // pred_region
      %184 = dma.done [#allocation14], 32
    $region105: #{decoder_forward.1} parent=1 // pred_fallthru
      _
    // Predicated region
    $region106: #{decoder_forward.1} parent=1 // pred_check
      _
    $region107: #{decoder_forward.1} parent=1 // pred_check_branch
      %186 = sbr.rel (0) target = $region109
    $region108: #{decoder_forward.1} parent=1 // pred_region
      %187 = dma.done [#allocation14], 32
    $region109: #{decoder_forward.1} parent=1 // pred_fallthru
      _
    // Predicated region
    $region110: #{decoder_forward.1} parent=1 // pred_check
      _
    $region111: #{decoder_forward.1} parent=1 // pred_check_branch
      %189 = sbr.rel (0) target = $region113
    $region112: #{decoder_forward.1} parent=1 // pred_region
      %190 = dma.done [#allocation17], 32
    $region113: #{decoder_forward.1} parent=1 // pred_fallthru
      _
    // Predicated region
    $region114: #{decoder_forward.1} parent=1 // pred_check
      _
    $region115: #{decoder_forward.1} parent=1 // pred_check_branch
      %192 = sbr.rel (0) target = $region117
    $region116: #{decoder_forward.1} parent=1 // pred_region
      %193 = dma.done [#allocation5], 32
    $region117: #{decoder_forward.1} parent=1 // pred_fallthru
      _
    // Predicated region
    $region118: #{decoder_forward.1} parent=1 // pred_check
      _
    $region119: #{decoder_forward.1} parent=1 // pred_check_branch
      %195 = sbr.rel (0) target = $region121
    $region120: #{decoder_forward.1} parent=1 // pred_region
      %196 = dma.done [#allocation6], 16
    $region121: #{decoder_forward.1} parent=1 // pred_fallthru
      _
    %197 = sfence
    %v198 = vld [vmem:[%s0] sm:$0xff]
    %v199 = vld [vmem:[%s0 + $0x8] sm:$0xff]
    %v200 = vld [vmem:[#allocation2] sm:$0xff]
    %v201 = vld [vmem:[#allocation2 + $0x8] sm:$0xff]
    %v202 = vld [vmem:[%s2] sm:$0xff]
    %v203 = vld [vmem:[%s2 + $0x8] sm:$0xff]
    %v204 = vld [vmem:[%s2 + $0x10] sm:$0xff]
    %v205 = vld [vmem:[%s2 + $0x18] sm:$0xff]
    %v206 = vld [vmem:[%s2 + $0x20] sm:$0xff]
    %v207 = vld [vmem:[%s2 + $0x28] sm:$0xff]
    %v208 = vld [vmem:[%s2 + $0x30] sm:$0xff]
    %v209 = vld [vmem:[%s2 + $0x38] sm:$0xff]
    %v210 = vld [vmem:[%s3] sm:$0xff]
    %v211 = vld [vmem:[%s3 + $0x8] sm:$0xff]
    %v212 = vld [vmem:[%s3 + $0x10] sm:$0xff]
    %v213 = vld [vmem:[%s3 + $0x18] sm:$0xff]
    %v214 = vld [vmem:[%s3 + $0x20] sm:$0xff]
    %v215 = vld [vmem:[%s3 + $0x28] sm:$0xff]
    %v216 = vld [vmem:[%s3 + $0x30] sm:$0xff]
    %v217 = vld [vmem:[%s3 + $0x38] sm:$0xff]
    %s218 = sld [smem:[#allocation18]]
    %s219 = sld [smem:[#allocation18 + $0x1]]
    %vm220 = vcmask 261120
    %v221 = vsel %vm220, %v198, 0.0
    %222 = vadd.xlane.f32.xlu0 %v221
    %v223 = vpop.xlane.xlu0 %222
    %v224 = vsel %vm220, %v199, 0.0
    %225 = vadd.xlane.f32.xlu0 %v224
    %v226 = vpop.xlane.xlu0 %225
    %v227 = vrcp.pop 32.0
    %v228 = vmul.f32 %v223, %v227
    %v229 = vmul.f32 %v226, %v227
    %v230 = vsub.f32 %v198, %v228
    %v231 = vsub.f32 %v199, %v229
    %v232 = vmul.f32 %v230, %v230
    %v233 = vmul.f32 %v231, %v231
    %v234 = vsel %vm220, %v232, 0.0
    %235 = vadd.xlane.f32.xlu0 %v234
    %v236 = vpop.xlane.xlu0 %235
    %v237 = vsel %vm220, %v233, 0.0
    %238 = vadd.xlane.f32.xlu0 %v237
    %v239 = vpop.xlane.xlu0 %238
    %v240 = vmul.f32 %v236, 0.032258064
    %v241 = vmul.f32 %v239, 0.032258064
    %v242 = vrsqrt.pop %v240
    %v243 = vmul.f32 %v240, %v242
    %vm244 = vcmp.eq.f32.partialorder %v240, inf
    %v245 = vsel %vm244, %v240, %v243
    %vm246 = vcmp.eq.f32.partialorder %v240, 0.0
    %v247 = vand.u32 %v240, 2147483648
    %v248 = vsel %vm246, %v247, %v245
    %v249 = vrsqrt.pop %v241
    %v250 = vmul.f32 %v241, %v249
    %vm251 = vcmp.eq.f32.partialorder %v241, inf
    %v252 = vsel %vm251, %v241, %v250
    %vm253 = vcmp.eq.f32.partialorder %v241, 0.0
    %v254 = vand.u32 %v241, 2147483648
    %v255 = vsel %vm253, %v254, %v252
    %v256 = vstv %s218
    %v257 = vmul.f32 %v256, %v230
    %v258 = vmul.f32 %v256, %v231
    %v259 = vadd.f32 %v248, 1e-06
    %v260 = vadd.f32 %v255, 1e-06
    %v261 = vrcp.pop %v259
    %v262 = vrcp.pop %v260
    %v263 = vmul.f32 %v257, %v261
    %v264 = vmul.f32 %v258, %v262
    %v265 = vstv %s219
    %v266 = vadd.f32 %v263, %v265
    %v267 = vadd.f32 %v264, %v265
    %v268 = vld [vmem:[%s4] sm:$0xff]
    %v269 = vld [vmem:[%s4 + $0x8] sm:$0xff]
    %v270 = vld [vmem:[%s4 + $0x10] sm:$0xff]
    %v271 = vld [vmem:[%s4 + $0x18] sm:$0xff]
    %v272 = vld [vmem:[#allocation7] sm:$0x1]
    %v274 = vlaneseq
    %v275 = vshrl.u32 %v274, 7
    %v276 = vsub.s32 0, %v275
    %v277 = vrot.slane %v272, %v276
    %v280 = vsel %vm220, %v266, 0
    %v283 = vsel %vm220, %v267, 0
    %285 = vmatprep.subr.mxu0 0.0
    %286 = vmatpush1.msra.mxu0 0.0
    %287 = vmatprep.subr.mxu0 0.0
    %288 = vmatpush1.msra.mxu0 0.0
    %289 = vmatprep.subr.mxu0 0.0
    %290 = vmatpush1.msra.mxu0 0.0
    %291 = vmatprep.subr.mxu0 0.0
    %292 = vmatpush1.msra.mxu0 0.0
    %293 = vmatprep.subr.mxu0 0.0
    %294 = vmatpush1.msra.mxu0 0.0
    %295 = vmatprep.subr.mxu0 0.0
    %296 = vmatpush1.msra.mxu0 0.0
    %297 = vmatprep.subr.mxu0 0.0
    %298 = vmatpush1.msra.mxu0 0.0
    %299 = vmatprep.subr.mxu0 0.0
    %300 = vmatpush1.msra.mxu0 0.0
    %301 = vmatprep.subr.mxu0 0.0
    %302 = vmatpush1.msra.mxu0 0.0
    %303 = vmatprep.subr.mxu0 0.0
    %304 = vmatpush1.msra.mxu0 0.0
    %305 = vmatprep.subr.mxu0 0.0
    %306 = vmatpush1.msra.mxu0 0.0
    %307 = vmatprep.subr.mxu0 0.0
    %308 = vmatpush1.msra.mxu0 0.0
    %309 = vmatprep.subr.mxu0 0.0
    %310 = vmatpush1.msra.mxu0 %v271
    %311 = vmatprep.subr.mxu0 0.0
    %312 = vmatpush1.msra.mxu0 %v270
    %313 = vmatprep.subr.mxu0 0.0
    %314 = vmatpush1.msra.mxu0 %v269
    %315 = vmatprep.subr.mxu0 0.0
    %316 = vmatpush1.msra.mxu0 %v268
    %317 = vmatprep.subr.mxu0 0.0
    %318 = vmatpush2.msra.mxu0 0.0
    %319 = vmatprep.subr.mxu0 0.0
    %320 = vmatpush2.msra.mxu0 0.0
    %321 = vmatprep.subr.mxu0 0.0
    %322 = vmatpush2.msra.mxu0 0.0
    %323 = vmatprep.subr.mxu0 0.0
    %324 = vmatpush2.msra.mxu0 0.0
    %325 = vmatprep.subr.mxu0 0.0
    %326 = vmatpush2.msra.mxu0 0.0
    %327 = vmatprep.subr.mxu0 0.0
    %328 = vmatpush2.msra.mxu0 0.0
    %329 = vmatprep.subr.mxu0 0.0
    %330 = vmatpush2.msra.mxu0 0.0
    %331 = vmatprep.subr.mxu0 0.0
    %332 = vmatpush2.msra.mxu0 0.0
    %333 = vmatprep.subr.mxu0 0.0
    %334 = vmatpush2.msra.mxu0 0.0
    %335 = vmatprep.subr.mxu0 0.0
    %336 = vmatpush2.msra.mxu0 0.0
    %337 = vmatprep.subr.mxu0 0.0
    %338 = vmatpush2.msra.mxu0 0.0
    %339 = vmatprep.subr.mxu0 0.0
    %340 = vmatpush2.msra.mxu0 0.0
    %341 = vmatprep.subr.mxu0 0.0
    %342 = vmatpush2.msra.mxu0 0.0
    %343 = vmatprep.subr.mxu0 0.0
    %344 = vmatpush2.msra.mxu0 0.0
    %345 = vmatprep.subr.mxu0 0.0
    %346 = vmatpush2.msra.mxu0 0.0
    %347 = vmatprep.subr.mxu0 0.0
    %348 = vmatpush2.msra.mxu0 0.0
    %349 = vmatprep.mubr.f32.mxu0 0.0
    %350 = vmatmul.mubr.f32.gmra.mxu0 %v280
    %v351 = vpop.f32.mrf.mxu0
    %v352 = vadd.f32 %v277, %v351
    %v353 = vpop.f32.mrf.mxu0
    %354 = vmatprep.mubr.f32.mxu0 0.0
    %355 = vmatmul.mubr.f32.gmra.mxu0 %v283
    %v356 = vpop.f32.mrf.mxu0
    %v357 = vadd.f32 %v277, %v356
    %v358 = vpop.f32.mrf.mxu0
    %359 = vdwg.mxu0
    %v360 = vld [vmem:[%s6] sm:$0xff]
    %v361 = vld [vmem:[%s6 + $0x8] sm:$0xff]
    %v362 = vld [vmem:[%s6 + $0x10] sm:$0xff]
    %v363 = vld [vmem:[%s6 + $0x18] sm:$0xff]
    %v364 = vld [vmem:[#allocation9] sm:$0x1]
    %367 = vrot.lane.b32.xlu0 %v352, 120
    %v368 = vpop.permute.xlu0 %367
    %369 = vrot.lane.b32.xlu0 %v357, 120
    %v370 = vpop.permute.xlu0 %369
    %371 = vrot.lane.b32.xlu0 %v352, 112
    %v372 = vpop.permute.xlu0 %371
    %373 = vrot.lane.b32.xlu0 %v357, 112
    %v374 = vpop.permute.xlu0 %373
    %375 = vrot.lane.b32.xlu0 %v352, 104
    %v376 = vpop.permute.xlu0 %375
    %377 = vrot.lane.b32.xlu0 %v357, 104
    %v378 = vpop.permute.xlu0 %377
    %379 = vrot.lane.b32.xlu0 %v352, 96
    %v380 = vpop.permute.xlu0 %379
    %vm381 = vcmask 64512
    %v382 = vsel %vm381, %v352, 0
    %v384 = vsel %vm381, %v380, 0
    %386 = vmatprep.subr.mxu0 0.0
    %387 = vmatpush1.xpose.msra.mxu0 0.0
    %388 = vmatprep.subr.mxu0 0.0
    %389 = vmatpush1.xpose.msra.mxu0 0.0
    %390 = vmatprep.subr.mxu0 0.0
    %391 = vmatpush1.xpose.msra.mxu0 0.0
    %392 = vmatprep.subr.mxu0 0.0
    %393 = vmatpush1.xpose.msra.mxu0 0.0
    %394 = vmatprep.subr.mxu0 0.0
    %395 = vmatpush1.xpose.msra.mxu0 0.0
    %396 = vmatprep.subr.mxu0 0.0
    %397 = vmatpush1.xpose.msra.mxu0 0.0
    %398 = vmatprep.subr.mxu0 0.0
    %399 = vmatpush1.xpose.msra.mxu0 0.0
    %400 = vmatprep.subr.mxu0 0.0
    %401 = vmatpush1.xpose.msra.mxu0 0.0
    %402 = vmatprep.subr.mxu0 0.0
    %403 = vmatpush1.xpose.msra.mxu0 0.0
    %404 = vmatprep.subr.mxu0 0.0
    %405 = vmatpush1.xpose.msra.mxu0 0.0
    %406 = vmatprep.subr.mxu0 0.0
    %407 = vmatpush1.xpose.msra.mxu0 0.0
    %408 = vmatprep.subr.mxu0 0.0
    %409 = vmatpush1.xpose.msra.mxu0 0.0
    %410 = vmatprep.subr.mxu0 0.0
    %411 = vmatpush1.xpose.msra.mxu0 0.0
    %412 = vmatprep.subr.mxu0 0.0
    %413 = vmatpush1.xpose.msra.mxu0 0.0
    %414 = vmatprep.subr.mxu0 0.0
    %415 = vmatpush1.xpose.msra.mxu0 0.0
    %416 = vmatprep.subr.mxu0 0.0
    %417 = vmatpush1.xpose.msra.mxu0 %v384
    %418 = vmatprep.subr.mxu0 0.0
    %419 = vmatpush2.xpose.msra.mxu0 0.0
    %420 = vmatprep.subr.mxu0 0.0
    %421 = vmatpush2.xpose.msra.mxu0 0.0
    %422 = vmatprep.subr.mxu0 0.0
    %423 = vmatpush2.xpose.msra.mxu0 0.0
    %424 = vmatprep.subr.mxu0 0.0
    %425 = vmatpush2.xpose.msra.mxu0 0.0
    %426 = vmatprep.subr.mxu0 0.0
    %427 = vmatpush2.xpose.msra.mxu0 0.0
    %428 = vmatprep.subr.mxu0 0.0
    %429 = vmatpush2.xpose.msra.mxu0 0.0
    %430 = vmatprep.subr.mxu0 0.0
    %431 = vmatpush2.xpose.msra.mxu0 0.0
    %432 = vmatprep.subr.mxu0 0.0
    %433 = vmatpush2.xpose.msra.mxu0 0.0
    %434 = vmatprep.subr.mxu0 0.0
    %435 = vmatpush2.xpose.msra.mxu0 0.0
    %436 = vmatprep.subr.mxu0 0.0
    %437 = vmatpush2.xpose.msra.mxu0 0.0
    %438 = vmatprep.subr.mxu0 0.0
    %439 = vmatpush2.xpose.msra.mxu0 0.0
    %440 = vmatprep.subr.mxu0 0.0
    %441 = vmatpush2.xpose.msra.mxu0 0.0
    %442 = vmatprep.subr.mxu0 0.0
    %443 = vmatpush2.xpose.msra.mxu0 0.0
    %444 = vmatprep.subr.mxu0 0.0
    %445 = vmatpush2.xpose.msra.mxu0 0.0
    %446 = vmatprep.subr.mxu0 0.0
    %447 = vmatpush2.xpose.msra.mxu0 0.0
    %448 = vmatprep.subr.mxu0 0.0
    %449 = vmatpush2.xpose.msra.mxu0 0.0
    %450 = vmatprep.mubr.f32.mxu0 0.0
    %451 = vmatmul.mubr.f32.gmra.mxu0 %v382
    %v452 = vpop.f32.mrf.mxu0
    %v453 = vadd.f32 %v210, %v452
    %v454 = vpop.f32.mrf.mxu0
    %455 = vdwg.mxu0
    %456 = vrot.lane.b32.xlu0 %v357, 96
    %v457 = vpop.permute.xlu0 %456
    %v458 = vsel %vm381, %v357, 0
    %v460 = vsel %vm381, %v457, 0
    %462 = vmatprep.subr.mxu0 0.0
    %463 = vmatpush1.xpose.msra.mxu0 0.0
    %464 = vmatprep.subr.mxu0 0.0
    %465 = vmatpush1.xpose.msra.mxu0 0.0
    %466 = vmatprep.subr.mxu0 0.0
    %467 = vmatpush1.xpose.msra.mxu0 0.0
    %468 = vmatprep.subr.mxu0 0.0
    %469 = vmatpush1.xpose.msra.mxu0 0.0
    %470 = vmatprep.subr.mxu0 0.0
    %471 = vmatpush1.xpose.msra.mxu0 0.0
    %472 = vmatprep.subr.mxu0 0.0
    %473 = vmatpush1.xpose.msra.mxu0 0.0
    %474 = vmatprep.subr.mxu0 0.0
    %475 = vmatpush1.xpose.msra.mxu0 0.0
    %476 = vmatprep.subr.mxu0 0.0
    %477 = vmatpush1.xpose.msra.mxu0 0.0
    %478 = vmatprep.subr.mxu0 0.0
    %479 = vmatpush1.xpose.msra.mxu0 0.0
    %480 = vmatprep.subr.mxu0 0.0
    %481 = vmatpush1.xpose.msra.mxu0 0.0
    %482 = vmatprep.subr.mxu0 0.0
    %483 = vmatpush1.xpose.msra.mxu0 0.0
    %484 = vmatprep.subr.mxu0 0.0
    %485 = vmatpush1.xpose.msra.mxu0 0.0
    %486 = vmatprep.subr.mxu0 0.0
    %487 = vmatpush1.xpose.msra.mxu0 0.0
    %488 = vmatprep.subr.mxu0 0.0
    %489 = vmatpush1.xpose.msra.mxu0 0.0
    %490 = vmatprep.subr.mxu0 0.0
    %491 = vmatpush1.xpose.msra.mxu0 0.0
    %492 = vmatprep.subr.mxu0 0.0
    %493 = vmatpush1.xpose.msra.mxu0 %v460
    %494 = vmatprep.subr.mxu0 0.0
    %495 = vmatpush2.xpose.msra.mxu0 0.0
    %496 = vmatprep.subr.mxu0 0.0
    %497 = vmatpush2.xpose.msra.mxu0 0.0
    %498 = vmatprep.subr.mxu0 0.0
    %499 = vmatpush2.xpose.msra.mxu0 0.0
    %500 = vmatprep.subr.mxu0 0.0
    %501 = vmatpush2.xpose.msra.mxu0 0.0
    %502 = vmatprep.subr.mxu0 0.0
    %503 = vmatpush2.xpose.msra.mxu0 0.0
    %504 = vmatprep.subr.mxu0 0.0
    %505 = vmatpush2.xpose.msra.mxu0 0.0
    %506 = vmatprep.subr.mxu0 0.0
    %507 = vmatpush2.xpose.msra.mxu0 0.0
    %508 = vmatprep.subr.mxu0 0.0
    %509 = vmatpush2.xpose.msra.mxu0 0.0
    %510 = vmatprep.subr.mxu0 0.0
    %511 = vmatpush2.xpose.msra.mxu0 0.0
    %512 = vmatprep.subr.mxu0 0.0
    %513 = vmatpush2.xpose.msra.mxu0 0.0
    %514 = vmatprep.subr.mxu0 0.0
    %515 = vmatpush2.xpose.msra.mxu0 0.0
    %516 = vmatprep.subr.mxu0 0.0
    %517 = vmatpush2.xpose.msra.mxu0 0.0
    %518 = vmatprep.subr.mxu0 0.0
    %519 = vmatpush2.xpose.msra.mxu0 0.0
    %520 = vmatprep.subr.mxu0 0.0
    %521 = vmatpush2.xpose.msra.mxu0 0.0
    %522 = vmatprep.subr.mxu0 0.0
    %523 = vmatpush2.xpose.msra.mxu0 0.0
    %524 = vmatprep.subr.mxu0 0.0
    %525 = vmatpush2.xpose.msra.mxu0 0.0
    %526 = vmatprep.mubr.f32.mxu0 0.0
    %527 = vmatmul.mubr.f32.gmra.mxu0 %v458
    %v528 = vpop.f32.mrf.mxu0
    %v529 = vadd.f32 %v211, %v528
    %v530 = vpop.f32.mrf.mxu0
    %531 = vdwg.mxu0
    %532 = vrot.lane.b32.xlu0 %v368, 96
    %v533 = vpop.permute.xlu0 %532
    %v534 = vsel %vm381, %v368, 0
    %v536 = vsel %vm381, %v533, 0
    %538 = vmatprep.subr.mxu0 0.0
    %539 = vmatpush1.xpose.msra.mxu0 0.0
    %540 = vmatprep.subr.mxu0 0.0
    %541 = vmatpush1.xpose.msra.mxu0 0.0
    %542 = vmatprep.subr.mxu0 0.0
    %543 = vmatpush1.xpose.msra.mxu0 0.0
    %544 = vmatprep.subr.mxu0 0.0
    %545 = vmatpush1.xpose.msra.mxu0 0.0
    %546 = vmatprep.subr.mxu0 0.0
    %547 = vmatpush1.xpose.msra.mxu0 0.0
    %548 = vmatprep.subr.mxu0 0.0
    %549 = vmatpush1.xpose.msra.mxu0 0.0
    %550 = vmatprep.subr.mxu0 0.0
    %551 = vmatpush1.xpose.msra.mxu0 0.0
    %552 = vmatprep.subr.mxu0 0.0
    %553 = vmatpush1.xpose.msra.mxu0 0.0
    %554 = vmatprep.subr.mxu0 0.0
    %555 = vmatpush1.xpose.msra.mxu0 0.0
    %556 = vmatprep.subr.mxu0 0.0
    %557 = vmatpush1.xpose.msra.mxu0 0.0
    %558 = vmatprep.subr.mxu0 0.0
    %559 = vmatpush1.xpose.msra.mxu0 0.0
    %560 = vmatprep.subr.mxu0 0.0
    %561 = vmatpush1.xpose.msra.mxu0 0.0
    %562 = vmatprep.subr.mxu0 0.0
    %563 = vmatpush1.xpose.msra.mxu0 0.0
    %564 = vmatprep.subr.mxu0 0.0
    %565 = vmatpush1.xpose.msra.mxu0 0.0
    %566 = vmatprep.subr.mxu0 0.0
    %567 = vmatpush1.xpose.msra.mxu0 0.0
    %568 = vmatprep.subr.mxu0 0.0
    %569 = vmatpush1.xpose.msra.mxu0 %v536
    %570 = vmatprep.subr.mxu0 0.0
    %571 = vmatpush2.xpose.msra.mxu0 0.0
    %572 = vmatprep.subr.mxu0 0.0
    %573 = vmatpush2.xpose.msra.mxu0 0.0
    %574 = vmatprep.subr.mxu0 0.0
    %575 = vmatpush2.xpose.msra.mxu0 0.0
    %576 = vmatprep.subr.mxu0 0.0
    %577 = vmatpush2.xpose.msra.mxu0 0.0
    %578 = vmatprep.subr.mxu0 0.0
    %579 = vmatpush2.xpose.msra.mxu0 0.0
    %580 = vmatprep.subr.mxu0 0.0
    %581 = vmatpush2.xpose.msra.mxu0 0.0
    %582 = vmatprep.subr.mxu0 0.0
    %583 = vmatpush2.xpose.msra.mxu0 0.0
    %584 = vmatprep.subr.mxu0 0.0
    %585 = vmatpush2.xpose.msra.mxu0 0.0
    %586 = vmatprep.subr.mxu0 0.0
    %587 = vmatpush2.xpose.msra.mxu0 0.0
    %588 = vmatprep.subr.mxu0 0.0
    %589 = vmatpush2.xpose.msra.mxu0 0.0
    %590 = vmatprep.subr.mxu0 0.0
    %591 = vmatpush2.xpose.msra.mxu0 0.0
    %592 = vmatprep.subr.mxu0 0.0
    %593 = vmatpush2.xpose.msra.mxu0 0.0
    %594 = vmatprep.subr.mxu0 0.0
    %595 = vmatpush2.xpose.msra.mxu0 0.0
    %596 = vmatprep.subr.mxu0 0.0
    %597 = vmatpush2.xpose.msra.mxu0 0.0
    %598 = vmatprep.subr.mxu0 0.0
    %599 = vmatpush2.xpose.msra.mxu0 0.0
    %600 = vmatprep.subr.mxu0 0.0
    %601 = vmatpush2.xpose.msra.mxu0 0.0
    %602 = vmatprep.mubr.f32.mxu0 0.0
    %603 = vmatmul.mubr.f32.gmra.mxu0 %v534
    %v604 = vpop.f32.mrf.mxu0
    %v605 = vadd.f32 %v212, %v604
    %v606 = vpop.f32.mrf.mxu0
    %607 = vdwg.mxu0
    %608 = vrot.lane.b32.xlu0 %v370, 96
    %v609 = vpop.permute.xlu0 %608
    %v610 = vsel %vm381, %v370, 0
    %v612 = vsel %vm381, %v609, 0
    %614 = vmatprep.subr.mxu0 0.0
    %615 = vmatpush1.xpose.msra.mxu0 0.0
    %616 = vmatprep.subr.mxu0 0.0
    %617 = vmatpush1.xpose.msra.mxu0 0.0
    %618 = vmatprep.subr.mxu0 0.0
    %619 = vmatpush1.xpose.msra.mxu0 0.0
    %620 = vmatprep.subr.mxu0 0.0
    %621 = vmatpush1.xpose.msra.mxu0 0.0
    %622 = vmatprep.subr.mxu0 0.0
    %623 = vmatpush1.xpose.msra.mxu0 0.0
    %624 = vmatprep.subr.mxu0 0.0
    %625 = vmatpush1.xpose.msra.mxu0 0.0
    %626 = vmatprep.subr.mxu0 0.0
    %627 = vmatpush1.xpose.msra.mxu0 0.0
    %628 = vmatprep.subr.mxu0 0.0
    %629 = vmatpush1.xpose.msra.mxu0 0.0
    %630 = vmatprep.subr.mxu0 0.0
    %631 = vmatpush1.xpose.msra.mxu0 0.0
    %632 = vmatprep.subr.mxu0 0.0
    %633 = vmatpush1.xpose.msra.mxu0 0.0
    %634 = vmatprep.subr.mxu0 0.0
    %635 = vmatpush1.xpose.msra.mxu0 0.0
    %636 = vmatprep.subr.mxu0 0.0
    %637 = vmatpush1.xpose.msra.mxu0 0.0
    %638 = vmatprep.subr.mxu0 0.0
    %639 = vmatpush1.xpose.msra.mxu0 0.0
    %640 = vmatprep.subr.mxu0 0.0
    %641 = vmatpush1.xpose.msra.mxu0 0.0
    %642 = vmatprep.subr.mxu0 0.0
    %643 = vmatpush1.xpose.msra.mxu0 0.0
    %644 = vmatprep.subr.mxu0 0.0
    %645 = vmatpush1.xpose.msra.mxu0 %v612
    %646 = vmatprep.subr.mxu0 0.0
    %647 = vmatpush2.xpose.msra.mxu0 0.0
    %648 = vmatprep.subr.mxu0 0.0
    %649 = vmatpush2.xpose.msra.mxu0 0.0
    %650 = vmatprep.subr.mxu0 0.0
    %651 = vmatpush2.xpose.msra.mxu0 0.0
    %652 = vmatprep.subr.mxu0 0.0
    %653 = vmatpush2.xpose.msra.mxu0 0.0
    %654 = vmatprep.subr.mxu0 0.0
    %655 = vmatpush2.xpose.msra.mxu0 0.0
    %656 = vmatprep.subr.mxu0 0.0
    %657 = vmatpush2.xpose.msra.mxu0 0.0
    %658 = vmatprep.subr.mxu0 0.0
    %659 = vmatpush2.xpose.msra.mxu0 0.0
    %660 = vmatprep.subr.mxu0 0.0
    %661 = vmatpush2.xpose.msra.mxu0 0.0
    %662 = vmatprep.subr.mxu0 0.0
    %663 = vmatpush2.xpose.msra.mxu0 0.0
    %664 = vmatprep.subr.mxu0 0.0
    %665 = vmatpush2.xpose.msra.mxu0 0.0
    %666 = vmatprep.subr.mxu0 0.0
    %667 = vmatpush2.xpose.msra.mxu0 0.0
    %668 = vmatprep.subr.mxu0 0.0
    %669 = vmatpush2.xpose.msra.mxu0 0.0
    %670 = vmatprep.subr.mxu0 0.0
    %671 = vmatpush2.xpose.msra.mxu0 0.0
    %672 = vmatprep.subr.mxu0 0.0
    %673 = vmatpush2.xpose.msra.mxu0 0.0
    %674 = vmatprep.subr.mxu0 0.0
    %675 = vmatpush2.xpose.msra.mxu0 0.0
    %676 = vmatprep.subr.mxu0 0.0
    %677 = vmatpush2.xpose.msra.mxu0 0.0
    %678 = vmatprep.mubr.f32.mxu0 0.0
    %679 = vmatmul.mubr.f32.gmra.mxu0 %v610
    %v680 = vpop.f32.mrf.mxu0
    %v681 = vadd.f32 %v213, %v680
    %v682 = vpop.f32.mrf.mxu0
    %683 = vdwg.mxu0
    %684 = vrot.lane.b32.xlu0 %v372, 96
    %v685 = vpop.permute.xlu0 %684
    %v686 = vsel %vm381, %v372, 0
    %v688 = vsel %vm381, %v685, 0
    %690 = vmatprep.subr.mxu0 0.0
    %691 = vmatpush1.xpose.msra.mxu0 0.0
    %692 = vmatprep.subr.mxu0 0.0
    %693 = vmatpush1.xpose.msra.mxu0 0.0
    %694 = vmatprep.subr.mxu0 0.0
    %695 = vmatpush1.xpose.msra.mxu0 0.0
    %696 = vmatprep.subr.mxu0 0.0
    %697 = vmatpush1.xpose.msra.mxu0 0.0
    %698 = vmatprep.subr.mxu0 0.0
    %699 = vmatpush1.xpose.msra.mxu0 0.0
    %700 = vmatprep.subr.mxu0 0.0
    %701 = vmatpush1.xpose.msra.mxu0 0.0
    %702 = vmatprep.subr.mxu0 0.0
    %703 = vmatpush1.xpose.msra.mxu0 0.0
    %704 = vmatprep.subr.mxu0 0.0
    %705 = vmatpush1.xpose.msra.mxu0 0.0
    %706 = vmatprep.subr.mxu0 0.0
    %707 = vmatpush1.xpose.msra.mxu0 0.0
    %708 = vmatprep.subr.mxu0 0.0
    %709 = vmatpush1.xpose.msra.mxu0 0.0
    %710 = vmatprep.subr.mxu0 0.0
    %711 = vmatpush1.xpose.msra.mxu0 0.0
    %712 = vmatprep.subr.mxu0 0.0
    %713 = vmatpush1.xpose.msra.mxu0 0.0
    %714 = vmatprep.subr.mxu0 0.0
    %715 = vmatpush1.xpose.msra.mxu0 0.0
    %716 = vmatprep.subr.mxu0 0.0
    %717 = vmatpush1.xpose.msra.mxu0 0.0
    %718 = vmatprep.subr.mxu0 0.0
    %719 = vmatpush1.xpose.msra.mxu0 0.0
    %720 = vmatprep.subr.mxu0 0.0
    %721 = vmatpush1.xpose.msra.mxu0 %v688
    %722 = vmatprep.subr.mxu0 0.0
    %723 = vmatpush2.xpose.msra.mxu0 0.0
    %724 = vmatprep.subr.mxu0 0.0
    %725 = vmatpush2.xpose.msra.mxu0 0.0
    %726 = vmatprep.subr.mxu0 0.0
    %727 = vmatpush2.xpose.msra.mxu0 0.0
    %728 = vmatprep.subr.mxu0 0.0
    %729 = vmatpush2.xpose.msra.mxu0 0.0
    %730 = vmatprep.subr.mxu0 0.0
    %731 = vmatpush2.xpose.msra.mxu0 0.0
    %732 = vmatprep.subr.mxu0 0.0
    %733 = vmatpush2.xpose.msra.mxu0 0.0
    %734 = vmatprep.subr.mxu0 0.0
    %735 = vmatpush2.xpose.msra.mxu0 0.0
    %736 = vmatprep.subr.mxu0 0.0
    %737 = vmatpush2.xpose.msra.mxu0 0.0
    %738 = vmatprep.subr.mxu0 0.0
    %739 = vmatpush2.xpose.msra.mxu0 0.0
    %740 = vmatprep.subr.mxu0 0.0
    %741 = vmatpush2.xpose.msra.mxu0 0.0
    %742 = vmatprep.subr.mxu0 0.0
    %743 = vmatpush2.xpose.msra.mxu0 0.0
    %744 = vmatprep.subr.mxu0 0.0
    %745 = vmatpush2.xpose.msra.mxu0 0.0
    %746 = vmatprep.subr.mxu0 0.0
    %747 = vmatpush2.xpose.msra.mxu0 0.0
    %748 = vmatprep.subr.mxu0 0.0
    %749 = vmatpush2.xpose.msra.mxu0 0.0
    %750 = vmatprep.subr.mxu0 0.0
    %751 = vmatpush2.xpose.msra.mxu0 0.0
    %752 = vmatprep.subr.mxu0 0.0
    %753 = vmatpush2.xpose.msra.mxu0 0.0
    %754 = vmatprep.mubr.f32.mxu0 0.0
    %755 = vmatmul.mubr.f32.gmra.mxu0 %v686
    %v756 = vpop.f32.mrf.mxu0
    %v757 = vadd.f32 %v214, %v756
    %v758 = vpop.f32.mrf.mxu0
    %759 = vdwg.mxu0
    %760 = vrot.lane.b32.xlu0 %v374, 96
    %v761 = vpop.permute.xlu0 %760
    %v762 = vsel %vm381, %v374, 0
    %v764 = vsel %vm381, %v761, 0
    %766 = vmatprep.subr.mxu0 0.0
    %767 = vmatpush1.xpose.msra.mxu0 0.0
    %768 = vmatprep.subr.mxu0 0.0
    %769 = vmatpush1.xpose.msra.mxu0 0.0
    %770 = vmatprep.subr.mxu0 0.0
    %771 = vmatpush1.xpose.msra.mxu0 0.0
    %772 = vmatprep.subr.mxu0 0.0
    %773 = vmatpush1.xpose.msra.mxu0 0.0
    %774 = vmatprep.subr.mxu0 0.0
    %775 = vmatpush1.xpose.msra.mxu0 0.0
    %776 = vmatprep.subr.mxu0 0.0
    %777 = vmatpush1.xpose.msra.mxu0 0.0
    %778 = vmatprep.subr.mxu0 0.0
    %779 = vmatpush1.xpose.msra.mxu0 0.0
    %780 = vmatprep.subr.mxu0 0.0
    %781 = vmatpush1.xpose.msra.mxu0 0.0
    %782 = vmatprep.subr.mxu0 0.0
    %783 = vmatpush1.xpose.msra.mxu0 0.0
    %784 = vmatprep.subr.mxu0 0.0
    %785 = vmatpush1.xpose.msra.mxu0 0.0
    %786 = vmatprep.subr.mxu0 0.0
    %787 = vmatpush1.xpose.msra.mxu0 0.0
    %788 = vmatprep.subr.mxu0 0.0
    %789 = vmatpush1.xpose.msra.mxu0 0.0
    %790 = vmatprep.subr.mxu0 0.0
    %791 = vmatpush1.xpose.msra.mxu0 0.0
    %792 = vmatprep.subr.mxu0 0.0
    %793 = vmatpush1.xpose.msra.mxu0 0.0
    %794 = vmatprep.subr.mxu0 0.0
    %795 = vmatpush1.xpose.msra.mxu0 0.0
    %796 = vmatprep.subr.mxu0 0.0
    %797 = vmatpush1.xpose.msra.mxu0 %v764
    %798 = vmatprep.subr.mxu0 0.0
    %799 = vmatpush2.xpose.msra.mxu0 0.0
    %800 = vmatprep.subr.mxu0 0.0
    %801 = vmatpush2.xpose.msra.mxu0 0.0
    %802 = vmatprep.subr.mxu0 0.0
    %803 = vmatpush2.xpose.msra.mxu0 0.0
    %804 = vmatprep.subr.mxu0 0.0
    %805 = vmatpush2.xpose.msra.mxu0 0.0
    %806 = vmatprep.subr.mxu0 0.0
    %807 = vmatpush2.xpose.msra.mxu0 0.0
    %808 = vmatprep.subr.mxu0 0.0
    %809 = vmatpush2.xpose.msra.mxu0 0.0
    %810 = vmatprep.subr.mxu0 0.0
    %811 = vmatpush2.xpose.msra.mxu0 0.0
    %812 = vmatprep.subr.mxu0 0.0
    %813 = vmatpush2.xpose.msra.mxu0 0.0
    %814 = vmatprep.subr.mxu0 0.0
    %815 = vmatpush2.xpose.msra.mxu0 0.0
    %816 = vmatprep.subr.mxu0 0.0
    %817 = vmatpush2.xpose.msra.mxu0 0.0
    %818 = vmatprep.subr.mxu0 0.0
    %819 = vmatpush2.xpose.msra.mxu0 0.0
    %820 = vmatprep.subr.mxu0 0.0
    %821 = vmatpush2.xpose.msra.mxu0 0.0
    %822 = vmatprep.subr.mxu0 0.0
    %823 = vmatpush2.xpose.msra.mxu0 0.0
    %824 = vmatprep.subr.mxu0 0.0
    %825 = vmatpush2.xpose.msra.mxu0 0.0
    %826 = vmatprep.subr.mxu0 0.0
    %827 = vmatpush2.xpose.msra.mxu0 0.0
    %828 = vmatprep.subr.mxu0 0.0
    %829 = vmatpush2.xpose.msra.mxu0 0.0
    %830 = vmatprep.mubr.f32.mxu0 0.0
    %831 = vmatmul.mubr.f32.gmra.mxu0 %v762
    %v832 = vpop.f32.mrf.mxu0
    %v833 = vadd.f32 %v215, %v832
    %v834 = vpop.f32.mrf.mxu0
    %835 = vdwg.mxu0
    %836 = vrot.lane.b32.xlu0 %v376, 96
    %v837 = vpop.permute.xlu0 %836
    %v838 = vsel %vm381, %v376, 0
    %v840 = vsel %vm381, %v837, 0
    %842 = vmatprep.subr.mxu0 0.0
    %843 = vmatpush1.xpose.msra.mxu0 0.0
    %844 = vmatprep.subr.mxu0 0.0
    %845 = vmatpush1.xpose.msra.mxu0 0.0
    %846 = vmatprep.subr.mxu0 0.0
    %847 = vmatpush1.xpose.msra.mxu0 0.0
    %848 = vmatprep.subr.mxu0 0.0
    %849 = vmatpush1.xpose.msra.mxu0 0.0
    %850 = vmatprep.subr.mxu0 0.0
    %851 = vmatpush1.xpose.msra.mxu0 0.0
    %852 = vmatprep.subr.mxu0 0.0
    %853 = vmatpush1.xpose.msra.mxu0 0.0
    %854 = vmatprep.subr.mxu0 0.0
    %855 = vmatpush1.xpose.msra.mxu0 0.0
    %856 = vmatprep.subr.mxu0 0.0
    %857 = vmatpush1.xpose.msra.mxu0 0.0
    %858 = vmatprep.subr.mxu0 0.0
    %859 = vmatpush1.xpose.msra.mxu0 0.0
    %860 = vmatprep.subr.mxu0 0.0
    %861 = vmatpush1.xpose.msra.mxu0 0.0
    %862 = vmatprep.subr.mxu0 0.0
    %863 = vmatpush1.xpose.msra.mxu0 0.0
    %864 = vmatprep.subr.mxu0 0.0
    %865 = vmatpush1.xpose.msra.mxu0 0.0
    %866 = vmatprep.subr.mxu0 0.0
    %867 = vmatpush1.xpose.msra.mxu0 0.0
    %868 = vmatprep.subr.mxu0 0.0
    %869 = vmatpush1.xpose.msra.mxu0 0.0
    %870 = vmatprep.subr.mxu0 0.0
    %871 = vmatpush1.xpose.msra.mxu0 0.0
    %872 = vmatprep.subr.mxu0 0.0
    %873 = vmatpush1.xpose.msra.mxu0 %v840
    %874 = vmatprep.subr.mxu0 0.0
    %875 = vmatpush2.xpose.msra.mxu0 0.0
    %876 = vmatprep.subr.mxu0 0.0
    %877 = vmatpush2.xpose.msra.mxu0 0.0
    %878 = vmatprep.subr.mxu0 0.0
    %879 = vmatpush2.xpose.msra.mxu0 0.0
    %880 = vmatprep.subr.mxu0 0.0
    %881 = vmatpush2.xpose.msra.mxu0 0.0
    %882 = vmatprep.subr.mxu0 0.0
    %883 = vmatpush2.xpose.msra.mxu0 0.0
    %884 = vmatprep.subr.mxu0 0.0
    %885 = vmatpush2.xpose.msra.mxu0 0.0
    %886 = vmatprep.subr.mxu0 0.0
    %887 = vmatpush2.xpose.msra.mxu0 0.0
    %888 = vmatprep.subr.mxu0 0.0
    %889 = vmatpush2.xpose.msra.mxu0 0.0
    %890 = vmatprep.subr.mxu0 0.0
    %891 = vmatpush2.xpose.msra.mxu0 0.0
    %892 = vmatprep.subr.mxu0 0.0
    %893 = vmatpush2.xpose.msra.mxu0 0.0
    %894 = vmatprep.subr.mxu0 0.0
    %895 = vmatpush2.xpose.msra.mxu0 0.0
    %896 = vmatprep.subr.mxu0 0.0
    %897 = vmatpush2.xpose.msra.mxu0 0.0
    %898 = vmatprep.subr.mxu0 0.0
    %899 = vmatpush2.xpose.msra.mxu0 0.0
    %900 = vmatprep.subr.mxu0 0.0
    %901 = vmatpush2.xpose.msra.mxu0 0.0
    %902 = vmatprep.subr.mxu0 0.0
    %903 = vmatpush2.xpose.msra.mxu0 0.0
    %904 = vmatprep.subr.mxu0 0.0
    %905 = vmatpush2.xpose.msra.mxu0 0.0
    %906 = vmatprep.mubr.f32.mxu0 0.0
    %907 = vmatmul.mubr.f32.gmra.mxu0 %v838
    %v908 = vpop.f32.mrf.mxu0
    %v909 = vadd.f32 %v216, %v908
    %v910 = vpop.f32.mrf.mxu0
    %911 = vdwg.mxu0
    %912 = vrot.lane.b32.xlu0 %v378, 96
    %v913 = vpop.permute.xlu0 %912
    %v914 = vsel %vm381, %v378, 0
    %v916 = vsel %vm381, %v913, 0
    %918 = vmatprep.subr.mxu0 0.0
    %919 = vmatpush1.xpose.msra.mxu0 0.0
    %920 = vmatprep.subr.mxu0 0.0
    %921 = vmatpush1.xpose.msra.mxu0 0.0
    %922 = vmatprep.subr.mxu0 0.0
    %923 = vmatpush1.xpose.msra.mxu0 0.0
    %924 = vmatprep.subr.mxu0 0.0
    %925 = vmatpush1.xpose.msra.mxu0 0.0
    %926 = vmatprep.subr.mxu0 0.0
    %927 = vmatpush1.xpose.msra.mxu0 0.0
    %928 = vmatprep.subr.mxu0 0.0
    %929 = vmatpush1.xpose.msra.mxu0 0.0
    %930 = vmatprep.subr.mxu0 0.0
    %931 = vmatpush1.xpose.msra.mxu0 0.0
    %932 = vmatprep.subr.mxu0 0.0
    %933 = vmatpush1.xpose.msra.mxu0 0.0
    %934 = vmatprep.subr.mxu0 0.0
    %935 = vmatpush1.xpose.msra.mxu0 0.0
    %936 = vmatprep.subr.mxu0 0.0
    %937 = vmatpush1.xpose.msra.mxu0 0.0
    %938 = vmatprep.subr.mxu0 0.0
    %939 = vmatpush1.xpose.msra.mxu0 0.0
    %940 = vmatprep.subr.mxu0 0.0
    %941 = vmatpush1.xpose.msra.mxu0 0.0
    %942 = vmatprep.subr.mxu0 0.0
    %943 = vmatpush1.xpose.msra.mxu0 0.0
    %944 = vmatprep.subr.mxu0 0.0
    %945 = vmatpush1.xpose.msra.mxu0 0.0
    %946 = vmatprep.subr.mxu0 0.0
    %947 = vmatpush1.xpose.msra.mxu0 0.0
    %948 = vmatprep.subr.mxu0 0.0
    %949 = vmatpush1.xpose.msra.mxu0 %v916
    %950 = vmatprep.subr.mxu0 0.0
    %951 = vmatpush2.xpose.msra.mxu0 0.0
    %952 = vmatprep.subr.mxu0 0.0
    %953 = vmatpush2.xpose.msra.mxu0 0.0
    %954 = vmatprep.subr.mxu0 0.0
    %955 = vmatpush2.xpose.msra.mxu0 0.0
    %956 = vmatprep.subr.mxu0 0.0
    %957 = vmatpush2.xpose.msra.mxu0 0.0
    %958 = vmatprep.subr.mxu0 0.0
    %959 = vmatpush2.xpose.msra.mxu0 0.0
    %960 = vmatprep.subr.mxu0 0.0
    %961 = vmatpush2.xpose.msra.mxu0 0.0
    %962 = vmatprep.subr.mxu0 0.0
    %963 = vmatpush2.xpose.msra.mxu0 0.0
    %964 = vmatprep.subr.mxu0 0.0
    %965 = vmatpush2.xpose.msra.mxu0 0.0
    %966 = vmatprep.subr.mxu0 0.0
    %967 = vmatpush2.xpose.msra.mxu0 0.0
    %968 = vmatprep.subr.mxu0 0.0
    %969 = vmatpush2.xpose.msra.mxu0 0.0
    %970 = vmatprep.subr.mxu0 0.0
    %971 = vmatpush2.xpose.msra.mxu0 0.0
    %972 = vmatprep.subr.mxu0 0.0
    %973 = vmatpush2.xpose.msra.mxu0 0.0
    %974 = vmatprep.subr.mxu0 0.0
    %975 = vmatpush2.xpose.msra.mxu0 0.0
    %976 = vmatprep.subr.mxu0 0.0
    %977 = vmatpush2.xpose.msra.mxu0 0.0
    %978 = vmatprep.subr.mxu0 0.0
    %979 = vmatpush2.xpose.msra.mxu0 0.0
    %980 = vmatprep.subr.mxu0 0.0
    %981 = vmatpush2.xpose.msra.mxu0 0.0
    %982 = vmatprep.mubr.f32.mxu0 0.0
    %983 = vmatmul.mubr.f32.gmra.mxu0 %v914
    %v984 = vpop.f32.mrf.mxu0
    %v985 = vadd.f32 %v217, %v984
    %v986 = vpop.f32.mrf.mxu0
    %987 = vdwg.mxu0
    %v988 = vsel %vm381, %v453, -inf
    %989 = vmax.xlane.f32.xlu0 %v988
    %v990 = vpop.xlane.xlu0 %989
    %v991 = vsel %vm381, %v529, -inf
    %992 = vmax.xlane.f32.xlu0 %v991
    %v993 = vpop.xlane.xlu0 %992
    %v994 = vsel %vm381, %v605, -inf
    %995 = vmax.xlane.f32.xlu0 %v994
    %v996 = vpop.xlane.xlu0 %995
    %v997 = vsel %vm381, %v681, -inf
    %998 = vmax.xlane.f32.xlu0 %v997
    %v999 = vpop.xlane.xlu0 %998
    %v1000 = vsel %vm381, %v757, -inf
    %1001 = vmax.xlane.f32.xlu0 %v1000
    %v1002 = vpop.xlane.xlu0 %1001
    %v1003 = vsel %vm381, %v833, -inf
    %1004 = vmax.xlane.f32.xlu0 %v1003
    %v1005 = vpop.xlane.xlu0 %1004
    %v1006 = vsel %vm381, %v909, -inf
    %1007 = vmax.xlane.f32.xlu0 %v1006
    %v1008 = vpop.xlane.xlu0 %1007
    %v1009 = vsel %vm381, %v985, -inf
    %1010 = vmax.xlane.f32.xlu0 %v1009
    %v1011 = vpop.xlane.xlu0 %1010
    %v1012 = vsub.f32 %v453, %v990
    %v1013 = vsub.f32 %v529, %v993
    %v1014 = vsub.f32 %v605, %v996
    %v1015 = vsub.f32 %v681, %v999
    %v1016 = vsub.f32 %v757, %v1002
    %v1017 = vsub.f32 %v833, %v1005
    %v1018 = vsub.f32 %v909, %v1008
    %v1019 = vsub.f32 %v985, %v1011
    %v1020 = vmul.f32 %v1012, 1.442695
    %v1021 = vpow.pop %v1020
    %v1022 = vmul.f32 %v1013, 1.442695
    %v1023 = vpow.pop %v1022
    %v1024 = vmul.f32 %v1014, 1.442695
    %v1025 = vpow.pop %v1024
    %v1026 = vmul.f32 %v1015, 1.442695
    %v1027 = vpow.pop %v1026
    %v1028 = vmul.f32 %v1016, 1.442695
    %v1029 = vpow.pop %v1028
    %v1030 = vmul.f32 %v1017, 1.442695
    %v1031 = vpow.pop %v1030
    %v1032 = vmul.f32 %v1018, 1.442695
    %v1033 = vpow.pop %v1032
    %v1034 = vmul.f32 %v1019, 1.442695
    %v1035 = vpow.pop %v1034
    %v1036 = vsel %vm381, %v1021, 0.0
    %1037 = vadd.xlane.f32.xlu0 %v1036
    %v1038 = vpop.xlane.xlu0 %1037
    %v1039 = vsel %vm381, %v1023, 0.0
    %1040 = vadd.xlane.f32.xlu0 %v1039
    %v1041 = vpop.xlane.xlu0 %1040
    %v1042 = vsel %vm381, %v1025, 0.0
    %1043 = vadd.xlane.f32.xlu0 %v1042
    %v1044 = vpop.xlane.xlu0 %1043
    %v1045 = vsel %vm381, %v1027, 0.0
    %1046 = vadd.xlane.f32.xlu0 %v1045
    %v1047 = vpop.xlane.xlu0 %1046
    %v1048 = vsel %vm381, %v1029, 0.0
    %1049 = vadd.xlane.f32.xlu0 %v1048
    %v1050 = vpop.xlane.xlu0 %1049
    %v1051 = vsel %vm381, %v1031, 0.0
    %1052 = vadd.xlane.f32.xlu0 %v1051
    %v1053 = vpop.xlane.xlu0 %1052
    %v1054 = vsel %vm381, %v1033, 0.0
    %1055 = vadd.xlane.f32.xlu0 %v1054
    %v1056 = vpop.xlane.xlu0 %1055
    %v1057 = vsel %vm381, %v1035, 0.0
    %1058 = vadd.xlane.f32.xlu0 %v1057
    %v1059 = vpop.xlane.xlu0 %1058
    %v1060 = vrcp.pop %v1038
    %v1061 = vrcp.pop %v1041
    %v1062 = vrcp.pop %v1044
    %v1063 = vrcp.pop %v1047
    %v1064 = vrcp.pop %v1050
    %v1065 = vrcp.pop %v1053
    %v1066 = vrcp.pop %v1056
    %v1067 = vrcp.pop %v1059
    %v1068 = vmul.f32 %v1021, %v1060
    %v1069 = vmul.f32 %v1023, %v1061
    %v1070 = vmul.f32 %v1025, %v1062
    %v1071 = vmul.f32 %v1027, %v1063
    %v1072 = vmul.f32 %v1029, %v1064
    %v1073 = vmul.f32 %v1031, %v1065
    %v1074 = vmul.f32 %v1033, %v1066
    %v1075 = vmul.f32 %v1035, %v1067
    %1076 = vrot.lane.b32.xlu0 %v352, 64
    %v1077 = vpop.permute.xlu0 %1076
    %v1080 = vsel %vm381, %v1068, 0
    %1082 = vmatprep.subr.mxu0 0.0
    %1083 = vmatpush1.msra.mxu0 0.0
    %1084 = vmatprep.subr.mxu0 0.0
    %1085 = vmatpush1.msra.mxu0 0.0
    %1086 = vmatprep.subr.mxu0 0.0
    %1087 = vmatpush1.msra.mxu0 0.0
    %1088 = vmatprep.subr.mxu0 0.0
    %1089 = vmatpush1.msra.mxu0 0.0
    %1090 = vmatprep.subr.mxu0 0.0
    %1091 = vmatpush1.msra.mxu0 0.0
    %1092 = vmatprep.subr.mxu0 0.0
    %1093 = vmatpush1.msra.mxu0 0.0
    %1094 = vmatprep.subr.mxu0 0.0
    %1095 = vmatpush1.msra.mxu0 0.0
    %1096 = vmatprep.subr.mxu0 0.0
    %1097 = vmatpush1.msra.mxu0 0.0
    %1098 = vmatprep.subr.mxu0 0.0
    %1099 = vmatpush1.msra.mxu0 0.0
    %1100 = vmatprep.subr.mxu0 0.0
    %1101 = vmatpush1.msra.mxu0 0.0
    %1102 = vmatprep.subr.mxu0 0.0
    %1103 = vmatpush1.msra.mxu0 0.0
    %1104 = vmatprep.subr.mxu0 0.0
    %1105 = vmatpush1.msra.mxu0 0.0
    %1106 = vmatprep.subr.mxu0 0.0
    %1107 = vmatpush1.msra.mxu0 0.0
    %1108 = vmatprep.subr.mxu0 0.0
    %1109 = vmatpush1.msra.mxu0 0.0
    %1110 = vmatprep.subr.mxu0 0.0
    %1111 = vmatpush1.msra.mxu0 0.0
    %1112 = vmatprep.subr.mxu0 0.0
    %1113 = vmatpush1.msra.mxu0 %v1077
    %1114 = vmatprep.subr.mxu0 0.0
    %1115 = vmatpush2.msra.mxu0 0.0
    %1116 = vmatprep.subr.mxu0 0.0
    %1117 = vmatpush2.msra.mxu0 0.0
    %1118 = vmatprep.subr.mxu0 0.0
    %1119 = vmatpush2.msra.mxu0 0.0
    %1120 = vmatprep.subr.mxu0 0.0
    %1121 = vmatpush2.msra.mxu0 0.0
    %1122 = vmatprep.subr.mxu0 0.0
    %1123 = vmatpush2.msra.mxu0 0.0
    %1124 = vmatprep.subr.mxu0 0.0
    %1125 = vmatpush2.msra.mxu0 0.0
    %1126 = vmatprep.subr.mxu0 0.0
    %1127 = vmatpush2.msra.mxu0 0.0
    %1128 = vmatprep.subr.mxu0 0.0
    %1129 = vmatpush2.msra.mxu0 0.0
    %1130 = vmatprep.subr.mxu0 0.0
    %1131 = vmatpush2.msra.mxu0 0.0
    %1132 = vmatprep.subr.mxu0 0.0
    %1133 = vmatpush2.msra.mxu0 0.0
    %1134 = vmatprep.subr.mxu0 0.0
    %1135 = vmatpush2.msra.mxu0 0.0
    %1136 = vmatprep.subr.mxu0 0.0
    %1137 = vmatpush2.msra.mxu0 0.0
    %1138 = vmatprep.subr.mxu0 0.0
    %1139 = vmatpush2.msra.mxu0 0.0
    %1140 = vmatprep.subr.mxu0 0.0
    %1141 = vmatpush2.msra.mxu0 0.0
    %1142 = vmatprep.subr.mxu0 0.0
    %1143 = vmatpush2.msra.mxu0 0.0
    %1144 = vmatprep.subr.mxu0 0.0
    %1145 = vmatpush2.msra.mxu0 0.0
    %1146 = vmatprep.mubr.f32.mxu0 0.0
    %1147 = vmatmul.mubr.f32.gmra.mxu0 %v1080
    %v1148 = vpop.f32.mrf.mxu0
    %v1149 = vadd.f32 0.0, %v1148
    %v1150 = vpop.f32.mrf.mxu0
    %1151 = vdwg.mxu0
    %1152 = vrot.lane.b32.xlu0 %v357, 64
    %v1153 = vpop.permute.xlu0 %1152
    %v1156 = vsel %vm381, %v1069, 0
    %1158 = vmatprep.subr.mxu0 0.0
    %1159 = vmatpush1.msra.mxu0 0.0
    %1160 = vmatprep.subr.mxu0 0.0
    %1161 = vmatpush1.msra.mxu0 0.0
    %1162 = vmatprep.subr.mxu0 0.0
    %1163 = vmatpush1.msra.mxu0 0.0
    %1164 = vmatprep.subr.mxu0 0.0
    %1165 = vmatpush1.msra.mxu0 0.0
    %1166 = vmatprep.subr.mxu0 0.0
    %1167 = vmatpush1.msra.mxu0 0.0
    %1168 = vmatprep.subr.mxu0 0.0
    %1169 = vmatpush1.msra.mxu0 0.0
    %1170 = vmatprep.subr.mxu0 0.0
    %1171 = vmatpush1.msra.mxu0 0.0
    %1172 = vmatprep.subr.mxu0 0.0
    %1173 = vmatpush1.msra.mxu0 0.0
    %1174 = vmatprep.subr.mxu0 0.0
    %1175 = vmatpush1.msra.mxu0 0.0
    %1176 = vmatprep.subr.mxu0 0.0
    %1177 = vmatpush1.msra.mxu0 0.0
    %1178 = vmatprep.subr.mxu0 0.0
    %1179 = vmatpush1.msra.mxu0 0.0
    %1180 = vmatprep.subr.mxu0 0.0
    %1181 = vmatpush1.msra.mxu0 0.0
    %1182 = vmatprep.subr.mxu0 0.0
    %1183 = vmatpush1.msra.mxu0 0.0
    %1184 = vmatprep.subr.mxu0 0.0
    %1185 = vmatpush1.msra.mxu0 0.0
    %1186 = vmatprep.subr.mxu0 0.0
    %1187 = vmatpush1.msra.mxu0 0.0
    %1188 = vmatprep.subr.mxu0 0.0
    %1189 = vmatpush1.msra.mxu0 %v1153
    %1190 = vmatprep.subr.mxu0 0.0
    %1191 = vmatpush2.msra.mxu0 0.0
    %1192 = vmatprep.subr.mxu0 0.0
    %1193 = vmatpush2.msra.mxu0 0.0
    %1194 = vmatprep.subr.mxu0 0.0
    %1195 = vmatpush2.msra.mxu0 0.0
    %1196 = vmatprep.subr.mxu0 0.0
    %1197 = vmatpush2.msra.mxu0 0.0
    %1198 = vmatprep.subr.mxu0 0.0
    %1199 = vmatpush2.msra.mxu0 0.0
    %1200 = vmatprep.subr.mxu0 0.0
    %1201 = vmatpush2.msra.mxu0 0.0
    %1202 = vmatprep.subr.mxu0 0.0
    %1203 = vmatpush2.msra.mxu0 0.0
    %1204 = vmatprep.subr.mxu0 0.0
    %1205 = vmatpush2.msra.mxu0 0.0
    %1206 = vmatprep.subr.mxu0 0.0
    %1207 = vmatpush2.msra.mxu0 0.0
    %1208 = vmatprep.subr.mxu0 0.0
    %1209 = vmatpush2.msra.mxu0 0.0
    %1210 = vmatprep.subr.mxu0 0.0
    %1211 = vmatpush2.msra.mxu0 0.0
    %1212 = vmatprep.subr.mxu0 0.0
    %1213 = vmatpush2.msra.mxu0 0.0
    %1214 = vmatprep.subr.mxu0 0.0
    %1215 = vmatpush2.msra.mxu0 0.0
    %1216 = vmatprep.subr.mxu0 0.0
    %1217 = vmatpush2.msra.mxu0 0.0
    %1218 = vmatprep.subr.mxu0 0.0
    %1219 = vmatpush2.msra.mxu0 0.0
    %1220 = vmatprep.subr.mxu0 0.0
    %1221 = vmatpush2.msra.mxu0 0.0
    %1222 = vmatprep.mubr.f32.mxu0 0.0
    %1223 = vmatmul.mubr.f32.gmra.mxu0 %v1156
    %v1224 = vpop.f32.mrf.mxu0
    %v1225 = vadd.f32 0.0, %v1224
    %v1226 = vpop.f32.mrf.mxu0
    %1227 = vdwg.mxu0
    %1228 = vrot.lane.b32.xlu0 %v368, 64
    %v1229 = vpop.permute.xlu0 %1228
    %v1232 = vsel %vm381, %v1070, 0
    %1234 = vmatprep.subr.mxu0 0.0
    %1235 = vmatpush1.msra.mxu0 0.0
    %1236 = vmatprep.subr.mxu0 0.0
    %1237 = vmatpush1.msra.mxu0 0.0
    %1238 = vmatprep.subr.mxu0 0.0
    %1239 = vmatpush1.msra.mxu0 0.0
    %1240 = vmatprep.subr.mxu0 0.0
    %1241 = vmatpush1.msra.mxu0 0.0
    %1242 = vmatprep.subr.mxu0 0.0
    %1243 = vmatpush1.msra.mxu0 0.0
    %1244 = vmatprep.subr.mxu0 0.0
    %1245 = vmatpush1.msra.mxu0 0.0
    %1246 = vmatprep.subr.mxu0 0.0
    %1247 = vmatpush1.msra.mxu0 0.0
    %1248 = vmatprep.subr.mxu0 0.0
    %1249 = vmatpush1.msra.mxu0 0.0
    %1250 = vmatprep.subr.mxu0 0.0
    %1251 = vmatpush1.msra.mxu0 0.0
    %1252 = vmatprep.subr.mxu0 0.0
    %1253 = vmatpush1.msra.mxu0 0.0
    %1254 = vmatprep.subr.mxu0 0.0
    %1255 = vmatpush1.msra.mxu0 0.0
    %1256 = vmatprep.subr.mxu0 0.0
    %1257 = vmatpush1.msra.mxu0 0.0
    %1258 = vmatprep.subr.mxu0 0.0
    %1259 = vmatpush1.msra.mxu0 0.0
    %1260 = vmatprep.subr.mxu0 0.0
    %1261 = vmatpush1.msra.mxu0 0.0
    %1262 = vmatprep.subr.mxu0 0.0
    %1263 = vmatpush1.msra.mxu0 0.0
    %1264 = vmatprep.subr.mxu0 0.0
    %1265 = vmatpush1.msra.mxu0 %v1229
    %1266 = vmatprep.subr.mxu0 0.0
    %1267 = vmatpush2.msra.mxu0 0.0
    %1268 = vmatprep.subr.mxu0 0.0
    %1269 = vmatpush2.msra.mxu0 0.0
    %1270 = vmatprep.subr.mxu0 0.0
    %1271 = vmatpush2.msra.mxu0 0.0
    %1272 = vmatprep.subr.mxu0 0.0
    %1273 = vmatpush2.msra.mxu0 0.0
    %1274 = vmatprep.subr.mxu0 0.0
    %1275 = vmatpush2.msra.mxu0 0.0
    %1276 = vmatprep.subr.mxu0 0.0
    %1277 = vmatpush2.msra.mxu0 0.0
    %1278 = vmatprep.subr.mxu0 0.0
    %1279 = vmatpush2.msra.mxu0 0.0
    %1280 = vmatprep.subr.mxu0 0.0
    %1281 = vmatpush2.msra.mxu0 0.0
    %1282 = vmatprep.subr.mxu0 0.0
    %1283 = vmatpush2.msra.mxu0 0.0
    %1284 = vmatprep.subr.mxu0 0.0
    %1285 = vmatpush2.msra.mxu0 0.0
    %1286 = vmatprep.subr.mxu0 0.0
    %1287 = vmatpush2.msra.mxu0 0.0
    %1288 = vmatprep.subr.mxu0 0.0
    %1289 = vmatpush2.msra.mxu0 0.0
    %1290 = vmatprep.subr.mxu0 0.0
    %1291 = vmatpush2.msra.mxu0 0.0
    %1292 = vmatprep.subr.mxu0 0.0
    %1293 = vmatpush2.msra.mxu0 0.0
    %1294 = vmatprep.subr.mxu0 0.0
    %1295 = vmatpush2.msra.mxu0 0.0
    %1296 = vmatprep.subr.mxu0 0.0
    %1297 = vmatpush2.msra.mxu0 0.0
    %1298 = vmatprep.mubr.f32.mxu0 0.0
    %1299 = vmatmul.mubr.f32.gmra.mxu0 %v1232
    %v1300 = vpop.f32.mrf.mxu0
    %v1301 = vadd.f32 0.0, %v1300
    %v1302 = vpop.f32.mrf.mxu0
    %1303 = vdwg.mxu0
    %1304 = vrot.lane.b32.xlu0 %v370, 64
    %v1305 = vpop.permute.xlu0 %1304
    %v1308 = vsel %vm381, %v1071, 0
    %1310 = vmatprep.subr.mxu0 0.0
    %1311 = vmatpush1.msra.mxu0 0.0
    %1312 = vmatprep.subr.mxu0 0.0
    %1313 = vmatpush1.msra.mxu0 0.0
    %1314 = vmatprep.subr.mxu0 0.0
    %1315 = vmatpush1.msra.mxu0 0.0
    %1316 = vmatprep.subr.mxu0 0.0
    %1317 = vmatpush1.msra.mxu0 0.0
    %1318 = vmatprep.subr.mxu0 0.0
    %1319 = vmatpush1.msra.mxu0 0.0
    %1320 = vmatprep.subr.mxu0 0.0
    %1321 = vmatpush1.msra.mxu0 0.0
    %1322 = vmatprep.subr.mxu0 0.0
    %1323 = vmatpush1.msra.mxu0 0.0
    %1324 = vmatprep.subr.mxu0 0.0
    %1325 = vmatpush1.msra.mxu0 0.0
    %1326 = vmatprep.subr.mxu0 0.0
    %1327 = vmatpush1.msra.mxu0 0.0
    %1328 = vmatprep.subr.mxu0 0.0
    %1329 = vmatpush1.msra.mxu0 0.0
    %1330 = vmatprep.subr.mxu0 0.0
    %1331 = vmatpush1.msra.mxu0 0.0
    %1332 = vmatprep.subr.mxu0 0.0
    %1333 = vmatpush1.msra.mxu0 0.0
    %1334 = vmatprep.subr.mxu0 0.0
    %1335 = vmatpush1.msra.mxu0 0.0
    %1336 = vmatprep.subr.mxu0 0.0
    %1337 = vmatpush1.msra.mxu0 0.0
    %1338 = vmatprep.subr.mxu0 0.0
    %1339 = vmatpush1.msra.mxu0 0.0
    %1340 = vmatprep.subr.mxu0 0.0
    %1341 = vmatpush1.msra.mxu0 %v1305
    %1342 = vmatprep.subr.mxu0 0.0
    %1343 = vmatpush2.msra.mxu0 0.0
    %1344 = vmatprep.subr.mxu0 0.0
    %1345 = vmatpush2.msra.mxu0 0.0
    %1346 = vmatprep.subr.mxu0 0.0
    %1347 = vmatpush2.msra.mxu0 0.0
    %1348 = vmatprep.subr.mxu0 0.0
    %1349 = vmatpush2.msra.mxu0 0.0
    %1350 = vmatprep.subr.mxu0 0.0
    %1351 = vmatpush2.msra.mxu0 0.0
    %1352 = vmatprep.subr.mxu0 0.0
    %1353 = vmatpush2.msra.mxu0 0.0
    %1354 = vmatprep.subr.mxu0 0.0
    %1355 = vmatpush2.msra.mxu0 0.0
    %1356 = vmatprep.subr.mxu0 0.0
    %1357 = vmatpush2.msra.mxu0 0.0
    %1358 = vmatprep.subr.mxu0 0.0
    %1359 = vmatpush2.msra.mxu0 0.0
    %1360 = vmatprep.subr.mxu0 0.0
    %1361 = vmatpush2.msra.mxu0 0.0
    %1362 = vmatprep.subr.mxu0 0.0
    %1363 = vmatpush2.msra.mxu0 0.0
    %1364 = vmatprep.subr.mxu0 0.0
    %1365 = vmatpush2.msra.mxu0 0.0
    %1366 = vmatprep.subr.mxu0 0.0
    %1367 = vmatpush2.msra.mxu0 0.0
    %1368 = vmatprep.subr.mxu0 0.0
    %1369 = vmatpush2.msra.mxu0 0.0
    %1370 = vmatprep.subr.mxu0 0.0
    %1371 = vmatpush2.msra.mxu0 0.0
    %1372 = vmatprep.subr.mxu0 0.0
    %1373 = vmatpush2.msra.mxu0 0.0
    %1374 = vmatprep.mubr.f32.mxu0 0.0
    %1375 = vmatmul.mubr.f32.gmra.mxu0 %v1308
    %v1376 = vpop.f32.mrf.mxu0
    %v1377 = vadd.f32 0.0, %v1376
    %v1378 = vpop.f32.mrf.mxu0
    %1379 = vdwg.mxu0
    %1380 = vrot.lane.b32.xlu0 %v372, 64
    %v1381 = vpop.permute.xlu0 %1380
    %v1384 = vsel %vm381, %v1072, 0
    %1386 = vmatprep.subr.mxu0 0.0
    %1387 = vmatpush1.msra.mxu0 0.0
    %1388 = vmatprep.subr.mxu0 0.0
    %1389 = vmatpush1.msra.mxu0 0.0
    %1390 = vmatprep.subr.mxu0 0.0
    %1391 = vmatpush1.msra.mxu0 0.0
    %1392 = vmatprep.subr.mxu0 0.0
    %1393 = vmatpush1.msra.mxu0 0.0
    %1394 = vmatprep.subr.mxu0 0.0
    %1395 = vmatpush1.msra.mxu0 0.0
    %1396 = vmatprep.subr.mxu0 0.0
    %1397 = vmatpush1.msra.mxu0 0.0
    %1398 = vmatprep.subr.mxu0 0.0
    %1399 = vmatpush1.msra.mxu0 0.0
    %1400 = vmatprep.subr.mxu0 0.0
    %1401 = vmatpush1.msra.mxu0 0.0
    %1402 = vmatprep.subr.mxu0 0.0
    %1403 = vmatpush1.msra.mxu0 0.0
    %1404 = vmatprep.subr.mxu0 0.0
    %1405 = vmatpush1.msra.mxu0 0.0
    %1406 = vmatprep.subr.mxu0 0.0
    %1407 = vmatpush1.msra.mxu0 0.0
    %1408 = vmatprep.subr.mxu0 0.0
    %1409 = vmatpush1.msra.mxu0 0.0
    %1410 = vmatprep.subr.mxu0 0.0
    %1411 = vmatpush1.msra.mxu0 0.0
    %1412 = vmatprep.subr.mxu0 0.0
    %1413 = vmatpush1.msra.mxu0 0.0
    %1414 = vmatprep.subr.mxu0 0.0
    %1415 = vmatpush1.msra.mxu0 0.0
    %1416 = vmatprep.subr.mxu0 0.0
    %1417 = vmatpush1.msra.mxu0 %v1381
    %1418 = vmatprep.subr.mxu0 0.0
    %1419 = vmatpush2.msra.mxu0 0.0
    %1420 = vmatprep.subr.mxu0 0.0
    %1421 = vmatpush2.msra.mxu0 0.0
    %1422 = vmatprep.subr.mxu0 0.0
    %1423 = vmatpush2.msra.mxu0 0.0
    %1424 = vmatprep.subr.mxu0 0.0
    %1425 = vmatpush2.msra.mxu0 0.0
    %1426 = vmatprep.subr.mxu0 0.0
    %1427 = vmatpush2.msra.mxu0 0.0
    %1428 = vmatprep.subr.mxu0 0.0
    %1429 = vmatpush2.msra.mxu0 0.0
    %1430 = vmatprep.subr.mxu0 0.0
    %1431 = vmatpush2.msra.mxu0 0.0
    %1432 = vmatprep.subr.mxu0 0.0
    %1433 = vmatpush2.msra.mxu0 0.0
    %1434 = vmatprep.subr.mxu0 0.0
    %1435 = vmatpush2.msra.mxu0 0.0
    %1436 = vmatprep.subr.mxu0 0.0
    %1437 = vmatpush2.msra.mxu0 0.0
    %1438 = vmatprep.subr.mxu0 0.0
    %1439 = vmatpush2.msra.mxu0 0.0
    %1440 = vmatprep.subr.mxu0 0.0
    %1441 = vmatpush2.msra.mxu0 0.0
    %1442 = vmatprep.subr.mxu0 0.0
    %1443 = vmatpush2.msra.mxu0 0.0
    %1444 = vmatprep.subr.mxu0 0.0
    %1445 = vmatpush2.msra.mxu0 0.0
    %1446 = vmatprep.subr.mxu0 0.0
    %1447 = vmatpush2.msra.mxu0 0.0
    %1448 = vmatprep.subr.mxu0 0.0
    %1449 = vmatpush2.msra.mxu0 0.0
    %1450 = vmatprep.mubr.f32.mxu0 0.0
    %1451 = vmatmul.mubr.f32.gmra.mxu0 %v1384
    %v1452 = vpop.f32.mrf.mxu0
    %v1453 = vadd.f32 0.0, %v1452
    %v1454 = vpop.f32.mrf.mxu0
    %1455 = vdwg.mxu0
    %1456 = vrot.lane.b32.xlu0 %v374, 64
    %v1457 = vpop.permute.xlu0 %1456
    %v1460 = vsel %vm381, %v1073, 0
    %1462 = vmatprep.subr.mxu0 0.0
    %1463 = vmatpush1.msra.mxu0 0.0
    %1464 = vmatprep.subr.mxu0 0.0
    %1465 = vmatpush1.msra.mxu0 0.0
    %1466 = vmatprep.subr.mxu0 0.0
    %1467 = vmatpush1.msra.mxu0 0.0
    %1468 = vmatprep.subr.mxu0 0.0
    %1469 = vmatpush1.msra.mxu0 0.0
    %1470 = vmatprep.subr.mxu0 0.0
    %1471 = vmatpush1.msra.mxu0 0.0
    %1472 = vmatprep.subr.mxu0 0.0
    %1473 = vmatpush1.msra.mxu0 0.0
    %1474 = vmatprep.subr.mxu0 0.0
    %1475 = vmatpush1.msra.mxu0 0.0
    %1476 = vmatprep.subr.mxu0 0.0
    %1477 = vmatpush1.msra.mxu0 0.0
    %1478 = vmatprep.subr.mxu0 0.0
    %1479 = vmatpush1.msra.mxu0 0.0
    %1480 = vmatprep.subr.mxu0 0.0
    %1481 = vmatpush1.msra.mxu0 0.0
    %1482 = vmatprep.subr.mxu0 0.0
    %1483 = vmatpush1.msra.mxu0 0.0
    %1484 = vmatprep.subr.mxu0 0.0
    %1485 = vmatpush1.msra.mxu0 0.0
    %1486 = vmatprep.subr.mxu0 0.0
    %1487 = vmatpush1.msra.mxu0 0.0
    %1488 = vmatprep.subr.mxu0 0.0
    %1489 = vmatpush1.msra.mxu0 0.0
    %1490 = vmatprep.subr.mxu0 0.0
    %1491 = vmatpush1.msra.mxu0 0.0
    %1492 = vmatprep.subr.mxu0 0.0
    %1493 = vmatpush1.msra.mxu0 %v1457
    %1494 = vmatprep.subr.mxu0 0.0
    %1495 = vmatpush2.msra.mxu0 0.0
    %1496 = vmatprep.subr.mxu0 0.0
    %1497 = vmatpush2.msra.mxu0 0.0
    %1498 = vmatprep.subr.mxu0 0.0
    %1499 = vmatpush2.msra.mxu0 0.0
    %1500 = vmatprep.subr.mxu0 0.0
    %1501 = vmatpush2.msra.mxu0 0.0
    %1502 = vmatprep.subr.mxu0 0.0
    %1503 = vmatpush2.msra.mxu0 0.0
    %1504 = vmatprep.subr.mxu0 0.0
    %1505 = vmatpush2.msra.mxu0 0.0
    %1506 = vmatprep.subr.mxu0 0.0
    %1507 = vmatpush2.msra.mxu0 0.0
    %1508 = vmatprep.subr.mxu0 0.0
    %1509 = vmatpush2.msra.mxu0 0.0
    %1510 = vmatprep.subr.mxu0 0.0
    %1511 = vmatpush2.msra.mxu0 0.0
    %1512 = vmatprep.subr.mxu0 0.0
    %1513 = vmatpush2.msra.mxu0 0.0
    %1514 = vmatprep.subr.mxu0 0.0
    %1515 = vmatpush2.msra.mxu0 0.0
    %1516 = vmatprep.subr.mxu0 0.0
    %1517 = vmatpush2.msra.mxu0 0.0
    %1518 = vmatprep.subr.mxu0 0.0
    %1519 = vmatpush2.msra.mxu0 0.0
    %1520 = vmatprep.subr.mxu0 0.0
    %1521 = vmatpush2.msra.mxu0 0.0
    %1522 = vmatprep.subr.mxu0 0.0
    %1523 = vmatpush2.msra.mxu0 0.0
    %1524 = vmatprep.subr.mxu0 0.0
    %1525 = vmatpush2.msra.mxu0 0.0
    %1526 = vmatprep.mubr.f32.mxu0 0.0
    %1527 = vmatmul.mubr.f32.gmra.mxu0 %v1460
    %v1528 = vpop.f32.mrf.mxu0
    %v1529 = vadd.f32 0.0, %v1528
    %v1530 = vpop.f32.mrf.mxu0
    %1531 = vdwg.mxu0
    %1532 = vrot.lane.b32.xlu0 %v376, 64
    %v1533 = vpop.permute.xlu0 %1532
    %v1536 = vsel %vm381, %v1074, 0
    %1538 = vmatprep.subr.mxu0 0.0
    %1539 = vmatpush1.msra.mxu0 0.0
    %1540 = vmatprep.subr.mxu0 0.0
    %1541 = vmatpush1.msra.mxu0 0.0
    %1542 = vmatprep.subr.mxu0 0.0
    %1543 = vmatpush1.msra.mxu0 0.0
    %1544 = vmatprep.subr.mxu0 0.0
    %1545 = vmatpush1.msra.mxu0 0.0
    %1546 = vmatprep.subr.mxu0 0.0
    %1547 = vmatpush1.msra.mxu0 0.0
    %1548 = vmatprep.subr.mxu0 0.0
    %1549 = vmatpush1.msra.mxu0 0.0
    %1550 = vmatprep.subr.mxu0 0.0
    %1551 = vmatpush1.msra.mxu0 0.0
    %1552 = vmatprep.subr.mxu0 0.0
    %1553 = vmatpush1.msra.mxu0 0.0
    %1554 = vmatprep.subr.mxu0 0.0
    %1555 = vmatpush1.msra.mxu0 0.0
    %1556 = vmatprep.subr.mxu0 0.0
    %1557 = vmatpush1.msra.mxu0 0.0
    %1558 = vmatprep.subr.mxu0 0.0
    %1559 = vmatpush1.msra.mxu0 0.0
    %1560 = vmatprep.subr.mxu0 0.0
    %1561 = vmatpush1.msra.mxu0 0.0
    %1562 = vmatprep.subr.mxu0 0.0
    %1563 = vmatpush1.msra.mxu0 0.0
    %1564 = vmatprep.subr.mxu0 0.0
    %1565 = vmatpush1.msra.mxu0 0.0
    %1566 = vmatprep.subr.mxu0 0.0
    %1567 = vmatpush1.msra.mxu0 0.0
    %1568 = vmatprep.subr.mxu0 0.0
    %1569 = vmatpush1.msra.mxu0 %v1533
    %1570 = vmatprep.subr.mxu0 0.0
    %1571 = vmatpush2.msra.mxu0 0.0
    %1572 = vmatprep.subr.mxu0 0.0
    %1573 = vmatpush2.msra.mxu0 0.0
    %1574 = vmatprep.subr.mxu0 0.0
    %1575 = vmatpush2.msra.mxu0 0.0
    %1576 = vmatprep.subr.mxu0 0.0
    %1577 = vmatpush2.msra.mxu0 0.0
    %1578 = vmatprep.subr.mxu0 0.0
    %1579 = vmatpush2.msra.mxu0 0.0
    %1580 = vmatprep.subr.mxu0 0.0
    %1581 = vmatpush2.msra.mxu0 0.0
    %1582 = vmatprep.subr.mxu0 0.0
    %1583 = vmatpush2.msra.mxu0 0.0
    %1584 = vmatprep.subr.mxu0 0.0
    %1585 = vmatpush2.msra.mxu0 0.0
    %1586 = vmatprep.subr.mxu0 0.0
    %1587 = vmatpush2.msra.mxu0 0.0
    %1588 = vmatprep.subr.mxu0 0.0
    %1589 = vmatpush2.msra.mxu0 0.0
    %1590 = vmatprep.subr.mxu0 0.0
    %1591 = vmatpush2.msra.mxu0 0.0
    %1592 = vmatprep.subr.mxu0 0.0
    %1593 = vmatpush2.msra.mxu0 0.0
    %1594 = vmatprep.subr.mxu0 0.0
    %1595 = vmatpush2.msra.mxu0 0.0
    %1596 = vmatprep.subr.mxu0 0.0
    %1597 = vmatpush2.msra.mxu0 0.0
    %1598 = vmatprep.subr.mxu0 0.0
    %1599 = vmatpush2.msra.mxu0 0.0
    %1600 = vmatprep.subr.mxu0 0.0
    %1601 = vmatpush2.msra.mxu0 0.0
    %1602 = vmatprep.mubr.f32.mxu0 0.0
    %1603 = vmatmul.mubr.f32.gmra.mxu0 %v1536
    %v1604 = vpop.f32.mrf.mxu0
    %v1605 = vadd.f32 0.0, %v1604
    %v1606 = vpop.f32.mrf.mxu0
    %1607 = vdwg.mxu0
    %1608 = vrot.lane.b32.xlu0 %v378, 64
    %v1609 = vpop.permute.xlu0 %1608
    %v1612 = vsel %vm381, %v1075, 0
    %1614 = vmatprep.subr.mxu0 0.0
    %1615 = vmatpush1.msra.mxu0 0.0
    %1616 = vmatprep.subr.mxu0 0.0
    %1617 = vmatpush1.msra.mxu0 0.0
    %1618 = vmatprep.subr.mxu0 0.0
    %1619 = vmatpush1.msra.mxu0 0.0
    %1620 = vmatprep.subr.mxu0 0.0
    %1621 = vmatpush1.msra.mxu0 0.0
    %1622 = vmatprep.subr.mxu0 0.0
    %1623 = vmatpush1.msra.mxu0 0.0
    %1624 = vmatprep.subr.mxu0 0.0
    %1625 = vmatpush1.msra.mxu0 0.0
    %1626 = vmatprep.subr.mxu0 0.0
    %1627 = vmatpush1.msra.mxu0 0.0
    %1628 = vmatprep.subr.mxu0 0.0
    %1629 = vmatpush1.msra.mxu0 0.0
    %1630 = vmatprep.subr.mxu0 0.0
    %1631 = vmatpush1.msra.mxu0 0.0
    %1632 = vmatprep.subr.mxu0 0.0
    %1633 = vmatpush1.msra.mxu0 0.0
    %1634 = vmatprep.subr.mxu0 0.0
    %1635 = vmatpush1.msra.mxu0 0.0
    %1636 = vmatprep.subr.mxu0 0.0
    %1637 = vmatpush1.msra.mxu0 0.0
    %1638 = vmatprep.subr.mxu0 0.0
    %1639 = vmatpush1.msra.mxu0 0.0
    %1640 = vmatprep.subr.mxu0 0.0
    %1641 = vmatpush1.msra.mxu0 0.0
    %1642 = vmatprep.subr.mxu0 0.0
    %1643 = vmatpush1.msra.mxu0 0.0
    %1644 = vmatprep.subr.mxu0 0.0
    %1645 = vmatpush1.msra.mxu0 %v1609
    %1646 = vmatprep.subr.mxu0 0.0
    %1647 = vmatpush2.msra.mxu0 0.0
    %1648 = vmatprep.subr.mxu0 0.0
    %1649 = vmatpush2.msra.mxu0 0.0
    %1650 = vmatprep.subr.mxu0 0.0
    %1651 = vmatpush2.msra.mxu0 0.0
    %1652 = vmatprep.subr.mxu0 0.0
    %1653 = vmatpush2.msra.mxu0 0.0
    %1654 = vmatprep.subr.mxu0 0.0
    %1655 = vmatpush2.msra.mxu0 0.0
    %1656 = vmatprep.subr.mxu0 0.0
    %1657 = vmatpush2.msra.mxu0 0.0
    %1658 = vmatprep.subr.mxu0 0.0
    %1659 = vmatpush2.msra.mxu0 0.0
    %1660 = vmatprep.subr.mxu0 0.0
    %1661 = vmatpush2.msra.mxu0 0.0
    %1662 = vmatprep.subr.mxu0 0.0
    %1663 = vmatpush2.msra.mxu0 0.0
    %1664 = vmatprep.subr.mxu0 0.0
    %1665 = vmatpush2.msra.mxu0 0.0
    %1666 = vmatprep.subr.mxu0 0.0
    %1667 = vmatpush2.msra.mxu0 0.0
    %1668 = vmatprep.subr.mxu0 0.0
    %1669 = vmatpush2.msra.mxu0 0.0
    %1670 = vmatprep.subr.mxu0 0.0
    %1671 = vmatpush2.msra.mxu0 0.0
    %1672 = vmatprep.subr.mxu0 0.0
    %1673 = vmatpush2.msra.mxu0 0.0
    %1674 = vmatprep.subr.mxu0 0.0
    %1675 = vmatpush2.msra.mxu0 0.0
    %1676 = vmatprep.subr.mxu0 0.0
    %1677 = vmatpush2.msra.mxu0 0.0
    %1678 = vmatprep.mubr.f32.mxu0 0.0
    %1679 = vmatmul.mubr.f32.gmra.mxu0 %v1612
    %v1680 = vpop.f32.mrf.mxu0
    %v1681 = vadd.f32 0.0, %v1680
    %v1682 = vpop.f32.mrf.mxu0
    %1683 = vdwg.mxu0
    %1686 = vrot.lane.b32.xlu0 %v1301, 8
    %v1687 = vpop.permute.xlu0 %1686
    %1688 = vrot.lane.b32.xlu0 %v1377, 8
    %v1689 = vpop.permute.xlu0 %1688
    %1694 = vrot.lane.b32.xlu0 %v1453, 16
    %v1695 = vpop.permute.xlu0 %1694
    %1696 = vrot.lane.b32.xlu0 %v1529, 16
    %v1697 = vpop.permute.xlu0 %1696
    %1702 = vrot.lane.b32.xlu0 %v1605, 24
    %v1703 = vpop.permute.xlu0 %1702
    %1704 = vrot.lane.b32.xlu0 %v1681, 24
    %v1705 = vpop.permute.xlu0 %1704
    %v1708 = vsel %vm381, %v1149, %v1687
    %v1709 = vsel %vm381, %v1225, %v1689
    %vm1710 = vcmask 130048
    %v1711 = vsel %vm1710, %v1708, %v1695
    %v1712 = vsel %vm1710, %v1709, %v1697
    %vm1713 = vcmask 195584
    %v1714 = vsel %vm1713, %v1711, %v1703
    %v1715 = vsel %vm1713, %v1712, %v1705
    %v1717 = vlaneseq
    %v1718 = vshrl.u32 %v1717, 7
    %v1719 = vsub.s32 0, %v1718
    %v1720 = vrot.slane %v364, %v1719
    %v1723 = vsel %vm220, %v1714, 0
    %v1726 = vsel %vm220, %v1715, 0
    %1728 = vmatprep.subr.mxu0 0.0
    %1729 = vmatpush1.msra.mxu0 0.0
    %1730 = vmatprep.subr.mxu0 0.0
    %1731 = vmatpush1.msra.mxu0 0.0
    %1732 = vmatprep.subr.mxu0 0.0
    %1733 = vmatpush1.msra.mxu0 0.0
    %1734 = vmatprep.subr.mxu0 0.0
    %1735 = vmatpush1.msra.mxu0 0.0
    %1736 = vmatprep.subr.mxu0 0.0
    %1737 = vmatpush1.msra.mxu0 0.0
    %1738 = vmatprep.subr.mxu0 0.0
    %1739 = vmatpush1.msra.mxu0 0.0
    %1740 = vmatprep.subr.mxu0 0.0
    %1741 = vmatpush1.msra.mxu0 0.0
    %1742 = vmatprep.subr.mxu0 0.0
    %1743 = vmatpush1.msra.mxu0 0.0
    %1744 = vmatprep.subr.mxu0 0.0
    %1745 = vmatpush1.msra.mxu0 0.0
    %1746 = vmatprep.subr.mxu0 0.0
    %1747 = vmatpush1.msra.mxu0 0.0
    %1748 = vmatprep.subr.mxu0 0.0
    %1749 = vmatpush1.msra.mxu0 0.0
    %1750 = vmatprep.subr.mxu0 0.0
    %1751 = vmatpush1.msra.mxu0 0.0
    %1752 = vmatprep.subr.mxu0 0.0
    %1753 = vmatpush1.msra.mxu0 %v363
    %1754 = vmatprep.subr.mxu0 0.0
    %1755 = vmatpush1.msra.mxu0 %v362
    %1756 = vmatprep.subr.mxu0 0.0
    %1757 = vmatpush1.msra.mxu0 %v361
    %1758 = vmatprep.subr.mxu0 0.0
    %1759 = vmatpush1.msra.mxu0 %v360
    %1760 = vmatprep.subr.mxu0 0.0
    %1761 = vmatpush2.msra.mxu0 0.0
    %1762 = vmatprep.subr.mxu0 0.0
    %1763 = vmatpush2.msra.mxu0 0.0
    %1764 = vmatprep.subr.mxu0 0.0
    %1765 = vmatpush2.msra.mxu0 0.0
    %1766 = vmatprep.subr.mxu0 0.0
    %1767 = vmatpush2.msra.mxu0 0.0
    %1768 = vmatprep.subr.mxu0 0.0
    %1769 = vmatpush2.msra.mxu0 0.0
    %1770 = vmatprep.subr.mxu0 0.0
    %1771 = vmatpush2.msra.mxu0 0.0
    %1772 = vmatprep.subr.mxu0 0.0
    %1773 = vmatpush2.msra.mxu0 0.0
    %1774 = vmatprep.subr.mxu0 0.0
    %1775 = vmatpush2.msra.mxu0 0.0
    %1776 = vmatprep.subr.mxu0 0.0
    %1777 = vmatpush2.msra.mxu0 0.0
    %1778 = vmatprep.subr.mxu0 0.0
    %1779 = vmatpush2.msra.mxu0 0.0
    %1780 = vmatprep.subr.mxu0 0.0
    %1781 = vmatpush2.msra.mxu0 0.0
    %1782 = vmatprep.subr.mxu0 0.0
    %1783 = vmatpush2.msra.mxu0 0.0
    %1784 = vmatprep.subr.mxu0 0.0
    %1785 = vmatpush2.msra.mxu0 0.0
    %1786 = vmatprep.subr.mxu0 0.0
    %1787 = vmatpush2.msra.mxu0 0.0
    %1788 = vmatprep.subr.mxu0 0.0
    %1789 = vmatpush2.msra.mxu0 0.0
    %1790 = vmatprep.subr.mxu0 0.0
    %1791 = vmatpush2.msra.mxu0 0.0
    %1792 = vmatprep.mubr.f32.mxu0 0.0
    %1793 = vmatmul.mubr.f32.gmra.mxu0 %v1723
    %v1794 = vpop.f32.mrf.mxu0
    %v1795 = vadd.f32 %v1720, %v1794
    %v1796 = vpop.f32.mrf.mxu0
    %1797 = vmatprep.mubr.f32.mxu0 0.0
    %1798 = vmatmul.mubr.f32.gmra.mxu0 %v1726
    %v1799 = vpop.f32.mrf.mxu0
    %v1800 = vadd.f32 %v1720, %v1799
    %v1801 = vpop.f32.mrf.mxu0
    %1802 = vdwg.mxu0
    %v1803 = vadd.f32 %v198, %v1795
    %v1804 = vadd.f32 %v199, %v1800
    %s1805 = sld [smem:[#allocation18 + $0x2]]
    %s1806 = sld [smem:[#allocation18 + $0x3]]
    %v1807 = vsel %vm220, %v1803, 0.0
    %1808 = vadd.xlane.f32.xlu0 %v1807
    %v1809 = vpop.xlane.xlu0 %1808
    %v1810 = vsel %vm220, %v1804, 0.0
    %1811 = vadd.xlane.f32.xlu0 %v1810
    %v1812 = vpop.xlane.xlu0 %1811
    %v1813 = vmul.f32 %v1809, %v227
    %v1814 = vmul.f32 %v1812, %v227
    %v1815 = vsub.f32 %v1803, %v1813
    %v1816 = vsub.f32 %v1804, %v1814
    %v1817 = vmul.f32 %v1815, %v1815
    %v1818 = vmul.f32 %v1816, %v1816
    %v1819 = vsel %vm220, %v1817, 0.0
    %1820 = vadd.xlane.f32.xlu0 %v1819
    %v1821 = vpop.xlane.xlu0 %1820
    %v1822 = vsel %vm220, %v1818, 0.0
    %1823 = vadd.xlane.f32.xlu0 %v1822
    %v1824 = vpop.xlane.xlu0 %1823
    %v1825 = vmul.f32 %v1821, 0.032258064
    %v1826 = vmul.f32 %v1824, 0.032258064
    %v1827 = vrsqrt.pop %v1825
    %v1828 = vmul.f32 %v1825, %v1827
    %vm1829 = vcmp.eq.f32.partialorder %v1825, inf
    %v1830 = vsel %vm1829, %v1825, %v1828
    %vm1831 = vcmp.eq.f32.partialorder %v1825, 0.0
    %v1832 = vand.u32 %v1825, 2147483648
    %v1833 = vsel %vm1831, %v1832, %v1830
    %v1834 = vrsqrt.pop %v1826
    %v1835 = vmul.f32 %v1826, %v1834
    %vm1836 = vcmp.eq.f32.partialorder %v1826, inf
    %v1837 = vsel %vm1836, %v1826, %v1835
    %vm1838 = vcmp.eq.f32.partialorder %v1826, 0.0
    %v1839 = vand.u32 %v1826, 2147483648
    %v1840 = vsel %vm1838, %v1839, %v1837
    %v1841 = vstv %s1805
    %v1842 = vmul.f32 %v1841, %v1815
    %v1843 = vmul.f32 %v1841, %v1816
    %v1844 = vadd.f32 %v1833, 1e-06
    %v1845 = vadd.f32 %v1840, 1e-06
    %v1846 = vrcp.pop %v1844
    %v1847 = vrcp.pop %v1845
    %v1848 = vmul.f32 %v1842, %v1846
    %v1849 = vmul.f32 %v1843, %v1847
    %v1850 = vstv %s1806
    %v1851 = vadd.f32 %v1848, %v1850
    %v1852 = vadd.f32 %v1849, %v1850
    %v1853 = vld [vmem:[%s8] sm:$0xff]
    %v1854 = vld [vmem:[%s8 + $0x8] sm:$0xff]
    %v1855 = vld [vmem:[%s8 + $0x10] sm:$0xff]
    %v1856 = vld [vmem:[%s8 + $0x18] sm:$0xff]
    %v1857 = vld [vmem:[#allocation10] sm:$0x1]
    %v1859 = vlaneseq
    %v1860 = vshrl.u32 %v1859, 7
    %v1861 = vsub.s32 0, %v1860
    %v1862 = vrot.slane %v1857, %v1861
    %v1865 = vsel %vm220, %v1851, 0
    %v1868 = vsel %vm220, %v1852, 0
    %1870 = vmatprep.subr.mxu0 0.0
    %1871 = vmatpush1.msra.mxu0 0.0
    %1872 = vmatprep.subr.mxu0 0.0
    %1873 = vmatpush1.msra.mxu0 0.0
    %1874 = vmatprep.subr.mxu0 0.0
    %1875 = vmatpush1.msra.mxu0 0.0
    %1876 = vmatprep.subr.mxu0 0.0
    %1877 = vmatpush1.msra.mxu0 0.0
    %1878 = vmatprep.subr.mxu0 0.0
    %1879 = vmatpush1.msra.mxu0 0.0
    %1880 = vmatprep.subr.mxu0 0.0
    %1881 = vmatpush1.msra.mxu0 0.0
    %1882 = vmatprep.subr.mxu0 0.0
    %1883 = vmatpush1.msra.mxu0 0.0
    %1884 = vmatprep.subr.mxu0 0.0
    %1885 = vmatpush1.msra.mxu0 0.0
    %1886 = vmatprep.subr.mxu0 0.0
    %1887 = vmatpush1.msra.mxu0 0.0
    %1888 = vmatprep.subr.mxu0 0.0
    %1889 = vmatpush1.msra.mxu0 0.0
    %1890 = vmatprep.subr.mxu0 0.0
    %1891 = vmatpush1.msra.mxu0 0.0
    %1892 = vmatprep.subr.mxu0 0.0
    %1893 = vmatpush1.msra.mxu0 0.0
    %1894 = vmatprep.subr.mxu0 0.0
    %1895 = vmatpush1.msra.mxu0 %v1856
    %1896 = vmatprep.subr.mxu0 0.0
    %1897 = vmatpush1.msra.mxu0 %v1855
    %1898 = vmatprep.subr.mxu0 0.0
    %1899 = vmatpush1.msra.mxu0 %v1854
    %1900 = vmatprep.subr.mxu0 0.0
    %1901 = vmatpush1.msra.mxu0 %v1853
    %1902 = vmatprep.subr.mxu0 0.0
    %1903 = vmatpush2.msra.mxu0 0.0
    %1904 = vmatprep.subr.mxu0 0.0
    %1905 = vmatpush2.msra.mxu0 0.0
    %1906 = vmatprep.subr.mxu0 0.0
    %1907 = vmatpush2.msra.mxu0 0.0
    %1908 = vmatprep.subr.mxu0 0.0
    %1909 = vmatpush2.msra.mxu0 0.0
    %1910 = vmatprep.subr.mxu0 0.0
    %1911 = vmatpush2.msra.mxu0 0.0
    %1912 = vmatprep.subr.mxu0 0.0
    %1913 = vmatpush2.msra.mxu0 0.0
    %1914 = vmatprep.subr.mxu0 0.0
    %1915 = vmatpush2.msra.mxu0 0.0
    %1916 = vmatprep.subr.mxu0 0.0
    %1917 = vmatpush2.msra.mxu0 0.0
    %1918 = vmatprep.subr.mxu0 0.0
    %1919 = vmatpush2.msra.mxu0 0.0
    %1920 = vmatprep.subr.mxu0 0.0
    %1921 = vmatpush2.msra.mxu0 0.0
    %1922 = vmatprep.subr.mxu0 0.0
    %1923 = vmatpush2.msra.mxu0 0.0
    %1924 = vmatprep.subr.mxu0 0.0
    %1925 = vmatpush2.msra.mxu0 0.0
    %1926 = vmatprep.subr.mxu0 0.0
    %1927 = vmatpush2.msra.mxu0 0.0
    %1928 = vmatprep.subr.mxu0 0.0
    %1929 = vmatpush2.msra.mxu0 0.0
    %1930 = vmatprep.subr.mxu0 0.0
    %1931 = vmatpush2.msra.mxu0 0.0
    %1932 = vmatprep.subr.mxu0 0.0
    %1933 = vmatpush2.msra.mxu0 0.0
    %1934 = vmatprep.mubr.f32.mxu0 0.0
    %1935 = vmatmul.mubr.f32.gmra.mxu0 %v1865
    %v1936 = vpop.f32.mrf.mxu0
    %v1937 = vadd.f32 %v1862, %v1936
    %v1938 = vpop.f32.mrf.mxu0
    %1939 = vmatprep.mubr.f32.mxu0 0.0
    %1940 = vmatmul.mubr.f32.gmra.mxu0 %v1868
    %v1941 = vpop.f32.mrf.mxu0
    %v1942 = vadd.f32 %v1862, %v1941
    %v1943 = vpop.f32.mrf.mxu0
    %1944 = vdwg.mxu0
    %v1945 = vld [vmem:[%s10] sm:$0xff]
    %v1946 = vld [vmem:[%s10 + $0x8] sm:$0xff]
    %v1947 = vld [vmem:[%s10 + $0x10] sm:$0xff]
    %v1948 = vld [vmem:[%s10 + $0x18] sm:$0xff]
    %v1949 = vld [vmem:[#allocation12] sm:$0x1]
    %v1951 = vlaneseq
    %v1952 = vshrl.u32 %v1951, 7
    %v1953 = vsub.s32 0, %v1952
    %v1954 = vrot.slane %v1949, %v1953
    %v1957 = vsel %vm220, %v200, 0
    %v1960 = vsel %vm220, %v201, 0
    %1962 = vmatprep.subr.mxu0 0.0
    %1963 = vmatpush1.msra.mxu0 0.0
    %1964 = vmatprep.subr.mxu0 0.0
    %1965 = vmatpush1.msra.mxu0 0.0
    %1966 = vmatprep.subr.mxu0 0.0
    %1967 = vmatpush1.msra.mxu0 0.0
    %1968 = vmatprep.subr.mxu0 0.0
    %1969 = vmatpush1.msra.mxu0 0.0
    %1970 = vmatprep.subr.mxu0 0.0
    %1971 = vmatpush1.msra.mxu0 0.0
    %1972 = vmatprep.subr.mxu0 0.0
    %1973 = vmatpush1.msra.mxu0 0.0
    %1974 = vmatprep.subr.mxu0 0.0
    %1975 = vmatpush1.msra.mxu0 0.0
    %1976 = vmatprep.subr.mxu0 0.0
    %1977 = vmatpush1.msra.mxu0 0.0
    %1978 = vmatprep.subr.mxu0 0.0
    %1979 = vmatpush1.msra.mxu0 0.0
    %1980 = vmatprep.subr.mxu0 0.0
    %1981 = vmatpush1.msra.mxu0 0.0
    %1982 = vmatprep.subr.mxu0 0.0
    %1983 = vmatpush1.msra.mxu0 0.0
    %1984 = vmatprep.subr.mxu0 0.0
    %1985 = vmatpush1.msra.mxu0 0.0
    %1986 = vmatprep.subr.mxu0 0.0
    %1987 = vmatpush1.msra.mxu0 %v1948
    %1988 = vmatprep.subr.mxu0 0.0
    %1989 = vmatpush1.msra.mxu0 %v1947
    %1990 = vmatprep.subr.mxu0 0.0
    %1991 = vmatpush1.msra.mxu0 %v1946
    %1992 = vmatprep.subr.mxu0 0.0
    %1993 = vmatpush1.msra.mxu0 %v1945
    %1994 = vmatprep.subr.mxu0 0.0
    %1995 = vmatpush2.msra.mxu0 0.0
    %1996 = vmatprep.subr.mxu0 0.0
    %1997 = vmatpush2.msra.mxu0 0.0
    %1998 = vmatprep.subr.mxu0 0.0
    %1999 = vmatpush2.msra.mxu0 0.0
    %2000 = vmatprep.subr.mxu0 0.0
    %2001 = vmatpush2.msra.mxu0 0.0
    %2002 = vmatprep.subr.mxu0 0.0
    %2003 = vmatpush2.msra.mxu0 0.0
    %2004 = vmatprep.subr.mxu0 0.0
    %2005 = vmatpush2.msra.mxu0 0.0
    %2006 = vmatprep.subr.mxu0 0.0
    %2007 = vmatpush2.msra.mxu0 0.0
    %2008 = vmatprep.subr.mxu0 0.0
    %2009 = vmatpush2.msra.mxu0 0.0
    %2010 = vmatprep.subr.mxu0 0.0
    %2011 = vmatpush2.msra.mxu0 0.0
    %2012 = vmatprep.subr.mxu0 0.0
    %2013 = vmatpush2.msra.mxu0 0.0
    %2014 = vmatprep.subr.mxu0 0.0
    %2015 = vmatpush2.msra.mxu0 0.0
    %2016 = vmatprep.subr.mxu0 0.0
    %2017 = vmatpush2.msra.mxu0 0.0
    %2018 = vmatprep.subr.mxu0 0.0
    %2019 = vmatpush2.msra.mxu0 0.0
    %2020 = vmatprep.subr.mxu0 0.0
    %2021 = vmatpush2.msra.mxu0 0.0
    %2022 = vmatprep.subr.mxu0 0.0
    %2023 = vmatpush2.msra.mxu0 0.0
    %2024 = vmatprep.subr.mxu0 0.0
    %2025 = vmatpush2.msra.mxu0 0.0
    %2026 = vmatprep.mubr.f32.mxu0 0.0
    %2027 = vmatmul.mubr.f32.gmra.mxu0 %v1957
    %v2028 = vpop.f32.mrf.mxu0
    %v2029 = vadd.f32 %v1954, %v2028
    %v2030 = vpop.f32.mrf.mxu0
    %2031 = vmatprep.mubr.f32.mxu0 0.0
    %2032 = vmatmul.mubr.f32.gmra.mxu0 %v1960
    %v2033 = vpop.f32.mrf.mxu0
    %v2034 = vadd.f32 %v1954, %v2033
    %v2035 = vpop.f32.mrf.mxu0
    %2036 = vdwg.mxu0
    %v2037 = vld [vmem:[%s12] sm:$0xff]
    %v2038 = vld [vmem:[%s12 + $0x8] sm:$0xff]
    %v2039 = vld [vmem:[%s12 + $0x10] sm:$0xff]
    %v2040 = vld [vmem:[%s12 + $0x18] sm:$0xff]
    %v2041 = vld [vmem:[#allocation13] sm:$0x1]
    %2044 = vrot.lane.b32.xlu0 %v1937, 120
    %v2045 = vpop.permute.xlu0 %2044
    %2046 = vrot.lane.b32.xlu0 %v1942, 120
    %v2047 = vpop.permute.xlu0 %2046
    %2048 = vrot.lane.b32.xlu0 %v1937, 112
    %v2049 = vpop.permute.xlu0 %2048
    %2050 = vrot.lane.b32.xlu0 %v1942, 112
    %v2051 = vpop.permute.xlu0 %2050
    %2052 = vrot.lane.b32.xlu0 %v1937, 104
    %v2053 = vpop.permute.xlu0 %2052
    %2054 = vrot.lane.b32.xlu0 %v1942, 104
    %v2055 = vpop.permute.xlu0 %2054
    %2058 = vrot.lane.b32.xlu0 %v2029, 120
    %v2059 = vpop.permute.xlu0 %2058
    %2060 = vrot.lane.b32.xlu0 %v2034, 120
    %v2061 = vpop.permute.xlu0 %2060
    %2062 = vrot.lane.b32.xlu0 %v2029, 112
    %v2063 = vpop.permute.xlu0 %2062
    %2064 = vrot.lane.b32.xlu0 %v2034, 112
    %v2065 = vpop.permute.xlu0 %2064
    %2066 = vrot.lane.b32.xlu0 %v2029, 104
    %v2067 = vpop.permute.xlu0 %2066
    %2068 = vrot.lane.b32.xlu0 %v2034, 104
    %v2069 = vpop.permute.xlu0 %2068
    %v2070 = vsel %vm381, %v1937, 0
    %v2072 = vsel %vm381, %v2029, 0
    %2074 = vmatprep.subr.mxu0 0.0
    %2075 = vmatpush1.xpose.msra.mxu0 0.0
    %2076 = vmatprep.subr.mxu0 0.0
    %2077 = vmatpush1.xpose.msra.mxu0 0.0
    %2078 = vmatprep.subr.mxu0 0.0
    %2079 = vmatpush1.xpose.msra.mxu0 0.0
    %2080 = vmatprep.subr.mxu0 0.0
    %2081 = vmatpush1.xpose.msra.mxu0 0.0
    %2082 = vmatprep.subr.mxu0 0.0
    %2083 = vmatpush1.xpose.msra.mxu0 0.0
    %2084 = vmatprep.subr.mxu0 0.0
    %2085 = vmatpush1.xpose.msra.mxu0 0.0
    %2086 = vmatprep.subr.mxu0 0.0
    %2087 = vmatpush1.xpose.msra.mxu0 0.0
    %2088 = vmatprep.subr.mxu0 0.0
    %2089 = vmatpush1.xpose.msra.mxu0 0.0
    %2090 = vmatprep.subr.mxu0 0.0
    %2091 = vmatpush1.xpose.msra.mxu0 0.0
    %2092 = vmatprep.subr.mxu0 0.0
    %2093 = vmatpush1.xpose.msra.mxu0 0.0
    %2094 = vmatprep.subr.mxu0 0.0
    %2095 = vmatpush1.xpose.msra.mxu0 0.0
    %2096 = vmatprep.subr.mxu0 0.0
    %2097 = vmatpush1.xpose.msra.mxu0 0.0
    %2098 = vmatprep.subr.mxu0 0.0
    %2099 = vmatpush1.xpose.msra.mxu0 0.0
    %2100 = vmatprep.subr.mxu0 0.0
    %2101 = vmatpush1.xpose.msra.mxu0 0.0
    %2102 = vmatprep.subr.mxu0 0.0
    %2103 = vmatpush1.xpose.msra.mxu0 0.0
    %2104 = vmatprep.subr.mxu0 0.0
    %2105 = vmatpush1.xpose.msra.mxu0 %v2072
    %2106 = vmatprep.subr.mxu0 0.0
    %2107 = vmatpush2.xpose.msra.mxu0 0.0
    %2108 = vmatprep.subr.mxu0 0.0
    %2109 = vmatpush2.xpose.msra.mxu0 0.0
    %2110 = vmatprep.subr.mxu0 0.0
    %2111 = vmatpush2.xpose.msra.mxu0 0.0
    %2112 = vmatprep.subr.mxu0 0.0
    %2113 = vmatpush2.xpose.msra.mxu0 0.0
    %2114 = vmatprep.subr.mxu0 0.0
    %2115 = vmatpush2.xpose.msra.mxu0 0.0
    %2116 = vmatprep.subr.mxu0 0.0
    %2117 = vmatpush2.xpose.msra.mxu0 0.0
    %2118 = vmatprep.subr.mxu0 0.0
    %2119 = vmatpush2.xpose.msra.mxu0 0.0
    %2120 = vmatprep.subr.mxu0 0.0
    %2121 = vmatpush2.xpose.msra.mxu0 0.0
    %2122 = vmatprep.subr.mxu0 0.0
    %2123 = vmatpush2.xpose.msra.mxu0 0.0
    %2124 = vmatprep.subr.mxu0 0.0
    %2125 = vmatpush2.xpose.msra.mxu0 0.0
    %2126 = vmatprep.subr.mxu0 0.0
    %2127 = vmatpush2.xpose.msra.mxu0 0.0
    %2128 = vmatprep.subr.mxu0 0.0
    %2129 = vmatpush2.xpose.msra.mxu0 0.0
    %2130 = vmatprep.subr.mxu0 0.0
    %2131 = vmatpush2.xpose.msra.mxu0 0.0
    %2132 = vmatprep.subr.mxu0 0.0
    %2133 = vmatpush2.xpose.msra.mxu0 0.0
    %2134 = vmatprep.subr.mxu0 0.0
    %2135 = vmatpush2.xpose.msra.mxu0 0.0
    %2136 = vmatprep.subr.mxu0 0.0
    %2137 = vmatpush2.xpose.msra.mxu0 0.0
    %2138 = vmatprep.mubr.f32.mxu0 0.0
    %2139 = vmatmul.mubr.f32.gmra.mxu0 %v2070
    %v2140 = vpop.f32.mrf.mxu0
    %v2141 = vadd.f32 %v202, %v2140
    %v2142 = vpop.f32.mrf.mxu0
    %2143 = vdwg.mxu0
    %v2144 = vsel %vm381, %v1942, 0
    %v2146 = vsel %vm381, %v2034, 0
    %2148 = vmatprep.subr.mxu0 0.0
    %2149 = vmatpush1.xpose.msra.mxu0 0.0
    %2150 = vmatprep.subr.mxu0 0.0
    %2151 = vmatpush1.xpose.msra.mxu0 0.0
    %2152 = vmatprep.subr.mxu0 0.0
    %2153 = vmatpush1.xpose.msra.mxu0 0.0
    %2154 = vmatprep.subr.mxu0 0.0
    %2155 = vmatpush1.xpose.msra.mxu0 0.0
    %2156 = vmatprep.subr.mxu0 0.0
    %2157 = vmatpush1.xpose.msra.mxu0 0.0
    %2158 = vmatprep.subr.mxu0 0.0
    %2159 = vmatpush1.xpose.msra.mxu0 0.0
    %2160 = vmatprep.subr.mxu0 0.0
    %2161 = vmatpush1.xpose.msra.mxu0 0.0
    %2162 = vmatprep.subr.mxu0 0.0
    %2163 = vmatpush1.xpose.msra.mxu0 0.0
    %2164 = vmatprep.subr.mxu0 0.0
    %2165 = vmatpush1.xpose.msra.mxu0 0.0
    %2166 = vmatprep.subr.mxu0 0.0
    %2167 = vmatpush1.xpose.msra.mxu0 0.0
    %2168 = vmatprep.subr.mxu0 0.0
    %2169 = vmatpush1.xpose.msra.mxu0 0.0
    %2170 = vmatprep.subr.mxu0 0.0
    %2171 = vmatpush1.xpose.msra.mxu0 0.0
    %2172 = vmatprep.subr.mxu0 0.0
    %2173 = vmatpush1.xpose.msra.mxu0 0.0
    %2174 = vmatprep.subr.mxu0 0.0
    %2175 = vmatpush1.xpose.msra.mxu0 0.0
    %2176 = vmatprep.subr.mxu0 0.0
    %2177 = vmatpush1.xpose.msra.mxu0 0.0
    %2178 = vmatprep.subr.mxu0 0.0
    %2179 = vmatpush1.xpose.msra.mxu0 %v2146
    %2180 = vmatprep.subr.mxu0 0.0
    %2181 = vmatpush2.xpose.msra.mxu0 0.0
    %2182 = vmatprep.subr.mxu0 0.0
    %2183 = vmatpush2.xpose.msra.mxu0 0.0
    %2184 = vmatprep.subr.mxu0 0.0
    %2185 = vmatpush2.xpose.msra.mxu0 0.0
    %2186 = vmatprep.subr.mxu0 0.0
    %2187 = vmatpush2.xpose.msra.mxu0 0.0
    %2188 = vmatprep.subr.mxu0 0.0
    %2189 = vmatpush2.xpose.msra.mxu0 0.0
    %2190 = vmatprep.subr.mxu0 0.0
    %2191 = vmatpush2.xpose.msra.mxu0 0.0
    %2192 = vmatprep.subr.mxu0 0.0
    %2193 = vmatpush2.xpose.msra.mxu0 0.0
    %2194 = vmatprep.subr.mxu0 0.0
    %2195 = vmatpush2.xpose.msra.mxu0 0.0
    %2196 = vmatprep.subr.mxu0 0.0
    %2197 = vmatpush2.xpose.msra.mxu0 0.0
    %2198 = vmatprep.subr.mxu0 0.0
    %2199 = vmatpush2.xpose.msra.mxu0 0.0
    %2200 = vmatprep.subr.mxu0 0.0
    %2201 = vmatpush2.xpose.msra.mxu0 0.0
    %2202 = vmatprep.subr.mxu0 0.0
    %2203 = vmatpush2.xpose.msra.mxu0 0.0
    %2204 = vmatprep.subr.mxu0 0.0
    %2205 = vmatpush2.xpose.msra.mxu0 0.0
    %2206 = vmatprep.subr.mxu0 0.0
    %2207 = vmatpush2.xpose.msra.mxu0 0.0
    %2208 = vmatprep.subr.mxu0 0.0
    %2209 = vmatpush2.xpose.msra.mxu0 0.0
    %2210 = vmatprep.subr.mxu0 0.0
    %2211 = vmatpush2.xpose.msra.mxu0 0.0
    %2212 = vmatprep.mubr.f32.mxu0 0.0
    %2213 = vmatmul.mubr.f32.gmra.mxu0 %v2144
    %v2214 = vpop.f32.mrf.mxu0
    %v2215 = vadd.f32 %v203, %v2214
    %v2216 = vpop.f32.mrf.mxu0
    %2217 = vdwg.mxu0
    %v2218 = vsel %vm381, %v2045, 0
    %v2220 = vsel %vm381, %v2059, 0
    %2222 = vmatprep.subr.mxu0 0.0
    %2223 = vmatpush1.xpose.msra.mxu0 0.0
    %2224 = vmatprep.subr.mxu0 0.0
    %2225 = vmatpush1.xpose.msra.mxu0 0.0
    %2226 = vmatprep.subr.mxu0 0.0
    %2227 = vmatpush1.xpose.msra.mxu0 0.0
    %2228 = vmatprep.subr.mxu0 0.0
    %2229 = vmatpush1.xpose.msra.mxu0 0.0
    %2230 = vmatprep.subr.mxu0 0.0
    %2231 = vmatpush1.xpose.msra.mxu0 0.0
    %2232 = vmatprep.subr.mxu0 0.0
    %2233 = vmatpush1.xpose.msra.mxu0 0.0
    %2234 = vmatprep.subr.mxu0 0.0
    %2235 = vmatpush1.xpose.msra.mxu0 0.0
    %2236 = vmatprep.subr.mxu0 0.0
    %2237 = vmatpush1.xpose.msra.mxu0 0.0
    %2238 = vmatprep.subr.mxu0 0.0
    %2239 = vmatpush1.xpose.msra.mxu0 0.0
    %2240 = vmatprep.subr.mxu0 0.0
    %2241 = vmatpush1.xpose.msra.mxu0 0.0
    %2242 = vmatprep.subr.mxu0 0.0
    %2243 = vmatpush1.xpose.msra.mxu0 0.0
    %2244 = vmatprep.subr.mxu0 0.0
    %2245 = vmatpush1.xpose.msra.mxu0 0.0
    %2246 = vmatprep.subr.mxu0 0.0
    %2247 = vmatpush1.xpose.msra.mxu0 0.0
    %2248 = vmatprep.subr.mxu0 0.0
    %2249 = vmatpush1.xpose.msra.mxu0 0.0
    %2250 = vmatprep.subr.mxu0 0.0
    %2251 = vmatpush1.xpose.msra.mxu0 0.0
    %2252 = vmatprep.subr.mxu0 0.0
    %2253 = vmatpush1.xpose.msra.mxu0 %v2220
    %2254 = vmatprep.subr.mxu0 0.0
    %2255 = vmatpush2.xpose.msra.mxu0 0.0
    %2256 = vmatprep.subr.mxu0 0.0
    %2257 = vmatpush2.xpose.msra.mxu0 0.0
    %2258 = vmatprep.subr.mxu0 0.0
    %2259 = vmatpush2.xpose.msra.mxu0 0.0
    %2260 = vmatprep.subr.mxu0 0.0
    %2261 = vmatpush2.xpose.msra.mxu0 0.0
    %2262 = vmatprep.subr.mxu0 0.0
    %2263 = vmatpush2.xpose.msra.mxu0 0.0
    %2264 = vmatprep.subr.mxu0 0.0
    %2265 = vmatpush2.xpose.msra.mxu0 0.0
    %2266 = vmatprep.subr.mxu0 0.0
    %2267 = vmatpush2.xpose.msra.mxu0 0.0
    %2268 = vmatprep.subr.mxu0 0.0
    %2269 = vmatpush2.xpose.msra.mxu0 0.0
    %2270 = vmatprep.subr.mxu0 0.0
    %2271 = vmatpush2.xpose.msra.mxu0 0.0
    %2272 = vmatprep.subr.mxu0 0.0
    %2273 = vmatpush2.xpose.msra.mxu0 0.0
    %2274 = vmatprep.subr.mxu0 0.0
    %2275 = vmatpush2.xpose.msra.mxu0 0.0
    %2276 = vmatprep.subr.mxu0 0.0
    %2277 = vmatpush2.xpose.msra.mxu0 0.0
    %2278 = vmatprep.subr.mxu0 0.0
    %2279 = vmatpush2.xpose.msra.mxu0 0.0
    %2280 = vmatprep.subr.mxu0 0.0
    %2281 = vmatpush2.xpose.msra.mxu0 0.0
    %2282 = vmatprep.subr.mxu0 0.0
    %2283 = vmatpush2.xpose.msra.mxu0 0.0
    %2284 = vmatprep.subr.mxu0 0.0
    %2285 = vmatpush2.xpose.msra.mxu0 0.0
    %2286 = vmatprep.mubr.f32.mxu0 0.0
    %2287 = vmatmul.mubr.f32.gmra.mxu0 %v2218
    %v2288 = vpop.f32.mrf.mxu0
    %v2289 = vadd.f32 %v204, %v2288
    %v2290 = vpop.f32.mrf.mxu0
    %2291 = vdwg.mxu0
    %v2292 = vsel %vm381, %v2047, 0
    %v2294 = vsel %vm381, %v2061, 0
    %2296 = vmatprep.subr.mxu0 0.0
    %2297 = vmatpush1.xpose.msra.mxu0 0.0
    %2298 = vmatprep.subr.mxu0 0.0
    %2299 = vmatpush1.xpose.msra.mxu0 0.0
    %2300 = vmatprep.subr.mxu0 0.0
    %2301 = vmatpush1.xpose.msra.mxu0 0.0
    %2302 = vmatprep.subr.mxu0 0.0
    %2303 = vmatpush1.xpose.msra.mxu0 0.0
    %2304 = vmatprep.subr.mxu0 0.0
    %2305 = vmatpush1.xpose.msra.mxu0 0.0
    %2306 = vmatprep.subr.mxu0 0.0
    %2307 = vmatpush1.xpose.msra.mxu0 0.0
    %2308 = vmatprep.subr.mxu0 0.0
    %2309 = vmatpush1.xpose.msra.mxu0 0.0
    %2310 = vmatprep.subr.mxu0 0.0
    %2311 = vmatpush1.xpose.msra.mxu0 0.0
    %2312 = vmatprep.subr.mxu0 0.0
    %2313 = vmatpush1.xpose.msra.mxu0 0.0
    %2314 = vmatprep.subr.mxu0 0.0
    %2315 = vmatpush1.xpose.msra.mxu0 0.0
    %2316 = vmatprep.subr.mxu0 0.0
    %2317 = vmatpush1.xpose.msra.mxu0 0.0
    %2318 = vmatprep.subr.mxu0 0.0
    %2319 = vmatpush1.xpose.msra.mxu0 0.0
    %2320 = vmatprep.subr.mxu0 0.0
    %2321 = vmatpush1.xpose.msra.mxu0 0.0
    %2322 = vmatprep.subr.mxu0 0.0
    %2323 = vmatpush1.xpose.msra.mxu0 0.0
    %2324 = vmatprep.subr.mxu0 0.0
    %2325 = vmatpush1.xpose.msra.mxu0 0.0
    %2326 = vmatprep.subr.mxu0 0.0
    %2327 = vmatpush1.xpose.msra.mxu0 %v2294
    %2328 = vmatprep.subr.mxu0 0.0
    %2329 = vmatpush2.xpose.msra.mxu0 0.0
    %2330 = vmatprep.subr.mxu0 0.0
    %2331 = vmatpush2.xpose.msra.mxu0 0.0
    %2332 = vmatprep.subr.mxu0 0.0
    %2333 = vmatpush2.xpose.msra.mxu0 0.0
    %2334 = vmatprep.subr.mxu0 0.0
    %2335 = vmatpush2.xpose.msra.mxu0 0.0
    %2336 = vmatprep.subr.mxu0 0.0
    %2337 = vmatpush2.xpose.msra.mxu0 0.0
    %2338 = vmatprep.subr.mxu0 0.0
    %2339 = vmatpush2.xpose.msra.mxu0 0.0
    %2340 = vmatprep.subr.mxu0 0.0
    %2341 = vmatpush2.xpose.msra.mxu0 0.0
    %2342 = vmatprep.subr.mxu0 0.0
    %2343 = vmatpush2.xpose.msra.mxu0 0.0
    %2344 = vmatprep.subr.mxu0 0.0
    %2345 = vmatpush2.xpose.msra.mxu0 0.0
    %2346 = vmatprep.subr.mxu0 0.0
    %2347 = vmatpush2.xpose.msra.mxu0 0.0
    %2348 = vmatprep.subr.mxu0 0.0
    %2349 = vmatpush2.xpose.msra.mxu0 0.0
    %2350 = vmatprep.subr.mxu0 0.0
    %2351 = vmatpush2.xpose.msra.mxu0 0.0
    %2352 = vmatprep.subr.mxu0 0.0
    %2353 = vmatpush2.xpose.msra.mxu0 0.0
    %2354 = vmatprep.subr.mxu0 0.0
    %2355 = vmatpush2.xpose.msra.mxu0 0.0
    %2356 = vmatprep.subr.mxu0 0.0
    %2357 = vmatpush2.xpose.msra.mxu0 0.0
    %2358 = vmatprep.subr.mxu0 0.0
    %2359 = vmatpush2.xpose.msra.mxu0 0.0
    %2360 = vmatprep.mubr.f32.mxu0 0.0
    %2361 = vmatmul.mubr.f32.gmra.mxu0 %v2292
    %v2362 = vpop.f32.mrf.mxu0
    %v2363 = vadd.f32 %v205, %v2362
    %v2364 = vpop.f32.mrf.mxu0
    %2365 = vdwg.mxu0
    %v2366 = vsel %vm381, %v2049, 0
    %v2368 = vsel %vm381, %v2063, 0
    %2370 = vmatprep.subr.mxu0 0.0
    %2371 = vmatpush1.xpose.msra.mxu0 0.0
    %2372 = vmatprep.subr.mxu0 0.0
    %2373 = vmatpush1.xpose.msra.mxu0 0.0
    %2374 = vmatprep.subr.mxu0 0.0
    %2375 = vmatpush1.xpose.msra.mxu0 0.0
    %2376 = vmatprep.subr.mxu0 0.0
    %2377 = vmatpush1.xpose.msra.mxu0 0.0
    %2378 = vmatprep.subr.mxu0 0.0
    %2379 = vmatpush1.xpose.msra.mxu0 0.0
    %2380 = vmatprep.subr.mxu0 0.0
    %2381 = vmatpush1.xpose.msra.mxu0 0.0
    %2382 = vmatprep.subr.mxu0 0.0
    %2383 = vmatpush1.xpose.msra.mxu0 0.0
    %2384 = vmatprep.subr.mxu0 0.0
    %2385 = vmatpush1.xpose.msra.mxu0 0.0
    %2386 = vmatprep.subr.mxu0 0.0
    %2387 = vmatpush1.xpose.msra.mxu0 0.0
    %2388 = vmatprep.subr.mxu0 0.0
    %2389 = vmatpush1.xpose.msra.mxu0 0.0
    %2390 = vmatprep.subr.mxu0 0.0
    %2391 = vmatpush1.xpose.msra.mxu0 0.0
    %2392 = vmatprep.subr.mxu0 0.0
    %2393 = vmatpush1.xpose.msra.mxu0 0.0
    %2394 = vmatprep.subr.mxu0 0.0
    %2395 = vmatpush1.xpose.msra.mxu0 0.0
    %2396 = vmatprep.subr.mxu0 0.0
    %2397 = vmatpush1.xpose.msra.mxu0 0.0
    %2398 = vmatprep.subr.mxu0 0.0
    %2399 = vmatpush1.xpose.msra.mxu0 0.0
    %2400 = vmatprep.subr.mxu0 0.0
    %2401 = vmatpush1.xpose.msra.mxu0 %v2368
    %2402 = vmatprep.subr.mxu0 0.0
    %2403 = vmatpush2.xpose.msra.mxu0 0.0
    %2404 = vmatprep.subr.mxu0 0.0
    %2405 = vmatpush2.xpose.msra.mxu0 0.0
    %2406 = vmatprep.subr.mxu0 0.0
    %2407 = vmatpush2.xpose.msra.mxu0 0.0
    %2408 = vmatprep.subr.mxu0 0.0
    %2409 = vmatpush2.xpose.msra.mxu0 0.0
    %2410 = vmatprep.subr.mxu0 0.0
    %2411 = vmatpush2.xpose.msra.mxu0 0.0
    %2412 = vmatprep.subr.mxu0 0.0
    %2413 = vmatpush2.xpose.msra.mxu0 0.0
    %2414 = vmatprep.subr.mxu0 0.0
    %2415 = vmatpush2.xpose.msra.mxu0 0.0
    %2416 = vmatprep.subr.mxu0 0.0
    %2417 = vmatpush2.xpose.msra.mxu0 0.0
    %2418 = vmatprep.subr.mxu0 0.0
    %2419 = vmatpush2.xpose.msra.mxu0 0.0
    %2420 = vmatprep.subr.mxu0 0.0
    %2421 = vmatpush2.xpose.msra.mxu0 0.0
    %2422 = vmatprep.subr.mxu0 0.0
    %2423 = vmatpush2.xpose.msra.mxu0 0.0
    %2424 = vmatprep.subr.mxu0 0.0
    %2425 = vmatpush2.xpose.msra.mxu0 0.0
    %2426 = vmatprep.subr.mxu0 0.0
    %2427 = vmatpush2.xpose.msra.mxu0 0.0
    %2428 = vmatprep.subr.mxu0 0.0
    %2429 = vmatpush2.xpose.msra.mxu0 0.0
    %2430 = vmatprep.subr.mxu0 0.0
    %2431 = vmatpush2.xpose.msra.mxu0 0.0
    %2432 = vmatprep.subr.mxu0 0.0
    %2433 = vmatpush2.xpose.msra.mxu0 0.0
    %2434 = vmatprep.mubr.f32.mxu0 0.0
    %2435 = vmatmul.mubr.f32.gmra.mxu0 %v2366
    %v2436 = vpop.f32.mrf.mxu0
    %v2437 = vadd.f32 %v206, %v2436
    %v2438 = vpop.f32.mrf.mxu0
    %2439 = vdwg.mxu0
    %v2440 = vsel %vm381, %v2051, 0
    %v2442 = vsel %vm381, %v2065, 0
    %2444 = vmatprep.subr.mxu0 0.0
    %2445 = vmatpush1.xpose.msra.mxu0 0.0
    %2446 = vmatprep.subr.mxu0 0.0
    %2447 = vmatpush1.xpose.msra.mxu0 0.0
    %2448 = vmatprep.subr.mxu0 0.0
    %2449 = vmatpush1.xpose.msra.mxu0 0.0
    %2450 = vmatprep.subr.mxu0 0.0
    %2451 = vmatpush1.xpose.msra.mxu0 0.0
    %2452 = vmatprep.subr.mxu0 0.0
    %2453 = vmatpush1.xpose.msra.mxu0 0.0
    %2454 = vmatprep.subr.mxu0 0.0
    %2455 = vmatpush1.xpose.msra.mxu0 0.0
    %2456 = vmatprep.subr.mxu0 0.0
    %2457 = vmatpush1.xpose.msra.mxu0 0.0
    %2458 = vmatprep.subr.mxu0 0.0
    %2459 = vmatpush1.xpose.msra.mxu0 0.0
    %2460 = vmatprep.subr.mxu0 0.0
    %2461 = vmatpush1.xpose.msra.mxu0 0.0
    %2462 = vmatprep.subr.mxu0 0.0
    %2463 = vmatpush1.xpose.msra.mxu0 0.0
    %2464 = vmatprep.subr.mxu0 0.0
    %2465 = vmatpush1.xpose.msra.mxu0 0.0
    %2466 = vmatprep.subr.mxu0 0.0
    %2467 = vmatpush1.xpose.msra.mxu0 0.0
    %2468 = vmatprep.subr.mxu0 0.0
    %2469 = vmatpush1.xpose.msra.mxu0 0.0
    %2470 = vmatprep.subr.mxu0 0.0
    %2471 = vmatpush1.xpose.msra.mxu0 0.0
    %2472 = vmatprep.subr.mxu0 0.0
    %2473 = vmatpush1.xpose.msra.mxu0 0.0
    %2474 = vmatprep.subr.mxu0 0.0
    %2475 = vmatpush1.xpose.msra.mxu0 %v2442
    %2476 = vmatprep.subr.mxu0 0.0
    %2477 = vmatpush2.xpose.msra.mxu0 0.0
    %2478 = vmatprep.subr.mxu0 0.0
    %2479 = vmatpush2.xpose.msra.mxu0 0.0
    %2480 = vmatprep.subr.mxu0 0.0
    %2481 = vmatpush2.xpose.msra.mxu0 0.0
    %2482 = vmatprep.subr.mxu0 0.0
    %2483 = vmatpush2.xpose.msra.mxu0 0.0
    %2484 = vmatprep.subr.mxu0 0.0
    %2485 = vmatpush2.xpose.msra.mxu0 0.0
    %2486 = vmatprep.subr.mxu0 0.0
    %2487 = vmatpush2.xpose.msra.mxu0 0.0
    %2488 = vmatprep.subr.mxu0 0.0
    %2489 = vmatpush2.xpose.msra.mxu0 0.0
    %2490 = vmatprep.subr.mxu0 0.0
    %2491 = vmatpush2.xpose.msra.mxu0 0.0
    %2492 = vmatprep.subr.mxu0 0.0
    %2493 = vmatpush2.xpose.msra.mxu0 0.0
    %2494 = vmatprep.subr.mxu0 0.0
    %2495 = vmatpush2.xpose.msra.mxu0 0.0
    %2496 = vmatprep.subr.mxu0 0.0
    %2497 = vmatpush2.xpose.msra.mxu0 0.0
    %2498 = vmatprep.subr.mxu0 0.0
    %2499 = vmatpush2.xpose.msra.mxu0 0.0
    %2500 = vmatprep.subr.mxu0 0.0
    %2501 = vmatpush2.xpose.msra.mxu0 0.0
    %2502 = vmatprep.subr.mxu0 0.0
    %2503 = vmatpush2.xpose.msra.mxu0 0.0
    %2504 = vmatprep.subr.mxu0 0.0
    %2505 = vmatpush2.xpose.msra.mxu0 0.0
    %2506 = vmatprep.subr.mxu0 0.0
    %2507 = vmatpush2.xpose.msra.mxu0 0.0
    %2508 = vmatprep.mubr.f32.mxu0 0.0
    %2509 = vmatmul.mubr.f32.gmra.mxu0 %v2440
    %v2510 = vpop.f32.mrf.mxu0
    %v2511 = vadd.f32 %v207, %v2510
    %v2512 = vpop.f32.mrf.mxu0
    %2513 = vdwg.mxu0
    %v2514 = vsel %vm381, %v2053, 0
    %v2516 = vsel %vm381, %v2067, 0
    %2518 = vmatprep.subr.mxu0 0.0
    %2519 = vmatpush1.xpose.msra.mxu0 0.0
    %2520 = vmatprep.subr.mxu0 0.0
    %2521 = vmatpush1.xpose.msra.mxu0 0.0
    %2522 = vmatprep.subr.mxu0 0.0
    %2523 = vmatpush1.xpose.msra.mxu0 0.0
    %2524 = vmatprep.subr.mxu0 0.0
    %2525 = vmatpush1.xpose.msra.mxu0 0.0
    %2526 = vmatprep.subr.mxu0 0.0
    %2527 = vmatpush1.xpose.msra.mxu0 0.0
    %2528 = vmatprep.subr.mxu0 0.0
    %2529 = vmatpush1.xpose.msra.mxu0 0.0
    %2530 = vmatprep.subr.mxu0 0.0
    %2531 = vmatpush1.xpose.msra.mxu0 0.0
    %2532 = vmatprep.subr.mxu0 0.0
    %2533 = vmatpush1.xpose.msra.mxu0 0.0
    %2534 = vmatprep.subr.mxu0 0.0
    %2535 = vmatpush1.xpose.msra.mxu0 0.0
    %2536 = vmatprep.subr.mxu0 0.0
    %2537 = vmatpush1.xpose.msra.mxu0 0.0
    %2538 = vmatprep.subr.mxu0 0.0
    %2539 = vmatpush1.xpose.msra.mxu0 0.0
    %2540 = vmatprep.subr.mxu0 0.0
    %2541 = vmatpush1.xpose.msra.mxu0 0.0
    %2542 = vmatprep.subr.mxu0 0.0
    %2543 = vmatpush1.xpose.msra.mxu0 0.0
    %2544 = vmatprep.subr.mxu0 0.0
    %2545 = vmatpush1.xpose.msra.mxu0 0.0
    %2546 = vmatprep.subr.mxu0 0.0
    %2547 = vmatpush1.xpose.msra.mxu0 0.0
    %2548 = vmatprep.subr.mxu0 0.0
    %2549 = vmatpush1.xpose.msra.mxu0 %v2516
    %2550 = vmatprep.subr.mxu0 0.0
    %2551 = vmatpush2.xpose.msra.mxu0 0.0
    %2552 = vmatprep.subr.mxu0 0.0
    %2553 = vmatpush2.xpose.msra.mxu0 0.0
    %2554 = vmatprep.subr.mxu0 0.0
    %2555 = vmatpush2.xpose.msra.mxu0 0.0
    %2556 = vmatprep.subr.mxu0 0.0
    %2557 = vmatpush2.xpose.msra.mxu0 0.0
    %2558 = vmatprep.subr.mxu0 0.0
    %2559 = vmatpush2.xpose.msra.mxu0 0.0
    %2560 = vmatprep.subr.mxu0 0.0
    %2561 = vmatpush2.xpose.msra.mxu0 0.0
    %2562 = vmatprep.subr.mxu0 0.0
    %2563 = vmatpush2.xpose.msra.mxu0 0.0
    %2564 = vmatprep.subr.mxu0 0.0
    %2565 = vmatpush2.xpose.msra.mxu0 0.0
    %2566 = vmatprep.subr.mxu0 0.0
    %2567 = vmatpush2.xpose.msra.mxu0 0.0
    %2568 = vmatprep.subr.mxu0 0.0
    %2569 = vmatpush2.xpose.msra.mxu0 0.0
    %2570 = vmatprep.subr.mxu0 0.0
    %2571 = vmatpush2.xpose.msra.mxu0 0.0
    %2572 = vmatprep.subr.mxu0 0.0
    %2573 = vmatpush2.xpose.msra.mxu0 0.0
    %2574 = vmatprep.subr.mxu0 0.0
    %2575 = vmatpush2.xpose.msra.mxu0 0.0
    %2576 = vmatprep.subr.mxu0 0.0
    %2577 = vmatpush2.xpose.msra.mxu0 0.0
    %2578 = vmatprep.subr.mxu0 0.0
    %2579 = vmatpush2.xpose.msra.mxu0 0.0
    %2580 = vmatprep.subr.mxu0 0.0
    %2581 = vmatpush2.xpose.msra.mxu0 0.0
    %2582 = vmatprep.mubr.f32.mxu0 0.0
    %2583 = vmatmul.mubr.f32.gmra.mxu0 %v2514
    %v2584 = vpop.f32.mrf.mxu0
    %v2585 = vadd.f32 %v208, %v2584
    %v2586 = vpop.f32.mrf.mxu0
    %2587 = vdwg.mxu0
    %v2588 = vsel %vm381, %v2055, 0
    %v2590 = vsel %vm381, %v2069, 0
    %2592 = vmatprep.subr.mxu0 0.0
    %2593 = vmatpush1.xpose.msra.mxu0 0.0
    %2594 = vmatprep.subr.mxu0 0.0
    %2595 = vmatpush1.xpose.msra.mxu0 0.0
    %2596 = vmatprep.subr.mxu0 0.0
    %2597 = vmatpush1.xpose.msra.mxu0 0.0
    %2598 = vmatprep.subr.mxu0 0.0
    %2599 = vmatpush1.xpose.msra.mxu0 0.0
    %2600 = vmatprep.subr.mxu0 0.0
    %2601 = vmatpush1.xpose.msra.mxu0 0.0
    %2602 = vmatprep.subr.mxu0 0.0
    %2603 = vmatpush1.xpose.msra.mxu0 0.0
    %2604 = vmatprep.subr.mxu0 0.0
    %2605 = vmatpush1.xpose.msra.mxu0 0.0
    %2606 = vmatprep.subr.mxu0 0.0
    %2607 = vmatpush1.xpose.msra.mxu0 0.0
    %2608 = vmatprep.subr.mxu0 0.0
    %2609 = vmatpush1.xpose.msra.mxu0 0.0
    %2610 = vmatprep.subr.mxu0 0.0
    %2611 = vmatpush1.xpose.msra.mxu0 0.0
    %2612 = vmatprep.subr.mxu0 0.0
    %2613 = vmatpush1.xpose.msra.mxu0 0.0
    %2614 = vmatprep.subr.mxu0 0.0
    %2615 = vmatpush1.xpose.msra.mxu0 0.0
    %2616 = vmatprep.subr.mxu0 0.0
    %2617 = vmatpush1.xpose.msra.mxu0 0.0
    %2618 = vmatprep.subr.mxu0 0.0
    %2619 = vmatpush1.xpose.msra.mxu0 0.0
    %2620 = vmatprep.subr.mxu0 0.0
    %2621 = vmatpush1.xpose.msra.mxu0 0.0
    %2622 = vmatprep.subr.mxu0 0.0
    %2623 = vmatpush1.xpose.msra.mxu0 %v2590
    %2624 = vmatprep.subr.mxu0 0.0
    %2625 = vmatpush2.xpose.msra.mxu0 0.0
    %2626 = vmatprep.subr.mxu0 0.0
    %2627 = vmatpush2.xpose.msra.mxu0 0.0
    %2628 = vmatprep.subr.mxu0 0.0
    %2629 = vmatpush2.xpose.msra.mxu0 0.0
    %2630 = vmatprep.subr.mxu0 0.0
    %2631 = vmatpush2.xpose.msra.mxu0 0.0
    %2632 = vmatprep.subr.mxu0 0.0
    %2633 = vmatpush2.xpose.msra.mxu0 0.0
    %2634 = vmatprep.subr.mxu0 0.0
    %2635 = vmatpush2.xpose.msra.mxu0 0.0
    %2636 = vmatprep.subr.mxu0 0.0
    %2637 = vmatpush2.xpose.msra.mxu0 0.0
    %2638 = vmatprep.subr.mxu0 0.0
    %2639 = vmatpush2.xpose.msra.mxu0 0.0
    %2640 = vmatprep.subr.mxu0 0.0
    %2641 = vmatpush2.xpose.msra.mxu0 0.0
    %2642 = vmatprep.subr.mxu0 0.0
    %2643 = vmatpush2.xpose.msra.mxu0 0.0
    %2644 = vmatprep.subr.mxu0 0.0
    %2645 = vmatpush2.xpose.msra.mxu0 0.0
    %2646 = vmatprep.subr.mxu0 0.0
    %2647 = vmatpush2.xpose.msra.mxu0 0.0
    %2648 = vmatprep.subr.mxu0 0.0
    %2649 = vmatpush2.xpose.msra.mxu0 0.0
    %2650 = vmatprep.subr.mxu0 0.0
    %2651 = vmatpush2.xpose.msra.mxu0 0.0
    %2652 = vmatprep.subr.mxu0 0.0
    %2653 = vmatpush2.xpose.msra.mxu0 0.0
    %2654 = vmatprep.subr.mxu0 0.0
    %2655 = vmatpush2.xpose.msra.mxu0 0.0
    %2656 = vmatprep.mubr.f32.mxu0 0.0
    %2657 = vmatmul.mubr.f32.gmra.mxu0 %v2588
    %v2658 = vpop.f32.mrf.mxu0
    %v2659 = vadd.f32 %v209, %v2658
    %v2660 = vpop.f32.mrf.mxu0
    %2661 = vdwg.mxu0
    %v2662 = vsel %vm381, %v2141, -inf
    %2663 = vmax.xlane.f32.xlu0 %v2662
    %v2664 = vpop.xlane.xlu0 %2663
    %v2665 = vsel %vm381, %v2215, -inf
    %2666 = vmax.xlane.f32.xlu0 %v2665
    %v2667 = vpop.xlane.xlu0 %2666
    %v2668 = vsel %vm381, %v2289, -inf
    %2669 = vmax.xlane.f32.xlu0 %v2668
    %v2670 = vpop.xlane.xlu0 %2669
    %v2671 = vsel %vm381, %v2363, -inf
    %2672 = vmax.xlane.f32.xlu0 %v2671
    %v2673 = vpop.xlane.xlu0 %2672
    %v2674 = vsel %vm381, %v2437, -inf
    %2675 = vmax.xlane.f32.xlu0 %v2674
    %v2676 = vpop.xlane.xlu0 %2675
    %v2677 = vsel %vm381, %v2511, -inf
    %2678 = vmax.xlane.f32.xlu0 %v2677
    %v2679 = vpop.xlane.xlu0 %2678
    %v2680 = vsel %vm381, %v2585, -inf
    %2681 = vmax.xlane.f32.xlu0 %v2680
    %v2682 = vpop.xlane.xlu0 %2681
    %v2683 = vsel %vm381, %v2659, -inf
    %2684 = vmax.xlane.f32.xlu0 %v2683
    %v2685 = vpop.xlane.xlu0 %2684
    %v2686 = vsub.f32 %v2141, %v2664
    %v2687 = vsub.f32 %v2215, %v2667
    %v2688 = vsub.f32 %v2289, %v2670
    %v2689 = vsub.f32 %v2363, %v2673
    %v2690 = vsub.f32 %v2437, %v2676
    %v2691 = vsub.f32 %v2511, %v2679
    %v2692 = vsub.f32 %v2585, %v2682
    %v2693 = vsub.f32 %v2659, %v2685
    %v2694 = vmul.f32 %v2686, 1.442695
    %v2695 = vpow.pop %v2694
    %v2696 = vmul.f32 %v2687, 1.442695
    %v2697 = vpow.pop %v2696
    %v2698 = vmul.f32 %v2688, 1.442695
    %v2699 = vpow.pop %v2698
    %v2700 = vmul.f32 %v2689, 1.442695
    %v2701 = vpow.pop %v2700
    %v2702 = vmul.f32 %v2690, 1.442695
    %v2703 = vpow.pop %v2702
    %v2704 = vmul.f32 %v2691, 1.442695
    %v2705 = vpow.pop %v2704
    %v2706 = vmul.f32 %v2692, 1.442695
    %v2707 = vpow.pop %v2706
    %v2708 = vmul.f32 %v2693, 1.442695
    %v2709 = vpow.pop %v2708
    %v2710 = vsel %vm381, %v2695, 0.0
    %2711 = vadd.xlane.f32.xlu0 %v2710
    %v2712 = vpop.xlane.xlu0 %2711
    %v2713 = vsel %vm381, %v2697, 0.0
    %2714 = vadd.xlane.f32.xlu0 %v2713
    %v2715 = vpop.xlane.xlu0 %2714
    %v2716 = vsel %vm381, %v2699, 0.0
    %2717 = vadd.xlane.f32.xlu0 %v2716
    %v2718 = vpop.xlane.xlu0 %2717
    %v2719 = vsel %vm381, %v2701, 0.0
    %2720 = vadd.xlane.f32.xlu0 %v2719
    %v2721 = vpop.xlane.xlu0 %2720
    %v2722 = vsel %vm381, %v2703, 0.0
    %2723 = vadd.xlane.f32.xlu0 %v2722
    %v2724 = vpop.xlane.xlu0 %2723
    %v2725 = vsel %vm381, %v2705, 0.0
    %2726 = vadd.xlane.f32.xlu0 %v2725
    %v2727 = vpop.xlane.xlu0 %2726
    %v2728 = vsel %vm381, %v2707, 0.0
    %2729 = vadd.xlane.f32.xlu0 %v2728
    %v2730 = vpop.xlane.xlu0 %2729
    %v2731 = vsel %vm381, %v2709, 0.0
    %2732 = vadd.xlane.f32.xlu0 %v2731
    %v2733 = vpop.xlane.xlu0 %2732
    %v2734 = vrcp.pop %v2712
    %v2735 = vrcp.pop %v2715
    %v2736 = vrcp.pop %v2718
    %v2737 = vrcp.pop %v2721
    %v2738 = vrcp.pop %v2724
    %v2739 = vrcp.pop %v2727
    %v2740 = vrcp.pop %v2730
    %v2741 = vrcp.pop %v2733
    %v2742 = vmul.f32 %v2695, %v2734
    %v2743 = vmul.f32 %v2697, %v2735
    %v2744 = vmul.f32 %v2699, %v2736
    %v2745 = vmul.f32 %v2701, %v2737
    %v2746 = vmul.f32 %v2703, %v2738
    %v2747 = vmul.f32 %v2705, %v2739
    %v2748 = vmul.f32 %v2707, %v2740
    %v2749 = vmul.f32 %v2709, %v2741
    %2750 = vrot.lane.b32.xlu0 %v2029, 96
    %v2751 = vpop.permute.xlu0 %2750
    %v2754 = vsel %vm381, %v2742, 0
    %2756 = vmatprep.subr.mxu0 0.0
    %2757 = vmatpush1.msra.mxu0 0.0
    %2758 = vmatprep.subr.mxu0 0.0
    %2759 = vmatpush1.msra.mxu0 0.0
    %2760 = vmatprep.subr.mxu0 0.0
    %2761 = vmatpush1.msra.mxu0 0.0
    %2762 = vmatprep.subr.mxu0 0.0
    %2763 = vmatpush1.msra.mxu0 0.0
    %2764 = vmatprep.subr.mxu0 0.0
    %2765 = vmatpush1.msra.mxu0 0.0
    %2766 = vmatprep.subr.mxu0 0.0
    %2767 = vmatpush1.msra.mxu0 0.0
    %2768 = vmatprep.subr.mxu0 0.0
    %2769 = vmatpush1.msra.mxu0 0.0
    %2770 = vmatprep.subr.mxu0 0.0
    %2771 = vmatpush1.msra.mxu0 0.0
    %2772 = vmatprep.subr.mxu0 0.0
    %2773 = vmatpush1.msra.mxu0 0.0
    %2774 = vmatprep.subr.mxu0 0.0
    %2775 = vmatpush1.msra.mxu0 0.0
    %2776 = vmatprep.subr.mxu0 0.0
    %2777 = vmatpush1.msra.mxu0 0.0
    %2778 = vmatprep.subr.mxu0 0.0
    %2779 = vmatpush1.msra.mxu0 0.0
    %2780 = vmatprep.subr.mxu0 0.0
    %2781 = vmatpush1.msra.mxu0 0.0
    %2782 = vmatprep.subr.mxu0 0.0
    %2783 = vmatpush1.msra.mxu0 0.0
    %2784 = vmatprep.subr.mxu0 0.0
    %2785 = vmatpush1.msra.mxu0 0.0
    %2786 = vmatprep.subr.mxu0 0.0
    %2787 = vmatpush1.msra.mxu0 %v2751
    %2788 = vmatprep.subr.mxu0 0.0
    %2789 = vmatpush2.msra.mxu0 0.0
    %2790 = vmatprep.subr.mxu0 0.0
    %2791 = vmatpush2.msra.mxu0 0.0
    %2792 = vmatprep.subr.mxu0 0.0
    %2793 = vmatpush2.msra.mxu0 0.0
    %2794 = vmatprep.subr.mxu0 0.0
    %2795 = vmatpush2.msra.mxu0 0.0
    %2796 = vmatprep.subr.mxu0 0.0
    %2797 = vmatpush2.msra.mxu0 0.0
    %2798 = vmatprep.subr.mxu0 0.0
    %2799 = vmatpush2.msra.mxu0 0.0
    %2800 = vmatprep.subr.mxu0 0.0
    %2801 = vmatpush2.msra.mxu0 0.0
    %2802 = vmatprep.subr.mxu0 0.0
    %2803 = vmatpush2.msra.mxu0 0.0
    %2804 = vmatprep.subr.mxu0 0.0
    %2805 = vmatpush2.msra.mxu0 0.0
    %2806 = vmatprep.subr.mxu0 0.0
    %2807 = vmatpush2.msra.mxu0 0.0
    %2808 = vmatprep.subr.mxu0 0.0
    %2809 = vmatpush2.msra.mxu0 0.0
    %2810 = vmatprep.subr.mxu0 0.0
    %2811 = vmatpush2.msra.mxu0 0.0
    %2812 = vmatprep.subr.mxu0 0.0
    %2813 = vmatpush2.msra.mxu0 0.0
    %2814 = vmatprep.subr.mxu0 0.0
    %2815 = vmatpush2.msra.mxu0 0.0
    %2816 = vmatprep.subr.mxu0 0.0
    %2817 = vmatpush2.msra.mxu0 0.0
    %2818 = vmatprep.subr.mxu0 0.0
    %2819 = vmatpush2.msra.mxu0 0.0
    %2820 = vmatprep.mubr.f32.mxu0 0.0
    %2821 = vmatmul.mubr.f32.gmra.mxu0 %v2754
    %v2822 = vpop.f32.mrf.mxu0
    %v2823 = vadd.f32 0.0, %v2822
    %v2824 = vpop.f32.mrf.mxu0
    %2825 = vdwg.mxu0
    %2826 = vrot.lane.b32.xlu0 %v2034, 96
    %v2827 = vpop.permute.xlu0 %2826
    %v2830 = vsel %vm381, %v2743, 0
    %2832 = vmatprep.subr.mxu0 0.0
    %2833 = vmatpush1.msra.mxu0 0.0
    %2834 = vmatprep.subr.mxu0 0.0
    %2835 = vmatpush1.msra.mxu0 0.0
    %2836 = vmatprep.subr.mxu0 0.0
    %2837 = vmatpush1.msra.mxu0 0.0
    %2838 = vmatprep.subr.mxu0 0.0
    %2839 = vmatpush1.msra.mxu0 0.0
    %2840 = vmatprep.subr.mxu0 0.0
    %2841 = vmatpush1.msra.mxu0 0.0
    %2842 = vmatprep.subr.mxu0 0.0
    %2843 = vmatpush1.msra.mxu0 0.0
    %2844 = vmatprep.subr.mxu0 0.0
    %2845 = vmatpush1.msra.mxu0 0.0
    %2846 = vmatprep.subr.mxu0 0.0
    %2847 = vmatpush1.msra.mxu0 0.0
    %2848 = vmatprep.subr.mxu0 0.0
    %2849 = vmatpush1.msra.mxu0 0.0
    %2850 = vmatprep.subr.mxu0 0.0
    %2851 = vmatpush1.msra.mxu0 0.0
    %2852 = vmatprep.subr.mxu0 0.0
    %2853 = vmatpush1.msra.mxu0 0.0
    %2854 = vmatprep.subr.mxu0 0.0
    %2855 = vmatpush1.msra.mxu0 0.0
    %2856 = vmatprep.subr.mxu0 0.0
    %2857 = vmatpush1.msra.mxu0 0.0
    %2858 = vmatprep.subr.mxu0 0.0
    %2859 = vmatpush1.msra.mxu0 0.0
    %2860 = vmatprep.subr.mxu0 0.0
    %2861 = vmatpush1.msra.mxu0 0.0
    %2862 = vmatprep.subr.mxu0 0.0
    %2863 = vmatpush1.msra.mxu0 %v2827
    %2864 = vmatprep.subr.mxu0 0.0
    %2865 = vmatpush2.msra.mxu0 0.0
    %2866 = vmatprep.subr.mxu0 0.0
    %2867 = vmatpush2.msra.mxu0 0.0
    %2868 = vmatprep.subr.mxu0 0.0
    %2869 = vmatpush2.msra.mxu0 0.0
    %2870 = vmatprep.subr.mxu0 0.0
    %2871 = vmatpush2.msra.mxu0 0.0
    %2872 = vmatprep.subr.mxu0 0.0
    %2873 = vmatpush2.msra.mxu0 0.0
    %2874 = vmatprep.subr.mxu0 0.0
    %2875 = vmatpush2.msra.mxu0 0.0
    %2876 = vmatprep.subr.mxu0 0.0
    %2877 = vmatpush2.msra.mxu0 0.0
    %2878 = vmatprep.subr.mxu0 0.0
    %2879 = vmatpush2.msra.mxu0 0.0
    %2880 = vmatprep.subr.mxu0 0.0
    %2881 = vmatpush2.msra.mxu0 0.0
    %2882 = vmatprep.subr.mxu0 0.0
    %2883 = vmatpush2.msra.mxu0 0.0
    %2884 = vmatprep.subr.mxu0 0.0
    %2885 = vmatpush2.msra.mxu0 0.0
    %2886 = vmatprep.subr.mxu0 0.0
    %2887 = vmatpush2.msra.mxu0 0.0
    %2888 = vmatprep.subr.mxu0 0.0
    %2889 = vmatpush2.msra.mxu0 0.0
    %2890 = vmatprep.subr.mxu0 0.0
    %2891 = vmatpush2.msra.mxu0 0.0
    %2892 = vmatprep.subr.mxu0 0.0
    %2893 = vmatpush2.msra.mxu0 0.0
    %2894 = vmatprep.subr.mxu0 0.0
    %2895 = vmatpush2.msra.mxu0 0.0
    %2896 = vmatprep.mubr.f32.mxu0 0.0
    %2897 = vmatmul.mubr.f32.gmra.mxu0 %v2830
    %v2898 = vpop.f32.mrf.mxu0
    %v2899 = vadd.f32 0.0, %v2898
    %v2900 = vpop.f32.mrf.mxu0
    %2901 = vdwg.mxu0
    %2902 = vrot.lane.b32.xlu0 %v2059, 96
    %v2903 = vpop.permute.xlu0 %2902
    %v2906 = vsel %vm381, %v2744, 0
    %2908 = vmatprep.subr.mxu0 0.0
    %2909 = vmatpush1.msra.mxu0 0.0
    %2910 = vmatprep.subr.mxu0 0.0
    %2911 = vmatpush1.msra.mxu0 0.0
    %2912 = vmatprep.subr.mxu0 0.0
    %2913 = vmatpush1.msra.mxu0 0.0
    %2914 = vmatprep.subr.mxu0 0.0
    %2915 = vmatpush1.msra.mxu0 0.0
    %2916 = vmatprep.subr.mxu0 0.0
    %2917 = vmatpush1.msra.mxu0 0.0
    %2918 = vmatprep.subr.mxu0 0.0
    %2919 = vmatpush1.msra.mxu0 0.0
    %2920 = vmatprep.subr.mxu0 0.0
    %2921 = vmatpush1.msra.mxu0 0.0
    %2922 = vmatprep.subr.mxu0 0.0
    %2923 = vmatpush1.msra.mxu0 0.0
    %2924 = vmatprep.subr.mxu0 0.0
    %2925 = vmatpush1.msra.mxu0 0.0
    %2926 = vmatprep.subr.mxu0 0.0
    %2927 = vmatpush1.msra.mxu0 0.0
    %2928 = vmatprep.subr.mxu0 0.0
    %2929 = vmatpush1.msra.mxu0 0.0
    %2930 = vmatprep.subr.mxu0 0.0
    %2931 = vmatpush1.msra.mxu0 0.0
    %2932 = vmatprep.subr.mxu0 0.0
    %2933 = vmatpush1.msra.mxu0 0.0
    %2934 = vmatprep.subr.mxu0 0.0
    %2935 = vmatpush1.msra.mxu0 0.0
    %2936 = vmatprep.subr.mxu0 0.0
    %2937 = vmatpush1.msra.mxu0 0.0
    %2938 = vmatprep.subr.mxu0 0.0
    %2939 = vmatpush1.msra.mxu0 %v2903
    %2940 = vmatprep.subr.mxu0 0.0
    %2941 = vmatpush2.msra.mxu0 0.0
    %2942 = vmatprep.subr.mxu0 0.0
    %2943 = vmatpush2.msra.mxu0 0.0
    %2944 = vmatprep.subr.mxu0 0.0
    %2945 = vmatpush2.msra.mxu0 0.0
    %2946 = vmatprep.subr.mxu0 0.0
    %2947 = vmatpush2.msra.mxu0 0.0
    %2948 = vmatprep.subr.mxu0 0.0
    %2949 = vmatpush2.msra.mxu0 0.0
    %2950 = vmatprep.subr.mxu0 0.0
    %2951 = vmatpush2.msra.mxu0 0.0
    %2952 = vmatprep.subr.mxu0 0.0
    %2953 = vmatpush2.msra.mxu0 0.0
    %2954 = vmatprep.subr.mxu0 0.0
    %2955 = vmatpush2.msra.mxu0 0.0
    %2956 = vmatprep.subr.mxu0 0.0
    %2957 = vmatpush2.msra.mxu0 0.0
    %2958 = vmatprep.subr.mxu0 0.0
    %2959 = vmatpush2.msra.mxu0 0.0
    %2960 = vmatprep.subr.mxu0 0.0
    %2961 = vmatpush2.msra.mxu0 0.0
    %2962 = vmatprep.subr.mxu0 0.0
    %2963 = vmatpush2.msra.mxu0 0.0
    %2964 = vmatprep.subr.mxu0 0.0
    %2965 = vmatpush2.msra.mxu0 0.0
    %2966 = vmatprep.subr.mxu0 0.0
    %2967 = vmatpush2.msra.mxu0 0.0
    %2968 = vmatprep.subr.mxu0 0.0
    %2969 = vmatpush2.msra.mxu0 0.0
    %2970 = vmatprep.subr.mxu0 0.0
    %2971 = vmatpush2.msra.mxu0 0.0
    %2972 = vmatprep.mubr.f32.mxu0 0.0
    %2973 = vmatmul.mubr.f32.gmra.mxu0 %v2906
    %v2974 = vpop.f32.mrf.mxu0
    %v2975 = vadd.f32 0.0, %v2974
    %v2976 = vpop.f32.mrf.mxu0
    %2977 = vdwg.mxu0
    %2978 = vrot.lane.b32.xlu0 %v2061, 96
    %v2979 = vpop.permute.xlu0 %2978
    %v2982 = vsel %vm381, %v2745, 0
    %2984 = vmatprep.subr.mxu0 0.0
    %2985 = vmatpush1.msra.mxu0 0.0
    %2986 = vmatprep.subr.mxu0 0.0
    %2987 = vmatpush1.msra.mxu0 0.0
    %2988 = vmatprep.subr.mxu0 0.0
    %2989 = vmatpush1.msra.mxu0 0.0
    %2990 = vmatprep.subr.mxu0 0.0
    %2991 = vmatpush1.msra.mxu0 0.0
    %2992 = vmatprep.subr.mxu0 0.0
    %2993 = vmatpush1.msra.mxu0 0.0
    %2994 = vmatprep.subr.mxu0 0.0
    %2995 = vmatpush1.msra.mxu0 0.0
    %2996 = vmatprep.subr.mxu0 0.0
    %2997 = vmatpush1.msra.mxu0 0.0
    %2998 = vmatprep.subr.mxu0 0.0
    %2999 = vmatpush1.msra.mxu0 0.0
    %3000 = vmatprep.subr.mxu0 0.0
    %3001 = vmatpush1.msra.mxu0 0.0
    %3002 = vmatprep.subr.mxu0 0.0
    %3003 = vmatpush1.msra.mxu0 0.0
    %3004 = vmatprep.subr.mxu0 0.0
    %3005 = vmatpush1.msra.mxu0 0.0
    %3006 = vmatprep.subr.mxu0 0.0
    %3007 = vmatpush1.msra.mxu0 0.0
    %3008 = vmatprep.subr.mxu0 0.0
    %3009 = vmatpush1.msra.mxu0 0.0
    %3010 = vmatprep.subr.mxu0 0.0
    %3011 = vmatpush1.msra.mxu0 0.0
    %3012 = vmatprep.subr.mxu0 0.0
    %3013 = vmatpush1.msra.mxu0 0.0
    %3014 = vmatprep.subr.mxu0 0.0
    %3015 = vmatpush1.msra.mxu0 %v2979
    %3016 = vmatprep.subr.mxu0 0.0
    %3017 = vmatpush2.msra.mxu0 0.0
    %3018 = vmatprep.subr.mxu0 0.0
    %3019 = vmatpush2.msra.mxu0 0.0
    %3020 = vmatprep.subr.mxu0 0.0
    %3021 = vmatpush2.msra.mxu0 0.0
    %3022 = vmatprep.subr.mxu0 0.0
    %3023 = vmatpush2.msra.mxu0 0.0
    %3024 = vmatprep.subr.mxu0 0.0
    %3025 = vmatpush2.msra.mxu0 0.0
    %3026 = vmatprep.subr.mxu0 0.0
    %3027 = vmatpush2.msra.mxu0 0.0
    %3028 = vmatprep.subr.mxu0 0.0
    %3029 = vmatpush2.msra.mxu0 0.0
    %3030 = vmatprep.subr.mxu0 0.0
    %3031 = vmatpush2.msra.mxu0 0.0
    %3032 = vmatprep.subr.mxu0 0.0
    %3033 = vmatpush2.msra.mxu0 0.0
    %3034 = vmatprep.subr.mxu0 0.0
    %3035 = vmatpush2.msra.mxu0 0.0
    %3036 = vmatprep.subr.mxu0 0.0
    %3037 = vmatpush2.msra.mxu0 0.0
    %3038 = vmatprep.subr.mxu0 0.0
    %3039 = vmatpush2.msra.mxu0 0.0
    %3040 = vmatprep.subr.mxu0 0.0
    %3041 = vmatpush2.msra.mxu0 0.0
    %3042 = vmatprep.subr.mxu0 0.0
    %3043 = vmatpush2.msra.mxu0 0.0
    %3044 = vmatprep.subr.mxu0 0.0
    %3045 = vmatpush2.msra.mxu0 0.0
    %3046 = vmatprep.subr.mxu0 0.0
    %3047 = vmatpush2.msra.mxu0 0.0
    %3048 = vmatprep.mubr.f32.mxu0 0.0
    %3049 = vmatmul.mubr.f32.gmra.mxu0 %v2982
    %v3050 = vpop.f32.mrf.mxu0
    %v3051 = vadd.f32 0.0, %v3050
    %v3052 = vpop.f32.mrf.mxu0
    %3053 = vdwg.mxu0
    %3054 = vrot.lane.b32.xlu0 %v2063, 96
    %v3055 = vpop.permute.xlu0 %3054
    %v3058 = vsel %vm381, %v2746, 0
    %3060 = vmatprep.subr.mxu0 0.0
    %3061 = vmatpush1.msra.mxu0 0.0
    %3062 = vmatprep.subr.mxu0 0.0
    %3063 = vmatpush1.msra.mxu0 0.0
    %3064 = vmatprep.subr.mxu0 0.0
    %3065 = vmatpush1.msra.mxu0 0.0
    %3066 = vmatprep.subr.mxu0 0.0
    %3067 = vmatpush1.msra.mxu0 0.0
    %3068 = vmatprep.subr.mxu0 0.0
    %3069 = vmatpush1.msra.mxu0 0.0
    %3070 = vmatprep.subr.mxu0 0.0
    %3071 = vmatpush1.msra.mxu0 0.0
    %3072 = vmatprep.subr.mxu0 0.0
    %3073 = vmatpush1.msra.mxu0 0.0
    %3074 = vmatprep.subr.mxu0 0.0
    %3075 = vmatpush1.msra.mxu0 0.0
    %3076 = vmatprep.subr.mxu0 0.0
    %3077 = vmatpush1.msra.mxu0 0.0
    %3078 = vmatprep.subr.mxu0 0.0
    %3079 = vmatpush1.msra.mxu0 0.0
    %3080 = vmatprep.subr.mxu0 0.0
    %3081 = vmatpush1.msra.mxu0 0.0
    %3082 = vmatprep.subr.mxu0 0.0
    %3083 = vmatpush1.msra.mxu0 0.0
    %3084 = vmatprep.subr.mxu0 0.0
    %3085 = vmatpush1.msra.mxu0 0.0
    %3086 = vmatprep.subr.mxu0 0.0
    %3087 = vmatpush1.msra.mxu0 0.0
    %3088 = vmatprep.subr.mxu0 0.0
    %3089 = vmatpush1.msra.mxu0 0.0
    %3090 = vmatprep.subr.mxu0 0.0
    %3091 = vmatpush1.msra.mxu0 %v3055
    %3092 = vmatprep.subr.mxu0 0.0
    %3093 = vmatpush2.msra.mxu0 0.0
    %3094 = vmatprep.subr.mxu0 0.0
    %3095 = vmatpush2.msra.mxu0 0.0
    %3096 = vmatprep.subr.mxu0 0.0
    %3097 = vmatpush2.msra.mxu0 0.0
    %3098 = vmatprep.subr.mxu0 0.0
    %3099 = vmatpush2.msra.mxu0 0.0
    %3100 = vmatprep.subr.mxu0 0.0
    %3101 = vmatpush2.msra.mxu0 0.0
    %3102 = vmatprep.subr.mxu0 0.0
    %3103 = vmatpush2.msra.mxu0 0.0
    %3104 = vmatprep.subr.mxu0 0.0
    %3105 = vmatpush2.msra.mxu0 0.0
    %3106 = vmatprep.subr.mxu0 0.0
    %3107 = vmatpush2.msra.mxu0 0.0
    %3108 = vmatprep.subr.mxu0 0.0
    %3109 = vmatpush2.msra.mxu0 0.0
    %3110 = vmatprep.subr.mxu0 0.0
    %3111 = vmatpush2.msra.mxu0 0.0
    %3112 = vmatprep.subr.mxu0 0.0
    %3113 = vmatpush2.msra.mxu0 0.0
    %3114 = vmatprep.subr.mxu0 0.0
    %3115 = vmatpush2.msra.mxu0 0.0
    %3116 = vmatprep.subr.mxu0 0.0
    %3117 = vmatpush2.msra.mxu0 0.0
    %3118 = vmatprep.subr.mxu0 0.0
    %3119 = vmatpush2.msra.mxu0 0.0
    %3120 = vmatprep.subr.mxu0 0.0
    %3121 = vmatpush2.msra.mxu0 0.0
    %3122 = vmatprep.subr.mxu0 0.0
    %3123 = vmatpush2.msra.mxu0 0.0
    %3124 = vmatprep.mubr.f32.mxu0 0.0
    %3125 = vmatmul.mubr.f32.gmra.mxu0 %v3058
    %v3126 = vpop.f32.mrf.mxu0
    %v3127 = vadd.f32 0.0, %v3126
    %v3128 = vpop.f32.mrf.mxu0
    %3129 = vdwg.mxu0
    %3130 = vrot.lane.b32.xlu0 %v2065, 96
    %v3131 = vpop.permute.xlu0 %3130
    %v3134 = vsel %vm381, %v2747, 0
    %3136 = vmatprep.subr.mxu0 0.0
    %3137 = vmatpush1.msra.mxu0 0.0
    %3138 = vmatprep.subr.mxu0 0.0
    %3139 = vmatpush1.msra.mxu0 0.0
    %3140 = vmatprep.subr.mxu0 0.0
    %3141 = vmatpush1.msra.mxu0 0.0
    %3142 = vmatprep.subr.mxu0 0.0
    %3143 = vmatpush1.msra.mxu0 0.0
    %3144 = vmatprep.subr.mxu0 0.0
    %3145 = vmatpush1.msra.mxu0 0.0
    %3146 = vmatprep.subr.mxu0 0.0
    %3147 = vmatpush1.msra.mxu0 0.0
    %3148 = vmatprep.subr.mxu0 0.0
    %3149 = vmatpush1.msra.mxu0 0.0
    %3150 = vmatprep.subr.mxu0 0.0
    %3151 = vmatpush1.msra.mxu0 0.0
    %3152 = vmatprep.subr.mxu0 0.0
    %3153 = vmatpush1.msra.mxu0 0.0
    %3154 = vmatprep.subr.mxu0 0.0
    %3155 = vmatpush1.msra.mxu0 0.0
    %3156 = vmatprep.subr.mxu0 0.0
    %3157 = vmatpush1.msra.mxu0 0.0
    %3158 = vmatprep.subr.mxu0 0.0
    %3159 = vmatpush1.msra.mxu0 0.0
    %3160 = vmatprep.subr.mxu0 0.0
    %3161 = vmatpush1.msra.mxu0 0.0
    %3162 = vmatprep.subr.mxu0 0.0
    %3163 = vmatpush1.msra.mxu0 0.0
    %3164 = vmatprep.subr.mxu0 0.0
    %3165 = vmatpush1.msra.mxu0 0.0
    %3166 = vmatprep.subr.mxu0 0.0
    %3167 = vmatpush1.msra.mxu0 %v3131
    %3168 = vmatprep.subr.mxu0 0.0
    %3169 = vmatpush2.msra.mxu0 0.0
    %3170 = vmatprep.subr.mxu0 0.0
    %3171 = vmatpush2.msra.mxu0 0.0
    %3172 = vmatprep.subr.mxu0 0.0
    %3173 = vmatpush2.msra.mxu0 0.0
    %3174 = vmatprep.subr.mxu0 0.0
    %3175 = vmatpush2.msra.mxu0 0.0
    %3176 = vmatprep.subr.mxu0 0.0
    %3177 = vmatpush2.msra.mxu0 0.0
    %3178 = vmatprep.subr.mxu0 0.0
    %3179 = vmatpush2.msra.mxu0 0.0
    %3180 = vmatprep.subr.mxu0 0.0
    %3181 = vmatpush2.msra.mxu0 0.0
    %3182 = vmatprep.subr.mxu0 0.0
    %3183 = vmatpush2.msra.mxu0 0.0
    %3184 = vmatprep.subr.mxu0 0.0
    %3185 = vmatpush2.msra.mxu0 0.0
    %3186 = vmatprep.subr.mxu0 0.0
    %3187 = vmatpush2.msra.mxu0 0.0
    %3188 = vmatprep.subr.mxu0 0.0
    %3189 = vmatpush2.msra.mxu0 0.0
    %3190 = vmatprep.subr.mxu0 0.0
    %3191 = vmatpush2.msra.mxu0 0.0
    %3192 = vmatprep.subr.mxu0 0.0
    %3193 = vmatpush2.msra.mxu0 0.0
    %3194 = vmatprep.subr.mxu0 0.0
    %3195 = vmatpush2.msra.mxu0 0.0
    %3196 = vmatprep.subr.mxu0 0.0
    %3197 = vmatpush2.msra.mxu0 0.0
    %3198 = vmatprep.subr.mxu0 0.0
    %3199 = vmatpush2.msra.mxu0 0.0
    %3200 = vmatprep.mubr.f32.mxu0 0.0
    %3201 = vmatmul.mubr.f32.gmra.mxu0 %v3134
    %v3202 = vpop.f32.mrf.mxu0
    %v3203 = vadd.f32 0.0, %v3202
    %v3204 = vpop.f32.mrf.mxu0
    %3205 = vdwg.mxu0
    %3206 = vrot.lane.b32.xlu0 %v2067, 96
    %v3207 = vpop.permute.xlu0 %3206
    %v3210 = vsel %vm381, %v2748, 0
    %3212 = vmatprep.subr.mxu0 0.0
    %3213 = vmatpush1.msra.mxu0 0.0
    %3214 = vmatprep.subr.mxu0 0.0
    %3215 = vmatpush1.msra.mxu0 0.0
    %3216 = vmatprep.subr.mxu0 0.0
    %3217 = vmatpush1.msra.mxu0 0.0
    %3218 = vmatprep.subr.mxu0 0.0
    %3219 = vmatpush1.msra.mxu0 0.0
    %3220 = vmatprep.subr.mxu0 0.0
    %3221 = vmatpush1.msra.mxu0 0.0
    %3222 = vmatprep.subr.mxu0 0.0
    %3223 = vmatpush1.msra.mxu0 0.0
    %3224 = vmatprep.subr.mxu0 0.0
    %3225 = vmatpush1.msra.mxu0 0.0
    %3226 = vmatprep.subr.mxu0 0.0
    %3227 = vmatpush1.msra.mxu0 0.0
    %3228 = vmatprep.subr.mxu0 0.0
    %3229 = vmatpush1.msra.mxu0 0.0
    %3230 = vmatprep.subr.mxu0 0.0
    %3231 = vmatpush1.msra.mxu0 0.0
    %3232 = vmatprep.subr.mxu0 0.0
    %3233 = vmatpush1.msra.mxu0 0.0
    %3234 = vmatprep.subr.mxu0 0.0
    %3235 = vmatpush1.msra.mxu0 0.0
    %3236 = vmatprep.subr.mxu0 0.0
    %3237 = vmatpush1.msra.mxu0 0.0
    %3238 = vmatprep.subr.mxu0 0.0
    %3239 = vmatpush1.msra.mxu0 0.0
    %3240 = vmatprep.subr.mxu0 0.0
    %3241 = vmatpush1.msra.mxu0 0.0
    %3242 = vmatprep.subr.mxu0 0.0
    %3243 = vmatpush1.msra.mxu0 %v3207
    %3244 = vmatprep.subr.mxu0 0.0
    %3245 = vmatpush2.msra.mxu0 0.0
    %3246 = vmatprep.subr.mxu0 0.0
    %3247 = vmatpush2.msra.mxu0 0.0
    %3248 = vmatprep.subr.mxu0 0.0
    %3249 = vmatpush2.msra.mxu0 0.0
    %3250 = vmatprep.subr.mxu0 0.0
    %3251 = vmatpush2.msra.mxu0 0.0
    %3252 = vmatprep.subr.mxu0 0.0
    %3253 = vmatpush2.msra.mxu0 0.0
    %3254 = vmatprep.subr.mxu0 0.0
    %3255 = vmatpush2.msra.mxu0 0.0
    %3256 = vmatprep.subr.mxu0 0.0
    %3257 = vmatpush2.msra.mxu0 0.0
    %3258 = vmatprep.subr.mxu0 0.0
    %3259 = vmatpush2.msra.mxu0 0.0
    %3260 = vmatprep.subr.mxu0 0.0
    %3261 = vmatpush2.msra.mxu0 0.0
    %3262 = vmatprep.subr.mxu0 0.0
    %3263 = vmatpush2.msra.mxu0 0.0
    %3264 = vmatprep.subr.mxu0 0.0
    %3265 = vmatpush2.msra.mxu0 0.0
    %3266 = vmatprep.subr.mxu0 0.0
    %3267 = vmatpush2.msra.mxu0 0.0
    %3268 = vmatprep.subr.mxu0 0.0
    %3269 = vmatpush2.msra.mxu0 0.0
    %3270 = vmatprep.subr.mxu0 0.0
    %3271 = vmatpush2.msra.mxu0 0.0
    %3272 = vmatprep.subr.mxu0 0.0
    %3273 = vmatpush2.msra.mxu0 0.0
    %3274 = vmatprep.subr.mxu0 0.0
    %3275 = vmatpush2.msra.mxu0 0.0
    %3276 = vmatprep.mubr.f32.mxu0 0.0
    %3277 = vmatmul.mubr.f32.gmra.mxu0 %v3210
    %v3278 = vpop.f32.mrf.mxu0
    %v3279 = vadd.f32 0.0, %v3278
    %v3280 = vpop.f32.mrf.mxu0
    %3281 = vdwg.mxu0
    %3282 = vrot.lane.b32.xlu0 %v2069, 96
    %v3283 = vpop.permute.xlu0 %3282
    %v3286 = vsel %vm381, %v2749, 0
    %3288 = vmatprep.subr.mxu0 0.0
    %3289 = vmatpush1.msra.mxu0 0.0
    %3290 = vmatprep.subr.mxu0 0.0
    %3291 = vmatpush1.msra.mxu0 0.0
    %3292 = vmatprep.subr.mxu0 0.0
    %3293 = vmatpush1.msra.mxu0 0.0
    %3294 = vmatprep.subr.mxu0 0.0
    %3295 = vmatpush1.msra.mxu0 0.0
    %3296 = vmatprep.subr.mxu0 0.0
    %3297 = vmatpush1.msra.mxu0 0.0
    %3298 = vmatprep.subr.mxu0 0.0
    %3299 = vmatpush1.msra.mxu0 0.0
    %3300 = vmatprep.subr.mxu0 0.0
    %3301 = vmatpush1.msra.mxu0 0.0
    %3302 = vmatprep.subr.mxu0 0.0
    %3303 = vmatpush1.msra.mxu0 0.0
    %3304 = vmatprep.subr.mxu0 0.0
    %3305 = vmatpush1.msra.mxu0 0.0
    %3306 = vmatprep.subr.mxu0 0.0
    %3307 = vmatpush1.msra.mxu0 0.0
    %3308 = vmatprep.subr.mxu0 0.0
    %3309 = vmatpush1.msra.mxu0 0.0
    %3310 = vmatprep.subr.mxu0 0.0
    %3311 = vmatpush1.msra.mxu0 0.0
    %3312 = vmatprep.subr.mxu0 0.0
    %3313 = vmatpush1.msra.mxu0 0.0
    %3314 = vmatprep.subr.mxu0 0.0
    %3315 = vmatpush1.msra.mxu0 0.0
    %3316 = vmatprep.subr.mxu0 0.0
    %3317 = vmatpush1.msra.mxu0 0.0
    %3318 = vmatprep.subr.mxu0 0.0
    %3319 = vmatpush1.msra.mxu0 %v3283
    %3320 = vmatprep.subr.mxu0 0.0
    %3321 = vmatpush2.msra.mxu0 0.0
    %3322 = vmatprep.subr.mxu0 0.0
    %3323 = vmatpush2.msra.mxu0 0.0
    %3324 = vmatprep.subr.mxu0 0.0
    %3325 = vmatpush2.msra.mxu0 0.0
    %3326 = vmatprep.subr.mxu0 0.0
    %3327 = vmatpush2.msra.mxu0 0.0
    %3328 = vmatprep.subr.mxu0 0.0
    %3329 = vmatpush2.msra.mxu0 0.0
    %3330 = vmatprep.subr.mxu0 0.0
    %3331 = vmatpush2.msra.mxu0 0.0
    %3332 = vmatprep.subr.mxu0 0.0
    %3333 = vmatpush2.msra.mxu0 0.0
    %3334 = vmatprep.subr.mxu0 0.0
    %3335 = vmatpush2.msra.mxu0 0.0
    %3336 = vmatprep.subr.mxu0 0.0
    %3337 = vmatpush2.msra.mxu0 0.0
    %3338 = vmatprep.subr.mxu0 0.0
    %3339 = vmatpush2.msra.mxu0 0.0
    %3340 = vmatprep.subr.mxu0 0.0
    %3341 = vmatpush2.msra.mxu0 0.0
    %3342 = vmatprep.subr.mxu0 0.0
    %3343 = vmatpush2.msra.mxu0 0.0
    %3344 = vmatprep.subr.mxu0 0.0
    %3345 = vmatpush2.msra.mxu0 0.0
    %3346 = vmatprep.subr.mxu0 0.0
    %3347 = vmatpush2.msra.mxu0 0.0
    %3348 = vmatprep.subr.mxu0 0.0
    %3349 = vmatpush2.msra.mxu0 0.0
    %3350 = vmatprep.subr.mxu0 0.0
    %3351 = vmatpush2.msra.mxu0 0.0
    %3352 = vmatprep.mubr.f32.mxu0 0.0
    %3353 = vmatmul.mubr.f32.gmra.mxu0 %v3286
    %v3354 = vpop.f32.mrf.mxu0
    %v3355 = vadd.f32 0.0, %v3354
    %v3356 = vpop.f32.mrf.mxu0
    %3357 = vdwg.mxu0
    %3360 = vrot.lane.b32.xlu0 %v2975, 8
    %v3361 = vpop.permute.xlu0 %3360
    %3362 = vrot.lane.b32.xlu0 %v3051, 8
    %v3363 = vpop.permute.xlu0 %3362
    %3368 = vrot.lane.b32.xlu0 %v3127, 16
    %v3369 = vpop.permute.xlu0 %3368
    %3370 = vrot.lane.b32.xlu0 %v3203, 16
    %v3371 = vpop.permute.xlu0 %3370
    %3376 = vrot.lane.b32.xlu0 %v3279, 24
    %v3377 = vpop.permute.xlu0 %3376
    %3378 = vrot.lane.b32.xlu0 %v3355, 24
    %v3379 = vpop.permute.xlu0 %3378
    %v3382 = vsel %vm381, %v2823, %v3361
    %v3383 = vsel %vm381, %v2899, %v3363
    %v3384 = vsel %vm1710, %v3382, %v3369
    %v3385 = vsel %vm1710, %v3383, %v3371
    %v3386 = vsel %vm1713, %v3384, %v3377
    %v3387 = vsel %vm1713, %v3385, %v3379
    %v3389 = vlaneseq
    %v3390 = vshrl.u32 %v3389, 7
    %v3391 = vsub.s32 0, %v3390
    %v3392 = vrot.slane %v2041, %v3391
    %v3395 = vsel %vm220, %v3386, 0
    %v3398 = vsel %vm220, %v3387, 0
    %3400 = vmatprep.subr.mxu0 0.0
    %3401 = vmatpush1.msra.mxu0 0.0
    %3402 = vmatprep.subr.mxu0 0.0
    %3403 = vmatpush1.msra.mxu0 0.0
    %3404 = vmatprep.subr.mxu0 0.0
    %3405 = vmatpush1.msra.mxu0 0.0
    %3406 = vmatprep.subr.mxu0 0.0
    %3407 = vmatpush1.msra.mxu0 0.0
    %3408 = vmatprep.subr.mxu0 0.0
    %3409 = vmatpush1.msra.mxu0 0.0
    %3410 = vmatprep.subr.mxu0 0.0
    %3411 = vmatpush1.msra.mxu0 0.0
    %3412 = vmatprep.subr.mxu0 0.0
    %3413 = vmatpush1.msra.mxu0 0.0
    %3414 = vmatprep.subr.mxu0 0.0
    %3415 = vmatpush1.msra.mxu0 0.0
    %3416 = vmatprep.subr.mxu0 0.0
    %3417 = vmatpush1.msra.mxu0 0.0
    %3418 = vmatprep.subr.mxu0 0.0
    %3419 = vmatpush1.msra.mxu0 0.0
    %3420 = vmatprep.subr.mxu0 0.0
    %3421 = vmatpush1.msra.mxu0 0.0
    %3422 = vmatprep.subr.mxu0 0.0
    %3423 = vmatpush1.msra.mxu0 0.0
    %3424 = vmatprep.subr.mxu0 0.0
    %3425 = vmatpush1.msra.mxu0 %v2040
    %3426 = vmatprep.subr.mxu0 0.0
    %3427 = vmatpush1.msra.mxu0 %v2039
    %3428 = vmatprep.subr.mxu0 0.0
    %3429 = vmatpush1.msra.mxu0 %v2038
    %3430 = vmatprep.subr.mxu0 0.0
    %3431 = vmatpush1.msra.mxu0 %v2037
    %3432 = vmatprep.subr.mxu0 0.0
    %3433 = vmatpush2.msra.mxu0 0.0
    %3434 = vmatprep.subr.mxu0 0.0
    %3435 = vmatpush2.msra.mxu0 0.0
    %3436 = vmatprep.subr.mxu0 0.0
    %3437 = vmatpush2.msra.mxu0 0.0
    %3438 = vmatprep.subr.mxu0 0.0
    %3439 = vmatpush2.msra.mxu0 0.0
    %3440 = vmatprep.subr.mxu0 0.0
    %3441 = vmatpush2.msra.mxu0 0.0
    %3442 = vmatprep.subr.mxu0 0.0
    %3443 = vmatpush2.msra.mxu0 0.0
    %3444 = vmatprep.subr.mxu0 0.0
    %3445 = vmatpush2.msra.mxu0 0.0
    %3446 = vmatprep.subr.mxu0 0.0
    %3447 = vmatpush2.msra.mxu0 0.0
    %3448 = vmatprep.subr.mxu0 0.0
    %3449 = vmatpush2.msra.mxu0 0.0
    %3450 = vmatprep.subr.mxu0 0.0
    %3451 = vmatpush2.msra.mxu0 0.0
    %3452 = vmatprep.subr.mxu0 0.0
    %3453 = vmatpush2.msra.mxu0 0.0
    %3454 = vmatprep.subr.mxu0 0.0
    %3455 = vmatpush2.msra.mxu0 0.0
    %3456 = vmatprep.subr.mxu0 0.0
    %3457 = vmatpush2.msra.mxu0 0.0
    %3458 = vmatprep.subr.mxu0 0.0
    %3459 = vmatpush2.msra.mxu0 0.0
    %3460 = vmatprep.subr.mxu0 0.0
    %3461 = vmatpush2.msra.mxu0 0.0
    %3462 = vmatprep.subr.mxu0 0.0
    %3463 = vmatpush2.msra.mxu0 0.0
    %3464 = vmatprep.mubr.f32.mxu0 0.0
    %3465 = vmatmul.mubr.f32.gmra.mxu0 %v3395
    %v3466 = vpop.f32.mrf.mxu0
    %v3467 = vadd.f32 %v3392, %v3466
    %v3468 = vpop.f32.mrf.mxu0
    %3469 = vmatprep.mubr.f32.mxu0 0.0
    %3470 = vmatmul.mubr.f32.gmra.mxu0 %v3398
    %v3471 = vpop.f32.mrf.mxu0
    %v3472 = vadd.f32 %v3392, %v3471
    %v3473 = vpop.f32.mrf.mxu0
    %3474 = vdwg.mxu0
    %v3475 = vadd.f32 %v1803, %v3467
    %v3476 = vadd.f32 %v1804, %v3472
    %s3477 = sld [smem:[#allocation18 + $0x4]]
    %s3478 = sld [smem:[#allocation18 + $0x5]]
    %v3479 = vsel %vm220, %v3475, 0.0
    %3480 = vadd.xlane.f32.xlu0 %v3479
    %v3481 = vpop.xlane.xlu0 %3480
    %v3482 = vsel %vm220, %v3476, 0.0
    %3483 = vadd.xlane.f32.xlu0 %v3482
    %v3484 = vpop.xlane.xlu0 %3483
    %v3485 = vmul.f32 %v3481, %v227
    %v3486 = vmul.f32 %v3484, %v227
    %v3487 = vsub.f32 %v3475, %v3485
    %v3488 = vsub.f32 %v3476, %v3486
    %v3489 = vmul.f32 %v3487, %v3487
    %v3490 = vmul.f32 %v3488, %v3488
    %v3491 = vsel %vm220, %v3489, 0.0
    %3492 = vadd.xlane.f32.xlu0 %v3491
    %v3493 = vpop.xlane.xlu0 %3492
    %v3494 = vsel %vm220, %v3490, 0.0
    %3495 = vadd.xlane.f32.xlu0 %v3494
    %v3496 = vpop.xlane.xlu0 %3495
    %v3497 = vmul.f32 %v3493, 0.032258064
    %v3498 = vmul.f32 %v3496, 0.032258064
    %v3499 = vrsqrt.pop %v3497
    %v3500 = vmul.f32 %v3497, %v3499
    %vm3501 = vcmp.eq.f32.partialorder %v3497, inf
    %v3502 = vsel %vm3501, %v3497, %v3500
    %vm3503 = vcmp.eq.f32.partialorder %v3497, 0.0
    %v3504 = vand.u32 %v3497, 2147483648
    %v3505 = vsel %vm3503, %v3504, %v3502
    %v3506 = vrsqrt.pop %v3498
    %v3507 = vmul.f32 %v3498, %v3506
    %vm3508 = vcmp.eq.f32.partialorder %v3498, inf
    %v3509 = vsel %vm3508, %v3498, %v3507
    %vm3510 = vcmp.eq.f32.partialorder %v3498, 0.0
    %v3511 = vand.u32 %v3498, 2147483648
    %v3512 = vsel %vm3510, %v3511, %v3509
    %v3513 = vstv %s3477
    %v3514 = vmul.f32 %v3513, %v3487
    %v3515 = vmul.f32 %v3513, %v3488
    %v3516 = vadd.f32 %v3505, 1e-06
    %v3517 = vadd.f32 %v3512, 1e-06
    %v3518 = vrcp.pop %v3516
    %v3519 = vrcp.pop %v3517
    %v3520 = vmul.f32 %v3514, %v3518
    %v3521 = vmul.f32 %v3515, %v3519
    %v3522 = vstv %s3478
    %v3523 = vadd.f32 %v3520, %v3522
    %v3524 = vadd.f32 %v3521, %v3522
    %v3525 = vld [vmem:[%s14] sm:$0xff]
    %v3526 = vld [vmem:[%s14 + $0x8] sm:$0xff]
    %v3527 = vld [vmem:[%s14 + $0x10] sm:$0xff]
    %v3528 = vld [vmem:[%s14 + $0x18] sm:$0xff]
    %v3529 = vld [vmem:[#allocation15] sm:$0x1]
    %v3531 = vlaneseq
    %v3532 = vshrl.u32 %v3531, 7
    %v3533 = vsub.s32 0, %v3532
    %v3534 = vrot.slane %v3529, %v3533
    %v3537 = vsel %vm220, %v3523, 0
    %v3540 = vsel %vm220, %v3524, 0
    %3542 = vmatprep.subr.mxu0 0.0
    %3543 = vmatpush1.msra.mxu0 0.0
    %3544 = vmatprep.subr.mxu0 0.0
    %3545 = vmatpush1.msra.mxu0 0.0
    %3546 = vmatprep.subr.mxu0 0.0
    %3547 = vmatpush1.msra.mxu0 0.0
    %3548 = vmatprep.subr.mxu0 0.0
    %3549 = vmatpush1.msra.mxu0 0.0
    %3550 = vmatprep.subr.mxu0 0.0
    %3551 = vmatpush1.msra.mxu0 0.0
    %3552 = vmatprep.subr.mxu0 0.0
    %3553 = vmatpush1.msra.mxu0 0.0
    %3554 = vmatprep.subr.mxu0 0.0
    %3555 = vmatpush1.msra.mxu0 0.0
    %3556 = vmatprep.subr.mxu0 0.0
    %3557 = vmatpush1.msra.mxu0 0.0
    %3558 = vmatprep.subr.mxu0 0.0
    %3559 = vmatpush1.msra.mxu0 0.0
    %3560 = vmatprep.subr.mxu0 0.0
    %3561 = vmatpush1.msra.mxu0 0.0
    %3562 = vmatprep.subr.mxu0 0.0
    %3563 = vmatpush1.msra.mxu0 0.0
    %3564 = vmatprep.subr.mxu0 0.0
    %3565 = vmatpush1.msra.mxu0 0.0
    %3566 = vmatprep.subr.mxu0 0.0
    %3567 = vmatpush1.msra.mxu0 %v3528
    %3568 = vmatprep.subr.mxu0 0.0
    %3569 = vmatpush1.msra.mxu0 %v3527
    %3570 = vmatprep.subr.mxu0 0.0
    %3571 = vmatpush1.msra.mxu0 %v3526
    %3572 = vmatprep.subr.mxu0 0.0
    %3573 = vmatpush1.msra.mxu0 %v3525
    %3574 = vmatprep.subr.mxu0 0.0
    %3575 = vmatpush2.msra.mxu0 0.0
    %3576 = vmatprep.subr.mxu0 0.0
    %3577 = vmatpush2.msra.mxu0 0.0
    %3578 = vmatprep.subr.mxu0 0.0
    %3579 = vmatpush2.msra.mxu0 0.0
    %3580 = vmatprep.subr.mxu0 0.0
    %3581 = vmatpush2.msra.mxu0 0.0
    %3582 = vmatprep.subr.mxu0 0.0
    %3583 = vmatpush2.msra.mxu0 0.0
    %3584 = vmatprep.subr.mxu0 0.0
    %3585 = vmatpush2.msra.mxu0 0.0
    %3586 = vmatprep.subr.mxu0 0.0
    %3587 = vmatpush2.msra.mxu0 0.0
    %3588 = vmatprep.subr.mxu0 0.0
    %3589 = vmatpush2.msra.mxu0 0.0
    %3590 = vmatprep.subr.mxu0 0.0
    %3591 = vmatpush2.msra.mxu0 0.0
    %3592 = vmatprep.subr.mxu0 0.0
    %3593 = vmatpush2.msra.mxu0 0.0
    %3594 = vmatprep.subr.mxu0 0.0
    %3595 = vmatpush2.msra.mxu0 0.0
    %3596 = vmatprep.subr.mxu0 0.0
    %3597 = vmatpush2.msra.mxu0 0.0
    %3598 = vmatprep.subr.mxu0 0.0
    %3599 = vmatpush2.msra.mxu0 0.0
    %3600 = vmatprep.subr.mxu0 0.0
    %3601 = vmatpush2.msra.mxu0 0.0
    %3602 = vmatprep.subr.mxu0 0.0
    %3603 = vmatpush2.msra.mxu0 0.0
    %3604 = vmatprep.subr.mxu0 0.0
    %3605 = vmatpush2.msra.mxu0 0.0
    %3606 = vmatprep.mubr.f32.mxu0 0.0
    %3607 = vmatmul.mubr.f32.gmra.mxu0 %v3537
    %v3608 = vpop.f32.mrf.mxu0
    %v3609 = vadd.f32 %v3534, %v3608
    %v3610 = vpop.f32.mrf.mxu0
    %3611 = vmatprep.mubr.f32.mxu0 0.0
    %3612 = vmatmul.mubr.f32.gmra.mxu0 %v3540
    %v3613 = vpop.f32.mrf.mxu0
    %v3614 = vadd.f32 %v3534, %v3613
    %v3615 = vpop.f32.mrf.mxu0
    %3616 = vdwg.mxu0
    %v3617 = vmax.f32 %v3609, 0.0
    %v3618 = vmax.f32 %v3614, 0.0
    %v3619 = vld [vmem:[%s16] sm:$0xff]
    %v3620 = vld [vmem:[%s16 + $0x8] sm:$0xff]
    %v3621 = vld [vmem:[%s16 + $0x10] sm:$0xff]
    %v3622 = vld [vmem:[%s16 + $0x18] sm:$0xff]
    %v3623 = vld [vmem:[%s16 + $0x20] sm:$0xff]
    %v3624 = vld [vmem:[%s16 + $0x28] sm:$0xff]
    %v3625 = vld [vmem:[%s16 + $0x30] sm:$0xff]
    %v3626 = vld [vmem:[%s16 + $0x38] sm:$0xff]
    %vm3627 = vcmask 523264
    %v3629 = vsel %vm3627, %v3617, 0
    %v3632 = vsel %vm3627, %v3618, 0
    %3634 = vmatprep.subr.mxu0 0.0
    %3635 = vmatpush1.msra.mxu0 0.0
    %3636 = vmatprep.subr.mxu0 0.0
    %3637 = vmatpush1.msra.mxu0 0.0
    %3638 = vmatprep.subr.mxu0 0.0
    %3639 = vmatpush1.msra.mxu0 0.0
    %3640 = vmatprep.subr.mxu0 0.0
    %3641 = vmatpush1.msra.mxu0 0.0
    %3642 = vmatprep.subr.mxu0 0.0
    %3643 = vmatpush1.msra.mxu0 0.0
    %3644 = vmatprep.subr.mxu0 0.0
    %3645 = vmatpush1.msra.mxu0 0.0
    %3646 = vmatprep.subr.mxu0 0.0
    %3647 = vmatpush1.msra.mxu0 0.0
    %3648 = vmatprep.subr.mxu0 0.0
    %3649 = vmatpush1.msra.mxu0 0.0
    %3650 = vmatprep.subr.mxu0 0.0
    %3651 = vmatpush1.msra.mxu0 %v3626
    %3652 = vmatprep.subr.mxu0 0.0
    %3653 = vmatpush1.msra.mxu0 %v3625
    %3654 = vmatprep.subr.mxu0 0.0
    %3655 = vmatpush1.msra.mxu0 %v3624
    %3656 = vmatprep.subr.mxu0 0.0
    %3657 = vmatpush1.msra.mxu0 %v3623
    %3658 = vmatprep.subr.mxu0 0.0
    %3659 = vmatpush1.msra.mxu0 %v3622
    %3660 = vmatprep.subr.mxu0 0.0
    %3661 = vmatpush1.msra.mxu0 %v3621
    %3662 = vmatprep.subr.mxu0 0.0
    %3663 = vmatpush1.msra.mxu0 %v3620
    %3664 = vmatprep.subr.mxu0 0.0
    %3665 = vmatpush1.msra.mxu0 %v3619
    %3666 = vmatprep.subr.mxu0 0.0
    %3667 = vmatpush2.msra.mxu0 0.0
    %3668 = vmatprep.subr.mxu0 0.0
    %3669 = vmatpush2.msra.mxu0 0.0
    %3670 = vmatprep.subr.mxu0 0.0
    %3671 = vmatpush2.msra.mxu0 0.0
    %3672 = vmatprep.subr.mxu0 0.0
    %3673 = vmatpush2.msra.mxu0 0.0
    %3674 = vmatprep.subr.mxu0 0.0
    %3675 = vmatpush2.msra.mxu0 0.0
    %3676 = vmatprep.subr.mxu0 0.0
    %3677 = vmatpush2.msra.mxu0 0.0
    %3678 = vmatprep.subr.mxu0 0.0
    %3679 = vmatpush2.msra.mxu0 0.0
    %3680 = vmatprep.subr.mxu0 0.0
    %3681 = vmatpush2.msra.mxu0 0.0
    %3682 = vmatprep.subr.mxu0 0.0
    %3683 = vmatpush2.msra.mxu0 0.0
    %3684 = vmatprep.subr.mxu0 0.0
    %3685 = vmatpush2.msra.mxu0 0.0
    %3686 = vmatprep.subr.mxu0 0.0
    %3687 = vmatpush2.msra.mxu0 0.0
    %3688 = vmatprep.subr.mxu0 0.0
    %3689 = vmatpush2.msra.mxu0 0.0
    %3690 = vmatprep.subr.mxu0 0.0
    %3691 = vmatpush2.msra.mxu0 0.0
    %3692 = vmatprep.subr.mxu0 0.0
    %3693 = vmatpush2.msra.mxu0 0.0
    %3694 = vmatprep.subr.mxu0 0.0
    %3695 = vmatpush2.msra.mxu0 0.0
    %3696 = vmatprep.subr.mxu0 0.0
    %3697 = vmatpush2.msra.mxu0 0.0
    %3698 = vmatprep.mubr.f32.mxu0 0.0
    %3699 = vmatmul.mubr.f32.gmra.mxu0 %v3629
    %v3700 = vpop.f32.mrf.mxu0
    %v3701 = vadd.f32 0.0, %v3700
    %v3702 = vpop.f32.mrf.mxu0
    %3703 = vmatprep.mubr.f32.mxu0 0.0
    %3704 = vmatmul.mubr.f32.gmra.mxu0 %v3632
    %v3705 = vpop.f32.mrf.mxu0
    %v3706 = vadd.f32 0.0, %v3705
    %v3707 = vpop.f32.mrf.mxu0
    %3708 = vdwg.mxu0
    %v3709 = vadd.f32 %v3475, %v3701
    %v3710 = vadd.f32 %v3476, %v3706
    %v3711 = vld [vmem:[#allocation16] sm:$0x1]
    %v3713 = vlaneseq
    %v3714 = vshrl.u32 %v3713, 7
    %v3715 = vsub.s32 0, %v3714
    %v3716 = vrot.slane %v3711, %v3715
    %v3718 = vadd.f32 %v3709, %v3716
    %v3719 = vadd.f32 %v3710, %v3716
    %s3720 = sld [smem:[#allocation18 + $0x80]]
    %s3721 = sld [smem:[#allocation18 + $0x81]]
    %v3722 = vsel %vm220, %v3718, 0.0
    %3723 = vadd.xlane.f32.xlu0 %v3722
    %v3724 = vpop.xlane.xlu0 %3723
    %v3725 = vsel %vm220, %v3719, 0.0
    %3726 = vadd.xlane.f32.xlu0 %v3725
    %v3727 = vpop.xlane.xlu0 %3726
    %v3728 = vmul.f32 %v3724, %v227
    %v3729 = vmul.f32 %v3727, %v227
    %v3730 = vsub.f32 %v3718, %v3728
    %v3731 = vsub.f32 %v3719, %v3729
    %v3732 = vmul.f32 %v3730, %v3730
    %v3733 = vmul.f32 %v3731, %v3731
    %v3734 = vsel %vm220, %v3732, 0.0
    %3735 = vadd.xlane.f32.xlu0 %v3734
    %v3736 = vpop.xlane.xlu0 %3735
    %v3737 = vsel %vm220, %v3733, 0.0
    %3738 = vadd.xlane.f32.xlu0 %v3737
    %v3739 = vpop.xlane.xlu0 %3738
    %v3740 = vmul.f32 %v3736, 0.032258064
    %v3741 = vmul.f32 %v3739, 0.032258064
    %v3742 = vrsqrt.pop %v3740
    %v3743 = vmul.f32 %v3740, %v3742
    %vm3744 = vcmp.eq.f32.partialorder %v3740, inf
    %v3745 = vsel %vm3744, %v3740, %v3743
    %vm3746 = vcmp.eq.f32.partialorder %v3740, 0.0
    %v3747 = vand.u32 %v3740, 2147483648
    %v3748 = vsel %vm3746, %v3747, %v3745
    %v3749 = vrsqrt.pop %v3741
    %v3750 = vmul.f32 %v3741, %v3749
    %vm3751 = vcmp.eq.f32.partialorder %v3741, inf
    %v3752 = vsel %vm3751, %v3741, %v3750
    %vm3753 = vcmp.eq.f32.partialorder %v3741, 0.0
    %v3754 = vand.u32 %v3741, 2147483648
    %v3755 = vsel %vm3753, %v3754, %v3752
    %v3756 = vstv %s3720
    %v3757 = vmul.f32 %v3756, %v3730
    %v3758 = vmul.f32 %v3756, %v3731
    %v3759 = vadd.f32 %v3748, 1e-06
    %v3760 = vadd.f32 %v3755, 1e-06
    %v3761 = vrcp.pop %v3759
    %v3762 = vrcp.pop %v3760
    %v3763 = vmul.f32 %v3757, %v3761
    %v3764 = vmul.f32 %v3758, %v3762
    %v3765 = vstv %s3721
    %v3766 = vadd.f32 %v3763, %v3765
    %v3767 = vadd.f32 %v3764, %v3765
    %s3768 = scalar_lea.vmem %s4, 32
    %v3769 = vld [vmem:[%s3768] sm:$0xff]
    %v3770 = vld [vmem:[%s3768 + $0x8] sm:$0xff]
    %v3771 = vld [vmem:[%s3768 + $0x10] sm:$0xff]
    %v3772 = vld [vmem:[%s3768 + $0x18] sm:$0xff]
    %s3773 = scalar_lea.vmem [#allocation7], 1
    %v3774 = vld [vmem:[%s3773] sm:$0x1]
    %v3776 = vlaneseq
    %v3777 = vshrl.u32 %v3776, 7
    %v3778 = vsub.s32 0, %v3777
    %v3779 = vrot.slane %v3774, %v3778
    %v3782 = vsel %vm220, %v3766, 0
    %v3785 = vsel %vm220, %v3767, 0
    %3787 = vmatprep.subr.mxu0 0.0
    %3788 = vmatpush1.msra.mxu0 0.0
    %3789 = vmatprep.subr.mxu0 0.0
    %3790 = vmatpush1.msra.mxu0 0.0
    %3791 = vmatprep.subr.mxu0 0.0
    %3792 = vmatpush1.msra.mxu0 0.0
    %3793 = vmatprep.subr.mxu0 0.0
    %3794 = vmatpush1.msra.mxu0 0.0
    %3795 = vmatprep.subr.mxu0 0.0
    %3796 = vmatpush1.msra.mxu0 0.0
    %3797 = vmatprep.subr.mxu0 0.0
    %3798 = vmatpush1.msra.mxu0 0.0
    %3799 = vmatprep.subr.mxu0 0.0
    %3800 = vmatpush1.msra.mxu0 0.0
    %3801 = vmatprep.subr.mxu0 0.0
    %3802 = vmatpush1.msra.mxu0 0.0
    %3803 = vmatprep.subr.mxu0 0.0
    %3804 = vmatpush1.msra.mxu0 0.0
    %3805 = vmatprep.subr.mxu0 0.0
    %3806 = vmatpush1.msra.mxu0 0.0
    %3807 = vmatprep.subr.mxu0 0.0
    %3808 = vmatpush1.msra.mxu0 0.0
    %3809 = vmatprep.subr.mxu0 0.0
    %3810 = vmatpush1.msra.mxu0 0.0
    %3811 = vmatprep.subr.mxu0 0.0
    %3812 = vmatpush1.msra.mxu0 %v3772
    %3813 = vmatprep.subr.mxu0 0.0
    %3814 = vmatpush1.msra.mxu0 %v3771
    %3815 = vmatprep.subr.mxu0 0.0
    %3816 = vmatpush1.msra.mxu0 %v3770
    %3817 = vmatprep.subr.mxu0 0.0
    %3818 = vmatpush1.msra.mxu0 %v3769
    %3819 = vmatprep.subr.mxu0 0.0
    %3820 = vmatpush2.msra.mxu0 0.0
    %3821 = vmatprep.subr.mxu0 0.0
    %3822 = vmatpush2.msra.mxu0 0.0
    %3823 = vmatprep.subr.mxu0 0.0
    %3824 = vmatpush2.msra.mxu0 0.0
    %3825 = vmatprep.subr.mxu0 0.0
    %3826 = vmatpush2.msra.mxu0 0.0
    %3827 = vmatprep.subr.mxu0 0.0
    %3828 = vmatpush2.msra.mxu0 0.0
    %3829 = vmatprep.subr.mxu0 0.0
    %3830 = vmatpush2.msra.mxu0 0.0
    %3831 = vmatprep.subr.mxu0 0.0
    %3832 = vmatpush2.msra.mxu0 0.0
    %3833 = vmatprep.subr.mxu0 0.0
    %3834 = vmatpush2.msra.mxu0 0.0
    %3835 = vmatprep.subr.mxu0 0.0
    %3836 = vmatpush2.msra.mxu0 0.0
    %3837 = vmatprep.subr.mxu0 0.0
    %3838 = vmatpush2.msra.mxu0 0.0
    %3839 = vmatprep.subr.mxu0 0.0
    %3840 = vmatpush2.msra.mxu0 0.0
    %3841 = vmatprep.subr.mxu0 0.0
    %3842 = vmatpush2.msra.mxu0 0.0
    %3843 = vmatprep.subr.mxu0 0.0
    %3844 = vmatpush2.msra.mxu0 0.0
    %3845 = vmatprep.subr.mxu0 0.0
    %3846 = vmatpush2.msra.mxu0 0.0
    %3847 = vmatprep.subr.mxu0 0.0
    %3848 = vmatpush2.msra.mxu0 0.0
    %3849 = vmatprep.subr.mxu0 0.0
    %3850 = vmatpush2.msra.mxu0 0.0
    %3851 = vmatprep.mubr.f32.mxu0 0.0
    %3852 = vmatmul.mubr.f32.gmra.mxu0 %v3782
    %v3853 = vpop.f32.mrf.mxu0
    %v3854 = vadd.f32 %v3779, %v3853
    %v3855 = vpop.f32.mrf.mxu0
    %3856 = vmatprep.mubr.f32.mxu0 0.0
    %3857 = vmatmul.mubr.f32.gmra.mxu0 %v3785
    %v3858 = vpop.f32.mrf.mxu0
    %v3859 = vadd.f32 %v3779, %v3858
    %v3860 = vpop.f32.mrf.mxu0
    %3861 = vdwg.mxu0
    %s3862 = scalar_lea.vmem %s6, 32
    %v3863 = vld [vmem:[%s3862] sm:$0xff]
    %v3864 = vld [vmem:[%s3862 + $0x8] sm:$0xff]
    %v3865 = vld [vmem:[%s3862 + $0x10] sm:$0xff]
    %v3866 = vld [vmem:[%s3862 + $0x18] sm:$0xff]
    %s3867 = scalar_lea.vmem [#allocation9], 1
    %v3868 = vld [vmem:[%s3867] sm:$0x1]
    %3871 = vrot.lane.b32.xlu0 %v3854, 120
    %v3872 = vpop.permute.xlu0 %3871
    %3873 = vrot.lane.b32.xlu0 %v3859, 120
    %v3874 = vpop.permute.xlu0 %3873
    %3875 = vrot.lane.b32.xlu0 %v3854, 112
    %v3876 = vpop.permute.xlu0 %3875
    %3877 = vrot.lane.b32.xlu0 %v3859, 112
    %v3878 = vpop.permute.xlu0 %3877
    %3879 = vrot.lane.b32.xlu0 %v3854, 104
    %v3880 = vpop.permute.xlu0 %3879
    %3881 = vrot.lane.b32.xlu0 %v3859, 104
    %v3882 = vpop.permute.xlu0 %3881
    %3883 = vrot.lane.b32.xlu0 %v3854, 96
    %v3884 = vpop.permute.xlu0 %3883
    %v3885 = vsel %vm381, %v3854, 0
    %v3887 = vsel %vm381, %v3884, 0
    %3889 = vmatprep.subr.mxu0 0.0
    %3890 = vmatpush1.xpose.msra.mxu0 0.0
    %3891 = vmatprep.subr.mxu0 0.0
    %3892 = vmatpush1.xpose.msra.mxu0 0.0
    %3893 = vmatprep.subr.mxu0 0.0
    %3894 = vmatpush1.xpose.msra.mxu0 0.0
    %3895 = vmatprep.subr.mxu0 0.0
    %3896 = vmatpush1.xpose.msra.mxu0 0.0
    %3897 = vmatprep.subr.mxu0 0.0
    %3898 = vmatpush1.xpose.msra.mxu0 0.0
    %3899 = vmatprep.subr.mxu0 0.0
    %3900 = vmatpush1.xpose.msra.mxu0 0.0
    %3901 = vmatprep.subr.mxu0 0.0
    %3902 = vmatpush1.xpose.msra.mxu0 0.0
    %3903 = vmatprep.subr.mxu0 0.0
    %3904 = vmatpush1.xpose.msra.mxu0 0.0
    %3905 = vmatprep.subr.mxu0 0.0
    %3906 = vmatpush1.xpose.msra.mxu0 0.0
    %3907 = vmatprep.subr.mxu0 0.0
    %3908 = vmatpush1.xpose.msra.mxu0 0.0
    %3909 = vmatprep.subr.mxu0 0.0
    %3910 = vmatpush1.xpose.msra.mxu0 0.0
    %3911 = vmatprep.subr.mxu0 0.0
    %3912 = vmatpush1.xpose.msra.mxu0 0.0
    %3913 = vmatprep.subr.mxu0 0.0
    %3914 = vmatpush1.xpose.msra.mxu0 0.0
    %3915 = vmatprep.subr.mxu0 0.0
    %3916 = vmatpush1.xpose.msra.mxu0 0.0
    %3917 = vmatprep.subr.mxu0 0.0
    %3918 = vmatpush1.xpose.msra.mxu0 0.0
    %3919 = vmatprep.subr.mxu0 0.0
    %3920 = vmatpush1.xpose.msra.mxu0 %v3887
    %3921 = vmatprep.subr.mxu0 0.0
    %3922 = vmatpush2.xpose.msra.mxu0 0.0
    %3923 = vmatprep.subr.mxu0 0.0
    %3924 = vmatpush2.xpose.msra.mxu0 0.0
    %3925 = vmatprep.subr.mxu0 0.0
    %3926 = vmatpush2.xpose.msra.mxu0 0.0
    %3927 = vmatprep.subr.mxu0 0.0
    %3928 = vmatpush2.xpose.msra.mxu0 0.0
    %3929 = vmatprep.subr.mxu0 0.0
    %3930 = vmatpush2.xpose.msra.mxu0 0.0
    %3931 = vmatprep.subr.mxu0 0.0
    %3932 = vmatpush2.xpose.msra.mxu0 0.0
    %3933 = vmatprep.subr.mxu0 0.0
    %3934 = vmatpush2.xpose.msra.mxu0 0.0
    %3935 = vmatprep.subr.mxu0 0.0
    %3936 = vmatpush2.xpose.msra.mxu0 0.0
    %3937 = vmatprep.subr.mxu0 0.0
    %3938 = vmatpush2.xpose.msra.mxu0 0.0
    %3939 = vmatprep.subr.mxu0 0.0
    %3940 = vmatpush2.xpose.msra.mxu0 0.0
    %3941 = vmatprep.subr.mxu0 0.0
    %3942 = vmatpush2.xpose.msra.mxu0 0.0
    %3943 = vmatprep.subr.mxu0 0.0
    %3944 = vmatpush2.xpose.msra.mxu0 0.0
    %3945 = vmatprep.subr.mxu0 0.0
    %3946 = vmatpush2.xpose.msra.mxu0 0.0
    %3947 = vmatprep.subr.mxu0 0.0
    %3948 = vmatpush2.xpose.msra.mxu0 0.0
    %3949 = vmatprep.subr.mxu0 0.0
    %3950 = vmatpush2.xpose.msra.mxu0 0.0
    %3951 = vmatprep.subr.mxu0 0.0
    %3952 = vmatpush2.xpose.msra.mxu0 0.0
    %3953 = vmatprep.mubr.f32.mxu0 0.0
    %3954 = vmatmul.mubr.f32.gmra.mxu0 %v3885
    %v3955 = vpop.f32.mrf.mxu0
    %v3956 = vadd.f32 %v210, %v3955
    %v3957 = vpop.f32.mrf.mxu0
    %3958 = vdwg.mxu0
    %3959 = vrot.lane.b32.xlu0 %v3859, 96
    %v3960 = vpop.permute.xlu0 %3959
    %v3961 = vsel %vm381, %v3859, 0
    %v3963 = vsel %vm381, %v3960, 0
    %3965 = vmatprep.subr.mxu0 0.0
    %3966 = vmatpush1.xpose.msra.mxu0 0.0
    %3967 = vmatprep.subr.mxu0 0.0
    %3968 = vmatpush1.xpose.msra.mxu0 0.0
    %3969 = vmatprep.subr.mxu0 0.0
    %3970 = vmatpush1.xpose.msra.mxu0 0.0
    %3971 = vmatprep.subr.mxu0 0.0
    %3972 = vmatpush1.xpose.msra.mxu0 0.0
    %3973 = vmatprep.subr.mxu0 0.0
    %3974 = vmatpush1.xpose.msra.mxu0 0.0
    %3975 = vmatprep.subr.mxu0 0.0
    %3976 = vmatpush1.xpose.msra.mxu0 0.0
    %3977 = vmatprep.subr.mxu0 0.0
    %3978 = vmatpush1.xpose.msra.mxu0 0.0
    %3979 = vmatprep.subr.mxu0 0.0
    %3980 = vmatpush1.xpose.msra.mxu0 0.0
    %3981 = vmatprep.subr.mxu0 0.0
    %3982 = vmatpush1.xpose.msra.mxu0 0.0
    %3983 = vmatprep.subr.mxu0 0.0
    %3984 = vmatpush1.xpose.msra.mxu0 0.0
    %3985 = vmatprep.subr.mxu0 0.0
    %3986 = vmatpush1.xpose.msra.mxu0 0.0
    %3987 = vmatprep.subr.mxu0 0.0
    %3988 = vmatpush1.xpose.msra.mxu0 0.0
    %3989 = vmatprep.subr.mxu0 0.0
    %3990 = vmatpush1.xpose.msra.mxu0 0.0
    %3991 = vmatprep.subr.mxu0 0.0
    %3992 = vmatpush1.xpose.msra.mxu0 0.0
    %3993 = vmatprep.subr.mxu0 0.0
    %3994 = vmatpush1.xpose.msra.mxu0 0.0
    %3995 = vmatprep.subr.mxu0 0.0
    %3996 = vmatpush1.xpose.msra.mxu0 %v3963
    %3997 = vmatprep.subr.mxu0 0.0
    %3998 = vmatpush2.xpose.msra.mxu0 0.0
    %3999 = vmatprep.subr.mxu0 0.0
    %4000 = vmatpush2.xpose.msra.mxu0 0.0
    %4001 = vmatprep.subr.mxu0 0.0
    %4002 = vmatpush2.xpose.msra.mxu0 0.0
    %4003 = vmatprep.subr.mxu0 0.0
    %4004 = vmatpush2.xpose.msra.mxu0 0.0
    %4005 = vmatprep.subr.mxu0 0.0
    %4006 = vmatpush2.xpose.msra.mxu0 0.0
    %4007 = vmatprep.subr.mxu0 0.0
    %4008 = vmatpush2.xpose.msra.mxu0 0.0
    %4009 = vmatprep.subr.mxu0 0.0
    %4010 = vmatpush2.xpose.msra.mxu0 0.0
    %4011 = vmatprep.subr.mxu0 0.0
    %4012 = vmatpush2.xpose.msra.mxu0 0.0
    %4013 = vmatprep.subr.mxu0 0.0
    %4014 = vmatpush2.xpose.msra.mxu0 0.0
    %4015 = vmatprep.subr.mxu0 0.0
    %4016 = vmatpush2.xpose.msra.mxu0 0.0
    %4017 = vmatprep.subr.mxu0 0.0
    %4018 = vmatpush2.xpose.msra.mxu0 0.0
    %4019 = vmatprep.subr.mxu0 0.0
    %4020 = vmatpush2.xpose.msra.mxu0 0.0
    %4021 = vmatprep.subr.mxu0 0.0
    %4022 = vmatpush2.xpose.msra.mxu0 0.0
    %4023 = vmatprep.subr.mxu0 0.0
    %4024 = vmatpush2.xpose.msra.mxu0 0.0
    %4025 = vmatprep.subr.mxu0 0.0
    %4026 = vmatpush2.xpose.msra.mxu0 0.0
    %4027 = vmatprep.subr.mxu0 0.0
    %4028 = vmatpush2.xpose.msra.mxu0 0.0
    %4029 = vmatprep.mubr.f32.mxu0 0.0
    %4030 = vmatmul.mubr.f32.gmra.mxu0 %v3961
    %v4031 = vpop.f32.mrf.mxu0
    %v4032 = vadd.f32 %v211, %v4031
    %v4033 = vpop.f32.mrf.mxu0
    %4034 = vdwg.mxu0
    %4035 = vrot.lane.b32.xlu0 %v3872, 96
    %v4036 = vpop.permute.xlu0 %4035
    %v4037 = vsel %vm381, %v3872, 0
    %v4039 = vsel %vm381, %v4036, 0
    %4041 = vmatprep.subr.mxu0 0.0
    %4042 = vmatpush1.xpose.msra.mxu0 0.0
    %4043 = vmatprep.subr.mxu0 0.0
    %4044 = vmatpush1.xpose.msra.mxu0 0.0
    %4045 = vmatprep.subr.mxu0 0.0
    %4046 = vmatpush1.xpose.msra.mxu0 0.0
    %4047 = vmatprep.subr.mxu0 0.0
    %4048 = vmatpush1.xpose.msra.mxu0 0.0
    %4049 = vmatprep.subr.mxu0 0.0
    %4050 = vmatpush1.xpose.msra.mxu0 0.0
    %4051 = vmatprep.subr.mxu0 0.0
    %4052 = vmatpush1.xpose.msra.mxu0 0.0
    %4053 = vmatprep.subr.mxu0 0.0
    %4054 = vmatpush1.xpose.msra.mxu0 0.0
    %4055 = vmatprep.subr.mxu0 0.0
    %4056 = vmatpush1.xpose.msra.mxu0 0.0
    %4057 = vmatprep.subr.mxu0 0.0
    %4058 = vmatpush1.xpose.msra.mxu0 0.0
    %4059 = vmatprep.subr.mxu0 0.0
    %4060 = vmatpush1.xpose.msra.mxu0 0.0
    %4061 = vmatprep.subr.mxu0 0.0
    %4062 = vmatpush1.xpose.msra.mxu0 0.0
    %4063 = vmatprep.subr.mxu0 0.0
    %4064 = vmatpush1.xpose.msra.mxu0 0.0
    %4065 = vmatprep.subr.mxu0 0.0
    %4066 = vmatpush1.xpose.msra.mxu0 0.0
    %4067 = vmatprep.subr.mxu0 0.0
    %4068 = vmatpush1.xpose.msra.mxu0 0.0
    %4069 = vmatprep.subr.mxu0 0.0
    %4070 = vmatpush1.xpose.msra.mxu0 0.0
    %4071 = vmatprep.subr.mxu0 0.0
    %4072 = vmatpush1.xpose.msra.mxu0 %v4039
    %4073 = vmatprep.subr.mxu0 0.0
    %4074 = vmatpush2.xpose.msra.mxu0 0.0
    %4075 = vmatprep.subr.mxu0 0.0
    %4076 = vmatpush2.xpose.msra.mxu0 0.0
    %4077 = vmatprep.subr.mxu0 0.0
    %4078 = vmatpush2.xpose.msra.mxu0 0.0
    %4079 = vmatprep.subr.mxu0 0.0
    %4080 = vmatpush2.xpose.msra.mxu0 0.0
    %4081 = vmatprep.subr.mxu0 0.0
    %4082 = vmatpush2.xpose.msra.mxu0 0.0
    %4083 = vmatprep.subr.mxu0 0.0
    %4084 = vmatpush2.xpose.msra.mxu0 0.0
    %4085 = vmatprep.subr.mxu0 0.0
    %4086 = vmatpush2.xpose.msra.mxu0 0.0
    %4087 = vmatprep.subr.mxu0 0.0
    %4088 = vmatpush2.xpose.msra.mxu0 0.0
    %4089 = vmatprep.subr.mxu0 0.0
    %4090 = vmatpush2.xpose.msra.mxu0 0.0
    %4091 = vmatprep.subr.mxu0 0.0
    %4092 = vmatpush2.xpose.msra.mxu0 0.0
    %4093 = vmatprep.subr.mxu0 0.0
    %4094 = vmatpush2.xpose.msra.mxu0 0.0
    %4095 = vmatprep.subr.mxu0 0.0
    %4096 = vmatpush2.xpose.msra.mxu0 0.0
    %4097 = vmatprep.subr.mxu0 0.0
    %4098 = vmatpush2.xpose.msra.mxu0 0.0
    %4099 = vmatprep.subr.mxu0 0.0
    %4100 = vmatpush2.xpose.msra.mxu0 0.0
    %4101 = vmatprep.subr.mxu0 0.0
    %4102 = vmatpush2.xpose.msra.mxu0 0.0
    %4103 = vmatprep.subr.mxu0 0.0
    %4104 = vmatpush2.xpose.msra.mxu0 0.0
    %4105 = vmatprep.mubr.f32.mxu0 0.0
    %4106 = vmatmul.mubr.f32.gmra.mxu0 %v4037
    %v4107 = vpop.f32.mrf.mxu0
    %v4108 = vadd.f32 %v212, %v4107
    %v4109 = vpop.f32.mrf.mxu0
    %4110 = vdwg.mxu0
    %4111 = vrot.lane.b32.xlu0 %v3874, 96
    %v4112 = vpop.permute.xlu0 %4111
    %v4113 = vsel %vm381, %v3874, 0
    %v4115 = vsel %vm381, %v4112, 0
    %4117 = vmatprep.subr.mxu0 0.0
    %4118 = vmatpush1.xpose.msra.mxu0 0.0
    %4119 = vmatprep.subr.mxu0 0.0
    %4120 = vmatpush1.xpose.msra.mxu0 0.0
    %4121 = vmatprep.subr.mxu0 0.0
    %4122 = vmatpush1.xpose.msra.mxu0 0.0
    %4123 = vmatprep.subr.mxu0 0.0
    %4124 = vmatpush1.xpose.msra.mxu0 0.0
    %4125 = vmatprep.subr.mxu0 0.0
    %4126 = vmatpush1.xpose.msra.mxu0 0.0
    %4127 = vmatprep.subr.mxu0 0.0
    %4128 = vmatpush1.xpose.msra.mxu0 0.0
    %4129 = vmatprep.subr.mxu0 0.0
    %4130 = vmatpush1.xpose.msra.mxu0 0.0
    %4131 = vmatprep.subr.mxu0 0.0
    %4132 = vmatpush1.xpose.msra.mxu0 0.0
    %4133 = vmatprep.subr.mxu0 0.0
    %4134 = vmatpush1.xpose.msra.mxu0 0.0
    %4135 = vmatprep.subr.mxu0 0.0
    %4136 = vmatpush1.xpose.msra.mxu0 0.0
    %4137 = vmatprep.subr.mxu0 0.0
    %4138 = vmatpush1.xpose.msra.mxu0 0.0
    %4139 = vmatprep.subr.mxu0 0.0
    %4140 = vmatpush1.xpose.msra.mxu0 0.0
    %4141 = vmatprep.subr.mxu0 0.0
    %4142 = vmatpush1.xpose.msra.mxu0 0.0
    %4143 = vmatprep.subr.mxu0 0.0
    %4144 = vmatpush1.xpose.msra.mxu0 0.0
    %4145 = vmatprep.subr.mxu0 0.0
    %4146 = vmatpush1.xpose.msra.mxu0 0.0
    %4147 = vmatprep.subr.mxu0 0.0
    %4148 = vmatpush1.xpose.msra.mxu0 %v4115
    %4149 = vmatprep.subr.mxu0 0.0
    %4150 = vmatpush2.xpose.msra.mxu0 0.0
    %4151 = vmatprep.subr.mxu0 0.0
    %4152 = vmatpush2.xpose.msra.mxu0 0.0
    %4153 = vmatprep.subr.mxu0 0.0
    %4154 = vmatpush2.xpose.msra.mxu0 0.0
    %4155 = vmatprep.subr.mxu0 0.0
    %4156 = vmatpush2.xpose.msra.mxu0 0.0
    %4157 = vmatprep.subr.mxu0 0.0
    %4158 = vmatpush2.xpose.msra.mxu0 0.0
    %4159 = vmatprep.subr.mxu0 0.0
    %4160 = vmatpush2.xpose.msra.mxu0 0.0
    %4161 = vmatprep.subr.mxu0 0.0
    %4162 = vmatpush2.xpose.msra.mxu0 0.0
    %4163 = vmatprep.subr.mxu0 0.0
    %4164 = vmatpush2.xpose.msra.mxu0 0.0
    %4165 = vmatprep.subr.mxu0 0.0
    %4166 = vmatpush2.xpose.msra.mxu0 0.0
    %4167 = vmatprep.subr.mxu0 0.0
    %4168 = vmatpush2.xpose.msra.mxu0 0.0
    %4169 = vmatprep.subr.mxu0 0.0
    %4170 = vmatpush2.xpose.msra.mxu0 0.0
    %4171 = vmatprep.subr.mxu0 0.0
    %4172 = vmatpush2.xpose.msra.mxu0 0.0
    %4173 = vmatprep.subr.mxu0 0.0
    %4174 = vmatpush2.xpose.msra.mxu0 0.0
    %4175 = vmatprep.subr.mxu0 0.0
    %4176 = vmatpush2.xpose.msra.mxu0 0.0
    %4177 = vmatprep.subr.mxu0 0.0
    %4178 = vmatpush2.xpose.msra.mxu0 0.0
    %4179 = vmatprep.subr.mxu0 0.0
    %4180 = vmatpush2.xpose.msra.mxu0 0.0
    %4181 = vmatprep.mubr.f32.mxu0 0.0
    %4182 = vmatmul.mubr.f32.gmra.mxu0 %v4113
    %v4183 = vpop.f32.mrf.mxu0
    %v4184 = vadd.f32 %v213, %v4183
    %v4185 = vpop.f32.mrf.mxu0
    %4186 = vdwg.mxu0
    %4187 = vrot.lane.b32.xlu0 %v3876, 96
    %v4188 = vpop.permute.xlu0 %4187
    %v4189 = vsel %vm381, %v3876, 0
    %v4191 = vsel %vm381, %v4188, 0
    %4193 = vmatprep.subr.mxu0 0.0
    %4194 = vmatpush1.xpose.msra.mxu0 0.0
    %4195 = vmatprep.subr.mxu0 0.0
    %4196 = vmatpush1.xpose.msra.mxu0 0.0
    %4197 = vmatprep.subr.mxu0 0.0
    %4198 = vmatpush1.xpose.msra.mxu0 0.0
    %4199 = vmatprep.subr.mxu0 0.0
    %4200 = vmatpush1.xpose.msra.mxu0 0.0
    %4201 = vmatprep.subr.mxu0 0.0
    %4202 = vmatpush1.xpose.msra.mxu0 0.0
    %4203 = vmatprep.subr.mxu0 0.0
    %4204 = vmatpush1.xpose.msra.mxu0 0.0
    %4205 = vmatprep.subr.mxu0 0.0
    %4206 = vmatpush1.xpose.msra.mxu0 0.0
    %4207 = vmatprep.subr.mxu0 0.0
    %4208 = vmatpush1.xpose.msra.mxu0 0.0
    %4209 = vmatprep.subr.mxu0 0.0
    %4210 = vmatpush1.xpose.msra.mxu0 0.0
    %4211 = vmatprep.subr.mxu0 0.0
    %4212 = vmatpush1.xpose.msra.mxu0 0.0
    %4213 = vmatprep.subr.mxu0 0.0
    %4214 = vmatpush1.xpose.msra.mxu0 0.0
    %4215 = vmatprep.subr.mxu0 0.0
    %4216 = vmatpush1.xpose.msra.mxu0 0.0
    %4217 = vmatprep.subr.mxu0 0.0
    %4218 = vmatpush1.xpose.msra.mxu0 0.0
    %4219 = vmatprep.subr.mxu0 0.0
    %4220 = vmatpush1.xpose.msra.mxu0 0.0
    %4221 = vmatprep.subr.mxu0 0.0
    %4222 = vmatpush1.xpose.msra.mxu0 0.0
    %4223 = vmatprep.subr.mxu0 0.0
    %4224 = vmatpush1.xpose.msra.mxu0 %v4191
    %4225 = vmatprep.subr.mxu0 0.0
    %4226 = vmatpush2.xpose.msra.mxu0 0.0
    %4227 = vmatprep.subr.mxu0 0.0
    %4228 = vmatpush2.xpose.msra.mxu0 0.0
    %4229 = vmatprep.subr.mxu0 0.0
    %4230 = vmatpush2.xpose.msra.mxu0 0.0
    %4231 = vmatprep.subr.mxu0 0.0
    %4232 = vmatpush2.xpose.msra.mxu0 0.0
    %4233 = vmatprep.subr.mxu0 0.0
    %4234 = vmatpush2.xpose.msra.mxu0 0.0
    %4235 = vmatprep.subr.mxu0 0.0
    %4236 = vmatpush2.xpose.msra.mxu0 0.0
    %4237 = vmatprep.subr.mxu0 0.0
    %4238 = vmatpush2.xpose.msra.mxu0 0.0
    %4239 = vmatprep.subr.mxu0 0.0
    %4240 = vmatpush2.xpose.msra.mxu0 0.0
    %4241 = vmatprep.subr.mxu0 0.0
    %4242 = vmatpush2.xpose.msra.mxu0 0.0
    %4243 = vmatprep.subr.mxu0 0.0
    %4244 = vmatpush2.xpose.msra.mxu0 0.0
    %4245 = vmatprep.subr.mxu0 0.0
    %4246 = vmatpush2.xpose.msra.mxu0 0.0
    %4247 = vmatprep.subr.mxu0 0.0
    %4248 = vmatpush2.xpose.msra.mxu0 0.0
    %4249 = vmatprep.subr.mxu0 0.0
    %4250 = vmatpush2.xpose.msra.mxu0 0.0
    %4251 = vmatprep.subr.mxu0 0.0
    %4252 = vmatpush2.xpose.msra.mxu0 0.0
    %4253 = vmatprep.subr.mxu0 0.0
    %4254 = vmatpush2.xpose.msra.mxu0 0.0
    %4255 = vmatprep.subr.mxu0 0.0
    %4256 = vmatpush2.xpose.msra.mxu0 0.0
    %4257 = vmatprep.mubr.f32.mxu0 0.0
    %4258 = vmatmul.mubr.f32.gmra.mxu0 %v4189
    %v4259 = vpop.f32.mrf.mxu0
    %v4260 = vadd.f32 %v214, %v4259
    %v4261 = vpop.f32.mrf.mxu0
    %4262 = vdwg.mxu0
    %4263 = vrot.lane.b32.xlu0 %v3878, 96
    %v4264 = vpop.permute.xlu0 %4263
    %v4265 = vsel %vm381, %v3878, 0
    %v4267 = vsel %vm381, %v4264, 0
    %4269 = vmatprep.subr.mxu0 0.0
    %4270 = vmatpush1.xpose.msra.mxu0 0.0
    %4271 = vmatprep.subr.mxu0 0.0
    %4272 = vmatpush1.xpose.msra.mxu0 0.0
    %4273 = vmatprep.subr.mxu0 0.0
    %4274 = vmatpush1.xpose.msra.mxu0 0.0
    %4275 = vmatprep.subr.mxu0 0.0
    %4276 = vmatpush1.xpose.msra.mxu0 0.0
    %4277 = vmatprep.subr.mxu0 0.0
    %4278 = vmatpush1.xpose.msra.mxu0 0.0
    %4279 = vmatprep.subr.mxu0 0.0
    %4280 = vmatpush1.xpose.msra.mxu0 0.0
    %4281 = vmatprep.subr.mxu0 0.0
    %4282 = vmatpush1.xpose.msra.mxu0 0.0
    %4283 = vmatprep.subr.mxu0 0.0
    %4284 = vmatpush1.xpose.msra.mxu0 0.0
    %4285 = vmatprep.subr.mxu0 0.0
    %4286 = vmatpush1.xpose.msra.mxu0 0.0
    %4287 = vmatprep.subr.mxu0 0.0
    %4288 = vmatpush1.xpose.msra.mxu0 0.0
    %4289 = vmatprep.subr.mxu0 0.0
    %4290 = vmatpush1.xpose.msra.mxu0 0.0
    %4291 = vmatprep.subr.mxu0 0.0
    %4292 = vmatpush1.xpose.msra.mxu0 0.0
    %4293 = vmatprep.subr.mxu0 0.0
    %4294 = vmatpush1.xpose.msra.mxu0 0.0
    %4295 = vmatprep.subr.mxu0 0.0
    %4296 = vmatpush1.xpose.msra.mxu0 0.0
    %4297 = vmatprep.subr.mxu0 0.0
    %4298 = vmatpush1.xpose.msra.mxu0 0.0
    %4299 = vmatprep.subr.mxu0 0.0
    %4300 = vmatpush1.xpose.msra.mxu0 %v4267
    %4301 = vmatprep.subr.mxu0 0.0
    %4302 = vmatpush2.xpose.msra.mxu0 0.0
    %4303 = vmatprep.subr.mxu0 0.0
    %4304 = vmatpush2.xpose.msra.mxu0 0.0
    %4305 = vmatprep.subr.mxu0 0.0
    %4306 = vmatpush2.xpose.msra.mxu0 0.0
    %4307 = vmatprep.subr.mxu0 0.0
    %4308 = vmatpush2.xpose.msra.mxu0 0.0
    %4309 = vmatprep.subr.mxu0 0.0
    %4310 = vmatpush2.xpose.msra.mxu0 0.0
    %4311 = vmatprep.subr.mxu0 0.0
    %4312 = vmatpush2.xpose.msra.mxu0 0.0
    %4313 = vmatprep.subr.mxu0 0.0
    %4314 = vmatpush2.xpose.msra.mxu0 0.0
    %4315 = vmatprep.subr.mxu0 0.0
    %4316 = vmatpush2.xpose.msra.mxu0 0.0
    %4317 = vmatprep.subr.mxu0 0.0
    %4318 = vmatpush2.xpose.msra.mxu0 0.0
    %4319 = vmatprep.subr.mxu0 0.0
    %4320 = vmatpush2.xpose.msra.mxu0 0.0
    %4321 = vmatprep.subr.mxu0 0.0
    %4322 = vmatpush2.xpose.msra.mxu0 0.0
    %4323 = vmatprep.subr.mxu0 0.0
    %4324 = vmatpush2.xpose.msra.mxu0 0.0
    %4325 = vmatprep.subr.mxu0 0.0
    %4326 = vmatpush2.xpose.msra.mxu0 0.0
    %4327 = vmatprep.subr.mxu0 0.0
    %4328 = vmatpush2.xpose.msra.mxu0 0.0
    %4329 = vmatprep.subr.mxu0 0.0
    %4330 = vmatpush2.xpose.msra.mxu0 0.0
    %4331 = vmatprep.subr.mxu0 0.0
    %4332 = vmatpush2.xpose.msra.mxu0 0.0
    %4333 = vmatprep.mubr.f32.mxu0 0.0
    %4334 = vmatmul.mubr.f32.gmra.mxu0 %v4265
    %v4335 = vpop.f32.mrf.mxu0
    %v4336 = vadd.f32 %v215, %v4335
    %v4337 = vpop.f32.mrf.mxu0
    %4338 = vdwg.mxu0
    %4339 = vrot.lane.b32.xlu0 %v3880, 96
    %v4340 = vpop.permute.xlu0 %4339
    %v4341 = vsel %vm381, %v3880, 0
    %v4343 = vsel %vm381, %v4340, 0
    %4345 = vmatprep.subr.mxu0 0.0
    %4346 = vmatpush1.xpose.msra.mxu0 0.0
    %4347 = vmatprep.subr.mxu0 0.0
    %4348 = vmatpush1.xpose.msra.mxu0 0.0
    %4349 = vmatprep.subr.mxu0 0.0
    %4350 = vmatpush1.xpose.msra.mxu0 0.0
    %4351 = vmatprep.subr.mxu0 0.0
    %4352 = vmatpush1.xpose.msra.mxu0 0.0
    %4353 = vmatprep.subr.mxu0 0.0
    %4354 = vmatpush1.xpose.msra.mxu0 0.0
    %4355 = vmatprep.subr.mxu0 0.0
    %4356 = vmatpush1.xpose.msra.mxu0 0.0
    %4357 = vmatprep.subr.mxu0 0.0
    %4358 = vmatpush1.xpose.msra.mxu0 0.0
    %4359 = vmatprep.subr.mxu0 0.0
    %4360 = vmatpush1.xpose.msra.mxu0 0.0
    %4361 = vmatprep.subr.mxu0 0.0
    %4362 = vmatpush1.xpose.msra.mxu0 0.0
    %4363 = vmatprep.subr.mxu0 0.0
    %4364 = vmatpush1.xpose.msra.mxu0 0.0
    %4365 = vmatprep.subr.mxu0 0.0
    %4366 = vmatpush1.xpose.msra.mxu0 0.0
    %4367 = vmatprep.subr.mxu0 0.0
    %4368 = vmatpush1.xpose.msra.mxu0 0.0
    %4369 = vmatprep.subr.mxu0 0.0
    %4370 = vmatpush1.xpose.msra.mxu0 0.0
    %4371 = vmatprep.subr.mxu0 0.0
    %4372 = vmatpush1.xpose.msra.mxu0 0.0
    %4373 = vmatprep.subr.mxu0 0.0
    %4374 = vmatpush1.xpose.msra.mxu0 0.0
    %4375 = vmatprep.subr.mxu0 0.0
    %4376 = vmatpush1.xpose.msra.mxu0 %v4343
    %4377 = vmatprep.subr.mxu0 0.0
    %4378 = vmatpush2.xpose.msra.mxu0 0.0
    %4379 = vmatprep.subr.mxu0 0.0
    %4380 = vmatpush2.xpose.msra.mxu0 0.0
    %4381 = vmatprep.subr.mxu0 0.0
    %4382 = vmatpush2.xpose.msra.mxu0 0.0
    %4383 = vmatprep.subr.mxu0 0.0
    %4384 = vmatpush2.xpose.msra.mxu0 0.0
    %4385 = vmatprep.subr.mxu0 0.0
    %4386 = vmatpush2.xpose.msra.mxu0 0.0
    %4387 = vmatprep.subr.mxu0 0.0
    %4388 = vmatpush2.xpose.msra.mxu0 0.0
    %4389 = vmatprep.subr.mxu0 0.0
    %4390 = vmatpush2.xpose.msra.mxu0 0.0
    %4391 = vmatprep.subr.mxu0 0.0
    %4392 = vmatpush2.xpose.msra.mxu0 0.0
    %4393 = vmatprep.subr.mxu0 0.0
    %4394 = vmatpush2.xpose.msra.mxu0 0.0
    %4395 = vmatprep.subr.mxu0 0.0
    %4396 = vmatpush2.xpose.msra.mxu0 0.0
    %4397 = vmatprep.subr.mxu0 0.0
    %4398 = vmatpush2.xpose.msra.mxu0 0.0
    %4399 = vmatprep.subr.mxu0 0.0
    %4400 = vmatpush2.xpose.msra.mxu0 0.0
    %4401 = vmatprep.subr.mxu0 0.0
    %4402 = vmatpush2.xpose.msra.mxu0 0.0
    %4403 = vmatprep.subr.mxu0 0.0
    %4404 = vmatpush2.xpose.msra.mxu0 0.0
    %4405 = vmatprep.subr.mxu0 0.0
    %4406 = vmatpush2.xpose.msra.mxu0 0.0
    %4407 = vmatprep.subr.mxu0 0.0
    %4408 = vmatpush2.xpose.msra.mxu0 0.0
    %4409 = vmatprep.mubr.f32.mxu0 0.0
    %4410 = vmatmul.mubr.f32.gmra.mxu0 %v4341
    %v4411 = vpop.f32.mrf.mxu0
    %v4412 = vadd.f32 %v216, %v4411
    %v4413 = vpop.f32.mrf.mxu0
    %4414 = vdwg.mxu0
    %4415 = vrot.lane.b32.xlu0 %v3882, 96
    %v4416 = vpop.permute.xlu0 %4415
    %v4417 = vsel %vm381, %v3882, 0
    %v4419 = vsel %vm381, %v4416, 0
    %4421 = vmatprep.subr.mxu0 0.0
    %4422 = vmatpush1.xpose.msra.mxu0 0.0
    %4423 = vmatprep.subr.mxu0 0.0
    %4424 = vmatpush1.xpose.msra.mxu0 0.0
    %4425 = vmatprep.subr.mxu0 0.0
    %4426 = vmatpush1.xpose.msra.mxu0 0.0
    %4427 = vmatprep.subr.mxu0 0.0
    %4428 = vmatpush1.xpose.msra.mxu0 0.0
    %4429 = vmatprep.subr.mxu0 0.0
    %4430 = vmatpush1.xpose.msra.mxu0 0.0
    %4431 = vmatprep.subr.mxu0 0.0
    %4432 = vmatpush1.xpose.msra.mxu0 0.0
    %4433 = vmatprep.subr.mxu0 0.0
    %4434 = vmatpush1.xpose.msra.mxu0 0.0
    %4435 = vmatprep.subr.mxu0 0.0
    %4436 = vmatpush1.xpose.msra.mxu0 0.0
    %4437 = vmatprep.subr.mxu0 0.0
    %4438 = vmatpush1.xpose.msra.mxu0 0.0
    %4439 = vmatprep.subr.mxu0 0.0
    %4440 = vmatpush1.xpose.msra.mxu0 0.0
    %4441 = vmatprep.subr.mxu0 0.0
    %4442 = vmatpush1.xpose.msra.mxu0 0.0
    %4443 = vmatprep.subr.mxu0 0.0
    %4444 = vmatpush1.xpose.msra.mxu0 0.0
    %4445 = vmatprep.subr.mxu0 0.0
    %4446 = vmatpush1.xpose.msra.mxu0 0.0
    %4447 = vmatprep.subr.mxu0 0.0
    %4448 = vmatpush1.xpose.msra.mxu0 0.0
    %4449 = vmatprep.subr.mxu0 0.0
    %4450 = vmatpush1.xpose.msra.mxu0 0.0
    %4451 = vmatprep.subr.mxu0 0.0
    %4452 = vmatpush1.xpose.msra.mxu0 %v4419
    %4453 = vmatprep.subr.mxu0 0.0
    %4454 = vmatpush2.xpose.msra.mxu0 0.0
    %4455 = vmatprep.subr.mxu0 0.0
    %4456 = vmatpush2.xpose.msra.mxu0 0.0
    %4457 = vmatprep.subr.mxu0 0.0
    %4458 = vmatpush2.xpose.msra.mxu0 0.0
    %4459 = vmatprep.subr.mxu0 0.0
    %4460 = vmatpush2.xpose.msra.mxu0 0.0
    %4461 = vmatprep.subr.mxu0 0.0
    %4462 = vmatpush2.xpose.msra.mxu0 0.0
    %4463 = vmatprep.subr.mxu0 0.0
    %4464 = vmatpush2.xpose.msra.mxu0 0.0
    %4465 = vmatprep.subr.mxu0 0.0
    %4466 = vmatpush2.xpose.msra.mxu0 0.0
    %4467 = vmatprep.subr.mxu0 0.0
    %4468 = vmatpush2.xpose.msra.mxu0 0.0
    %4469 = vmatprep.subr.mxu0 0.0
    %4470 = vmatpush2.xpose.msra.mxu0 0.0
    %4471 = vmatprep.subr.mxu0 0.0
    %4472 = vmatpush2.xpose.msra.mxu0 0.0
    %4473 = vmatprep.subr.mxu0 0.0
    %4474 = vmatpush2.xpose.msra.mxu0 0.0
    %4475 = vmatprep.subr.mxu0 0.0
    %4476 = vmatpush2.xpose.msra.mxu0 0.0
    %4477 = vmatprep.subr.mxu0 0.0
    %4478 = vmatpush2.xpose.msra.mxu0 0.0
    %4479 = vmatprep.subr.mxu0 0.0
    %4480 = vmatpush2.xpose.msra.mxu0 0.0
    %4481 = vmatprep.subr.mxu0 0.0
    %4482 = vmatpush2.xpose.msra.mxu0 0.0
    %4483 = vmatprep.subr.mxu0 0.0
    %4484 = vmatpush2.xpose.msra.mxu0 0.0
    %4485 = vmatprep.mubr.f32.mxu0 0.0
    %4486 = vmatmul.mubr.f32.gmra.mxu0 %v4417
    %v4487 = vpop.f32.mrf.mxu0
    %v4488 = vadd.f32 %v217, %v4487
    %v4489 = vpop.f32.mrf.mxu0
    %4490 = vdwg.mxu0
    %v4491 = vsel %vm381, %v3956, -inf
    %4492 = vmax.xlane.f32.xlu0 %v4491
    %v4493 = vpop.xlane.xlu0 %4492
    %v4494 = vsel %vm381, %v4032, -inf
    %4495 = vmax.xlane.f32.xlu0 %v4494
    %v4496 = vpop.xlane.xlu0 %4495
    %v4497 = vsel %vm381, %v4108, -inf
    %4498 = vmax.xlane.f32.xlu0 %v4497
    %v4499 = vpop.xlane.xlu0 %4498
    %v4500 = vsel %vm381, %v4184, -inf
    %4501 = vmax.xlane.f32.xlu0 %v4500
    %v4502 = vpop.xlane.xlu0 %4501
    %v4503 = vsel %vm381, %v4260, -inf
    %4504 = vmax.xlane.f32.xlu0 %v4503
    %v4505 = vpop.xlane.xlu0 %4504
    %v4506 = vsel %vm381, %v4336, -inf
    %4507 = vmax.xlane.f32.xlu0 %v4506
    %v4508 = vpop.xlane.xlu0 %4507
    %v4509 = vsel %vm381, %v4412, -inf
    %4510 = vmax.xlane.f32.xlu0 %v4509
    %v4511 = vpop.xlane.xlu0 %4510
    %v4512 = vsel %vm381, %v4488, -inf
    %4513 = vmax.xlane.f32.xlu0 %v4512
    %v4514 = vpop.xlane.xlu0 %4513
    %v4515 = vsub.f32 %v3956, %v4493
    %v4516 = vsub.f32 %v4032, %v4496
    %v4517 = vsub.f32 %v4108, %v4499
    %v4518 = vsub.f32 %v4184, %v4502
    %v4519 = vsub.f32 %v4260, %v4505
    %v4520 = vsub.f32 %v4336, %v4508
    %v4521 = vsub.f32 %v4412, %v4511
    %v4522 = vsub.f32 %v4488, %v4514
    %v4523 = vmul.f32 %v4515, 1.442695
    %v4524 = vpow.pop %v4523
    %v4525 = vmul.f32 %v4516, 1.442695
    %v4526 = vpow.pop %v4525
    %v4527 = vmul.f32 %v4517, 1.442695
    %v4528 = vpow.pop %v4527
    %v4529 = vmul.f32 %v4518, 1.442695
    %v4530 = vpow.pop %v4529
    %v4531 = vmul.f32 %v4519, 1.442695
    %v4532 = vpow.pop %v4531
    %v4533 = vmul.f32 %v4520, 1.442695
    %v4534 = vpow.pop %v4533
    %v4535 = vmul.f32 %v4521, 1.442695
    %v4536 = vpow.pop %v4535
    %v4537 = vmul.f32 %v4522, 1.442695
    %v4538 = vpow.pop %v4537
    %v4539 = vsel %vm381, %v4524, 0.0
    %4540 = vadd.xlane.f32.xlu0 %v4539
    %v4541 = vpop.xlane.xlu0 %4540
    %v4542 = vsel %vm381, %v4526, 0.0
    %4543 = vadd.xlane.f32.xlu0 %v4542
    %v4544 = vpop.xlane.xlu0 %4543
    %v4545 = vsel %vm381, %v4528, 0.0
    %4546 = vadd.xlane.f32.xlu0 %v4545
    %v4547 = vpop.xlane.xlu0 %4546
    %v4548 = vsel %vm381, %v4530, 0.0
    %4549 = vadd.xlane.f32.xlu0 %v4548
    %v4550 = vpop.xlane.xlu0 %4549
    %v4551 = vsel %vm381, %v4532, 0.0
    %4552 = vadd.xlane.f32.xlu0 %v4551
    %v4553 = vpop.xlane.xlu0 %4552
    %v4554 = vsel %vm381, %v4534, 0.0
    %4555 = vadd.xlane.f32.xlu0 %v4554
    %v4556 = vpop.xlane.xlu0 %4555
    %v4557 = vsel %vm381, %v4536, 0.0
    %4558 = vadd.xlane.f32.xlu0 %v4557
    %v4559 = vpop.xlane.xlu0 %4558
    %v4560 = vsel %vm381, %v4538, 0.0
    %4561 = vadd.xlane.f32.xlu0 %v4560
    %v4562 = vpop.xlane.xlu0 %4561
    %v4563 = vrcp.pop %v4541
    %v4564 = vrcp.pop %v4544
    %v4565 = vrcp.pop %v4547
    %v4566 = vrcp.pop %v4550
    %v4567 = vrcp.pop %v4553
    %v4568 = vrcp.pop %v4556
    %v4569 = vrcp.pop %v4559
    %v4570 = vrcp.pop %v4562
    %v4571 = vmul.f32 %v4524, %v4563
    %v4572 = vmul.f32 %v4526, %v4564
    %v4573 = vmul.f32 %v4528, %v4565
    %v4574 = vmul.f32 %v4530, %v4566
    %v4575 = vmul.f32 %v4532, %v4567
    %v4576 = vmul.f32 %v4534, %v4568
    %v4577 = vmul.f32 %v4536, %v4569
    %v4578 = vmul.f32 %v4538, %v4570
    %4579 = vrot.lane.b32.xlu0 %v3854, 64
    %v4580 = vpop.permute.xlu0 %4579
    %v4583 = vsel %vm381, %v4571, 0
    %4585 = vmatprep.subr.mxu0 0.0
    %4586 = vmatpush1.msra.mxu0 0.0
    %4587 = vmatprep.subr.mxu0 0.0
    %4588 = vmatpush1.msra.mxu0 0.0
    %4589 = vmatprep.subr.mxu0 0.0
    %4590 = vmatpush1.msra.mxu0 0.0
    %4591 = vmatprep.subr.mxu0 0.0
    %4592 = vmatpush1.msra.mxu0 0.0
    %4593 = vmatprep.subr.mxu0 0.0
    %4594 = vmatpush1.msra.mxu0 0.0
    %4595 = vmatprep.subr.mxu0 0.0
    %4596 = vmatpush1.msra.mxu0 0.0
    %4597 = vmatprep.subr.mxu0 0.0
    %4598 = vmatpush1.msra.mxu0 0.0
    %4599 = vmatprep.subr.mxu0 0.0
    %4600 = vmatpush1.msra.mxu0 0.0
    %4601 = vmatprep.subr.mxu0 0.0
    %4602 = vmatpush1.msra.mxu0 0.0
    %4603 = vmatprep.subr.mxu0 0.0
    %4604 = vmatpush1.msra.mxu0 0.0
    %4605 = vmatprep.subr.mxu0 0.0
    %4606 = vmatpush1.msra.mxu0 0.0
    %4607 = vmatprep.subr.mxu0 0.0
    %4608 = vmatpush1.msra.mxu0 0.0
    %4609 = vmatprep.subr.mxu0 0.0
    %4610 = vmatpush1.msra.mxu0 0.0
    %4611 = vmatprep.subr.mxu0 0.0
    %4612 = vmatpush1.msra.mxu0 0.0
    %4613 = vmatprep.subr.mxu0 0.0
    %4614 = vmatpush1.msra.mxu0 0.0
    %4615 = vmatprep.subr.mxu0 0.0
    %4616 = vmatpush1.msra.mxu0 %v4580
    %4617 = vmatprep.subr.mxu0 0.0
    %4618 = vmatpush2.msra.mxu0 0.0
    %4619 = vmatprep.subr.mxu0 0.0
    %4620 = vmatpush2.msra.mxu0 0.0
    %4621 = vmatprep.subr.mxu0 0.0
    %4622 = vmatpush2.msra.mxu0 0.0
    %4623 = vmatprep.subr.mxu0 0.0
    %4624 = vmatpush2.msra.mxu0 0.0
    %4625 = vmatprep.subr.mxu0 0.0
    %4626 = vmatpush2.msra.mxu0 0.0
    %4627 = vmatprep.subr.mxu0 0.0
    %4628 = vmatpush2.msra.mxu0 0.0
    %4629 = vmatprep.subr.mxu0 0.0
    %4630 = vmatpush2.msra.mxu0 0.0
    %4631 = vmatprep.subr.mxu0 0.0
    %4632 = vmatpush2.msra.mxu0 0.0
    %4633 = vmatprep.subr.mxu0 0.0
    %4634 = vmatpush2.msra.mxu0 0.0
    %4635 = vmatprep.subr.mxu0 0.0
    %4636 = vmatpush2.msra.mxu0 0.0
    %4637 = vmatprep.subr.mxu0 0.0
    %4638 = vmatpush2.msra.mxu0 0.0
    %4639 = vmatprep.subr.mxu0 0.0
    %4640 = vmatpush2.msra.mxu0 0.0
    %4641 = vmatprep.subr.mxu0 0.0
    %4642 = vmatpush2.msra.mxu0 0.0
    %4643 = vmatprep.subr.mxu0 0.0
    %4644 = vmatpush2.msra.mxu0 0.0
    %4645 = vmatprep.subr.mxu0 0.0
    %4646 = vmatpush2.msra.mxu0 0.0
    %4647 = vmatprep.subr.mxu0 0.0
    %4648 = vmatpush2.msra.mxu0 0.0
    %4649 = vmatprep.mubr.f32.mxu0 0.0
    %4650 = vmatmul.mubr.f32.gmra.mxu0 %v4583
    %v4651 = vpop.f32.mrf.mxu0
    %v4652 = vadd.f32 0.0, %v4651
    %v4653 = vpop.f32.mrf.mxu0
    %4654 = vdwg.mxu0
    %4655 = vrot.lane.b32.xlu0 %v3859, 64
    %v4656 = vpop.permute.xlu0 %4655
    %v4659 = vsel %vm381, %v4572, 0
    %4661 = vmatprep.subr.mxu0 0.0
    %4662 = vmatpush1.msra.mxu0 0.0
    %4663 = vmatprep.subr.mxu0 0.0
    %4664 = vmatpush1.msra.mxu0 0.0
    %4665 = vmatprep.subr.mxu0 0.0
    %4666 = vmatpush1.msra.mxu0 0.0
    %4667 = vmatprep.subr.mxu0 0.0
    %4668 = vmatpush1.msra.mxu0 0.0
    %4669 = vmatprep.subr.mxu0 0.0
    %4670 = vmatpush1.msra.mxu0 0.0
    %4671 = vmatprep.subr.mxu0 0.0
    %4672 = vmatpush1.msra.mxu0 0.0
    %4673 = vmatprep.subr.mxu0 0.0
    %4674 = vmatpush1.msra.mxu0 0.0
    %4675 = vmatprep.subr.mxu0 0.0
    %4676 = vmatpush1.msra.mxu0 0.0
    %4677 = vmatprep.subr.mxu0 0.0
    %4678 = vmatpush1.msra.mxu0 0.0
    %4679 = vmatprep.subr.mxu0 0.0
    %4680 = vmatpush1.msra.mxu0 0.0
    %4681 = vmatprep.subr.mxu0 0.0
    %4682 = vmatpush1.msra.mxu0 0.0
    %4683 = vmatprep.subr.mxu0 0.0
    %4684 = vmatpush1.msra.mxu0 0.0
    %4685 = vmatprep.subr.mxu0 0.0
    %4686 = vmatpush1.msra.mxu0 0.0
    %4687 = vmatprep.subr.mxu0 0.0
    %4688 = vmatpush1.msra.mxu0 0.0
    %4689 = vmatprep.subr.mxu0 0.0
    %4690 = vmatpush1.msra.mxu0 0.0
    %4691 = vmatprep.subr.mxu0 0.0
    %4692 = vmatpush1.msra.mxu0 %v4656
    %4693 = vmatprep.subr.mxu0 0.0
    %4694 = vmatpush2.msra.mxu0 0.0
    %4695 = vmatprep.subr.mxu0 0.0
    %4696 = vmatpush2.msra.mxu0 0.0
    %4697 = vmatprep.subr.mxu0 0.0
    %4698 = vmatpush2.msra.mxu0 0.0
    %4699 = vmatprep.subr.mxu0 0.0
    %4700 = vmatpush2.msra.mxu0 0.0
    %4701 = vmatprep.subr.mxu0 0.0
    %4702 = vmatpush2.msra.mxu0 0.0
    %4703 = vmatprep.subr.mxu0 0.0
    %4704 = vmatpush2.msra.mxu0 0.0
    %4705 = vmatprep.subr.mxu0 0.0
    %4706 = vmatpush2.msra.mxu0 0.0
    %4707 = vmatprep.subr.mxu0 0.0
    %4708 = vmatpush2.msra.mxu0 0.0
    %4709 = vmatprep.subr.mxu0 0.0
    %4710 = vmatpush2.msra.mxu0 0.0
    %4711 = vmatprep.subr.mxu0 0.0
    %4712 = vmatpush2.msra.mxu0 0.0
    %4713 = vmatprep.subr.mxu0 0.0
    %4714 = vmatpush2.msra.mxu0 0.0
    %4715 = vmatprep.subr.mxu0 0.0
    %4716 = vmatpush2.msra.mxu0 0.0
    %4717 = vmatprep.subr.mxu0 0.0
    %4718 = vmatpush2.msra.mxu0 0.0
    %4719 = vmatprep.subr.mxu0 0.0
    %4720 = vmatpush2.msra.mxu0 0.0
    %4721 = vmatprep.subr.mxu0 0.0
    %4722 = vmatpush2.msra.mxu0 0.0
    %4723 = vmatprep.subr.mxu0 0.0
    %4724 = vmatpush2.msra.mxu0 0.0
    %4725 = vmatprep.mubr.f32.mxu0 0.0
    %4726 = vmatmul.mubr.f32.gmra.mxu0 %v4659
    %v4727 = vpop.f32.mrf.mxu0
    %v4728 = vadd.f32 0.0, %v4727
    %v4729 = vpop.f32.mrf.mxu0
    %4730 = vdwg.mxu0
    %4731 = vrot.lane.b32.xlu0 %v3872, 64
    %v4732 = vpop.permute.xlu0 %4731
    %v4735 = vsel %vm381, %v4573, 0
    %4737 = vmatprep.subr.mxu0 0.0
    %4738 = vmatpush1.msra.mxu0 0.0
    %4739 = vmatprep.subr.mxu0 0.0
    %4740 = vmatpush1.msra.mxu0 0.0
    %4741 = vmatprep.subr.mxu0 0.0
    %4742 = vmatpush1.msra.mxu0 0.0
    %4743 = vmatprep.subr.mxu0 0.0
    %4744 = vmatpush1.msra.mxu0 0.0
    %4745 = vmatprep.subr.mxu0 0.0
    %4746 = vmatpush1.msra.mxu0 0.0
    %4747 = vmatprep.subr.mxu0 0.0
    %4748 = vmatpush1.msra.mxu0 0.0
    %4749 = vmatprep.subr.mxu0 0.0
    %4750 = vmatpush1.msra.mxu0 0.0
    %4751 = vmatprep.subr.mxu0 0.0
    %4752 = vmatpush1.msra.mxu0 0.0
    %4753 = vmatprep.subr.mxu0 0.0
    %4754 = vmatpush1.msra.mxu0 0.0
    %4755 = vmatprep.subr.mxu0 0.0
    %4756 = vmatpush1.msra.mxu0 0.0
    %4757 = vmatprep.subr.mxu0 0.0
    %4758 = vmatpush1.msra.mxu0 0.0
    %4759 = vmatprep.subr.mxu0 0.0
    %4760 = vmatpush1.msra.mxu0 0.0
    %4761 = vmatprep.subr.mxu0 0.0
    %4762 = vmatpush1.msra.mxu0 0.0
    %4763 = vmatprep.subr.mxu0 0.0
    %4764 = vmatpush1.msra.mxu0 0.0
    %4765 = vmatprep.subr.mxu0 0.0
    %4766 = vmatpush1.msra.mxu0 0.0
    %4767 = vmatprep.subr.mxu0 0.0
    %4768 = vmatpush1.msra.mxu0 %v4732
    %4769 = vmatprep.subr.mxu0 0.0
    %4770 = vmatpush2.msra.mxu0 0.0
    %4771 = vmatprep.subr.mxu0 0.0
    %4772 = vmatpush2.msra.mxu0 0.0
    %4773 = vmatprep.subr.mxu0 0.0
    %4774 = vmatpush2.msra.mxu0 0.0
    %4775 = vmatprep.subr.mxu0 0.0
    %4776 = vmatpush2.msra.mxu0 0.0
    %4777 = vmatprep.subr.mxu0 0.0
    %4778 = vmatpush2.msra.mxu0 0.0
    %4779 = vmatprep.subr.mxu0 0.0
    %4780 = vmatpush2.msra.mxu0 0.0
    %4781 = vmatprep.subr.mxu0 0.0
    %4782 = vmatpush2.msra.mxu0 0.0
    %4783 = vmatprep.subr.mxu0 0.0
    %4784 = vmatpush2.msra.mxu0 0.0
    %4785 = vmatprep.subr.mxu0 0.0
    %4786 = vmatpush2.msra.mxu0 0.0
    %4787 = vmatprep.subr.mxu0 0.0
    %4788 = vmatpush2.msra.mxu0 0.0
    %4789 = vmatprep.subr.mxu0 0.0
    %4790 = vmatpush2.msra.mxu0 0.0
    %4791 = vmatprep.subr.mxu0 0.0
    %4792 = vmatpush2.msra.mxu0 0.0
    %4793 = vmatprep.subr.mxu0 0.0
    %4794 = vmatpush2.msra.mxu0 0.0
    %4795 = vmatprep.subr.mxu0 0.0
    %4796 = vmatpush2.msra.mxu0 0.0
    %4797 = vmatprep.subr.mxu0 0.0
    %4798 = vmatpush2.msra.mxu0 0.0
    %4799 = vmatprep.subr.mxu0 0.0
    %4800 = vmatpush2.msra.mxu0 0.0
    %4801 = vmatprep.mubr.f32.mxu0 0.0
    %4802 = vmatmul.mubr.f32.gmra.mxu0 %v4735
    %v4803 = vpop.f32.mrf.mxu0
    %v4804 = vadd.f32 0.0, %v4803
    %v4805 = vpop.f32.mrf.mxu0
    %4806 = vdwg.mxu0
    %4807 = vrot.lane.b32.xlu0 %v3874, 64
    %v4808 = vpop.permute.xlu0 %4807
    %v4811 = vsel %vm381, %v4574, 0
    %4813 = vmatprep.subr.mxu0 0.0
    %4814 = vmatpush1.msra.mxu0 0.0
    %4815 = vmatprep.subr.mxu0 0.0
    %4816 = vmatpush1.msra.mxu0 0.0
    %4817 = vmatprep.subr.mxu0 0.0
    %4818 = vmatpush1.msra.mxu0 0.0
    %4819 = vmatprep.subr.mxu0 0.0
    %4820 = vmatpush1.msra.mxu0 0.0
    %4821 = vmatprep.subr.mxu0 0.0
    %4822 = vmatpush1.msra.mxu0 0.0
    %4823 = vmatprep.subr.mxu0 0.0
    %4824 = vmatpush1.msra.mxu0 0.0
    %4825 = vmatprep.subr.mxu0 0.0
    %4826 = vmatpush1.msra.mxu0 0.0
    %4827 = vmatprep.subr.mxu0 0.0
    %4828 = vmatpush1.msra.mxu0 0.0
    %4829 = vmatprep.subr.mxu0 0.0
    %4830 = vmatpush1.msra.mxu0 0.0
    %4831 = vmatprep.subr.mxu0 0.0
    %4832 = vmatpush1.msra.mxu0 0.0
    %4833 = vmatprep.subr.mxu0 0.0
    %4834 = vmatpush1.msra.mxu0 0.0
    %4835 = vmatprep.subr.mxu0 0.0
    %4836 = vmatpush1.msra.mxu0 0.0
    %4837 = vmatprep.subr.mxu0 0.0
    %4838 = vmatpush1.msra.mxu0 0.0
    %4839 = vmatprep.subr.mxu0 0.0
    %4840 = vmatpush1.msra.mxu0 0.0
    %4841 = vmatprep.subr.mxu0 0.0
    %4842 = vmatpush1.msra.mxu0 0.0
    %4843 = vmatprep.subr.mxu0 0.0
    %4844 = vmatpush1.msra.mxu0 %v4808
    %4845 = vmatprep.subr.mxu0 0.0
    %4846 = vmatpush2.msra.mxu0 0.0
    %4847 = vmatprep.subr.mxu0 0.0
    %4848 = vmatpush2.msra.mxu0 0.0
    %4849 = vmatprep.subr.mxu0 0.0
    %4850 = vmatpush2.msra.mxu0 0.0
    %4851 = vmatprep.subr.mxu0 0.0
    %4852 = vmatpush2.msra.mxu0 0.0
    %4853 = vmatprep.subr.mxu0 0.0
    %4854 = vmatpush2.msra.mxu0 0.0
    %4855 = vmatprep.subr.mxu0 0.0
    %4856 = vmatpush2.msra.mxu0 0.0
    %4857 = vmatprep.subr.mxu0 0.0
    %4858 = vmatpush2.msra.mxu0 0.0
    %4859 = vmatprep.subr.mxu0 0.0
    %4860 = vmatpush2.msra.mxu0 0.0
    %4861 = vmatprep.subr.mxu0 0.0
    %4862 = vmatpush2.msra.mxu0 0.0
    %4863 = vmatprep.subr.mxu0 0.0
    %4864 = vmatpush2.msra.mxu0 0.0
    %4865 = vmatprep.subr.mxu0 0.0
    %4866 = vmatpush2.msra.mxu0 0.0
    %4867 = vmatprep.subr.mxu0 0.0
    %4868 = vmatpush2.msra.mxu0 0.0
    %4869 = vmatprep.subr.mxu0 0.0
    %4870 = vmatpush2.msra.mxu0 0.0
    %4871 = vmatprep.subr.mxu0 0.0
    %4872 = vmatpush2.msra.mxu0 0.0
    %4873 = vmatprep.subr.mxu0 0.0
    %4874 = vmatpush2.msra.mxu0 0.0
    %4875 = vmatprep.subr.mxu0 0.0
    %4876 = vmatpush2.msra.mxu0 0.0
    %4877 = vmatprep.mubr.f32.mxu0 0.0
    %4878 = vmatmul.mubr.f32.gmra.mxu0 %v4811
    %v4879 = vpop.f32.mrf.mxu0
    %v4880 = vadd.f32 0.0, %v4879
    %v4881 = vpop.f32.mrf.mxu0
    %4882 = vdwg.mxu0
    %4883 = vrot.lane.b32.xlu0 %v3876, 64
    %v4884 = vpop.permute.xlu0 %4883
    %v4887 = vsel %vm381, %v4575, 0
    %4889 = vmatprep.subr.mxu0 0.0
    %4890 = vmatpush1.msra.mxu0 0.0
    %4891 = vmatprep.subr.mxu0 0.0
    %4892 = vmatpush1.msra.mxu0 0.0
    %4893 = vmatprep.subr.mxu0 0.0
    %4894 = vmatpush1.msra.mxu0 0.0
    %4895 = vmatprep.subr.mxu0 0.0
    %4896 = vmatpush1.msra.mxu0 0.0
    %4897 = vmatprep.subr.mxu0 0.0
    %4898 = vmatpush1.msra.mxu0 0.0
    %4899 = vmatprep.subr.mxu0 0.0
    %4900 = vmatpush1.msra.mxu0 0.0
    %4901 = vmatprep.subr.mxu0 0.0
    %4902 = vmatpush1.msra.mxu0 0.0
    %4903 = vmatprep.subr.mxu0 0.0
    %4904 = vmatpush1.msra.mxu0 0.0
    %4905 = vmatprep.subr.mxu0 0.0
    %4906 = vmatpush1.msra.mxu0 0.0
    %4907 = vmatprep.subr.mxu0 0.0
    %4908 = vmatpush1.msra.mxu0 0.0
    %4909 = vmatprep.subr.mxu0 0.0
    %4910 = vmatpush1.msra.mxu0 0.0
    %4911 = vmatprep.subr.mxu0 0.0
    %4912 = vmatpush1.msra.mxu0 0.0
    %4913 = vmatprep.subr.mxu0 0.0
    %4914 = vmatpush1.msra.mxu0 0.0
    %4915 = vmatprep.subr.mxu0 0.0
    %4916 = vmatpush1.msra.mxu0 0.0
    %4917 = vmatprep.subr.mxu0 0.0
    %4918 = vmatpush1.msra.mxu0 0.0
    %4919 = vmatprep.subr.mxu0 0.0
    %4920 = vmatpush1.msra.mxu0 %v4884
    %4921 = vmatprep.subr.mxu0 0.0
    %4922 = vmatpush2.msra.mxu0 0.0
    %4923 = vmatprep.subr.mxu0 0.0
    %4924 = vmatpush2.msra.mxu0 0.0
    %4925 = vmatprep.subr.mxu0 0.0
    %4926 = vmatpush2.msra.mxu0 0.0
    %4927 = vmatprep.subr.mxu0 0.0
    %4928 = vmatpush2.msra.mxu0 0.0
    %4929 = vmatprep.subr.mxu0 0.0
    %4930 = vmatpush2.msra.mxu0 0.0
    %4931 = vmatprep.subr.mxu0 0.0
    %4932 = vmatpush2.msra.mxu0 0.0
    %4933 = vmatprep.subr.mxu0 0.0
    %4934 = vmatpush2.msra.mxu0 0.0
    %4935 = vmatprep.subr.mxu0 0.0
    %4936 = vmatpush2.msra.mxu0 0.0
    %4937 = vmatprep.subr.mxu0 0.0
    %4938 = vmatpush2.msra.mxu0 0.0
    %4939 = vmatprep.subr.mxu0 0.0
    %4940 = vmatpush2.msra.mxu0 0.0
    %4941 = vmatprep.subr.mxu0 0.0
    %4942 = vmatpush2.msra.mxu0 0.0
    %4943 = vmatprep.subr.mxu0 0.0
    %4944 = vmatpush2.msra.mxu0 0.0
    %4945 = vmatprep.subr.mxu0 0.0
    %4946 = vmatpush2.msra.mxu0 0.0
    %4947 = vmatprep.subr.mxu0 0.0
    %4948 = vmatpush2.msra.mxu0 0.0
    %4949 = vmatprep.subr.mxu0 0.0
    %4950 = vmatpush2.msra.mxu0 0.0
    %4951 = vmatprep.subr.mxu0 0.0
    %4952 = vmatpush2.msra.mxu0 0.0
    %4953 = vmatprep.mubr.f32.mxu0 0.0
    %4954 = vmatmul.mubr.f32.gmra.mxu0 %v4887
    %v4955 = vpop.f32.mrf.mxu0
    %v4956 = vadd.f32 0.0, %v4955
    %v4957 = vpop.f32.mrf.mxu0
    %4958 = vdwg.mxu0
    %4959 = vrot.lane.b32.xlu0 %v3878, 64
    %v4960 = vpop.permute.xlu0 %4959
    %v4963 = vsel %vm381, %v4576, 0
    %4965 = vmatprep.subr.mxu0 0.0
    %4966 = vmatpush1.msra.mxu0 0.0
    %4967 = vmatprep.subr.mxu0 0.0
    %4968 = vmatpush1.msra.mxu0 0.0
    %4969 = vmatprep.subr.mxu0 0.0
    %4970 = vmatpush1.msra.mxu0 0.0
    %4971 = vmatprep.subr.mxu0 0.0
    %4972 = vmatpush1.msra.mxu0 0.0
    %4973 = vmatprep.subr.mxu0 0.0
    %4974 = vmatpush1.msra.mxu0 0.0
    %4975 = vmatprep.subr.mxu0 0.0
    %4976 = vmatpush1.msra.mxu0 0.0
    %4977 = vmatprep.subr.mxu0 0.0
    %4978 = vmatpush1.msra.mxu0 0.0
    %4979 = vmatprep.subr.mxu0 0.0
    %4980 = vmatpush1.msra.mxu0 0.0
    %4981 = vmatprep.subr.mxu0 0.0
    %4982 = vmatpush1.msra.mxu0 0.0
    %4983 = vmatprep.subr.mxu0 0.0
    %4984 = vmatpush1.msra.mxu0 0.0
    %4985 = vmatprep.subr.mxu0 0.0
    %4986 = vmatpush1.msra.mxu0 0.0
    %4987 = vmatprep.subr.mxu0 0.0
    %4988 = vmatpush1.msra.mxu0 0.0
    %4989 = vmatprep.subr.mxu0 0.0
    %4990 = vmatpush1.msra.mxu0 0.0
    %4991 = vmatprep.subr.mxu0 0.0
    %4992 = vmatpush1.msra.mxu0 0.0
    %4993 = vmatprep.subr.mxu0 0.0
    %4994 = vmatpush1.msra.mxu0 0.0
    %4995 = vmatprep.subr.mxu0 0.0
    %4996 = vmatpush1.msra.mxu0 %v4960
    %4997 = vmatprep.subr.mxu0 0.0
    %4998 = vmatpush2.msra.mxu0 0.0
    %4999 = vmatprep.subr.mxu0 0.0
    %5000 = vmatpush2.msra.mxu0 0.0
    %5001 = vmatprep.subr.mxu0 0.0
    %5002 = vmatpush2.msra.mxu0 0.0
    %5003 = vmatprep.subr.mxu0 0.0
    %5004 = vmatpush2.msra.mxu0 0.0
    %5005 = vmatprep.subr.mxu0 0.0
    %5006 = vmatpush2.msra.mxu0 0.0
    %5007 = vmatprep.subr.mxu0 0.0
    %5008 = vmatpush2.msra.mxu0 0.0
    %5009 = vmatprep.subr.mxu0 0.0
    %5010 = vmatpush2.msra.mxu0 0.0
    %5011 = vmatprep.subr.mxu0 0.0
    %5012 = vmatpush2.msra.mxu0 0.0
    %5013 = vmatprep.subr.mxu0 0.0
    %5014 = vmatpush2.msra.mxu0 0.0
    %5015 = vmatprep.subr.mxu0 0.0
    %5016 = vmatpush2.msra.mxu0 0.0
    %5017 = vmatprep.subr.mxu0 0.0
    %5018 = vmatpush2.msra.mxu0 0.0
    %5019 = vmatprep.subr.mxu0 0.0
    %5020 = vmatpush2.msra.mxu0 0.0
    %5021 = vmatprep.subr.mxu0 0.0
    %5022 = vmatpush2.msra.mxu0 0.0
    %5023 = vmatprep.subr.mxu0 0.0
    %5024 = vmatpush2.msra.mxu0 0.0
    %5025 = vmatprep.subr.mxu0 0.0
    %5026 = vmatpush2.msra.mxu0 0.0
    %5027 = vmatprep.subr.mxu0 0.0
    %5028 = vmatpush2.msra.mxu0 0.0
    %5029 = vmatprep.mubr.f32.mxu0 0.0
    %5030 = vmatmul.mubr.f32.gmra.mxu0 %v4963
    %v5031 = vpop.f32.mrf.mxu0
    %v5032 = vadd.f32 0.0, %v5031
    %v5033 = vpop.f32.mrf.mxu0
    %5034 = vdwg.mxu0
    %5035 = vrot.lane.b32.xlu0 %v3880, 64
    %v5036 = vpop.permute.xlu0 %5035
    %v5039 = vsel %vm381, %v4577, 0
    %5041 = vmatprep.subr.mxu0 0.0
    %5042 = vmatpush1.msra.mxu0 0.0
    %5043 = vmatprep.subr.mxu0 0.0
    %5044 = vmatpush1.msra.mxu0 0.0
    %5045 = vmatprep.subr.mxu0 0.0
    %5046 = vmatpush1.msra.mxu0 0.0
    %5047 = vmatprep.subr.mxu0 0.0
    %5048 = vmatpush1.msra.mxu0 0.0
    %5049 = vmatprep.subr.mxu0 0.0
    %5050 = vmatpush1.msra.mxu0 0.0
    %5051 = vmatprep.subr.mxu0 0.0
    %5052 = vmatpush1.msra.mxu0 0.0
    %5053 = vmatprep.subr.mxu0 0.0
    %5054 = vmatpush1.msra.mxu0 0.0
    %5055 = vmatprep.subr.mxu0 0.0
    %5056 = vmatpush1.msra.mxu0 0.0
    %5057 = vmatprep.subr.mxu0 0.0
    %5058 = vmatpush1.msra.mxu0 0.0
    %5059 = vmatprep.subr.mxu0 0.0
    %5060 = vmatpush1.msra.mxu0 0.0
    %5061 = vmatprep.subr.mxu0 0.0
    %5062 = vmatpush1.msra.mxu0 0.0
    %5063 = vmatprep.subr.mxu0 0.0
    %5064 = vmatpush1.msra.mxu0 0.0
    %5065 = vmatprep.subr.mxu0 0.0
    %5066 = vmatpush1.msra.mxu0 0.0
    %5067 = vmatprep.subr.mxu0 0.0
    %5068 = vmatpush1.msra.mxu0 0.0
    %5069 = vmatprep.subr.mxu0 0.0
    %5070 = vmatpush1.msra.mxu0 0.0
    %5071 = vmatprep.subr.mxu0 0.0
    %5072 = vmatpush1.msra.mxu0 %v5036
    %5073 = vmatprep.subr.mxu0 0.0
    %5074 = vmatpush2.msra.mxu0 0.0
    %5075 = vmatprep.subr.mxu0 0.0
    %5076 = vmatpush2.msra.mxu0 0.0
    %5077 = vmatprep.subr.mxu0 0.0
    %5078 = vmatpush2.msra.mxu0 0.0
    %5079 = vmatprep.subr.mxu0 0.0
    %5080 = vmatpush2.msra.mxu0 0.0
    %5081 = vmatprep.subr.mxu0 0.0
    %5082 = vmatpush2.msra.mxu0 0.0
    %5083 = vmatprep.subr.mxu0 0.0
    %5084 = vmatpush2.msra.mxu0 0.0
    %5085 = vmatprep.subr.mxu0 0.0
    %5086 = vmatpush2.msra.mxu0 0.0
    %5087 = vmatprep.subr.mxu0 0.0
    %5088 = vmatpush2.msra.mxu0 0.0
    %5089 = vmatprep.subr.mxu0 0.0
    %5090 = vmatpush2.msra.mxu0 0.0
    %5091 = vmatprep.subr.mxu0 0.0
    %5092 = vmatpush2.msra.mxu0 0.0
    %5093 = vmatprep.subr.mxu0 0.0
    %5094 = vmatpush2.msra.mxu0 0.0
    %5095 = vmatprep.subr.mxu0 0.0
    %5096 = vmatpush2.msra.mxu0 0.0
    %5097 = vmatprep.subr.mxu0 0.0
    %5098 = vmatpush2.msra.mxu0 0.0
    %5099 = vmatprep.subr.mxu0 0.0
    %5100 = vmatpush2.msra.mxu0 0.0
    %5101 = vmatprep.subr.mxu0 0.0
    %5102 = vmatpush2.msra.mxu0 0.0
    %5103 = vmatprep.subr.mxu0 0.0
    %5104 = vmatpush2.msra.mxu0 0.0
    %5105 = vmatprep.mubr.f32.mxu0 0.0
    %5106 = vmatmul.mubr.f32.gmra.mxu0 %v5039
    %v5107 = vpop.f32.mrf.mxu0
    %v5108 = vadd.f32 0.0, %v5107
    %v5109 = vpop.f32.mrf.mxu0
    %5110 = vdwg.mxu0
    %5111 = vrot.lane.b32.xlu0 %v3882, 64
    %v5112 = vpop.permute.xlu0 %5111
    %v5115 = vsel %vm381, %v4578, 0
    %5117 = vmatprep.subr.mxu0 0.0
    %5118 = vmatpush1.msra.mxu0 0.0
    %5119 = vmatprep.subr.mxu0 0.0
    %5120 = vmatpush1.msra.mxu0 0.0
    %5121 = vmatprep.subr.mxu0 0.0
    %5122 = vmatpush1.msra.mxu0 0.0
    %5123 = vmatprep.subr.mxu0 0.0
    %5124 = vmatpush1.msra.mxu0 0.0
    %5125 = vmatprep.subr.mxu0 0.0
    %5126 = vmatpush1.msra.mxu0 0.0
    %5127 = vmatprep.subr.mxu0 0.0
    %5128 = vmatpush1.msra.mxu0 0.0
    %5129 = vmatprep.subr.mxu0 0.0
    %5130 = vmatpush1.msra.mxu0 0.0
    %5131 = vmatprep.subr.mxu0 0.0
    %5132 = vmatpush1.msra.mxu0 0.0
    %5133 = vmatprep.subr.mxu0 0.0
    %5134 = vmatpush1.msra.mxu0 0.0
    %5135 = vmatprep.subr.mxu0 0.0
    %5136 = vmatpush1.msra.mxu0 0.0
    %5137 = vmatprep.subr.mxu0 0.0
    %5138 = vmatpush1.msra.mxu0 0.0
    %5139 = vmatprep.subr.mxu0 0.0
    %5140 = vmatpush1.msra.mxu0 0.0
    %5141 = vmatprep.subr.mxu0 0.0
    %5142 = vmatpush1.msra.mxu0 0.0
    %5143 = vmatprep.subr.mxu0 0.0
    %5144 = vmatpush1.msra.mxu0 0.0
    %5145 = vmatprep.subr.mxu0 0.0
    %5146 = vmatpush1.msra.mxu0 0.0
    %5147 = vmatprep.subr.mxu0 0.0
    %5148 = vmatpush1.msra.mxu0 %v5112
    %5149 = vmatprep.subr.mxu0 0.0
    %5150 = vmatpush2.msra.mxu0 0.0
    %5151 = vmatprep.subr.mxu0 0.0
    %5152 = vmatpush2.msra.mxu0 0.0
    %5153 = vmatprep.subr.mxu0 0.0
    %5154 = vmatpush2.msra.mxu0 0.0
    %5155 = vmatprep.subr.mxu0 0.0
    %5156 = vmatpush2.msra.mxu0 0.0
    %5157 = vmatprep.subr.mxu0 0.0
    %5158 = vmatpush2.msra.mxu0 0.0
    %5159 = vmatprep.subr.mxu0 0.0
    %5160 = vmatpush2.msra.mxu0 0.0
    %5161 = vmatprep.subr.mxu0 0.0
    %5162 = vmatpush2.msra.mxu0 0.0
    %5163 = vmatprep.subr.mxu0 0.0
    %5164 = vmatpush2.msra.mxu0 0.0
    %5165 = vmatprep.subr.mxu0 0.0
    %5166 = vmatpush2.msra.mxu0 0.0
    %5167 = vmatprep.subr.mxu0 0.0
    %5168 = vmatpush2.msra.mxu0 0.0
    %5169 = vmatprep.subr.mxu0 0.0
    %5170 = vmatpush2.msra.mxu0 0.0
    %5171 = vmatprep.subr.mxu0 0.0
    %5172 = vmatpush2.msra.mxu0 0.0
    %5173 = vmatprep.subr.mxu0 0.0
    %5174 = vmatpush2.msra.mxu0 0.0
    %5175 = vmatprep.subr.mxu0 0.0
    %5176 = vmatpush2.msra.mxu0 0.0
    %5177 = vmatprep.subr.mxu0 0.0
    %5178 = vmatpush2.msra.mxu0 0.0
    %5179 = vmatprep.subr.mxu0 0.0
    %5180 = vmatpush2.msra.mxu0 0.0
    %5181 = vmatprep.mubr.f32.mxu0 0.0
    %5182 = vmatmul.mubr.f32.gmra.mxu0 %v5115
    %v5183 = vpop.f32.mrf.mxu0
    %v5184 = vadd.f32 0.0, %v5183
    %v5185 = vpop.f32.mrf.mxu0
    %5186 = vdwg.mxu0
    %5189 = vrot.lane.b32.xlu0 %v4804, 8
    %v5190 = vpop.permute.xlu0 %5189
    %5191 = vrot.lane.b32.xlu0 %v4880, 8
    %v5192 = vpop.permute.xlu0 %5191
    %5197 = vrot.lane.b32.xlu0 %v4956, 16
    %v5198 = vpop.permute.xlu0 %5197
    %5199 = vrot.lane.b32.xlu0 %v5032, 16
    %v5200 = vpop.permute.xlu0 %5199
    %5205 = vrot.lane.b32.xlu0 %v5108, 24
    %v5206 = vpop.permute.xlu0 %5205
    %5207 = vrot.lane.b32.xlu0 %v5184, 24
    %v5208 = vpop.permute.xlu0 %5207
    %v5211 = vsel %vm381, %v4652, %v5190
    %v5212 = vsel %vm381, %v4728, %v5192
    %v5213 = vsel %vm1710, %v5211, %v5198
    %v5214 = vsel %vm1710, %v5212, %v5200
    %v5215 = vsel %vm1713, %v5213, %v5206
    %v5216 = vsel %vm1713, %v5214, %v5208
    %v5218 = vlaneseq
    %v5219 = vshrl.u32 %v5218, 7
    %v5220 = vsub.s32 0, %v5219
    %v5221 = vrot.slane %v3868, %v5220
    %v5224 = vsel %vm220, %v5215, 0
    %v5227 = vsel %vm220, %v5216, 0
    %5229 = vmatprep.subr.mxu0 0.0
    %5230 = vmatpush1.msra.mxu0 0.0
    %5231 = vmatprep.subr.mxu0 0.0
    %5232 = vmatpush1.msra.mxu0 0.0
    %5233 = vmatprep.subr.mxu0 0.0
    %5234 = vmatpush1.msra.mxu0 0.0
    %5235 = vmatprep.subr.mxu0 0.0
    %5236 = vmatpush1.msra.mxu0 0.0
    %5237 = vmatprep.subr.mxu0 0.0
    %5238 = vmatpush1.msra.mxu0 0.0
    %5239 = vmatprep.subr.mxu0 0.0
    %5240 = vmatpush1.msra.mxu0 0.0
    %5241 = vmatprep.subr.mxu0 0.0
    %5242 = vmatpush1.msra.mxu0 0.0
    %5243 = vmatprep.subr.mxu0 0.0
    %5244 = vmatpush1.msra.mxu0 0.0
    %5245 = vmatprep.subr.mxu0 0.0
    %5246 = vmatpush1.msra.mxu0 0.0
    %5247 = vmatprep.subr.mxu0 0.0
    %5248 = vmatpush1.msra.mxu0 0.0
    %5249 = vmatprep.subr.mxu0 0.0
    %5250 = vmatpush1.msra.mxu0 0.0
    %5251 = vmatprep.subr.mxu0 0.0
    %5252 = vmatpush1.msra.mxu0 0.0
    %5253 = vmatprep.subr.mxu0 0.0
    %5254 = vmatpush1.msra.mxu0 %v3866
    %5255 = vmatprep.subr.mxu0 0.0
    %5256 = vmatpush1.msra.mxu0 %v3865
    %5257 = vmatprep.subr.mxu0 0.0
    %5258 = vmatpush1.msra.mxu0 %v3864
    %5259 = vmatprep.subr.mxu0 0.0
    %5260 = vmatpush1.msra.mxu0 %v3863
    %5261 = vmatprep.subr.mxu0 0.0
    %5262 = vmatpush2.msra.mxu0 0.0
    %5263 = vmatprep.subr.mxu0 0.0
    %5264 = vmatpush2.msra.mxu0 0.0
    %5265 = vmatprep.subr.mxu0 0.0
    %5266 = vmatpush2.msra.mxu0 0.0
    %5267 = vmatprep.subr.mxu0 0.0
    %5268 = vmatpush2.msra.mxu0 0.0
    %5269 = vmatprep.subr.mxu0 0.0
    %5270 = vmatpush2.msra.mxu0 0.0
    %5271 = vmatprep.subr.mxu0 0.0
    %5272 = vmatpush2.msra.mxu0 0.0
    %5273 = vmatprep.subr.mxu0 0.0
    %5274 = vmatpush2.msra.mxu0 0.0
    %5275 = vmatprep.subr.mxu0 0.0
    %5276 = vmatpush2.msra.mxu0 0.0
    %5277 = vmatprep.subr.mxu0 0.0
    %5278 = vmatpush2.msra.mxu0 0.0
    %5279 = vmatprep.subr.mxu0 0.0
    %5280 = vmatpush2.msra.mxu0 0.0
    %5281 = vmatprep.subr.mxu0 0.0
    %5282 = vmatpush2.msra.mxu0 0.0
    %5283 = vmatprep.subr.mxu0 0.0
    %5284 = vmatpush2.msra.mxu0 0.0
    %5285 = vmatprep.subr.mxu0 0.0
    %5286 = vmatpush2.msra.mxu0 0.0
    %5287 = vmatprep.subr.mxu0 0.0
    %5288 = vmatpush2.msra.mxu0 0.0
    %5289 = vmatprep.subr.mxu0 0.0
    %5290 = vmatpush2.msra.mxu0 0.0
    %5291 = vmatprep.subr.mxu0 0.0
    %5292 = vmatpush2.msra.mxu0 0.0
    %5293 = vmatprep.mubr.f32.mxu0 0.0
    %5294 = vmatmul.mubr.f32.gmra.mxu0 %v5224
    %v5295 = vpop.f32.mrf.mxu0
    %v5296 = vadd.f32 %v5221, %v5295
    %v5297 = vpop.f32.mrf.mxu0
    %5298 = vmatprep.mubr.f32.mxu0 0.0
    %5299 = vmatmul.mubr.f32.gmra.mxu0 %v5227
    %v5300 = vpop.f32.mrf.mxu0
    %v5301 = vadd.f32 %v5221, %v5300
    %v5302 = vpop.f32.mrf.mxu0
    %5303 = vdwg.mxu0
    %v5304 = vadd.f32 %v3718, %v5296
    %v5305 = vadd.f32 %v3719, %v5301
    %s5306 = sld [smem:[#allocation18 + $0x82]]
    %s5307 = sld [smem:[#allocation18 + $0x83]]
    %v5308 = vsel %vm220, %v5304, 0.0
    %5309 = vadd.xlane.f32.xlu0 %v5308
    %v5310 = vpop.xlane.xlu0 %5309
    %v5311 = vsel %vm220, %v5305, 0.0
    %5312 = vadd.xlane.f32.xlu0 %v5311
    %v5313 = vpop.xlane.xlu0 %5312
    %v5314 = vmul.f32 %v5310, %v227
    %v5315 = vmul.f32 %v5313, %v227
    %v5316 = vsub.f32 %v5304, %v5314
    %v5317 = vsub.f32 %v5305, %v5315
    %v5318 = vmul.f32 %v5316, %v5316
    %v5319 = vmul.f32 %v5317, %v5317
    %v5320 = vsel %vm220, %v5318, 0.0
    %5321 = vadd.xlane.f32.xlu0 %v5320
    %v5322 = vpop.xlane.xlu0 %5321
    %v5323 = vsel %vm220, %v5319, 0.0
    %5324 = vadd.xlane.f32.xlu0 %v5323
    %v5325 = vpop.xlane.xlu0 %5324
    %v5326 = vmul.f32 %v5322, 0.032258064
    %v5327 = vmul.f32 %v5325, 0.032258064
    %v5328 = vrsqrt.pop %v5326
    %v5329 = vmul.f32 %v5326, %v5328
    %vm5330 = vcmp.eq.f32.partialorder %v5326, inf
    %v5331 = vsel %vm5330, %v5326, %v5329
    %vm5332 = vcmp.eq.f32.partialorder %v5326, 0.0
    %v5333 = vand.u32 %v5326, 2147483648
    %v5334 = vsel %vm5332, %v5333, %v5331
    %v5335 = vrsqrt.pop %v5327
    %v5336 = vmul.f32 %v5327, %v5335
    %vm5337 = vcmp.eq.f32.partialorder %v5327, inf
    %v5338 = vsel %vm5337, %v5327, %v5336
    %vm5339 = vcmp.eq.f32.partialorder %v5327, 0.0
    %v5340 = vand.u32 %v5327, 2147483648
    %v5341 = vsel %vm5339, %v5340, %v5338
    %v5342 = vstv %s5306
    %v5343 = vmul.f32 %v5342, %v5316
    %v5344 = vmul.f32 %v5342, %v5317
    %v5345 = vadd.f32 %v5334, 1e-06
    %v5346 = vadd.f32 %v5341, 1e-06
    %v5347 = vrcp.pop %v5345
    %v5348 = vrcp.pop %v5346
    %v5349 = vmul.f32 %v5343, %v5347
    %v5350 = vmul.f32 %v5344, %v5348
    %v5351 = vstv %s5307
    %v5352 = vadd.f32 %v5349, %v5351
    %v5353 = vadd.f32 %v5350, %v5351
    %s5354 = scalar_lea.vmem %s8, 32
    %v5355 = vld [vmem:[%s5354] sm:$0xff]
    %v5356 = vld [vmem:[%s5354 + $0x8] sm:$0xff]
    %v5357 = vld [vmem:[%s5354 + $0x10] sm:$0xff]
    %v5358 = vld [vmem:[%s5354 + $0x18] sm:$0xff]
    %s5359 = scalar_lea.vmem [#allocation10], 1
    %v5360 = vld [vmem:[%s5359] sm:$0x1]
    %v5362 = vlaneseq
    %v5363 = vshrl.u32 %v5362, 7
    %v5364 = vsub.s32 0, %v5363
    %v5365 = vrot.slane %v5360, %v5364
    %v5368 = vsel %vm220, %v5352, 0
    %v5371 = vsel %vm220, %v5353, 0
    %5373 = vmatprep.subr.mxu0 0.0
    %5374 = vmatpush1.msra.mxu0 0.0
    %5375 = vmatprep.subr.mxu0 0.0
    %5376 = vmatpush1.msra.mxu0 0.0
    %5377 = vmatprep.subr.mxu0 0.0
    %5378 = vmatpush1.msra.mxu0 0.0
    %5379 = vmatprep.subr.mxu0 0.0
    %5380 = vmatpush1.msra.mxu0 0.0
    %5381 = vmatprep.subr.mxu0 0.0
    %5382 = vmatpush1.msra.mxu0 0.0
    %5383 = vmatprep.subr.mxu0 0.0
    %5384 = vmatpush1.msra.mxu0 0.0
    %5385 = vmatprep.subr.mxu0 0.0
    %5386 = vmatpush1.msra.mxu0 0.0
    %5387 = vmatprep.subr.mxu0 0.0
    %5388 = vmatpush1.msra.mxu0 0.0
    %5389 = vmatprep.subr.mxu0 0.0
    %5390 = vmatpush1.msra.mxu0 0.0
    %5391 = vmatprep.subr.mxu0 0.0
    %5392 = vmatpush1.msra.mxu0 0.0
    %5393 = vmatprep.subr.mxu0 0.0
    %5394 = vmatpush1.msra.mxu0 0.0
    %5395 = vmatprep.subr.mxu0 0.0
    %5396 = vmatpush1.msra.mxu0 0.0
    %5397 = vmatprep.subr.mxu0 0.0
    %5398 = vmatpush1.msra.mxu0 %v5358
    %5399 = vmatprep.subr.mxu0 0.0
    %5400 = vmatpush1.msra.mxu0 %v5357
    %5401 = vmatprep.subr.mxu0 0.0
    %5402 = vmatpush1.msra.mxu0 %v5356
    %5403 = vmatprep.subr.mxu0 0.0
    %5404 = vmatpush1.msra.mxu0 %v5355
    %5405 = vmatprep.subr.mxu0 0.0
    %5406 = vmatpush2.msra.mxu0 0.0
    %5407 = vmatprep.subr.mxu0 0.0
    %5408 = vmatpush2.msra.mxu0 0.0
    %5409 = vmatprep.subr.mxu0 0.0
    %5410 = vmatpush2.msra.mxu0 0.0
    %5411 = vmatprep.subr.mxu0 0.0
    %5412 = vmatpush2.msra.mxu0 0.0
    %5413 = vmatprep.subr.mxu0 0.0
    %5414 = vmatpush2.msra.mxu0 0.0
    %5415 = vmatprep.subr.mxu0 0.0
    %5416 = vmatpush2.msra.mxu0 0.0
    %5417 = vmatprep.subr.mxu0 0.0
    %5418 = vmatpush2.msra.mxu0 0.0
    %5419 = vmatprep.subr.mxu0 0.0
    %5420 = vmatpush2.msra.mxu0 0.0
    %5421 = vmatprep.subr.mxu0 0.0
    %5422 = vmatpush2.msra.mxu0 0.0
    %5423 = vmatprep.subr.mxu0 0.0
    %5424 = vmatpush2.msra.mxu0 0.0
    %5425 = vmatprep.subr.mxu0 0.0
    %5426 = vmatpush2.msra.mxu0 0.0
    %5427 = vmatprep.subr.mxu0 0.0
    %5428 = vmatpush2.msra.mxu0 0.0
    %5429 = vmatprep.subr.mxu0 0.0
    %5430 = vmatpush2.msra.mxu0 0.0
    %5431 = vmatprep.subr.mxu0 0.0
    %5432 = vmatpush2.msra.mxu0 0.0
    %5433 = vmatprep.subr.mxu0 0.0
    %5434 = vmatpush2.msra.mxu0 0.0
    %5435 = vmatprep.subr.mxu0 0.0
    %5436 = vmatpush2.msra.mxu0 0.0
    %5437 = vmatprep.mubr.f32.mxu0 0.0
    %5438 = vmatmul.mubr.f32.gmra.mxu0 %v5368
    %v5439 = vpop.f32.mrf.mxu0
    %v5440 = vadd.f32 %v5365, %v5439
    %v5441 = vpop.f32.mrf.mxu0
    %5442 = vmatprep.mubr.f32.mxu0 0.0
    %5443 = vmatmul.mubr.f32.gmra.mxu0 %v5371
    %v5444 = vpop.f32.mrf.mxu0
    %v5445 = vadd.f32 %v5365, %v5444
    %v5446 = vpop.f32.mrf.mxu0
    %5447 = vdwg.mxu0
    %s5448 = scalar_lea.vmem %s10, 32
    %v5449 = vld [vmem:[%s5448] sm:$0xff]
    %v5450 = vld [vmem:[%s5448 + $0x8] sm:$0xff]
    %v5451 = vld [vmem:[%s5448 + $0x10] sm:$0xff]
    %v5452 = vld [vmem:[%s5448 + $0x18] sm:$0xff]
    %s5453 = scalar_lea.vmem [#allocation12], 1
    %v5454 = vld [vmem:[%s5453] sm:$0x1]
    %v5456 = vlaneseq
    %v5457 = vshrl.u32 %v5456, 7
    %v5458 = vsub.s32 0, %v5457
    %v5459 = vrot.slane %v5454, %v5458
    %5461 = vmatprep.subr.mxu0 0.0
    %5462 = vmatpush1.msra.mxu0 0.0
    %5463 = vmatprep.subr.mxu0 0.0
    %5464 = vmatpush1.msra.mxu0 0.0
    %5465 = vmatprep.subr.mxu0 0.0
    %5466 = vmatpush1.msra.mxu0 0.0
    %5467 = vmatprep.subr.mxu0 0.0
    %5468 = vmatpush1.msra.mxu0 0.0
    %5469 = vmatprep.subr.mxu0 0.0
    %5470 = vmatpush1.msra.mxu0 0.0
    %5471 = vmatprep.subr.mxu0 0.0
    %5472 = vmatpush1.msra.mxu0 0.0
    %5473 = vmatprep.subr.mxu0 0.0
    %5474 = vmatpush1.msra.mxu0 0.0
    %5475 = vmatprep.subr.mxu0 0.0
    %5476 = vmatpush1.msra.mxu0 0.0
    %5477 = vmatprep.subr.mxu0 0.0
    %5478 = vmatpush1.msra.mxu0 0.0
    %5479 = vmatprep.subr.mxu0 0.0
    %5480 = vmatpush1.msra.mxu0 0.0
    %5481 = vmatprep.subr.mxu0 0.0
    %5482 = vmatpush1.msra.mxu0 0.0
    %5483 = vmatprep.subr.mxu0 0.0
    %5484 = vmatpush1.msra.mxu0 0.0
    %5485 = vmatprep.subr.mxu0 0.0
    %5486 = vmatpush1.msra.mxu0 %v5452
    %5487 = vmatprep.subr.mxu0 0.0
    %5488 = vmatpush1.msra.mxu0 %v5451
    %5489 = vmatprep.subr.mxu0 0.0
    %5490 = vmatpush1.msra.mxu0 %v5450
    %5491 = vmatprep.subr.mxu0 0.0
    %5492 = vmatpush1.msra.mxu0 %v5449
    %5493 = vmatprep.subr.mxu0 0.0
    %5494 = vmatpush2.msra.mxu0 0.0
    %5495 = vmatprep.subr.mxu0 0.0
    %5496 = vmatpush2.msra.mxu0 0.0
    %5497 = vmatprep.subr.mxu0 0.0
    %5498 = vmatpush2.msra.mxu0 0.0
    %5499 = vmatprep.subr.mxu0 0.0
    %5500 = vmatpush2.msra.mxu0 0.0
    %5501 = vmatprep.subr.mxu0 0.0
    %5502 = vmatpush2.msra.mxu0 0.0
    %5503 = vmatprep.subr.mxu0 0.0
    %5504 = vmatpush2.msra.mxu0 0.0
    %5505 = vmatprep.subr.mxu0 0.0
    %5506 = vmatpush2.msra.mxu0 0.0
    %5507 = vmatprep.subr.mxu0 0.0
    %5508 = vmatpush2.msra.mxu0 0.0
    %5509 = vmatprep.subr.mxu0 0.0
    %5510 = vmatpush2.msra.mxu0 0.0
    %5511 = vmatprep.subr.mxu0 0.0
    %5512 = vmatpush2.msra.mxu0 0.0
    %5513 = vmatprep.subr.mxu0 0.0
    %5514 = vmatpush2.msra.mxu0 0.0
    %5515 = vmatprep.subr.mxu0 0.0
    %5516 = vmatpush2.msra.mxu0 0.0
    %5517 = vmatprep.subr.mxu0 0.0
    %5518 = vmatpush2.msra.mxu0 0.0
    %5519 = vmatprep.subr.mxu0 0.0
    %5520 = vmatpush2.msra.mxu0 0.0
    %5521 = vmatprep.subr.mxu0 0.0
    %5522 = vmatpush2.msra.mxu0 0.0
    %5523 = vmatprep.subr.mxu0 0.0
    %5524 = vmatpush2.msra.mxu0 0.0
    %5525 = vmatprep.mubr.f32.mxu0 0.0
    %5526 = vmatmul.mubr.f32.gmra.mxu0 %v1957
    %v5527 = vpop.f32.mrf.mxu0
    %v5528 = vadd.f32 %v5459, %v5527
    %v5529 = vpop.f32.mrf.mxu0
    %5530 = vmatprep.mubr.f32.mxu0 0.0
    %5531 = vmatmul.mubr.f32.gmra.mxu0 %v1960
    %v5532 = vpop.f32.mrf.mxu0
    %v5533 = vadd.f32 %v5459, %v5532
    %v5534 = vpop.f32.mrf.mxu0
    %5535 = vdwg.mxu0
    %s5536 = scalar_lea.vmem %s12, 32
    %v5537 = vld [vmem:[%s5536] sm:$0xff]
    %v5538 = vld [vmem:[%s5536 + $0x8] sm:$0xff]
    %v5539 = vld [vmem:[%s5536 + $0x10] sm:$0xff]
    %v5540 = vld [vmem:[%s5536 + $0x18] sm:$0xff]
    %s5541 = scalar_lea.vmem [#allocation13], 1
    %v5542 = vld [vmem:[%s5541] sm:$0x1]
    %5545 = vrot.lane.b32.xlu0 %v5440, 120
    %v5546 = vpop.permute.xlu0 %5545
    %5547 = vrot.lane.b32.xlu0 %v5445, 120
    %v5548 = vpop.permute.xlu0 %5547
    %5549 = vrot.lane.b32.xlu0 %v5440, 112
    %v5550 = vpop.permute.xlu0 %5549
    %5551 = vrot.lane.b32.xlu0 %v5445, 112
    %v5552 = vpop.permute.xlu0 %5551
    %5553 = vrot.lane.b32.xlu0 %v5440, 104
    %v5554 = vpop.permute.xlu0 %5553
    %5555 = vrot.lane.b32.xlu0 %v5445, 104
    %v5556 = vpop.permute.xlu0 %5555
    %5559 = vrot.lane.b32.xlu0 %v5528, 120
    %v5560 = vpop.permute.xlu0 %5559
    %5561 = vrot.lane.b32.xlu0 %v5533, 120
    %v5562 = vpop.permute.xlu0 %5561
    %5563 = vrot.lane.b32.xlu0 %v5528, 112
    %v5564 = vpop.permute.xlu0 %5563
    %5565 = vrot.lane.b32.xlu0 %v5533, 112
    %v5566 = vpop.permute.xlu0 %5565
    %5567 = vrot.lane.b32.xlu0 %v5528, 104
    %v5568 = vpop.permute.xlu0 %5567
    %5569 = vrot.lane.b32.xlu0 %v5533, 104
    %v5570 = vpop.permute.xlu0 %5569
    %v5571 = vsel %vm381, %v5440, 0
    %v5573 = vsel %vm381, %v5528, 0
    %5575 = vmatprep.subr.mxu0 0.0
    %5576 = vmatpush1.xpose.msra.mxu0 0.0
    %5577 = vmatprep.subr.mxu0 0.0
    %5578 = vmatpush1.xpose.msra.mxu0 0.0
    %5579 = vmatprep.subr.mxu0 0.0
    %5580 = vmatpush1.xpose.msra.mxu0 0.0
    %5581 = vmatprep.subr.mxu0 0.0
    %5582 = vmatpush1.xpose.msra.mxu0 0.0
    %5583 = vmatprep.subr.mxu0 0.0
    %5584 = vmatpush1.xpose.msra.mxu0 0.0
    %5585 = vmatprep.subr.mxu0 0.0
    %5586 = vmatpush1.xpose.msra.mxu0 0.0
    %5587 = vmatprep.subr.mxu0 0.0
    %5588 = vmatpush1.xpose.msra.mxu0 0.0
    %5589 = vmatprep.subr.mxu0 0.0
    %5590 = vmatpush1.xpose.msra.mxu0 0.0
    %5591 = vmatprep.subr.mxu0 0.0
    %5592 = vmatpush1.xpose.msra.mxu0 0.0
    %5593 = vmatprep.subr.mxu0 0.0
    %5594 = vmatpush1.xpose.msra.mxu0 0.0
    %5595 = vmatprep.subr.mxu0 0.0
    %5596 = vmatpush1.xpose.msra.mxu0 0.0
    %5597 = vmatprep.subr.mxu0 0.0
    %5598 = vmatpush1.xpose.msra.mxu0 0.0
    %5599 = vmatprep.subr.mxu0 0.0
    %5600 = vmatpush1.xpose.msra.mxu0 0.0
    %5601 = vmatprep.subr.mxu0 0.0
    %5602 = vmatpush1.xpose.msra.mxu0 0.0
    %5603 = vmatprep.subr.mxu0 0.0
    %5604 = vmatpush1.xpose.msra.mxu0 0.0
    %5605 = vmatprep.subr.mxu0 0.0
    %5606 = vmatpush1.xpose.msra.mxu0 %v5573
    %5607 = vmatprep.subr.mxu0 0.0
    %5608 = vmatpush2.xpose.msra.mxu0 0.0
    %5609 = vmatprep.subr.mxu0 0.0
    %5610 = vmatpush2.xpose.msra.mxu0 0.0
    %5611 = vmatprep.subr.mxu0 0.0
    %5612 = vmatpush2.xpose.msra.mxu0 0.0
    %5613 = vmatprep.subr.mxu0 0.0
    %5614 = vmatpush2.xpose.msra.mxu0 0.0
    %5615 = vmatprep.subr.mxu0 0.0
    %5616 = vmatpush2.xpose.msra.mxu0 0.0
    %5617 = vmatprep.subr.mxu0 0.0
    %5618 = vmatpush2.xpose.msra.mxu0 0.0
    %5619 = vmatprep.subr.mxu0 0.0
    %5620 = vmatpush2.xpose.msra.mxu0 0.0
    %5621 = vmatprep.subr.mxu0 0.0
    %5622 = vmatpush2.xpose.msra.mxu0 0.0
    %5623 = vmatprep.subr.mxu0 0.0
    %5624 = vmatpush2.xpose.msra.mxu0 0.0
    %5625 = vmatprep.subr.mxu0 0.0
    %5626 = vmatpush2.xpose.msra.mxu0 0.0
    %5627 = vmatprep.subr.mxu0 0.0
    %5628 = vmatpush2.xpose.msra.mxu0 0.0
    %5629 = vmatprep.subr.mxu0 0.0
    %5630 = vmatpush2.xpose.msra.mxu0 0.0
    %5631 = vmatprep.subr.mxu0 0.0
    %5632 = vmatpush2.xpose.msra.mxu0 0.0
    %5633 = vmatprep.subr.mxu0 0.0
    %5634 = vmatpush2.xpose.msra.mxu0 0.0
    %5635 = vmatprep.subr.mxu0 0.0
    %5636 = vmatpush2.xpose.msra.mxu0 0.0
    %5637 = vmatprep.subr.mxu0 0.0
    %5638 = vmatpush2.xpose.msra.mxu0 0.0
    %5639 = vmatprep.mubr.f32.mxu0 0.0
    %5640 = vmatmul.mubr.f32.gmra.mxu0 %v5571
    %v5641 = vpop.f32.mrf.mxu0
    %v5642 = vadd.f32 %v202, %v5641
    %v5643 = vpop.f32.mrf.mxu0
    %5644 = vdwg.mxu0
    %v5645 = vsel %vm381, %v5445, 0
    %v5647 = vsel %vm381, %v5533, 0
    %5649 = vmatprep.subr.mxu0 0.0
    %5650 = vmatpush1.xpose.msra.mxu0 0.0
    %5651 = vmatprep.subr.mxu0 0.0
    %5652 = vmatpush1.xpose.msra.mxu0 0.0
    %5653 = vmatprep.subr.mxu0 0.0
    %5654 = vmatpush1.xpose.msra.mxu0 0.0
    %5655 = vmatprep.subr.mxu0 0.0
    %5656 = vmatpush1.xpose.msra.mxu0 0.0
    %5657 = vmatprep.subr.mxu0 0.0
    %5658 = vmatpush1.xpose.msra.mxu0 0.0
    %5659 = vmatprep.subr.mxu0 0.0
    %5660 = vmatpush1.xpose.msra.mxu0 0.0
    %5661 = vmatprep.subr.mxu0 0.0
    %5662 = vmatpush1.xpose.msra.mxu0 0.0
    %5663 = vmatprep.subr.mxu0 0.0
    %5664 = vmatpush1.xpose.msra.mxu0 0.0
    %5665 = vmatprep.subr.mxu0 0.0
    %5666 = vmatpush1.xpose.msra.mxu0 0.0
    %5667 = vmatprep.subr.mxu0 0.0
    %5668 = vmatpush1.xpose.msra.mxu0 0.0
    %5669 = vmatprep.subr.mxu0 0.0
    %5670 = vmatpush1.xpose.msra.mxu0 0.0
    %5671 = vmatprep.subr.mxu0 0.0
    %5672 = vmatpush1.xpose.msra.mxu0 0.0
    %5673 = vmatprep.subr.mxu0 0.0
    %5674 = vmatpush1.xpose.msra.mxu0 0.0
    %5675 = vmatprep.subr.mxu0 0.0
    %5676 = vmatpush1.xpose.msra.mxu0 0.0
    %5677 = vmatprep.subr.mxu0 0.0
    %5678 = vmatpush1.xpose.msra.mxu0 0.0
    %5679 = vmatprep.subr.mxu0 0.0
    %5680 = vmatpush1.xpose.msra.mxu0 %v5647
    %5681 = vmatprep.subr.mxu0 0.0
    %5682 = vmatpush2.xpose.msra.mxu0 0.0
    %5683 = vmatprep.subr.mxu0 0.0
    %5684 = vmatpush2.xpose.msra.mxu0 0.0
    %5685 = vmatprep.subr.mxu0 0.0
    %5686 = vmatpush2.xpose.msra.mxu0 0.0
    %5687 = vmatprep.subr.mxu0 0.0
    %5688 = vmatpush2.xpose.msra.mxu0 0.0
    %5689 = vmatprep.subr.mxu0 0.0
    %5690 = vmatpush2.xpose.msra.mxu0 0.0
    %5691 = vmatprep.subr.mxu0 0.0
    %5692 = vmatpush2.xpose.msra.mxu0 0.0
    %5693 = vmatprep.subr.mxu0 0.0
    %5694 = vmatpush2.xpose.msra.mxu0 0.0
    %5695 = vmatprep.subr.mxu0 0.0
    %5696 = vmatpush2.xpose.msra.mxu0 0.0
    %5697 = vmatprep.subr.mxu0 0.0
    %5698 = vmatpush2.xpose.msra.mxu0 0.0
    %5699 = vmatprep.subr.mxu0 0.0
    %5700 = vmatpush2.xpose.msra.mxu0 0.0
    %5701 = vmatprep.subr.mxu0 0.0
    %5702 = vmatpush2.xpose.msra.mxu0 0.0
    %5703 = vmatprep.subr.mxu0 0.0
    %5704 = vmatpush2.xpose.msra.mxu0 0.0
    %5705 = vmatprep.subr.mxu0 0.0
    %5706 = vmatpush2.xpose.msra.mxu0 0.0
    %5707 = vmatprep.subr.mxu0 0.0
    %5708 = vmatpush2.xpose.msra.mxu0 0.0
    %5709 = vmatprep.subr.mxu0 0.0
    %5710 = vmatpush2.xpose.msra.mxu0 0.0
    %5711 = vmatprep.subr.mxu0 0.0
    %5712 = vmatpush2.xpose.msra.mxu0 0.0
    %5713 = vmatprep.mubr.f32.mxu0 0.0
    %5714 = vmatmul.mubr.f32.gmra.mxu0 %v5645
    %v5715 = vpop.f32.mrf.mxu0
    %v5716 = vadd.f32 %v203, %v5715
    %v5717 = vpop.f32.mrf.mxu0
    %5718 = vdwg.mxu0
    %v5719 = vsel %vm381, %v5546, 0
    %v5721 = vsel %vm381, %v5560, 0
    %5723 = vmatprep.subr.mxu0 0.0
    %5724 = vmatpush1.xpose.msra.mxu0 0.0
    %5725 = vmatprep.subr.mxu0 0.0
    %5726 = vmatpush1.xpose.msra.mxu0 0.0
    %5727 = vmatprep.subr.mxu0 0.0
    %5728 = vmatpush1.xpose.msra.mxu0 0.0
    %5729 = vmatprep.subr.mxu0 0.0
    %5730 = vmatpush1.xpose.msra.mxu0 0.0
    %5731 = vmatprep.subr.mxu0 0.0
    %5732 = vmatpush1.xpose.msra.mxu0 0.0
    %5733 = vmatprep.subr.mxu0 0.0
    %5734 = vmatpush1.xpose.msra.mxu0 0.0
    %5735 = vmatprep.subr.mxu0 0.0
    %5736 = vmatpush1.xpose.msra.mxu0 0.0
    %5737 = vmatprep.subr.mxu0 0.0
    %5738 = vmatpush1.xpose.msra.mxu0 0.0
    %5739 = vmatprep.subr.mxu0 0.0
    %5740 = vmatpush1.xpose.msra.mxu0 0.0
    %5741 = vmatprep.subr.mxu0 0.0
    %5742 = vmatpush1.xpose.msra.mxu0 0.0
    %5743 = vmatprep.subr.mxu0 0.0
    %5744 = vmatpush1.xpose.msra.mxu0 0.0
    %5745 = vmatprep.subr.mxu0 0.0
    %5746 = vmatpush1.xpose.msra.mxu0 0.0
    %5747 = vmatprep.subr.mxu0 0.0
    %5748 = vmatpush1.xpose.msra.mxu0 0.0
    %5749 = vmatprep.subr.mxu0 0.0
    %5750 = vmatpush1.xpose.msra.mxu0 0.0
    %5751 = vmatprep.subr.mxu0 0.0
    %5752 = vmatpush1.xpose.msra.mxu0 0.0
    %5753 = vmatprep.subr.mxu0 0.0
    %5754 = vmatpush1.xpose.msra.mxu0 %v5721
    %5755 = vmatprep.subr.mxu0 0.0
    %5756 = vmatpush2.xpose.msra.mxu0 0.0
    %5757 = vmatprep.subr.mxu0 0.0
    %5758 = vmatpush2.xpose.msra.mxu0 0.0
    %5759 = vmatprep.subr.mxu0 0.0
    %5760 = vmatpush2.xpose.msra.mxu0 0.0
    %5761 = vmatprep.subr.mxu0 0.0
    %5762 = vmatpush2.xpose.msra.mxu0 0.0
    %5763 = vmatprep.subr.mxu0 0.0
    %5764 = vmatpush2.xpose.msra.mxu0 0.0
    %5765 = vmatprep.subr.mxu0 0.0
    %5766 = vmatpush2.xpose.msra.mxu0 0.0
    %5767 = vmatprep.subr.mxu0 0.0
    %5768 = vmatpush2.xpose.msra.mxu0 0.0
    %5769 = vmatprep.subr.mxu0 0.0
    %5770 = vmatpush2.xpose.msra.mxu0 0.0
    %5771 = vmatprep.subr.mxu0 0.0
    %5772 = vmatpush2.xpose.msra.mxu0 0.0
    %5773 = vmatprep.subr.mxu0 0.0
    %5774 = vmatpush2.xpose.msra.mxu0 0.0
    %5775 = vmatprep.subr.mxu0 0.0
    %5776 = vmatpush2.xpose.msra.mxu0 0.0
    %5777 = vmatprep.subr.mxu0 0.0
    %5778 = vmatpush2.xpose.msra.mxu0 0.0
    %5779 = vmatprep.subr.mxu0 0.0
    %5780 = vmatpush2.xpose.msra.mxu0 0.0
    %5781 = vmatprep.subr.mxu0 0.0
    %5782 = vmatpush2.xpose.msra.mxu0 0.0
    %5783 = vmatprep.subr.mxu0 0.0
    %5784 = vmatpush2.xpose.msra.mxu0 0.0
    %5785 = vmatprep.subr.mxu0 0.0
    %5786 = vmatpush2.xpose.msra.mxu0 0.0
    %5787 = vmatprep.mubr.f32.mxu0 0.0
    %5788 = vmatmul.mubr.f32.gmra.mxu0 %v5719
    %v5789 = vpop.f32.mrf.mxu0
    %v5790 = vadd.f32 %v204, %v5789
    %v5791 = vpop.f32.mrf.mxu0
    %5792 = vdwg.mxu0
    %v5793 = vsel %vm381, %v5548, 0
    %v5795 = vsel %vm381, %v5562, 0
    %5797 = vmatprep.subr.mxu0 0.0
    %5798 = vmatpush1.xpose.msra.mxu0 0.0
    %5799 = vmatprep.subr.mxu0 0.0
    %5800 = vmatpush1.xpose.msra.mxu0 0.0
    %5801 = vmatprep.subr.mxu0 0.0
    %5802 = vmatpush1.xpose.msra.mxu0 0.0
    %5803 = vmatprep.subr.mxu0 0.0
    %5804 = vmatpush1.xpose.msra.mxu0 0.0
    %5805 = vmatprep.subr.mxu0 0.0
    %5806 = vmatpush1.xpose.msra.mxu0 0.0
    %5807 = vmatprep.subr.mxu0 0.0
    %5808 = vmatpush1.xpose.msra.mxu0 0.0
    %5809 = vmatprep.subr.mxu0 0.0
    %5810 = vmatpush1.xpose.msra.mxu0 0.0
    %5811 = vmatprep.subr.mxu0 0.0
    %5812 = vmatpush1.xpose.msra.mxu0 0.0
    %5813 = vmatprep.subr.mxu0 0.0
    %5814 = vmatpush1.xpose.msra.mxu0 0.0
    %5815 = vmatprep.subr.mxu0 0.0
    %5816 = vmatpush1.xpose.msra.mxu0 0.0
    %5817 = vmatprep.subr.mxu0 0.0
    %5818 = vmatpush1.xpose.msra.mxu0 0.0
    %5819 = vmatprep.subr.mxu0 0.0
    %5820 = vmatpush1.xpose.msra.mxu0 0.0
    %5821 = vmatprep.subr.mxu0 0.0
    %5822 = vmatpush1.xpose.msra.mxu0 0.0
    %5823 = vmatprep.subr.mxu0 0.0
    %5824 = vmatpush1.xpose.msra.mxu0 0.0
    %5825 = vmatprep.subr.mxu0 0.0
    %5826 = vmatpush1.xpose.msra.mxu0 0.0
    %5827 = vmatprep.subr.mxu0 0.0
    %5828 = vmatpush1.xpose.msra.mxu0 %v5795
    %5829 = vmatprep.subr.mxu0 0.0
    %5830 = vmatpush2.xpose.msra.mxu0 0.0
    %5831 = vmatprep.subr.mxu0 0.0
    %5832 = vmatpush2.xpose.msra.mxu0 0.0
    %5833 = vmatprep.subr.mxu0 0.0
    %5834 = vmatpush2.xpose.msra.mxu0 0.0
    %5835 = vmatprep.subr.mxu0 0.0
    %5836 = vmatpush2.xpose.msra.mxu0 0.0
    %5837 = vmatprep.subr.mxu0 0.0
    %5838 = vmatpush2.xpose.msra.mxu0 0.0
    %5839 = vmatprep.subr.mxu0 0.0
    %5840 = vmatpush2.xpose.msra.mxu0 0.0
    %5841 = vmatprep.subr.mxu0 0.0
    %5842 = vmatpush2.xpose.msra.mxu0 0.0
    %5843 = vmatprep.subr.mxu0 0.0
    %5844 = vmatpush2.xpose.msra.mxu0 0.0
    %5845 = vmatprep.subr.mxu0 0.0
    %5846 = vmatpush2.xpose.msra.mxu0 0.0
    %5847 = vmatprep.subr.mxu0 0.0
    %5848 = vmatpush2.xpose.msra.mxu0 0.0
    %5849 = vmatprep.subr.mxu0 0.0
    %5850 = vmatpush2.xpose.msra.mxu0 0.0
    %5851 = vmatprep.subr.mxu0 0.0
    %5852 = vmatpush2.xpose.msra.mxu0 0.0
    %5853 = vmatprep.subr.mxu0 0.0
    %5854 = vmatpush2.xpose.msra.mxu0 0.0
    %5855 = vmatprep.subr.mxu0 0.0
    %5856 = vmatpush2.xpose.msra.mxu0 0.0
    %5857 = vmatprep.subr.mxu0 0.0
    %5858 = vmatpush2.xpose.msra.mxu0 0.0
    %5859 = vmatprep.subr.mxu0 0.0
    %5860 = vmatpush2.xpose.msra.mxu0 0.0
    %5861 = vmatprep.mubr.f32.mxu0 0.0
    %5862 = vmatmul.mubr.f32.gmra.mxu0 %v5793
    %v5863 = vpop.f32.mrf.mxu0
    %v5864 = vadd.f32 %v205, %v5863
    %v5865 = vpop.f32.mrf.mxu0
    %5866 = vdwg.mxu0
    %v5867 = vsel %vm381, %v5550, 0
    %v5869 = vsel %vm381, %v5564, 0
    %5871 = vmatprep.subr.mxu0 0.0
    %5872 = vmatpush1.xpose.msra.mxu0 0.0
    %5873 = vmatprep.subr.mxu0 0.0
    %5874 = vmatpush1.xpose.msra.mxu0 0.0
    %5875 = vmatprep.subr.mxu0 0.0
    %5876 = vmatpush1.xpose.msra.mxu0 0.0
    %5877 = vmatprep.subr.mxu0 0.0
    %5878 = vmatpush1.xpose.msra.mxu0 0.0
    %5879 = vmatprep.subr.mxu0 0.0
    %5880 = vmatpush1.xpose.msra.mxu0 0.0
    %5881 = vmatprep.subr.mxu0 0.0
    %5882 = vmatpush1.xpose.msra.mxu0 0.0
    %5883 = vmatprep.subr.mxu0 0.0
    %5884 = vmatpush1.xpose.msra.mxu0 0.0
    %5885 = vmatprep.subr.mxu0 0.0
    %5886 = vmatpush1.xpose.msra.mxu0 0.0
    %5887 = vmatprep.subr.mxu0 0.0
    %5888 = vmatpush1.xpose.msra.mxu0 0.0
    %5889 = vmatprep.subr.mxu0 0.0
    %5890 = vmatpush1.xpose.msra.mxu0 0.0
    %5891 = vmatprep.subr.mxu0 0.0
    %5892 = vmatpush1.xpose.msra.mxu0 0.0
    %5893 = vmatprep.subr.mxu0 0.0
    %5894 = vmatpush1.xpose.msra.mxu0 0.0
    %5895 = vmatprep.subr.mxu0 0.0
    %5896 = vmatpush1.xpose.msra.mxu0 0.0
    %5897 = vmatprep.subr.mxu0 0.0
    %5898 = vmatpush1.xpose.msra.mxu0 0.0
    %5899 = vmatprep.subr.mxu0 0.0
    %5900 = vmatpush1.xpose.msra.mxu0 0.0
    %5901 = vmatprep.subr.mxu0 0.0
    %5902 = vmatpush1.xpose.msra.mxu0 %v5869
    %5903 = vmatprep.subr.mxu0 0.0
    %5904 = vmatpush2.xpose.msra.mxu0 0.0
    %5905 = vmatprep.subr.mxu0 0.0
    %5906 = vmatpush2.xpose.msra.mxu0 0.0
    %5907 = vmatprep.subr.mxu0 0.0
    %5908 = vmatpush2.xpose.msra.mxu0 0.0
    %5909 = vmatprep.subr.mxu0 0.0
    %5910 = vmatpush2.xpose.msra.mxu0 0.0
    %5911 = vmatprep.subr.mxu0 0.0
    %5912 = vmatpush2.xpose.msra.mxu0 0.0
    %5913 = vmatprep.subr.mxu0 0.0
    %5914 = vmatpush2.xpose.msra.mxu0 0.0
    %5915 = vmatprep.subr.mxu0 0.0
    %5916 = vmatpush2.xpose.msra.mxu0 0.0
    %5917 = vmatprep.subr.mxu0 0.0
    %5918 = vmatpush2.xpose.msra.mxu0 0.0
    %5919 = vmatprep.subr.mxu0 0.0
    %5920 = vmatpush2.xpose.msra.mxu0 0.0
    %5921 = vmatprep.subr.mxu0 0.0
    %5922 = vmatpush2.xpose.msra.mxu0 0.0
    %5923 = vmatprep.subr.mxu0 0.0
    %5924 = vmatpush2.xpose.msra.mxu0 0.0
    %5925 = vmatprep.subr.mxu0 0.0
    %5926 = vmatpush2.xpose.msra.mxu0 0.0
    %5927 = vmatprep.subr.mxu0 0.0
    %5928 = vmatpush2.xpose.msra.mxu0 0.0
    %5929 = vmatprep.subr.mxu0 0.0
    %5930 = vmatpush2.xpose.msra.mxu0 0.0
    %5931 = vmatprep.subr.mxu0 0.0
    %5932 = vmatpush2.xpose.msra.mxu0 0.0
    %5933 = vmatprep.subr.mxu0 0.0
    %5934 = vmatpush2.xpose.msra.mxu0 0.0
    %5935 = vmatprep.mubr.f32.mxu0 0.0
    %5936 = vmatmul.mubr.f32.gmra.mxu0 %v5867
    %v5937 = vpop.f32.mrf.mxu0
    %v5938 = vadd.f32 %v206, %v5937
    %v5939 = vpop.f32.mrf.mxu0
    %5940 = vdwg.mxu0
    %v5941 = vsel %vm381, %v5552, 0
    %v5943 = vsel %vm381, %v5566, 0
    %5945 = vmatprep.subr.mxu0 0.0
    %5946 = vmatpush1.xpose.msra.mxu0 0.0
    %5947 = vmatprep.subr.mxu0 0.0
    %5948 = vmatpush1.xpose.msra.mxu0 0.0
    %5949 = vmatprep.subr.mxu0 0.0
    %5950 = vmatpush1.xpose.msra.mxu0 0.0
    %5951 = vmatprep.subr.mxu0 0.0
    %5952 = vmatpush1.xpose.msra.mxu0 0.0
    %5953 = vmatprep.subr.mxu0 0.0
    %5954 = vmatpush1.xpose.msra.mxu0 0.0
    %5955 = vmatprep.subr.mxu0 0.0
    %5956 = vmatpush1.xpose.msra.mxu0 0.0
    %5957 = vmatprep.subr.mxu0 0.0
    %5958 = vmatpush1.xpose.msra.mxu0 0.0
    %5959 = vmatprep.subr.mxu0 0.0
    %5960 = vmatpush1.xpose.msra.mxu0 0.0
    %5961 = vmatprep.subr.mxu0 0.0
    %5962 = vmatpush1.xpose.msra.mxu0 0.0
    %5963 = vmatprep.subr.mxu0 0.0
    %5964 = vmatpush1.xpose.msra.mxu0 0.0
    %5965 = vmatprep.subr.mxu0 0.0
    %5966 = vmatpush1.xpose.msra.mxu0 0.0
    %5967 = vmatprep.subr.mxu0 0.0
    %5968 = vmatpush1.xpose.msra.mxu0 0.0
    %5969 = vmatprep.subr.mxu0 0.0
    %5970 = vmatpush1.xpose.msra.mxu0 0.0
    %5971 = vmatprep.subr.mxu0 0.0
    %5972 = vmatpush1.xpose.msra.mxu0 0.0
    %5973 = vmatprep.subr.mxu0 0.0
    %5974 = vmatpush1.xpose.msra.mxu0 0.0
    %5975 = vmatprep.subr.mxu0 0.0
    %5976 = vmatpush1.xpose.msra.mxu0 %v5943
    %5977 = vmatprep.subr.mxu0 0.0
    %5978 = vmatpush2.xpose.msra.mxu0 0.0
    %5979 = vmatprep.subr.mxu0 0.0
    %5980 = vmatpush2.xpose.msra.mxu0 0.0
    %5981 = vmatprep.subr.mxu0 0.0
    %5982 = vmatpush2.xpose.msra.mxu0 0.0
    %5983 = vmatprep.subr.mxu0 0.0
    %5984 = vmatpush2.xpose.msra.mxu0 0.0
    %5985 = vmatprep.subr.mxu0 0.0
    %5986 = vmatpush2.xpose.msra.mxu0 0.0
    %5987 = vmatprep.subr.mxu0 0.0
    %5988 = vmatpush2.xpose.msra.mxu0 0.0
    %5989 = vmatprep.subr.mxu0 0.0
    %5990 = vmatpush2.xpose.msra.mxu0 0.0
    %5991 = vmatprep.subr.mxu0 0.0
    %5992 = vmatpush2.xpose.msra.mxu0 0.0
    %5993 = vmatprep.subr.mxu0 0.0
    %5994 = vmatpush2.xpose.msra.mxu0 0.0
    %5995 = vmatprep.subr.mxu0 0.0
    %5996 = vmatpush2.xpose.msra.mxu0 0.0
    %5997 = vmatprep.subr.mxu0 0.0
    %5998 = vmatpush2.xpose.msra.mxu0 0.0
    %5999 = vmatprep.subr.mxu0 0.0
    %6000 = vmatpush2.xpose.msra.mxu0 0.0
    %6001 = vmatprep.subr.mxu0 0.0
    %6002 = vmatpush2.xpose.msra.mxu0 0.0
    %6003 = vmatprep.subr.mxu0 0.0
    %6004 = vmatpush2.xpose.msra.mxu0 0.0
    %6005 = vmatprep.subr.mxu0 0.0
    %6006 = vmatpush2.xpose.msra.mxu0 0.0
    %6007 = vmatprep.subr.mxu0 0.0
    %6008 = vmatpush2.xpose.msra.mxu0 0.0
    %6009 = vmatprep.mubr.f32.mxu0 0.0
    %6010 = vmatmul.mubr.f32.gmra.mxu0 %v5941
    %v6011 = vpop.f32.mrf.mxu0
    %v6012 = vadd.f32 %v207, %v6011
    %v6013 = vpop.f32.mrf.mxu0
    %6014 = vdwg.mxu0
    %v6015 = vsel %vm381, %v5554, 0
    %v6017 = vsel %vm381, %v5568, 0
    %6019 = vmatprep.subr.mxu0 0.0
    %6020 = vmatpush1.xpose.msra.mxu0 0.0
    %6021 = vmatprep.subr.mxu0 0.0
    %6022 = vmatpush1.xpose.msra.mxu0 0.0
    %6023 = vmatprep.subr.mxu0 0.0
    %6024 = vmatpush1.xpose.msra.mxu0 0.0
    %6025 = vmatprep.subr.mxu0 0.0
    %6026 = vmatpush1.xpose.msra.mxu0 0.0
    %6027 = vmatprep.subr.mxu0 0.0
    %6028 = vmatpush1.xpose.msra.mxu0 0.0
    %6029 = vmatprep.subr.mxu0 0.0
    %6030 = vmatpush1.xpose.msra.mxu0 0.0
    %6031 = vmatprep.subr.mxu0 0.0
    %6032 = vmatpush1.xpose.msra.mxu0 0.0
    %6033 = vmatprep.subr.mxu0 0.0
    %6034 = vmatpush1.xpose.msra.mxu0 0.0
    %6035 = vmatprep.subr.mxu0 0.0
    %6036 = vmatpush1.xpose.msra.mxu0 0.0
    %6037 = vmatprep.subr.mxu0 0.0
    %6038 = vmatpush1.xpose.msra.mxu0 0.0
    %6039 = vmatprep.subr.mxu0 0.0
    %6040 = vmatpush1.xpose.msra.mxu0 0.0
    %6041 = vmatprep.subr.mxu0 0.0
    %6042 = vmatpush1.xpose.msra.mxu0 0.0
    %6043 = vmatprep.subr.mxu0 0.0
    %6044 = vmatpush1.xpose.msra.mxu0 0.0
    %6045 = vmatprep.subr.mxu0 0.0
    %6046 = vmatpush1.xpose.msra.mxu0 0.0
    %6047 = vmatprep.subr.mxu0 0.0
    %6048 = vmatpush1.xpose.msra.mxu0 0.0
    %6049 = vmatprep.subr.mxu0 0.0
    %6050 = vmatpush1.xpose.msra.mxu0 %v6017
    %6051 = vmatprep.subr.mxu0 0.0
    %6052 = vmatpush2.xpose.msra.mxu0 0.0
    %6053 = vmatprep.subr.mxu0 0.0
    %6054 = vmatpush2.xpose.msra.mxu0 0.0
    %6055 = vmatprep.subr.mxu0 0.0
    %6056 = vmatpush2.xpose.msra.mxu0 0.0
    %6057 = vmatprep.subr.mxu0 0.0
    %6058 = vmatpush2.xpose.msra.mxu0 0.0
    %6059 = vmatprep.subr.mxu0 0.0
    %6060 = vmatpush2.xpose.msra.mxu0 0.0
    %6061 = vmatprep.subr.mxu0 0.0
    %6062 = vmatpush2.xpose.msra.mxu0 0.0
    %6063 = vmatprep.subr.mxu0 0.0
    %6064 = vmatpush2.xpose.msra.mxu0 0.0
    %6065 = vmatprep.subr.mxu0 0.0
    %6066 = vmatpush2.xpose.msra.mxu0 0.0
    %6067 = vmatprep.subr.mxu0 0.0
    %6068 = vmatpush2.xpose.msra.mxu0 0.0
    %6069 = vmatprep.subr.mxu0 0.0
    %6070 = vmatpush2.xpose.msra.mxu0 0.0
    %6071 = vmatprep.subr.mxu0 0.0
    %6072 = vmatpush2.xpose.msra.mxu0 0.0
    %6073 = vmatprep.subr.mxu0 0.0
    %6074 = vmatpush2.xpose.msra.mxu0 0.0
    %6075 = vmatprep.subr.mxu0 0.0
    %6076 = vmatpush2.xpose.msra.mxu0 0.0
    %6077 = vmatprep.subr.mxu0 0.0
    %6078 = vmatpush2.xpose.msra.mxu0 0.0
    %6079 = vmatprep.subr.mxu0 0.0
    %6080 = vmatpush2.xpose.msra.mxu0 0.0
    %6081 = vmatprep.subr.mxu0 0.0
    %6082 = vmatpush2.xpose.msra.mxu0 0.0
    %6083 = vmatprep.mubr.f32.mxu0 0.0
    %6084 = vmatmul.mubr.f32.gmra.mxu0 %v6015
    %v6085 = vpop.f32.mrf.mxu0
    %v6086 = vadd.f32 %v208, %v6085
    %v6087 = vpop.f32.mrf.mxu0
    %6088 = vdwg.mxu0
    %v6089 = vsel %vm381, %v5556, 0
    %v6091 = vsel %vm381, %v5570, 0
    %6093 = vmatprep.subr.mxu0 0.0
    %6094 = vmatpush1.xpose.msra.mxu0 0.0
    %6095 = vmatprep.subr.mxu0 0.0
    %6096 = vmatpush1.xpose.msra.mxu0 0.0
    %6097 = vmatprep.subr.mxu0 0.0
    %6098 = vmatpush1.xpose.msra.mxu0 0.0
    %6099 = vmatprep.subr.mxu0 0.0
    %6100 = vmatpush1.xpose.msra.mxu0 0.0
    %6101 = vmatprep.subr.mxu0 0.0
    %6102 = vmatpush1.xpose.msra.mxu0 0.0
    %6103 = vmatprep.subr.mxu0 0.0
    %6104 = vmatpush1.xpose.msra.mxu0 0.0
    %6105 = vmatprep.subr.mxu0 0.0
    %6106 = vmatpush1.xpose.msra.mxu0 0.0
    %6107 = vmatprep.subr.mxu0 0.0
    %6108 = vmatpush1.xpose.msra.mxu0 0.0
    %6109 = vmatprep.subr.mxu0 0.0
    %6110 = vmatpush1.xpose.msra.mxu0 0.0
    %6111 = vmatprep.subr.mxu0 0.0
    %6112 = vmatpush1.xpose.msra.mxu0 0.0
    %6113 = vmatprep.subr.mxu0 0.0
    %6114 = vmatpush1.xpose.msra.mxu0 0.0
    %6115 = vmatprep.subr.mxu0 0.0
    %6116 = vmatpush1.xpose.msra.mxu0 0.0
    %6117 = vmatprep.subr.mxu0 0.0
    %6118 = vmatpush1.xpose.msra.mxu0 0.0
    %6119 = vmatprep.subr.mxu0 0.0
    %6120 = vmatpush1.xpose.msra.mxu0 0.0
    %6121 = vmatprep.subr.mxu0 0.0
    %6122 = vmatpush1.xpose.msra.mxu0 0.0
    %6123 = vmatprep.subr.mxu0 0.0
    %6124 = vmatpush1.xpose.msra.mxu0 %v6091
    %6125 = vmatprep.subr.mxu0 0.0
    %6126 = vmatpush2.xpose.msra.mxu0 0.0
    %6127 = vmatprep.subr.mxu0 0.0
    %6128 = vmatpush2.xpose.msra.mxu0 0.0
    %6129 = vmatprep.subr.mxu0 0.0
    %6130 = vmatpush2.xpose.msra.mxu0 0.0
    %6131 = vmatprep.subr.mxu0 0.0
    %6132 = vmatpush2.xpose.msra.mxu0 0.0
    %6133 = vmatprep.subr.mxu0 0.0
    %6134 = vmatpush2.xpose.msra.mxu0 0.0
    %6135 = vmatprep.subr.mxu0 0.0
    %6136 = vmatpush2.xpose.msra.mxu0 0.0
    %6137 = vmatprep.subr.mxu0 0.0
    %6138 = vmatpush2.xpose.msra.mxu0 0.0
    %6139 = vmatprep.subr.mxu0 0.0
    %6140 = vmatpush2.xpose.msra.mxu0 0.0
    %6141 = vmatprep.subr.mxu0 0.0
    %6142 = vmatpush2.xpose.msra.mxu0 0.0
    %6143 = vmatprep.subr.mxu0 0.0
    %6144 = vmatpush2.xpose.msra.mxu0 0.0
    %6145 = vmatprep.subr.mxu0 0.0
    %6146 = vmatpush2.xpose.msra.mxu0 0.0
    %6147 = vmatprep.subr.mxu0 0.0
    %6148 = vmatpush2.xpose.msra.mxu0 0.0
    %6149 = vmatprep.subr.mxu0 0.0
    %6150 = vmatpush2.xpose.msra.mxu0 0.0
    %6151 = vmatprep.subr.mxu0 0.0
    %6152 = vmatpush2.xpose.msra.mxu0 0.0
    %6153 = vmatprep.subr.mxu0 0.0
    %6154 = vmatpush2.xpose.msra.mxu0 0.0
    %6155 = vmatprep.subr.mxu0 0.0
    %6156 = vmatpush2.xpose.msra.mxu0 0.0
    %6157 = vmatprep.mubr.f32.mxu0 0.0
    %6158 = vmatmul.mubr.f32.gmra.mxu0 %v6089
    %v6159 = vpop.f32.mrf.mxu0
    %v6160 = vadd.f32 %v209, %v6159
    %v6161 = vpop.f32.mrf.mxu0
    %6162 = vdwg.mxu0
    %v6163 = vsel %vm381, %v5642, -inf
    %6164 = vmax.xlane.f32.xlu0 %v6163
    %v6165 = vpop.xlane.xlu0 %6164
    %v6166 = vsel %vm381, %v5716, -inf
    %6167 = vmax.xlane.f32.xlu0 %v6166
    %v6168 = vpop.xlane.xlu0 %6167
    %v6169 = vsel %vm381, %v5790, -inf
    %6170 = vmax.xlane.f32.xlu0 %v6169
    %v6171 = vpop.xlane.xlu0 %6170
    %v6172 = vsel %vm381, %v5864, -inf
    %6173 = vmax.xlane.f32.xlu0 %v6172
    %v6174 = vpop.xlane.xlu0 %6173
    %v6175 = vsel %vm381, %v5938, -inf
    %6176 = vmax.xlane.f32.xlu0 %v6175
    %v6177 = vpop.xlane.xlu0 %6176
    %v6178 = vsel %vm381, %v6012, -inf
    %6179 = vmax.xlane.f32.xlu0 %v6178
    %v6180 = vpop.xlane.xlu0 %6179
    %v6181 = vsel %vm381, %v6086, -inf
    %6182 = vmax.xlane.f32.xlu0 %v6181
    %v6183 = vpop.xlane.xlu0 %6182
    %v6184 = vsel %vm381, %v6160, -inf
    %6185 = vmax.xlane.f32.xlu0 %v6184
    %v6186 = vpop.xlane.xlu0 %6185
    %v6187 = vsub.f32 %v5642, %v6165
    %v6188 = vsub.f32 %v5716, %v6168
    %v6189 = vsub.f32 %v5790, %v6171
    %v6190 = vsub.f32 %v5864, %v6174
    %v6191 = vsub.f32 %v5938, %v6177
    %v6192 = vsub.f32 %v6012, %v6180
    %v6193 = vsub.f32 %v6086, %v6183
    %v6194 = vsub.f32 %v6160, %v6186
    %v6195 = vmul.f32 %v6187, 1.442695
    %v6196 = vpow.pop %v6195
    %v6197 = vmul.f32 %v6188, 1.442695
    %v6198 = vpow.pop %v6197
    %v6199 = vmul.f32 %v6189, 1.442695
    %v6200 = vpow.pop %v6199
    %v6201 = vmul.f32 %v6190, 1.442695
    %v6202 = vpow.pop %v6201
    %v6203 = vmul.f32 %v6191, 1.442695
    %v6204 = vpow.pop %v6203
    %v6205 = vmul.f32 %v6192, 1.442695
    %v6206 = vpow.pop %v6205
    %v6207 = vmul.f32 %v6193, 1.442695
    %v6208 = vpow.pop %v6207
    %v6209 = vmul.f32 %v6194, 1.442695
    %v6210 = vpow.pop %v6209
    %v6211 = vsel %vm381, %v6196, 0.0
    %6212 = vadd.xlane.f32.xlu0 %v6211
    %v6213 = vpop.xlane.xlu0 %6212
    %v6214 = vsel %vm381, %v6198, 0.0
    %6215 = vadd.xlane.f32.xlu0 %v6214
    %v6216 = vpop.xlane.xlu0 %6215
    %v6217 = vsel %vm381, %v6200, 0.0
    %6218 = vadd.xlane.f32.xlu0 %v6217
    %v6219 = vpop.xlane.xlu0 %6218
    %v6220 = vsel %vm381, %v6202, 0.0
    %6221 = vadd.xlane.f32.xlu0 %v6220
    %v6222 = vpop.xlane.xlu0 %6221
    %v6223 = vsel %vm381, %v6204, 0.0
    %6224 = vadd.xlane.f32.xlu0 %v6223
    %v6225 = vpop.xlane.xlu0 %6224
    %v6226 = vsel %vm381, %v6206, 0.0
    %6227 = vadd.xlane.f32.xlu0 %v6226
    %v6228 = vpop.xlane.xlu0 %6227
    %v6229 = vsel %vm381, %v6208, 0.0
    %6230 = vadd.xlane.f32.xlu0 %v6229
    %v6231 = vpop.xlane.xlu0 %6230
    %v6232 = vsel %vm381, %v6210, 0.0
    %6233 = vadd.xlane.f32.xlu0 %v6232
    %v6234 = vpop.xlane.xlu0 %6233
    %v6235 = vrcp.pop %v6213
    %v6236 = vrcp.pop %v6216
    %v6237 = vrcp.pop %v6219
    %v6238 = vrcp.pop %v6222
    %v6239 = vrcp.pop %v6225
    %v6240 = vrcp.pop %v6228
    %v6241 = vrcp.pop %v6231
    %v6242 = vrcp.pop %v6234
    %v6243 = vmul.f32 %v6196, %v6235
    %v6244 = vmul.f32 %v6198, %v6236
    %v6245 = vmul.f32 %v6200, %v6237
    %v6246 = vmul.f32 %v6202, %v6238
    %v6247 = vmul.f32 %v6204, %v6239
    %v6248 = vmul.f32 %v6206, %v6240
    %v6249 = vmul.f32 %v6208, %v6241
    %v6250 = vmul.f32 %v6210, %v6242
    %6251 = vrot.lane.b32.xlu0 %v5528, 96
    %v6252 = vpop.permute.xlu0 %6251
    %v6255 = vsel %vm381, %v6243, 0
    %6257 = vmatprep.subr.mxu0 0.0
    %6258 = vmatpush1.msra.mxu0 0.0
    %6259 = vmatprep.subr.mxu0 0.0
    %6260 = vmatpush1.msra.mxu0 0.0
    %6261 = vmatprep.subr.mxu0 0.0
    %6262 = vmatpush1.msra.mxu0 0.0
    %6263 = vmatprep.subr.mxu0 0.0
    %6264 = vmatpush1.msra.mxu0 0.0
    %6265 = vmatprep.subr.mxu0 0.0
    %6266 = vmatpush1.msra.mxu0 0.0
    %6267 = vmatprep.subr.mxu0 0.0
    %6268 = vmatpush1.msra.mxu0 0.0
    %6269 = vmatprep.subr.mxu0 0.0
    %6270 = vmatpush1.msra.mxu0 0.0
    %6271 = vmatprep.subr.mxu0 0.0
    %6272 = vmatpush1.msra.mxu0 0.0
    %6273 = vmatprep.subr.mxu0 0.0
    %6274 = vmatpush1.msra.mxu0 0.0
    %6275 = vmatprep.subr.mxu0 0.0
    %6276 = vmatpush1.msra.mxu0 0.0
    %6277 = vmatprep.subr.mxu0 0.0
    %6278 = vmatpush1.msra.mxu0 0.0
    %6279 = vmatprep.subr.mxu0 0.0
    %6280 = vmatpush1.msra.mxu0 0.0
    %6281 = vmatprep.subr.mxu0 0.0
    %6282 = vmatpush1.msra.mxu0 0.0
    %6283 = vmatprep.subr.mxu0 0.0
    %6284 = vmatpush1.msra.mxu0 0.0
    %6285 = vmatprep.subr.mxu0 0.0
    %6286 = vmatpush1.msra.mxu0 0.0
    %6287 = vmatprep.subr.mxu0 0.0
    %6288 = vmatpush1.msra.mxu0 %v6252
    %6289 = vmatprep.subr.mxu0 0.0
    %6290 = vmatpush2.msra.mxu0 0.0
    %6291 = vmatprep.subr.mxu0 0.0
    %6292 = vmatpush2.msra.mxu0 0.0
    %6293 = vmatprep.subr.mxu0 0.0
    %6294 = vmatpush2.msra.mxu0 0.0
    %6295 = vmatprep.subr.mxu0 0.0
    %6296 = vmatpush2.msra.mxu0 0.0
    %6297 = vmatprep.subr.mxu0 0.0
    %6298 = vmatpush2.msra.mxu0 0.0
    %6299 = vmatprep.subr.mxu0 0.0
    %6300 = vmatpush2.msra.mxu0 0.0
    %6301 = vmatprep.subr.mxu0 0.0
    %6302 = vmatpush2.msra.mxu0 0.0
    %6303 = vmatprep.subr.mxu0 0.0
    %6304 = vmatpush2.msra.mxu0 0.0
    %6305 = vmatprep.subr.mxu0 0.0
    %6306 = vmatpush2.msra.mxu0 0.0
    %6307 = vmatprep.subr.mxu0 0.0
    %6308 = vmatpush2.msra.mxu0 0.0
    %6309 = vmatprep.subr.mxu0 0.0
    %6310 = vmatpush2.msra.mxu0 0.0
    %6311 = vmatprep.subr.mxu0 0.0
    %6312 = vmatpush2.msra.mxu0 0.0
    %6313 = vmatprep.subr.mxu0 0.0
    %6314 = vmatpush2.msra.mxu0 0.0
    %6315 = vmatprep.subr.mxu0 0.0
    %6316 = vmatpush2.msra.mxu0 0.0
    %6317 = vmatprep.subr.mxu0 0.0
    %6318 = vmatpush2.msra.mxu0 0.0
    %6319 = vmatprep.subr.mxu0 0.0
    %6320 = vmatpush2.msra.mxu0 0.0
    %6321 = vmatprep.mubr.f32.mxu0 0.0
    %6322 = vmatmul.mubr.f32.gmra.mxu0 %v6255
    %v6323 = vpop.f32.mrf.mxu0
    %v6324 = vadd.f32 0.0, %v6323
    %v6325 = vpop.f32.mrf.mxu0
    %6326 = vdwg.mxu0
    %6327 = vrot.lane.b32.xlu0 %v5533, 96
    %v6328 = vpop.permute.xlu0 %6327
    %v6331 = vsel %vm381, %v6244, 0
    %6333 = vmatprep.subr.mxu0 0.0
    %6334 = vmatpush1.msra.mxu0 0.0
    %6335 = vmatprep.subr.mxu0 0.0
    %6336 = vmatpush1.msra.mxu0 0.0
    %6337 = vmatprep.subr.mxu0 0.0
    %6338 = vmatpush1.msra.mxu0 0.0
    %6339 = vmatprep.subr.mxu0 0.0
    %6340 = vmatpush1.msra.mxu0 0.0
    %6341 = vmatprep.subr.mxu0 0.0
    %6342 = vmatpush1.msra.mxu0 0.0
    %6343 = vmatprep.subr.mxu0 0.0
    %6344 = vmatpush1.msra.mxu0 0.0
    %6345 = vmatprep.subr.mxu0 0.0
    %6346 = vmatpush1.msra.mxu0 0.0
    %6347 = vmatprep.subr.mxu0 0.0
    %6348 = vmatpush1.msra.mxu0 0.0
    %6349 = vmatprep.subr.mxu0 0.0
    %6350 = vmatpush1.msra.mxu0 0.0
    %6351 = vmatprep.subr.mxu0 0.0
    %6352 = vmatpush1.msra.mxu0 0.0
    %6353 = vmatprep.subr.mxu0 0.0
    %6354 = vmatpush1.msra.mxu0 0.0
    %6355 = vmatprep.subr.mxu0 0.0
    %6356 = vmatpush1.msra.mxu0 0.0
    %6357 = vmatprep.subr.mxu0 0.0
    %6358 = vmatpush1.msra.mxu0 0.0
    %6359 = vmatprep.subr.mxu0 0.0
    %6360 = vmatpush1.msra.mxu0 0.0
    %6361 = vmatprep.subr.mxu0 0.0
    %6362 = vmatpush1.msra.mxu0 0.0
    %6363 = vmatprep.subr.mxu0 0.0
    %6364 = vmatpush1.msra.mxu0 %v6328
    %6365 = vmatprep.subr.mxu0 0.0
    %6366 = vmatpush2.msra.mxu0 0.0
    %6367 = vmatprep.subr.mxu0 0.0
    %6368 = vmatpush2.msra.mxu0 0.0
    %6369 = vmatprep.subr.mxu0 0.0
    %6370 = vmatpush2.msra.mxu0 0.0
    %6371 = vmatprep.subr.mxu0 0.0
    %6372 = vmatpush2.msra.mxu0 0.0
    %6373 = vmatprep.subr.mxu0 0.0
    %6374 = vmatpush2.msra.mxu0 0.0
    %6375 = vmatprep.subr.mxu0 0.0
    %6376 = vmatpush2.msra.mxu0 0.0
    %6377 = vmatprep.subr.mxu0 0.0
    %6378 = vmatpush2.msra.mxu0 0.0
    %6379 = vmatprep.subr.mxu0 0.0
    %6380 = vmatpush2.msra.mxu0 0.0
    %6381 = vmatprep.subr.mxu0 0.0
    %6382 = vmatpush2.msra.mxu0 0.0
    %6383 = vmatprep.subr.mxu0 0.0
    %6384 = vmatpush2.msra.mxu0 0.0
    %6385 = vmatprep.subr.mxu0 0.0
    %6386 = vmatpush2.msra.mxu0 0.0
    %6387 = vmatprep.subr.mxu0 0.0
    %6388 = vmatpush2.msra.mxu0 0.0
    %6389 = vmatprep.subr.mxu0 0.0
    %6390 = vmatpush2.msra.mxu0 0.0
    %6391 = vmatprep.subr.mxu0 0.0
    %6392 = vmatpush2.msra.mxu0 0.0
    %6393 = vmatprep.subr.mxu0 0.0
    %6394 = vmatpush2.msra.mxu0 0.0
    %6395 = vmatprep.subr.mxu0 0.0
    %6396 = vmatpush2.msra.mxu0 0.0
    %6397 = vmatprep.mubr.f32.mxu0 0.0
    %6398 = vmatmul.mubr.f32.gmra.mxu0 %v6331
    %v6399 = vpop.f32.mrf.mxu0
    %v6400 = vadd.f32 0.0, %v6399
    %v6401 = vpop.f32.mrf.mxu0
    %6402 = vdwg.mxu0
    %6403 = vrot.lane.b32.xlu0 %v5560, 96
    %v6404 = vpop.permute.xlu0 %6403
    %v6407 = vsel %vm381, %v6245, 0
    %6409 = vmatprep.subr.mxu0 0.0
    %6410 = vmatpush1.msra.mxu0 0.0
    %6411 = vmatprep.subr.mxu0 0.0
    %6412 = vmatpush1.msra.mxu0 0.0
    %6413 = vmatprep.subr.mxu0 0.0
    %6414 = vmatpush1.msra.mxu0 0.0
    %6415 = vmatprep.subr.mxu0 0.0
    %6416 = vmatpush1.msra.mxu0 0.0
    %6417 = vmatprep.subr.mxu0 0.0
    %6418 = vmatpush1.msra.mxu0 0.0
    %6419 = vmatprep.subr.mxu0 0.0
    %6420 = vmatpush1.msra.mxu0 0.0
    %6421 = vmatprep.subr.mxu0 0.0
    %6422 = vmatpush1.msra.mxu0 0.0
    %6423 = vmatprep.subr.mxu0 0.0
    %6424 = vmatpush1.msra.mxu0 0.0
    %6425 = vmatprep.subr.mxu0 0.0
    %6426 = vmatpush1.msra.mxu0 0.0
    %6427 = vmatprep.subr.mxu0 0.0
    %6428 = vmatpush1.msra.mxu0 0.0
    %6429 = vmatprep.subr.mxu0 0.0
    %6430 = vmatpush1.msra.mxu0 0.0
    %6431 = vmatprep.subr.mxu0 0.0
    %6432 = vmatpush1.msra.mxu0 0.0
    %6433 = vmatprep.subr.mxu0 0.0
    %6434 = vmatpush1.msra.mxu0 0.0
    %6435 = vmatprep.subr.mxu0 0.0
    %6436 = vmatpush1.msra.mxu0 0.0
    %6437 = vmatprep.subr.mxu0 0.0
    %6438 = vmatpush1.msra.mxu0 0.0
    %6439 = vmatprep.subr.mxu0 0.0
    %6440 = vmatpush1.msra.mxu0 %v6404
    %6441 = vmatprep.subr.mxu0 0.0
    %6442 = vmatpush2.msra.mxu0 0.0
    %6443 = vmatprep.subr.mxu0 0.0
    %6444 = vmatpush2.msra.mxu0 0.0
    %6445 = vmatprep.subr.mxu0 0.0
    %6446 = vmatpush2.msra.mxu0 0.0
    %6447 = vmatprep.subr.mxu0 0.0
    %6448 = vmatpush2.msra.mxu0 0.0
    %6449 = vmatprep.subr.mxu0 0.0
    %6450 = vmatpush2.msra.mxu0 0.0
    %6451 = vmatprep.subr.mxu0 0.0
    %6452 = vmatpush2.msra.mxu0 0.0
    %6453 = vmatprep.subr.mxu0 0.0
    %6454 = vmatpush2.msra.mxu0 0.0
    %6455 = vmatprep.subr.mxu0 0.0
    %6456 = vmatpush2.msra.mxu0 0.0
    %6457 = vmatprep.subr.mxu0 0.0
    %6458 = vmatpush2.msra.mxu0 0.0
    %6459 = vmatprep.subr.mxu0 0.0
    %6460 = vmatpush2.msra.mxu0 0.0
    %6461 = vmatprep.subr.mxu0 0.0
    %6462 = vmatpush2.msra.mxu0 0.0
    %6463 = vmatprep.subr.mxu0 0.0
    %6464 = vmatpush2.msra.mxu0 0.0
    %6465 = vmatprep.subr.mxu0 0.0
    %6466 = vmatpush2.msra.mxu0 0.0
    %6467 = vmatprep.subr.mxu0 0.0
    %6468 = vmatpush2.msra.mxu0 0.0
    %6469 = vmatprep.subr.mxu0 0.0
    %6470 = vmatpush2.msra.mxu0 0.0
    %6471 = vmatprep.subr.mxu0 0.0
    %6472 = vmatpush2.msra.mxu0 0.0
    %6473 = vmatprep.mubr.f32.mxu0 0.0
    %6474 = vmatmul.mubr.f32.gmra.mxu0 %v6407
    %v6475 = vpop.f32.mrf.mxu0
    %v6476 = vadd.f32 0.0, %v6475
    %v6477 = vpop.f32.mrf.mxu0
    %6478 = vdwg.mxu0
    %6479 = vrot.lane.b32.xlu0 %v5562, 96
    %v6480 = vpop.permute.xlu0 %6479
    %v6483 = vsel %vm381, %v6246, 0
    %6485 = vmatprep.subr.mxu0 0.0
    %6486 = vmatpush1.msra.mxu0 0.0
    %6487 = vmatprep.subr.mxu0 0.0
    %6488 = vmatpush1.msra.mxu0 0.0
    %6489 = vmatprep.subr.mxu0 0.0
    %6490 = vmatpush1.msra.mxu0 0.0
    %6491 = vmatprep.subr.mxu0 0.0
    %6492 = vmatpush1.msra.mxu0 0.0
    %6493 = vmatprep.subr.mxu0 0.0
    %6494 = vmatpush1.msra.mxu0 0.0
    %6495 = vmatprep.subr.mxu0 0.0
    %6496 = vmatpush1.msra.mxu0 0.0
    %6497 = vmatprep.subr.mxu0 0.0
    %6498 = vmatpush1.msra.mxu0 0.0
    %6499 = vmatprep.subr.mxu0 0.0
    %6500 = vmatpush1.msra.mxu0 0.0
    %6501 = vmatprep.subr.mxu0 0.0
    %6502 = vmatpush1.msra.mxu0 0.0
    %6503 = vmatprep.subr.mxu0 0.0
    %6504 = vmatpush1.msra.mxu0 0.0
    %6505 = vmatprep.subr.mxu0 0.0
    %6506 = vmatpush1.msra.mxu0 0.0
    %6507 = vmatprep.subr.mxu0 0.0
    %6508 = vmatpush1.msra.mxu0 0.0
    %6509 = vmatprep.subr.mxu0 0.0
    %6510 = vmatpush1.msra.mxu0 0.0
    %6511 = vmatprep.subr.mxu0 0.0
    %6512 = vmatpush1.msra.mxu0 0.0
    %6513 = vmatprep.subr.mxu0 0.0
    %6514 = vmatpush1.msra.mxu0 0.0
    %6515 = vmatprep.subr.mxu0 0.0
    %6516 = vmatpush1.msra.mxu0 %v6480
    %6517 = vmatprep.subr.mxu0 0.0
    %6518 = vmatpush2.msra.mxu0 0.0
    %6519 = vmatprep.subr.mxu0 0.0
    %6520 = vmatpush2.msra.mxu0 0.0
    %6521 = vmatprep.subr.mxu0 0.0
    %6522 = vmatpush2.msra.mxu0 0.0
    %6523 = vmatprep.subr.mxu0 0.0
    %6524 = vmatpush2.msra.mxu0 0.0
    %6525 = vmatprep.subr.mxu0 0.0
    %6526 = vmatpush2.msra.mxu0 0.0
    %6527 = vmatprep.subr.mxu0 0.0
    %6528 = vmatpush2.msra.mxu0 0.0
    %6529 = vmatprep.subr.mxu0 0.0
    %6530 = vmatpush2.msra.mxu0 0.0
    %6531 = vmatprep.subr.mxu0 0.0
    %6532 = vmatpush2.msra.mxu0 0.0
    %6533 = vmatprep.subr.mxu0 0.0
    %6534 = vmatpush2.msra.mxu0 0.0
    %6535 = vmatprep.subr.mxu0 0.0
    %6536 = vmatpush2.msra.mxu0 0.0
    %6537 = vmatprep.subr.mxu0 0.0
    %6538 = vmatpush2.msra.mxu0 0.0
    %6539 = vmatprep.subr.mxu0 0.0
    %6540 = vmatpush2.msra.mxu0 0.0
    %6541 = vmatprep.subr.mxu0 0.0
    %6542 = vmatpush2.msra.mxu0 0.0
    %6543 = vmatprep.subr.mxu0 0.0
    %6544 = vmatpush2.msra.mxu0 0.0
    %6545 = vmatprep.subr.mxu0 0.0
    %6546 = vmatpush2.msra.mxu0 0.0
    %6547 = vmatprep.subr.mxu0 0.0
    %6548 = vmatpush2.msra.mxu0 0.0
    %6549 = vmatprep.mubr.f32.mxu0 0.0
    %6550 = vmatmul.mubr.f32.gmra.mxu0 %v6483
    %v6551 = vpop.f32.mrf.mxu0
    %v6552 = vadd.f32 0.0, %v6551
    %v6553 = vpop.f32.mrf.mxu0
    %6554 = vdwg.mxu0
    %6555 = vrot.lane.b32.xlu0 %v5564, 96
    %v6556 = vpop.permute.xlu0 %6555
    %v6559 = vsel %vm381, %v6247, 0
    %6561 = vmatprep.subr.mxu0 0.0
    %6562 = vmatpush1.msra.mxu0 0.0
    %6563 = vmatprep.subr.mxu0 0.0
    %6564 = vmatpush1.msra.mxu0 0.0
    %6565 = vmatprep.subr.mxu0 0.0
    %6566 = vmatpush1.msra.mxu0 0.0
    %6567 = vmatprep.subr.mxu0 0.0
    %6568 = vmatpush1.msra.mxu0 0.0
    %6569 = vmatprep.subr.mxu0 0.0
    %6570 = vmatpush1.msra.mxu0 0.0
    %6571 = vmatprep.subr.mxu0 0.0
    %6572 = vmatpush1.msra.mxu0 0.0
    %6573 = vmatprep.subr.mxu0 0.0
    %6574 = vmatpush1.msra.mxu0 0.0
    %6575 = vmatprep.subr.mxu0 0.0
    %6576 = vmatpush1.msra.mxu0 0.0
    %6577 = vmatprep.subr.mxu0 0.0
    %6578 = vmatpush1.msra.mxu0 0.0
    %6579 = vmatprep.subr.mxu0 0.0
    %6580 = vmatpush1.msra.mxu0 0.0
    %6581 = vmatprep.subr.mxu0 0.0
    %6582 = vmatpush1.msra.mxu0 0.0
    %6583 = vmatprep.subr.mxu0 0.0
    %6584 = vmatpush1.msra.mxu0 0.0
    %6585 = vmatprep.subr.mxu0 0.0
    %6586 = vmatpush1.msra.mxu0 0.0
    %6587 = vmatprep.subr.mxu0 0.0
    %6588 = vmatpush1.msra.mxu0 0.0
    %6589 = vmatprep.subr.mxu0 0.0
    %6590 = vmatpush1.msra.mxu0 0.0
    %6591 = vmatprep.subr.mxu0 0.0
    %6592 = vmatpush1.msra.mxu0 %v6556
    %6593 = vmatprep.subr.mxu0 0.0
    %6594 = vmatpush2.msra.mxu0 0.0
    %6595 = vmatprep.subr.mxu0 0.0
    %6596 = vmatpush2.msra.mxu0 0.0
    %6597 = vmatprep.subr.mxu0 0.0
    %6598 = vmatpush2.msra.mxu0 0.0
    %6599 = vmatprep.subr.mxu0 0.0
    %6600 = vmatpush2.msra.mxu0 0.0
    %6601 = vmatprep.subr.mxu0 0.0
    %6602 = vmatpush2.msra.mxu0 0.0
    %6603 = vmatprep.subr.mxu0 0.0
    %6604 = vmatpush2.msra.mxu0 0.0
    %6605 = vmatprep.subr.mxu0 0.0
    %6606 = vmatpush2.msra.mxu0 0.0
    %6607 = vmatprep.subr.mxu0 0.0
    %6608 = vmatpush2.msra.mxu0 0.0
    %6609 = vmatprep.subr.mxu0 0.0
    %6610 = vmatpush2.msra.mxu0 0.0
    %6611 = vmatprep.subr.mxu0 0.0
    %6612 = vmatpush2.msra.mxu0 0.0
    %6613 = vmatprep.subr.mxu0 0.0
    %6614 = vmatpush2.msra.mxu0 0.0
    %6615 = vmatprep.subr.mxu0 0.0
    %6616 = vmatpush2.msra.mxu0 0.0
    %6617 = vmatprep.subr.mxu0 0.0
    %6618 = vmatpush2.msra.mxu0 0.0
    %6619 = vmatprep.subr.mxu0 0.0
    %6620 = vmatpush2.msra.mxu0 0.0
    %6621 = vmatprep.subr.mxu0 0.0
    %6622 = vmatpush2.msra.mxu0 0.0
    %6623 = vmatprep.subr.mxu0 0.0
    %6624 = vmatpush2.msra.mxu0 0.0
    %6625 = vmatprep.mubr.f32.mxu0 0.0
    %6626 = vmatmul.mubr.f32.gmra.mxu0 %v6559
    %v6627 = vpop.f32.mrf.mxu0
    %v6628 = vadd.f32 0.0, %v6627
    %v6629 = vpop.f32.mrf.mxu0
    %6630 = vdwg.mxu0
    %6631 = vrot.lane.b32.xlu0 %v5566, 96
    %v6632 = vpop.permute.xlu0 %6631
    %v6635 = vsel %vm381, %v6248, 0
    %6637 = vmatprep.subr.mxu0 0.0
    %6638 = vmatpush1.msra.mxu0 0.0
    %6639 = vmatprep.subr.mxu0 0.0
    %6640 = vmatpush1.msra.mxu0 0.0
    %6641 = vmatprep.subr.mxu0 0.0
    %6642 = vmatpush1.msra.mxu0 0.0
    %6643 = vmatprep.subr.mxu0 0.0
    %6644 = vmatpush1.msra.mxu0 0.0
    %6645 = vmatprep.subr.mxu0 0.0
    %6646 = vmatpush1.msra.mxu0 0.0
    %6647 = vmatprep.subr.mxu0 0.0
    %6648 = vmatpush1.msra.mxu0 0.0
    %6649 = vmatprep.subr.mxu0 0.0
    %6650 = vmatpush1.msra.mxu0 0.0
    %6651 = vmatprep.subr.mxu0 0.0
    %6652 = vmatpush1.msra.mxu0 0.0
    %6653 = vmatprep.subr.mxu0 0.0
    %6654 = vmatpush1.msra.mxu0 0.0
    %6655 = vmatprep.subr.mxu0 0.0
    %6656 = vmatpush1.msra.mxu0 0.0
    %6657 = vmatprep.subr.mxu0 0.0
    %6658 = vmatpush1.msra.mxu0 0.0
    %6659 = vmatprep.subr.mxu0 0.0
    %6660 = vmatpush1.msra.mxu0 0.0
    %6661 = vmatprep.subr.mxu0 0.0
    %6662 = vmatpush1.msra.mxu0 0.0
    %6663 = vmatprep.subr.mxu0 0.0
    %6664 = vmatpush1.msra.mxu0 0.0
    %6665 = vmatprep.subr.mxu0 0.0
    %6666 = vmatpush1.msra.mxu0 0.0
    %6667 = vmatprep.subr.mxu0 0.0
    %6668 = vmatpush1.msra.mxu0 %v6632
    %6669 = vmatprep.subr.mxu0 0.0
    %6670 = vmatpush2.msra.mxu0 0.0
    %6671 = vmatprep.subr.mxu0 0.0
    %6672 = vmatpush2.msra.mxu0 0.0
    %6673 = vmatprep.subr.mxu0 0.0
    %6674 = vmatpush2.msra.mxu0 0.0
    %6675 = vmatprep.subr.mxu0 0.0
    %6676 = vmatpush2.msra.mxu0 0.0
    %6677 = vmatprep.subr.mxu0 0.0
    %6678 = vmatpush2.msra.mxu0 0.0
    %6679 = vmatprep.subr.mxu0 0.0
    %6680 = vmatpush2.msra.mxu0 0.0
    %6681 = vmatprep.subr.mxu0 0.0
    %6682 = vmatpush2.msra.mxu0 0.0
    %6683 = vmatprep.subr.mxu0 0.0
    %6684 = vmatpush2.msra.mxu0 0.0
    %6685 = vmatprep.subr.mxu0 0.0
    %6686 = vmatpush2.msra.mxu0 0.0
    %6687 = vmatprep.subr.mxu0 0.0
    %6688 = vmatpush2.msra.mxu0 0.0
    %6689 = vmatprep.subr.mxu0 0.0
    %6690 = vmatpush2.msra.mxu0 0.0
    %6691 = vmatprep.subr.mxu0 0.0
    %6692 = vmatpush2.msra.mxu0 0.0
    %6693 = vmatprep.subr.mxu0 0.0
    %6694 = vmatpush2.msra.mxu0 0.0
    %6695 = vmatprep.subr.mxu0 0.0
    %6696 = vmatpush2.msra.mxu0 0.0
    %6697 = vmatprep.subr.mxu0 0.0
    %6698 = vmatpush2.msra.mxu0 0.0
    %6699 = vmatprep.subr.mxu0 0.0
    %6700 = vmatpush2.msra.mxu0 0.0
    %6701 = vmatprep.mubr.f32.mxu0 0.0
    %6702 = vmatmul.mubr.f32.gmra.mxu0 %v6635
    %v6703 = vpop.f32.mrf.mxu0
    %v6704 = vadd.f32 0.0, %v6703
    %v6705 = vpop.f32.mrf.mxu0
    %6706 = vdwg.mxu0
    %6707 = vrot.lane.b32.xlu0 %v5568, 96
    %v6708 = vpop.permute.xlu0 %6707
    %v6711 = vsel %vm381, %v6249, 0
    %6713 = vmatprep.subr.mxu0 0.0
    %6714 = vmatpush1.msra.mxu0 0.0
    %6715 = vmatprep.subr.mxu0 0.0
    %6716 = vmatpush1.msra.mxu0 0.0
    %6717 = vmatprep.subr.mxu0 0.0
    %6718 = vmatpush1.msra.mxu0 0.0
    %6719 = vmatprep.subr.mxu0 0.0
    %6720 = vmatpush1.msra.mxu0 0.0
    %6721 = vmatprep.subr.mxu0 0.0
    %6722 = vmatpush1.msra.mxu0 0.0
    %6723 = vmatprep.subr.mxu0 0.0
    %6724 = vmatpush1.msra.mxu0 0.0
    %6725 = vmatprep.subr.mxu0 0.0
    %6726 = vmatpush1.msra.mxu0 0.0
    %6727 = vmatprep.subr.mxu0 0.0
    %6728 = vmatpush1.msra.mxu0 0.0
    %6729 = vmatprep.subr.mxu0 0.0
    %6730 = vmatpush1.msra.mxu0 0.0
    %6731 = vmatprep.subr.mxu0 0.0
    %6732 = vmatpush1.msra.mxu0 0.0
    %6733 = vmatprep.subr.mxu0 0.0
    %6734 = vmatpush1.msra.mxu0 0.0
    %6735 = vmatprep.subr.mxu0 0.0
    %6736 = vmatpush1.msra.mxu0 0.0
    %6737 = vmatprep.subr.mxu0 0.0
    %6738 = vmatpush1.msra.mxu0 0.0
    %6739 = vmatprep.subr.mxu0 0.0
    %6740 = vmatpush1.msra.mxu0 0.0
    %6741 = vmatprep.subr.mxu0 0.0
    %6742 = vmatpush1.msra.mxu0 0.0
    %6743 = vmatprep.subr.mxu0 0.0
    %6744 = vmatpush1.msra.mxu0 %v6708
    %6745 = vmatprep.subr.mxu0 0.0
    %6746 = vmatpush2.msra.mxu0 0.0
    %6747 = vmatprep.subr.mxu0 0.0
    %6748 = vmatpush2.msra.mxu0 0.0
    %6749 = vmatprep.subr.mxu0 0.0
    %6750 = vmatpush2.msra.mxu0 0.0
    %6751 = vmatprep.subr.mxu0 0.0
    %6752 = vmatpush2.msra.mxu0 0.0
    %6753 = vmatprep.subr.mxu0 0.0
    %6754 = vmatpush2.msra.mxu0 0.0
    %6755 = vmatprep.subr.mxu0 0.0
    %6756 = vmatpush2.msra.mxu0 0.0
    %6757 = vmatprep.subr.mxu0 0.0
    %6758 = vmatpush2.msra.mxu0 0.0
    %6759 = vmatprep.subr.mxu0 0.0
    %6760 = vmatpush2.msra.mxu0 0.0
    %6761 = vmatprep.subr.mxu0 0.0
    %6762 = vmatpush2.msra.mxu0 0.0
    %6763 = vmatprep.subr.mxu0 0.0
    %6764 = vmatpush2.msra.mxu0 0.0
    %6765 = vmatprep.subr.mxu0 0.0
    %6766 = vmatpush2.msra.mxu0 0.0
    %6767 = vmatprep.subr.mxu0 0.0
    %6768 = vmatpush2.msra.mxu0 0.0
    %6769 = vmatprep.subr.mxu0 0.0
    %6770 = vmatpush2.msra.mxu0 0.0
    %6771 = vmatprep.subr.mxu0 0.0
    %6772 = vmatpush2.msra.mxu0 0.0
    %6773 = vmatprep.subr.mxu0 0.0
    %6774 = vmatpush2.msra.mxu0 0.0
    %6775 = vmatprep.subr.mxu0 0.0
    %6776 = vmatpush2.msra.mxu0 0.0
    %6777 = vmatprep.mubr.f32.mxu0 0.0
    %6778 = vmatmul.mubr.f32.gmra.mxu0 %v6711
    %v6779 = vpop.f32.mrf.mxu0
    %v6780 = vadd.f32 0.0, %v6779
    %v6781 = vpop.f32.mrf.mxu0
    %6782 = vdwg.mxu0
    %6783 = vrot.lane.b32.xlu0 %v5570, 96
    %v6784 = vpop.permute.xlu0 %6783
    %v6787 = vsel %vm381, %v6250, 0
    %6789 = vmatprep.subr.mxu0 0.0
    %6790 = vmatpush1.msra.mxu0 0.0
    %6791 = vmatprep.subr.mxu0 0.0
    %6792 = vmatpush1.msra.mxu0 0.0
    %6793 = vmatprep.subr.mxu0 0.0
    %6794 = vmatpush1.msra.mxu0 0.0
    %6795 = vmatprep.subr.mxu0 0.0
    %6796 = vmatpush1.msra.mxu0 0.0
    %6797 = vmatprep.subr.mxu0 0.0
    %6798 = vmatpush1.msra.mxu0 0.0
    %6799 = vmatprep.subr.mxu0 0.0
    %6800 = vmatpush1.msra.mxu0 0.0
    %6801 = vmatprep.subr.mxu0 0.0
    %6802 = vmatpush1.msra.mxu0 0.0
    %6803 = vmatprep.subr.mxu0 0.0
    %6804 = vmatpush1.msra.mxu0 0.0
    %6805 = vmatprep.subr.mxu0 0.0
    %6806 = vmatpush1.msra.mxu0 0.0
    %6807 = vmatprep.subr.mxu0 0.0
    %6808 = vmatpush1.msra.mxu0 0.0
    %6809 = vmatprep.subr.mxu0 0.0
    %6810 = vmatpush1.msra.mxu0 0.0
    %6811 = vmatprep.subr.mxu0 0.0
    %6812 = vmatpush1.msra.mxu0 0.0
    %6813 = vmatprep.subr.mxu0 0.0
    %6814 = vmatpush1.msra.mxu0 0.0
    %6815 = vmatprep.subr.mxu0 0.0
    %6816 = vmatpush1.msra.mxu0 0.0
    %6817 = vmatprep.subr.mxu0 0.0
    %6818 = vmatpush1.msra.mxu0 0.0
    %6819 = vmatprep.subr.mxu0 0.0
    %6820 = vmatpush1.msra.mxu0 %v6784
    %6821 = vmatprep.subr.mxu0 0.0
    %6822 = vmatpush2.msra.mxu0 0.0
    %6823 = vmatprep.subr.mxu0 0.0
    %6824 = vmatpush2.msra.mxu0 0.0
    %6825 = vmatprep.subr.mxu0 0.0
    %6826 = vmatpush2.msra.mxu0 0.0
    %6827 = vmatprep.subr.mxu0 0.0
    %6828 = vmatpush2.msra.mxu0 0.0
    %6829 = vmatprep.subr.mxu0 0.0
    %6830 = vmatpush2.msra.mxu0 0.0
    %6831 = vmatprep.subr.mxu0 0.0
    %6832 = vmatpush2.msra.mxu0 0.0
    %6833 = vmatprep.subr.mxu0 0.0
    %6834 = vmatpush2.msra.mxu0 0.0
    %6835 = vmatprep.subr.mxu0 0.0
    %6836 = vmatpush2.msra.mxu0 0.0
    %6837 = vmatprep.subr.mxu0 0.0
    %6838 = vmatpush2.msra.mxu0 0.0
    %6839 = vmatprep.subr.mxu0 0.0
    %6840 = vmatpush2.msra.mxu0 0.0
    %6841 = vmatprep.subr.mxu0 0.0
    %6842 = vmatpush2.msra.mxu0 0.0
    %6843 = vmatprep.subr.mxu0 0.0
    %6844 = vmatpush2.msra.mxu0 0.0
    %6845 = vmatprep.subr.mxu0 0.0
    %6846 = vmatpush2.msra.mxu0 0.0
    %6847 = vmatprep.subr.mxu0 0.0
    %6848 = vmatpush2.msra.mxu0 0.0
    %6849 = vmatprep.subr.mxu0 0.0
    %6850 = vmatpush2.msra.mxu0 0.0
    %6851 = vmatprep.subr.mxu0 0.0
    %6852 = vmatpush2.msra.mxu0 0.0
    %6853 = vmatprep.mubr.f32.mxu0 0.0
    %6854 = vmatmul.mubr.f32.gmra.mxu0 %v6787
    %v6855 = vpop.f32.mrf.mxu0
    %v6856 = vadd.f32 0.0, %v6855
    %v6857 = vpop.f32.mrf.mxu0
    %6858 = vdwg.mxu0
    %6861 = vrot.lane.b32.xlu0 %v6476, 8
    %v6862 = vpop.permute.xlu0 %6861
    %6863 = vrot.lane.b32.xlu0 %v6552, 8
    %v6864 = vpop.permute.xlu0 %6863
    %6869 = vrot.lane.b32.xlu0 %v6628, 16
    %v6870 = vpop.permute.xlu0 %6869
    %6871 = vrot.lane.b32.xlu0 %v6704, 16
    %v6872 = vpop.permute.xlu0 %6871
    %6877 = vrot.lane.b32.xlu0 %v6780, 24
    %v6878 = vpop.permute.xlu0 %6877
    %6879 = vrot.lane.b32.xlu0 %v6856, 24
    %v6880 = vpop.permute.xlu0 %6879
    %v6883 = vsel %vm381, %v6324, %v6862
    %v6884 = vsel %vm381, %v6400, %v6864
    %v6885 = vsel %vm1710, %v6883, %v6870
    %v6886 = vsel %vm1710, %v6884, %v6872
    %v6887 = vsel %vm1713, %v6885, %v6878
    %v6888 = vsel %vm1713, %v6886, %v6880
    %v6890 = vlaneseq
    %v6891 = vshrl.u32 %v6890, 7
    %v6892 = vsub.s32 0, %v6891
    %v6893 = vrot.slane %v5542, %v6892
    %v6896 = vsel %vm220, %v6887, 0
    %v6899 = vsel %vm220, %v6888, 0
    %6901 = vmatprep.subr.mxu0 0.0
    %6902 = vmatpush1.msra.mxu0 0.0
    %6903 = vmatprep.subr.mxu0 0.0
    %6904 = vmatpush1.msra.mxu0 0.0
    %6905 = vmatprep.subr.mxu0 0.0
    %6906 = vmatpush1.msra.mxu0 0.0
    %6907 = vmatprep.subr.mxu0 0.0
    %6908 = vmatpush1.msra.mxu0 0.0
    %6909 = vmatprep.subr.mxu0 0.0
    %6910 = vmatpush1.msra.mxu0 0.0
    %6911 = vmatprep.subr.mxu0 0.0
    %6912 = vmatpush1.msra.mxu0 0.0
    %6913 = vmatprep.subr.mxu0 0.0
    %6914 = vmatpush1.msra.mxu0 0.0
    %6915 = vmatprep.subr.mxu0 0.0
    %6916 = vmatpush1.msra.mxu0 0.0
    %6917 = vmatprep.subr.mxu0 0.0
    %6918 = vmatpush1.msra.mxu0 0.0
    %6919 = vmatprep.subr.mxu0 0.0
    %6920 = vmatpush1.msra.mxu0 0.0
    %6921 = vmatprep.subr.mxu0 0.0
    %6922 = vmatpush1.msra.mxu0 0.0
    %6923 = vmatprep.subr.mxu0 0.0
    %6924 = vmatpush1.msra.mxu0 0.0
    %6925 = vmatprep.subr.mxu0 0.0
    %6926 = vmatpush1.msra.mxu0 %v5540
    %6927 = vmatprep.subr.mxu0 0.0
    %6928 = vmatpush1.msra.mxu0 %v5539
    %6929 = vmatprep.subr.mxu0 0.0
    %6930 = vmatpush1.msra.mxu0 %v5538
    %6931 = vmatprep.subr.mxu0 0.0
    %6932 = vmatpush1.msra.mxu0 %v5537
    %6933 = vmatprep.subr.mxu0 0.0
    %6934 = vmatpush2.msra.mxu0 0.0
    %6935 = vmatprep.subr.mxu0 0.0
    %6936 = vmatpush2.msra.mxu0 0.0
    %6937 = vmatprep.subr.mxu0 0.0
    %6938 = vmatpush2.msra.mxu0 0.0
    %6939 = vmatprep.subr.mxu0 0.0
    %6940 = vmatpush2.msra.mxu0 0.0
    %6941 = vmatprep.subr.mxu0 0.0
    %6942 = vmatpush2.msra.mxu0 0.0
    %6943 = vmatprep.subr.mxu0 0.0
    %6944 = vmatpush2.msra.mxu0 0.0
    %6945 = vmatprep.subr.mxu0 0.0
    %6946 = vmatpush2.msra.mxu0 0.0
    %6947 = vmatprep.subr.mxu0 0.0
    %6948 = vmatpush2.msra.mxu0 0.0
    %6949 = vmatprep.subr.mxu0 0.0
    %6950 = vmatpush2.msra.mxu0 0.0
    %6951 = vmatprep.subr.mxu0 0.0
    %6952 = vmatpush2.msra.mxu0 0.0
    %6953 = vmatprep.subr.mxu0 0.0
    %6954 = vmatpush2.msra.mxu0 0.0
    %6955 = vmatprep.subr.mxu0 0.0
    %6956 = vmatpush2.msra.mxu0 0.0
    %6957 = vmatprep.subr.mxu0 0.0
    %6958 = vmatpush2.msra.mxu0 0.0
    %6959 = vmatprep.subr.mxu0 0.0
    %6960 = vmatpush2.msra.mxu0 0.0
    %6961 = vmatprep.subr.mxu0 0.0
    %6962 = vmatpush2.msra.mxu0 0.0
    %6963 = vmatprep.subr.mxu0 0.0
    %6964 = vmatpush2.msra.mxu0 0.0
    %6965 = vmatprep.mubr.f32.mxu0 0.0
    %6966 = vmatmul.mubr.f32.gmra.mxu0 %v6896
    %v6967 = vpop.f32.mrf.mxu0
    %v6968 = vadd.f32 %v6893, %v6967
    %v6969 = vpop.f32.mrf.mxu0
    %6970 = vmatprep.mubr.f32.mxu0 0.0
    %6971 = vmatmul.mubr.f32.gmra.mxu0 %v6899
    %v6972 = vpop.f32.mrf.mxu0
    %v6973 = vadd.f32 %v6893, %v6972
    %v6974 = vpop.f32.mrf.mxu0
    %6975 = vdwg.mxu0
    %v6976 = vadd.f32 %v5304, %v6968
    %v6977 = vadd.f32 %v5305, %v6973
    %s6978 = sld [smem:[#allocation18 + $0x84]]
    %s6979 = sld [smem:[#allocation18 + $0x85]]
    %v6980 = vsel %vm220, %v6976, 0.0
    %6981 = vadd.xlane.f32.xlu0 %v6980
    %v6982 = vpop.xlane.xlu0 %6981
    %v6983 = vsel %vm220, %v6977, 0.0
    %6984 = vadd.xlane.f32.xlu0 %v6983
    %v6985 = vpop.xlane.xlu0 %6984
    %v6986 = vmul.f32 %v6982, %v227
    %v6987 = vmul.f32 %v6985, %v227
    %v6988 = vsub.f32 %v6976, %v6986
    %v6989 = vsub.f32 %v6977, %v6987
    %v6990 = vmul.f32 %v6988, %v6988
    %v6991 = vmul.f32 %v6989, %v6989
    %v6992 = vsel %vm220, %v6990, 0.0
    %6993 = vadd.xlane.f32.xlu0 %v6992
    %v6994 = vpop.xlane.xlu0 %6993
    %v6995 = vsel %vm220, %v6991, 0.0
    %6996 = vadd.xlane.f32.xlu0 %v6995
    %v6997 = vpop.xlane.xlu0 %6996
    %v6998 = vmul.f32 %v6994, 0.032258064
    %v6999 = vmul.f32 %v6997, 0.032258064
    %v7000 = vrsqrt.pop %v6998
    %v7001 = vmul.f32 %v6998, %v7000
    %vm7002 = vcmp.eq.f32.partialorder %v6998, inf
    %v7003 = vsel %vm7002, %v6998, %v7001
    %vm7004 = vcmp.eq.f32.partialorder %v6998, 0.0
    %v7005 = vand.u32 %v6998, 2147483648
    %v7006 = vsel %vm7004, %v7005, %v7003
    %v7007 = vrsqrt.pop %v6999
    %v7008 = vmul.f32 %v6999, %v7007
    %vm7009 = vcmp.eq.f32.partialorder %v6999, inf
    %v7010 = vsel %vm7009, %v6999, %v7008
    %vm7011 = vcmp.eq.f32.partialorder %v6999, 0.0
    %v7012 = vand.u32 %v6999, 2147483648
    %v7013 = vsel %vm7011, %v7012, %v7010
    %v7014 = vstv %s6978
    %v7015 = vmul.f32 %v7014, %v6988
    %v7016 = vmul.f32 %v7014, %v6989
    %v7017 = vadd.f32 %v7006, 1e-06
    %v7018 = vadd.f32 %v7013, 1e-06
    %v7019 = vrcp.pop %v7017
    %v7020 = vrcp.pop %v7018
    %v7021 = vmul.f32 %v7015, %v7019
    %v7022 = vmul.f32 %v7016, %v7020
    %v7023 = vstv %s6979
    %v7024 = vadd.f32 %v7021, %v7023
    %v7025 = vadd.f32 %v7022, %v7023
    %s7026 = scalar_lea.vmem %s14, 32
    %v7027 = vld [vmem:[%s7026] sm:$0xff]
    %v7028 = vld [vmem:[%s7026 + $0x8] sm:$0xff]
    %v7029 = vld [vmem:[%s7026 + $0x10] sm:$0xff]
    %v7030 = vld [vmem:[%s7026 + $0x18] sm:$0xff]
    %s7031 = scalar_lea.vmem [#allocation15], 1
    %v7032 = vld [vmem:[%s7031] sm:$0x1]
    %v7034 = vlaneseq
    %v7035 = vshrl.u32 %v7034, 7
    %v7036 = vsub.s32 0, %v7035
    %v7037 = vrot.slane %v7032, %v7036
    %v7040 = vsel %vm220, %v7024, 0
    %v7043 = vsel %vm220, %v7025, 0
    %7045 = vmatprep.subr.mxu0 0.0
    %7046 = vmatpush1.msra.mxu0 0.0
    %7047 = vmatprep.subr.mxu0 0.0
    %7048 = vmatpush1.msra.mxu0 0.0
    %7049 = vmatprep.subr.mxu0 0.0
    %7050 = vmatpush1.msra.mxu0 0.0
    %7051 = vmatprep.subr.mxu0 0.0
    %7052 = vmatpush1.msra.mxu0 0.0
    %7053 = vmatprep.subr.mxu0 0.0
    %7054 = vmatpush1.msra.mxu0 0.0
    %7055 = vmatprep.subr.mxu0 0.0
    %7056 = vmatpush1.msra.mxu0 0.0
    %7057 = vmatprep.subr.mxu0 0.0
    %7058 = vmatpush1.msra.mxu0 0.0
    %7059 = vmatprep.subr.mxu0 0.0
    %7060 = vmatpush1.msra.mxu0 0.0
    %7061 = vmatprep.subr.mxu0 0.0
    %7062 = vmatpush1.msra.mxu0 0.0
    %7063 = vmatprep.subr.mxu0 0.0
    %7064 = vmatpush1.msra.mxu0 0.0
    %7065 = vmatprep.subr.mxu0 0.0
    %7066 = vmatpush1.msra.mxu0 0.0
    %7067 = vmatprep.subr.mxu0 0.0
    %7068 = vmatpush1.msra.mxu0 0.0
    %7069 = vmatprep.subr.mxu0 0.0
    %7070 = vmatpush1.msra.mxu0 %v7030
    %7071 = vmatprep.subr.mxu0 0.0
    %7072 = vmatpush1.msra.mxu0 %v7029
    %7073 = vmatprep.subr.mxu0 0.0
    %7074 = vmatpush1.msra.mxu0 %v7028
    %7075 = vmatprep.subr.mxu0 0.0
    %7076 = vmatpush1.msra.mxu0 %v7027
    %7077 = vmatprep.subr.mxu0 0.0
    %7078 = vmatpush2.msra.mxu0 0.0
    %7079 = vmatprep.subr.mxu0 0.0
    %7080 = vmatpush2.msra.mxu0 0.0
    %7081 = vmatprep.subr.mxu0 0.0
    %7082 = vmatpush2.msra.mxu0 0.0
    %7083 = vmatprep.subr.mxu0 0.0
    %7084 = vmatpush2.msra.mxu0 0.0
    %7085 = vmatprep.subr.mxu0 0.0
    %7086 = vmatpush2.msra.mxu0 0.0
    %7087 = vmatprep.subr.mxu0 0.0
    %7088 = vmatpush2.msra.mxu0 0.0
    %7089 = vmatprep.subr.mxu0 0.0
    %7090 = vmatpush2.msra.mxu0 0.0
    %7091 = vmatprep.subr.mxu0 0.0
    %7092 = vmatpush2.msra.mxu0 0.0
    %7093 = vmatprep.subr.mxu0 0.0
    %7094 = vmatpush2.msra.mxu0 0.0
    %7095 = vmatprep.subr.mxu0 0.0
    %7096 = vmatpush2.msra.mxu0 0.0
    %7097 = vmatprep.subr.mxu0 0.0
    %7098 = vmatpush2.msra.mxu0 0.0
    %7099 = vmatprep.subr.mxu0 0.0
    %7100 = vmatpush2.msra.mxu0 0.0
    %7101 = vmatprep.subr.mxu0 0.0
    %7102 = vmatpush2.msra.mxu0 0.0
    %7103 = vmatprep.subr.mxu0 0.0
    %7104 = vmatpush2.msra.mxu0 0.0
    %7105 = vmatprep.subr.mxu0 0.0
    %7106 = vmatpush2.msra.mxu0 0.0
    %7107 = vmatprep.subr.mxu0 0.0
    %7108 = vmatpush2.msra.mxu0 0.0
    %7109 = vmatprep.mubr.f32.mxu0 0.0
    %7110 = vmatmul.mubr.f32.gmra.mxu0 %v7040
    %v7111 = vpop.f32.mrf.mxu0
    %v7112 = vadd.f32 %v7037, %v7111
    %v7113 = vpop.f32.mrf.mxu0
    %7114 = vmatprep.mubr.f32.mxu0 0.0
    %7115 = vmatmul.mubr.f32.gmra.mxu0 %v7043
    %v7116 = vpop.f32.mrf.mxu0
    %v7117 = vadd.f32 %v7037, %v7116
    %v7118 = vpop.f32.mrf.mxu0
    %7119 = vdwg.mxu0
    %v7120 = vmax.f32 %v7112, 0.0
    %v7121 = vmax.f32 %v7117, 0.0
    %s7122 = scalar_lea.vmem %s16, 64
    %v7123 = vld [vmem:[%s7122] sm:$0xff]
    %v7124 = vld [vmem:[%s7122 + $0x8] sm:$0xff]
    %v7125 = vld [vmem:[%s7122 + $0x10] sm:$0xff]
    %v7126 = vld [vmem:[%s7122 + $0x18] sm:$0xff]
    %v7127 = vld [vmem:[%s7122 + $0x20] sm:$0xff]
    %v7128 = vld [vmem:[%s7122 + $0x28] sm:$0xff]
    %v7129 = vld [vmem:[%s7122 + $0x30] sm:$0xff]
    %v7130 = vld [vmem:[%s7122 + $0x38] sm:$0xff]
    %v7132 = vsel %vm3627, %v7120, 0
    %v7135 = vsel %vm3627, %v7121, 0
    %7137 = vmatprep.subr.mxu0 0.0
    %7138 = vmatpush1.msra.mxu0 0.0
    %7139 = vmatprep.subr.mxu0 0.0
    %7140 = vmatpush1.msra.mxu0 0.0
    %7141 = vmatprep.subr.mxu0 0.0
    %7142 = vmatpush1.msra.mxu0 0.0
    %7143 = vmatprep.subr.mxu0 0.0
    %7144 = vmatpush1.msra.mxu0 0.0
    %7145 = vmatprep.subr.mxu0 0.0
    %7146 = vmatpush1.msra.mxu0 0.0
    %7147 = vmatprep.subr.mxu0 0.0
    %7148 = vmatpush1.msra.mxu0 0.0
    %7149 = vmatprep.subr.mxu0 0.0
    %7150 = vmatpush1.msra.mxu0 0.0
    %7151 = vmatprep.subr.mxu0 0.0
    %7152 = vmatpush1.msra.mxu0 0.0
    %7153 = vmatprep.subr.mxu0 0.0
    %7154 = vmatpush1.msra.mxu0 %v7130
    %7155 = vmatprep.subr.mxu0 0.0
    %7156 = vmatpush1.msra.mxu0 %v7129
    %7157 = vmatprep.subr.mxu0 0.0
    %7158 = vmatpush1.msra.mxu0 %v7128
    %7159 = vmatprep.subr.mxu0 0.0
    %7160 = vmatpush1.msra.mxu0 %v7127
    %7161 = vmatprep.subr.mxu0 0.0
    %7162 = vmatpush1.msra.mxu0 %v7126
    %7163 = vmatprep.subr.mxu0 0.0
    %7164 = vmatpush1.msra.mxu0 %v7125
    %7165 = vmatprep.subr.mxu0 0.0
    %7166 = vmatpush1.msra.mxu0 %v7124
    %7167 = vmatprep.subr.mxu0 0.0
    %7168 = vmatpush1.msra.mxu0 %v7123
    %7169 = vmatprep.subr.mxu0 0.0
    %7170 = vmatpush2.msra.mxu0 0.0
    %7171 = vmatprep.subr.mxu0 0.0
    %7172 = vmatpush2.msra.mxu0 0.0
    %7173 = vmatprep.subr.mxu0 0.0
    %7174 = vmatpush2.msra.mxu0 0.0
    %7175 = vmatprep.subr.mxu0 0.0
    %7176 = vmatpush2.msra.mxu0 0.0
    %7177 = vmatprep.subr.mxu0 0.0
    %7178 = vmatpush2.msra.mxu0 0.0
    %7179 = vmatprep.subr.mxu0 0.0
    %7180 = vmatpush2.msra.mxu0 0.0
    %7181 = vmatprep.subr.mxu0 0.0
    %7182 = vmatpush2.msra.mxu0 0.0
    %7183 = vmatprep.subr.mxu0 0.0
    %7184 = vmatpush2.msra.mxu0 0.0
    %7185 = vmatprep.subr.mxu0 0.0
    %7186 = vmatpush2.msra.mxu0 0.0
    %7187 = vmatprep.subr.mxu0 0.0
    %7188 = vmatpush2.msra.mxu0 0.0
    %7189 = vmatprep.subr.mxu0 0.0
    %7190 = vmatpush2.msra.mxu0 0.0
    %7191 = vmatprep.subr.mxu0 0.0
    %7192 = vmatpush2.msra.mxu0 0.0
    %7193 = vmatprep.subr.mxu0 0.0
    %7194 = vmatpush2.msra.mxu0 0.0
    %7195 = vmatprep.subr.mxu0 0.0
    %7196 = vmatpush2.msra.mxu0 0.0
    %7197 = vmatprep.subr.mxu0 0.0
    %7198 = vmatpush2.msra.mxu0 0.0
    %7199 = vmatprep.subr.mxu0 0.0
    %7200 = vmatpush2.msra.mxu0 0.0
    %7201 = vmatprep.mubr.f32.mxu0 0.0
    %7202 = vmatmul.mubr.f32.gmra.mxu0 %v7132
    %v7203 = vpop.f32.mrf.mxu0
    %v7204 = vadd.f32 0.0, %v7203
    %v7205 = vpop.f32.mrf.mxu0
    %7206 = vmatprep.mubr.f32.mxu0 0.0
    %7207 = vmatmul.mubr.f32.gmra.mxu0 %v7135
    %v7208 = vpop.f32.mrf.mxu0
    %v7209 = vadd.f32 0.0, %v7208
    %v7210 = vpop.f32.mrf.mxu0
    %7211 = vdwg.mxu0
    %v7212 = vadd.f32 %v6976, %v7204
    %v7213 = vadd.f32 %v6977, %v7209
    %s7214 = scalar_lea.vmem [#allocation16], 1
    %v7215 = vld [vmem:[%s7214] sm:$0x1]
    %v7217 = vlaneseq
    %v7218 = vshrl.u32 %v7217, 7
    %v7219 = vsub.s32 0, %v7218
    %v7220 = vrot.slane %v7215, %v7219
    %v7222 = vadd.f32 %v7212, %v7220
    %v7223 = vadd.f32 %v7213, %v7220
    %s7224 = sld [smem:[#allocation19]]
    %s7225 = sld [smem:[#allocation19 + $0x1]]
    %v7226 = vsel %vm220, %v7222, 0.0
    %7227 = vadd.xlane.f32.xlu0 %v7226
    %v7228 = vpop.xlane.xlu0 %7227
    %v7229 = vsel %vm220, %v7223, 0.0
    %7230 = vadd.xlane.f32.xlu0 %v7229
    %v7231 = vpop.xlane.xlu0 %7230
    %v7232 = vmul.f32 %v7228, %v227
    %v7233 = vmul.f32 %v7231, %v227
    %v7234 = vsub.f32 %v7222, %v7232
    %v7235 = vsub.f32 %v7223, %v7233
    %v7236 = vmul.f32 %v7234, %v7234
    %v7237 = vmul.f32 %v7235, %v7235
    %v7238 = vsel %vm220, %v7236, 0.0
    %7239 = vadd.xlane.f32.xlu0 %v7238
    %v7240 = vpop.xlane.xlu0 %7239
    %v7241 = vsel %vm220, %v7237, 0.0
    %7242 = vadd.xlane.f32.xlu0 %v7241
    %v7243 = vpop.xlane.xlu0 %7242
    %v7244 = vmul.f32 %v7240, 0.032258064
    %v7245 = vmul.f32 %v7243, 0.032258064
    %v7246 = vrsqrt.pop %v7244
    %v7247 = vmul.f32 %v7244, %v7246
    %vm7248 = vcmp.eq.f32.partialorder %v7244, inf
    %v7249 = vsel %vm7248, %v7244, %v7247
    %vm7250 = vcmp.eq.f32.partialorder %v7244, 0.0
    %v7251 = vand.u32 %v7244, 2147483648
    %v7252 = vsel %vm7250, %v7251, %v7249
    %v7253 = vrsqrt.pop %v7245
    %v7254 = vmul.f32 %v7245, %v7253
    %vm7255 = vcmp.eq.f32.partialorder %v7245, inf
    %v7256 = vsel %vm7255, %v7245, %v7254
    %vm7257 = vcmp.eq.f32.partialorder %v7245, 0.0
    %v7258 = vand.u32 %v7245, 2147483648
    %v7259 = vsel %vm7257, %v7258, %v7256
    %v7260 = vstv %s7224
    %v7261 = vmul.f32 %v7260, %v7234
    %v7262 = vmul.f32 %v7260, %v7235
    %v7263 = vadd.f32 %v7252, 1e-06
    %v7264 = vadd.f32 %v7259, 1e-06
    %v7265 = vrcp.pop %v7263
    %v7266 = vrcp.pop %v7264
    %v7267 = vmul.f32 %v7261, %v7265
    %v7268 = vmul.f32 %v7262, %v7266
    %v7269 = vstv %s7225
    %v7270 = vadd.f32 %v7267, %v7269
    %v7271 = vadd.f32 %v7268, %v7269
    %7272 = vst.msk [vmem:[#allocation20] sm:$0xff] %vm220, %v7270
    %7273 = vst.msk [vmem:[#allocation20 + $0x8] sm:$0xff] %vm220, %v7271
    // Predicated region
    $region122: #{decoder_forward.1} parent=1 // pred_check
      _
    $region123: #{decoder_forward.1} parent=1 // pred_check_branch
      %7275 = sbr.rel (0) target = $region125
    $region124: #{decoder_forward.1} parent=1 // pred_region
      %s7277 = ssub.s32 256, 256
      %7278 = vsyncadd [#allocation4], %s7277
      %s7279 = sshll.u32 [#allocation20], 4
      %s7280 = int_to_ptr.vmem [resolvable:$true] %s7279
      %7285 = dma.vmem_to_hbm [thread:$0]  %s7280, 256, %s20, [#allocation4], 128, 128, 8
    $region125: #{decoder_forward.1} parent=1 // pred_fallthru
      _
    // Predicated region
    $region126: #{decoder_forward.1} parent=1 // pred_check
      _
    $region127: #{decoder_forward.1} parent=1 // pred_check_branch
      %7287 = sbr.rel (0) target = $region129
    $region128: #{decoder_forward.1} parent=1 // pred_region
      %7288 = dma.done [#allocation4], 256
    $region129: #{decoder_forward.1} parent=1 // pred_fallthru
      _
    %7289 = vsyncpa [#allocation3], 1
    %7290 = vsyncpa [#allocation8], 1
    %7291 = vsyncpa [#allocation11], 1
    %7292 = vsyncpa [#allocation14], 1
    %7293 = vsyncpa [#allocation17], 1
    %7294 = vsyncpa [#allocation4], 1
    %7295 = vsyncpa [#allocation5], 1
    %7296 = vsyncpa [#allocation6], 1

</llo_original>
